<compile_context>
chip_gen: v7x
topology: tpu7x:2x2x1
jax: 0.10.0
libtpu: 0.0.40
codegen_flags: <defaults>
</compile_context>

<pallas_src>
import functools

import jax
import jax.numpy as jnp
from jax.experimental import pallas as pl
from jax.experimental.pallas import tpu as pltpu

EPS = 1e-3
LANES = 128


# ------------------------------- helpers ------------------------------------
def _round_up(x, m):
    return (x + m - 1) // m * m


def _vmem_limit(nbytes):
    # actual per-call footprint * 1.5 headroom, floored at 8 MiB and capped so
    # it always fits v7x's 64 MiB physical VMEM with margin.
    return int(min(max(int(nbytes * 1.5), 8 << 20), 48 << 20))


def _make_taps(stride, wq, ll):
    """(flat offset into the plane-stacked input) for each of the 9 taps."""
    taps = []
    for di in range(3):
        for dj in range(3):
            if stride == 1:
                taps.append(di * wq + dj)
            else:  # stride 2: parity-plane decomposition
                plane = 2 * (di % 2) + (dj % 2)
                taps.append(plane * ll + (di // 2) * wq + (dj // 2))
    return tuple(taps)


def _make_planes(x, stride, hqp, wq):
    """Zero-padded NHWC planes, flattened to (N, P*hqp*wq, C).  ~1x input bytes."""
    n, h, w, c = x.shape
    if stride == 1:
        xp = jnp.pad(x, ((0, 0), (1, hqp - h - 1), (1, wq - w - 1), (0, 0)))
        planes = xp[:, None]                                   # (n,1,hqp,wq,c)
    else:  # stride 2: four parity planes of the padded image
        xp = jnp.pad(x, ((0, 0), (1, 1), (1, 1), (0, 0)))
        ps = []
        for ph in range(2):
            for pw in range(2):
                p = xp[:, ph::2, pw::2, :]
                ps.append(jnp.pad(
                    p, ((0, 0), (0, hqp - p.shape[1]),
                        (0, wq - p.shape[2]), (0, 0))))
        planes = jnp.stack(ps, axis=1)                         # (n,4,hqp,wq,c)
    return planes.reshape(n, planes.shape[1] * hqp * wq, c)


# ----------------------------- Pallas kernels -------------------------------
def _conv_stats_kernel(x_ref, w_ref, y_ref, sum_ref, ssq_ref, *,
                       taps, mx, wq, wo):
    """Fused im2col conv-as-matmul (9 tap dots, f32 acc) + BN pass-1 stats.

    x_ref : (1, P*L, Cin_pad) bf16 planes for one image
    w_ref : (9, Cin_pad, C)   bf16 per-tap weights (downsample in centre tap)
    y_ref : (1, mx, C)        bf16 conv output, extended-row layout
    sum_ref/ssq_ref : (1, C)  f32 resident accumulators across the batch grid
    """
    acc = None
    for t, off in enumerate(taps):
        part = jnp.dot(x_ref[0, pl.ds(off, mx), :], w_ref[t],
                       preferred_element_type=jnp.float32)
        acc = part if acc is None else acc + part
    y_ref[0] = acc.astype(y_ref.dtype)

    @pl.when(pl.program_id(0) == 0)
    def _init():
        sum_ref[...] = jnp.zeros_like(sum_ref)
        ssq_ref[...] = jnp.zeros_like(ssq_ref)

    # mask the 2 garbage columns per extended row out of the statistics
    col = jax.lax.broadcasted_iota(jnp.int32, (mx, 1), 0) % wq
    masked = jnp.where(col < wo, acc, 0.0)
    sum_ref[...] += jnp.sum(masked, axis=0, keepdims=True)
    ssq_ref[...] += jnp.sum(masked * masked, axis=0, keepdims=True)


def _bn_stats(sum_ref, ssq_ref, m_total):
    inv_m = 1.0 / m_total
    mean = sum_ref[...] * inv_m
    var = jnp.maximum(ssq_ref[...] * inv_m - mean * mean, 0.0)
    return mean, jax.lax.rsqrt(var + EPS)


def _bn_apply_split_kernel(y_ref, sum_ref, ssq_ref, g_ref, b_ref,
                           h_ref, r_ref, *, m_total, ch):
    """BN pass 2 for stage A with fused downsample: two native outputs,
    conv branch (ReLU) and downsample branch (linear)."""
    mean, rstd = _bn_stats(sum_ref, ssq_ref, m_total)
    z = (y_ref[0].astype(jnp.float32) - mean) * rstd * g_ref[...] + b_ref[...]
    h_ref[0] = jnp.maximum(z[:, :ch], 0.0).astype(h_ref.dtype)
    r_ref[0] = z[:, ch:].astype(r_ref.dtype)


def _bn_apply_relu_kernel(y_ref, sum_ref, ssq_ref, g_ref, b_ref, o_ref, *,
                          m_total):
    """BN pass 2 + ReLU (stage A without downsample)."""
    mean, rstd = _bn_stats(sum_ref, ssq_ref, m_total)
    z = (y_ref[0].astype(jnp.float32) - mean) * rstd * g_ref[...] + b_ref[...]
    o_ref[0] = jnp.maximum(z, 0.0).astype(o_ref.dtype)


def _bn_add_relu_kernel(y_ref, sum_ref, ssq_ref, g_ref, b_ref, r_ref, o_ref, *,
                        m_total):
    """BN pass 2 + residual add + ReLU (end of the block)."""
    mean, rstd = _bn_stats(sum_ref, ssq_ref, m_total)
    z = (y_ref[0].astype(jnp.float32) - mean) * rstd * g_ref[...] + b_ref[...]
    o_ref[0] = jnp.maximum(z + r_ref[0].astype(jnp.float32), 0.0
                           ).astype(o_ref.dtype)


# ------------------------------ call wrappers --------------------------------
def _conv_stats(xf, w, *, taps, mx, wq, wo):
    n, lp, ck = xf.shape
    cw = w.shape[2]
    fp = (2 * lp * ck * 2 + 9 * ck * cw * 2 + 2 * mx * cw * 2
          + 2 * mx * cw * 4 + 8 * cw * 4)
    cost = pl.CostEstimate(
        flops=2 * n * mx * ck * cw * 9, transcendentals=0,
        bytes_accessed=(n * lp * ck + 9 * ck * cw + n * mx * cw) * 2 + 8 * cw)
    return pl.pallas_call(
        functools.partial(_conv_stats_kernel, taps=taps, mx=mx, wq=wq, wo=wo),
        grid=(n,),
        in_specs=[pl.BlockSpec((1, lp, ck), lambda i: (i, 0, 0)),
                  pl.BlockSpec((9, ck, cw), lambda i: (0, 0, 0))],
        out_specs=[pl.BlockSpec((1, mx, cw), lambda i: (i, 0, 0)),
                   pl.BlockSpec((1, cw), lambda i: (0, 0)),
                   pl.BlockSpec((1, cw), lambda i: (0, 0))],
        out_shape=(jax.ShapeDtypeStruct((n, mx, cw), jnp.bfloat16),
                   jax.ShapeDtypeStruct((1, cw), jnp.float32),
                   jax.ShapeDtypeStruct((1, cw), jnp.float32)),
        compiler_params=pltpu.CompilerParams(
            dimension_semantics=("arbitrary",),  # stats accumulate sequentially
            vmem_limit_bytes=_vmem_limit(fp)),
        cost_estimate=cost,
    )(xf, w)


def _bn_split(y, ssum, ssq, g, b, *, m_total, ch):
    n, mx, ca = y.shape
    fp = 2 * mx * ca * 2 + 4 * mx * ch * 2 + mx * ca * 4 + 16 * ca * 4
    vec = pl.BlockSpec((1, ca), lambda i: (0, 0))
    tile = pl.BlockSpec((1, mx, ca), lambda i: (i, 0, 0))
    otile = pl.BlockSpec((1, mx, ch), lambda i: (i, 0, 0))
    return pl.pallas_call(
        functools.partial(_bn_apply_split_kernel, m_total=m_total, ch=ch),
        grid=(n,),
        in_specs=[tile, vec, vec, vec, vec],
        out_specs=[otile, otile],
        out_shape=(jax.ShapeDtypeStruct((n, mx, ch), jnp.bfloat16),
                   jax.ShapeDtypeStruct((n, mx, ch), jnp.bfloat16)),
        compiler_params=pltpu.CompilerParams(
            dimension_semantics=("parallel",),
            vmem_limit_bytes=_vmem_limit(fp)),
    )(y, ssum, ssq, g, b)


def _bn_relu(y, ssum, ssq, g, b, *, m_total):
    n, mx, c = y.shape
    fp = 2 * mx * c * 2 + 2 * mx * c * 2 + mx * c * 4 + 16 * c * 4
    vec = pl.BlockSpec((1, c), lambda i: (0, 0))
    tile = pl.BlockSpec((1, mx, c), lambda i: (i, 0, 0))
    return pl.pallas_call(
        functools.partial(_bn_apply_relu_kernel, m_total=m_total),
        grid=(n,),
        in_specs=[tile, vec, vec, vec, vec],
        out_specs=pl.BlockSpec((1, mx, c), lambda i: (i, 0, 0)),
        out_shape=jax.ShapeDtypeStruct((n, mx, c), jnp.bfloat16),
        compiler_params=pltpu.CompilerParams(
            dimension_semantics=("parallel",),
            vmem_limit_bytes=_vmem_limit(fp)),
    )(y, ssum, ssq, g, b)


def _bn_add_relu(y, ssum, ssq, g, b, r, *, m_total):
    n, mx, c = y.shape
    fp = 4 * mx * c * 2 + 2 * mx * c * 2 + mx * c * 4 + 16 * c * 4
    vec = pl.BlockSpec((1, c), lambda i: (0, 0))
    tile = pl.BlockSpec((1, mx, c), lambda i: (i, 0, 0))
    return pl.pallas_call(
        functools.partial(_bn_add_relu_kernel, m_total=m_total),
        grid=(n,),
        in_specs=[tile, vec, vec, vec, vec, tile],
        out_specs=pl.BlockSpec((1, mx, c), lambda i: (i, 0, 0)),
        out_shape=jax.ShapeDtypeStruct((n, mx, c), jnp.bfloat16),
        compiler_params=pltpu.CompilerParams(
            dimension_semantics=("parallel",),
            vmem_limit_bytes=_vmem_limit(fp)),
    )(y, ssum, ssq, g, b, r)


# ------------------------------ JAX glue -------------------------------------
def residual_block(x_nchw, params, stride):
    """Forward pass of the PyTorch residualBlock (NCHW in, NCHW out)."""
    if stride not in (1, 2):
        # TODO(synk): generalize the parity-plane decomposition beyond stride 2.
        raise NotImplementedError("residual_block supports stride 1 or 2 only")

    n, cin, h, w = x_nchw.shape
    cout = params["w1"].shape[0]
    has_ds = (stride != 1) or (cin != cout)

    ho = (h + 2 - 3) // stride + 1
    wo = (w + 2 - 3) // stride + 1
    wq = wo + 2            # extended row width (2 garbage cols per output row)
    hqp = ho + 3           # plane rows: ho+2 padded rows + 1 zero guard row
    ll = hqp * wq
    mx = ho * wq
    m_total = n * ho * wo  # valid elements per channel for BN statistics

    cin_p = _round_up(cin, LANES)
    ch = _round_up(cout, LANES)
    ca = 2 * ch if has_ds else ch

    x = jnp.transpose(x_nchw, (0, 2, 3, 1))
    x = jnp.pad(x, ((0, 0), (0, 0), (0, 0), (0, cin_p - cin))).astype(jnp.bfloat16)

    # ---- stage A: 3x3 conv (stride s) fused with 1x1 downsample + BN stats --
    xa = _make_planes(x, stride, hqp, wq)
    taps_a = _make_taps(stride, wq, ll)

    wa = jnp.zeros((9, cin_p, ca), jnp.float32)
    for di in range(3):
        for dj in range(3):
            wa = wa.at[di * 3 + dj, :cin, :cout].set(params["w1"][:, :, di, dj].T)
    ga = jnp.ones((1, ca), jnp.float32).at[0, :cout].set(params["g1"])
    ba = jnp.zeros((1, ca), jnp.float32).at[0, :cout].set(params["b1"])
    if has_ds:
        wa = wa.at[4, :cin, ch:ch + cout].set(params["wd"].reshape(cout, cin).T)
        ga = ga.at[0, ch:ch + cout].set(params["gd"])
        ba = ba.at[0, ch:ch + cout].set(params["bd"])
    wa = wa.astype(jnp.bfloat16)

    y1, s1, q1 = _conv_stats(xa, wa, taps=taps_a, mx=mx, wq=wq, wo=wo)

    if has_ds:
        h_ext, r_ext = _bn_split(y1, s1, q1, ga, ba, m_total=m_total, ch=ch)
    else:
        h_ext = _bn_relu(y1, s1, q1, ga, ba, m_total=m_total)
        # identity shortcut, re-laid into the same extended-row format (cheap)
        r_ext = jnp.pad(x, ((0, 0), (0, 0), (0, wq - w), (0, 0))).reshape(n, mx, ch)

    # ---- stage B: 3x3 conv (stride 1) + BN + residual add + ReLU ------------
    h_sp = h_ext.reshape(n, ho, wq, ch)[:, :, :wo, :]
    xb = jnp.pad(h_sp, ((0, 0), (1, hqp - ho - 1), (1, 1), (0, 0))).reshape(n, ll, ch)
    taps_b = _make_taps(1, wq, ll)

    wb = jnp.zeros((9, ch, ch), jnp.float32)
    for di in range(3):
        for dj in range(3):
            wb = wb.at[di * 3 + dj, :cout, :cout].set(params["w2"][:, :, di, dj].T)
    gb = jnp.ones((1, ch), jnp.float32).at[0, :cout].set(params["g2"])
    bb = jnp.zeros((1, ch), jnp.float32).at[0, :cout].set(params["b2"])
    wb = wb.astype(jnp.bfloat16)

    y2, s2, q2 = _conv_stats(xb, wb, taps=taps_b, mx=mx, wq=wq, wo=wo)
    out_ext = _bn_add_relu(y2, s2, q2, gb, bb, r_ext, m_total=m_total)

    out = out_ext.reshape(n, ho, wq, ch)[:, :, :wo, :cout]
    # TODO(synk): when chaining blocks, return NHWC bf16 here and skip the
    # transpose/cast below (it costs an extra HBM round trip of the activation).
    return jnp.transpose(out, (0, 3, 1, 2)).astype(jnp.float32)


# --------------------------- pure-JAX reference -------------------------------
def _reference(x, params, stride):
    def conv(y, w, s, pad):
        return jax.lax.conv_general_dilated(
            y, w, (s, s), [(pad, pad), (pad, pad)],
            dimension_numbers=("NCHW", "OIHW", "NCHW"))

    def bn(y, g, b):
        mean = y.mean(axis=(0, 2, 3), keepdims=True)
        var = jnp.square(y - mean).mean(axis=(0, 2, 3), keepdims=True)
        return ((y - mean) * jax.lax.rsqrt(var + EPS)
                * g.reshape(1, -1, 1, 1) + b.reshape(1, -1, 1, 1))

    h = jax.nn.relu(bn(conv(x, params["w1"], stride, 1), params["g1"], params["b1"]))
    h = bn(conv(h, params["w2"], 1, 1), params["g2"], params["b2"])
    cin, cout = x.shape[1], params["w1"].shape[0]
    d = x
    if stride != 1 or cin != cout:
        d = bn(conv(x, params["wd"], stride, 0), params["gd"], params["bd"])
    return jax.nn.relu(h + d)


# ---------------------------------- main --------------------------------------
if __name__ == "__main__":
    def make_params(key, cin, cout, has_ds):
        ks = jax.random.split(key, 10)
        p = {
            "w1": 0.1 * jax.random.normal(ks[1], (cout, cin, 3, 3), jnp.float32),
            "g1": 1.0 + 0.1 * jax.random.normal(ks[2], (cout,), jnp.float32),
            "b1": 0.1 * jax.random.normal(ks[3], (cout,), jnp.float32),
            "w2": 0.1 * jax.random.normal(ks[4], (cout, cout, 3, 3), jnp.float32),
            "g2": 1.0 + 0.1 * jax.random.normal(ks[5], (cout,), jnp.float32),
            "b2": 0.1 * jax.random.normal(ks[6], (cout,), jnp.float32),
        }
        if has_ds:
            p["wd"] = 0.1 * jax.random.normal(ks[7], (cout, cin, 1, 1), jnp.float32)
            p["gd"] = 1.0 + 0.1 * jax.random.normal(ks[8], (cout,), jnp.float32)
            p["bd"] = 0.1 * jax.random.normal(ks[9], (cout,), jnp.float32)
        return p

    key = jax.random.PRNGKey(0)
    k1, k2, k3, k4 = jax.random.split(key, 4)
    fwd = jax.jit(residual_block, static_argnums=(2,))

    # case 1: transition block (stride 2, 4 -> 8 channels, fused downsample)
    x1 = jax.random.normal(k1, (2, 4, 16, 16), jnp.float32)
    p1 = make_params(k2, 4, 8, True)
    out1 = jax.block_until_ready(fwd(x1, p1, 2))
    ref1 = jax.block_until_ready(_reference(x1, p1, 2))
    assert out1.shape == (2, 8, 8, 8), out1.shape
    err1 = float(jnp.max(jnp.abs(out1 - ref1)))
    assert jnp.allclose(out1, ref1, atol=6e-2, rtol=6e-2), err1

    # case 2: identity block (stride 1, 8 -> 8 channels, identity shortcut)
    x2 = jax.random.normal(k3, (2, 8, 8, 8), jnp.float32)
    p2 = make_params(k4, 8, 8, False)
    out2 = jax.block_until_ready(fwd(x2, p2, 1))
    ref2 = jax.block_until_ready(_reference(x2, p2, 1))
    assert out2.shape == (2, 8, 8, 8), out2.shape
    err2 = float(jnp.max(jnp.abs(out2 - ref2)))
    assert jnp.allclose(out2, ref2, atol=6e-2, rtol=6e-2), err2

    print("KERNEL_OK")
</pallas_src>

<mosaic_0001>
module attributes {stable_mosaic.version = 11 : i64} {
  func.func @_conv_stats_kernel(%arg0: i32, %arg1: memref<1x440x128xbf16, #tpu.memory_space<vmem>>, %arg2: memref<9x128x256xbf16, #tpu.memory_space<vmem>>, %arg3: memref<1x80x256xbf16, #tpu.memory_space<vmem>>, %arg4: memref<1x256xf32, #tpu.memory_space<vmem>>, %arg5: memref<1x256xf32, #tpu.memory_space<vmem>>) attributes {dimension_semantics = [#tpu.dimension_semantics<arbitrary>], iteration_bounds = array<i64: 2>, scalar_prefetch = 0 : i64, scratch_operands = 0 : i64, tpu.core_type = #tpu.core_type<tc>, window_params = [{transform_indices = @transform_0, window_bounds = array<i64: 1, 440, 128>}, {pipeline_mode = #tpu.pipeline_mode<synchronous>, transform_indices = @transform_1, window_bounds = array<i64: 9, 128, 256>}, {transform_indices = @transform_2, window_bounds = array<i64: 1, 80, 256>}, {pipeline_mode = #tpu.pipeline_mode<synchronous>, transform_indices = @transform_3, window_bounds = array<i64: 1, 256>}, {pipeline_mode = #tpu.pipeline_mode<synchronous>, transform_indices = @transform_4, window_bounds = array<i64: 1, 256>}]} {
    %c0 = arith.constant 0 : index
    %c0_0 = arith.constant 0 : index
    %c0_1 = arith.constant 0 : index
    %0 = vector.load %arg1[%c0, %c0_0, %c0_1] : memref<1x440x128xbf16, #tpu.memory_space<vmem>>, vector<1x80x128xbf16>
    %1 = vector.shape_cast %0 : vector<1x80x128xbf16> to vector<80x128xbf16>
    %c0_2 = arith.constant 0 : index
    %c0_3 = arith.constant 0 : index
    %c0_4 = arith.constant 0 : index
    %2 = vector.load %arg2[%c0_2, %c0_3, %c0_4] : memref<9x128x256xbf16, #tpu.memory_space<vmem>>, vector<1x128x256xbf16>
    %3 = vector.shape_cast %2 : vector<1x128x256xbf16> to vector<128x256xbf16>
    %cst = arith.constant dense<0.000000e+00> : vector<80x256xf32>
    %4 = tpu.matmul %1, %3, %cst {dimension_numbers = #tpu.dot_dimension_numbers<[1], [0], [0], [1], [0, 0, 1, 1], [], []>} : vector<80x128xbf16>, vector<128x256xbf16>, vector<80x256xf32> -> vector<80x256xf32>
    %c0_5 = arith.constant 0 : index
    %c110 = arith.constant 110 : index
    %c0_6 = arith.constant 0 : index
    %5 = vector.load %arg1[%c0_5, %c110, %c0_6] : memref<1x440x128xbf16, #tpu.memory_space<vmem>>, vector<1x80x128xbf16>
    %6 = vector.shape_cast %5 : vector<1x80x128xbf16> to vector<80x128xbf16>
    %c1 = arith.constant 1 : index
    %c0_7 = arith.constant 0 : index
    %c0_8 = arith.constant 0 : index
    %7 = vector.load %arg2[%c1, %c0_7, %c0_8] : memref<9x128x256xbf16, #tpu.memory_space<vmem>>, vector<1x128x256xbf16>
    %8 = vector.shape_cast %7 : vector<1x128x256xbf16> to vector<128x256xbf16>
    %cst_9 = arith.constant dense<0.000000e+00> : vector<80x256xf32>
    %9 = tpu.matmul %6, %8, %cst_9 {dimension_numbers = #tpu.dot_dimension_numbers<[1], [0], [0], [1], [0, 0, 1, 1], [], []>} : vector<80x128xbf16>, vector<128x256xbf16>, vector<80x256xf32> -> vector<80x256xf32>
    %10 = arith.addf %4, %9 : vector<80x256xf32>
    %c0_10 = arith.constant 0 : index
    %c1_11 = arith.constant 1 : index
    %c0_12 = arith.constant 0 : index
    %11 = vector.load %arg1[%c0_10, %c1_11, %c0_12] : memref<1x440x128xbf16, #tpu.memory_space<vmem>>, vector<1x80x128xbf16>
    %12 = vector.shape_cast %11 : vector<1x80x128xbf16> to vector<80x128xbf16>
    %c2 = arith.constant 2 : index
    %c0_13 = arith.constant 0 : index
    %c0_14 = arith.constant 0 : index
    %13 = vector.load %arg2[%c2, %c0_13, %c0_14] : memref<9x128x256xbf16, #tpu.memory_space<vmem>>, vector<1x128x256xbf16>
    %14 = vector.shape_cast %13 : vector<1x128x256xbf16> to vector<128x256xbf16>
    %cst_15 = arith.constant dense<0.000000e+00> : vector<80x256xf32>
    %15 = tpu.matmul %12, %14, %cst_15 {dimension_numbers = #tpu.dot_dimension_numbers<[1], [0], [0], [1], [0, 0, 1, 1], [], []>} : vector<80x128xbf16>, vector<128x256xbf16>, vector<80x256xf32> -> vector<80x256xf32>
    %16 = arith.addf %10, %15 : vector<80x256xf32>
    %c0_16 = arith.constant 0 : index
    %c220 = arith.constant 220 : index
    %c0_17 = arith.constant 0 : index
    %17 = vector.load %arg1[%c0_16, %c220, %c0_17] : memref<1x440x128xbf16, #tpu.memory_space<vmem>>, vector<1x80x128xbf16>
    %18 = vector.shape_cast %17 : vector<1x80x128xbf16> to vector<80x128xbf16>
    %c3 = arith.constant 3 : index
    %c0_18 = arith.constant 0 : index
    %c0_19 = arith.constant 0 : index
    %19 = vector.load %arg2[%c3, %c0_18, %c0_19] : memref<9x128x256xbf16, #tpu.memory_space<vmem>>, vector<1x128x256xbf16>
    %20 = vector.shape_cast %19 : vector<1x128x256xbf16> to vector<128x256xbf16>
    %cst_20 = arith.constant dense<0.000000e+00> : vector<80x256xf32>
    %21 = tpu.matmul %18, %20, %cst_20 {dimension_numbers = #tpu.dot_dimension_numbers<[1], [0], [0], [1], [0, 0, 1, 1], [], []>} : vector<80x128xbf16>, vector<128x256xbf16>, vector<80x256xf32> -> vector<80x256xf32>
    %22 = arith.addf %16, %21 : vector<80x256xf32>
    %c0_21 = arith.constant 0 : index
    %c330 = arith.constant 330 : index
    %c0_22 = arith.constant 0 : index
    %23 = vector.load %arg1[%c0_21, %c330, %c0_22] : memref<1x440x128xbf16, #tpu.memory_space<vmem>>, vector<1x80x128xbf16>
    %24 = vector.shape_cast %23 : vector<1x80x128xbf16> to vector<80x128xbf16>
    %c4 = arith.constant 4 : index
    %c0_23 = arith.constant 0 : index
    %c0_24 = arith.constant 0 : index
    %25 = vector.load %arg2[%c4, %c0_23, %c0_24] : memref<9x128x256xbf16, #tpu.memory_space<vmem>>, vector<1x128x256xbf16>
    %26 = vector.shape_cast %25 : vector<1x128x256xbf16> to vector<128x256xbf16>
    %cst_25 = arith.constant dense<0.000000e+00> : vector<80x256xf32>
    %27 = tpu.matmul %24, %26, %cst_25 {dimension_numbers = #tpu.dot_dimension_numbers<[1], [0], [0], [1], [0, 0, 1, 1], [], []>} : vector<80x128xbf16>, vector<128x256xbf16>, vector<80x256xf32> -> vector<80x256xf32>
    %28 = arith.addf %22, %27 : vector<80x256xf32>
    %c0_26 = arith.constant 0 : index
    %c221 = arith.constant 221 : index
    %c0_27 = arith.constant 0 : index
    %29 = vector.load %arg1[%c0_26, %c221, %c0_27] : memref<1x440x128xbf16, #tpu.memory_space<vmem>>, vector<1x80x128xbf16>
    %30 = vector.shape_cast %29 : vector<1x80x128xbf16> to vector<80x128xbf16>
    %c5 = arith.constant 5 : index
    %c0_28 = arith.constant 0 : index
    %c0_29 = arith.constant 0 : index
    %31 = vector.load %arg2[%c5, %c0_28, %c0_29] : memref<9x128x256xbf16, #tpu.memory_space<vmem>>, vector<1x128x256xbf16>
    %32 = vector.shape_cast %31 : vector<1x128x256xbf16> to vector<128x256xbf16>
    %cst_30 = arith.constant dense<0.000000e+00> : vector<80x256xf32>
    %33 = tpu.matmul %30, %32, %cst_30 {dimension_numbers = #tpu.dot_dimension_numbers<[1], [0], [0], [1], [0, 0, 1, 1], [], []>} : vector<80x128xbf16>, vector<128x256xbf16>, vector<80x256xf32> -> vector<80x256xf32>
    %34 = arith.addf %28, %33 : vector<80x256xf32>
    %c0_31 = arith.constant 0 : index
    %c10 = arith.constant 10 : index
    %c0_32 = arith.constant 0 : index
    %35 = vector.load %arg1[%c0_31, %c10, %c0_32] : memref<1x440x128xbf16, #tpu.memory_space<vmem>>, vector<1x80x128xbf16>
    %36 = vector.shape_cast %35 : vector<1x80x128xbf16> to vector<80x128xbf16>
    %c6 = arith.constant 6 : index
    %c0_33 = arith.constant 0 : index
    %c0_34 = arith.constant 0 : index
    %37 = vector.load %arg2[%c6, %c0_33, %c0_34] : memref<9x128x256xbf16, #tpu.memory_space<vmem>>, vector<1x128x256xbf16>
    %38 = vector.shape_cast %37 : vector<1x128x256xbf16> to vector<128x256xbf16>
    %cst_35 = arith.constant dense<0.000000e+00> : vector<80x256xf32>
    %39 = tpu.matmul %36, %38, %cst_35 {dimension_numbers = #tpu.dot_dimension_numbers<[1], [0], [0], [1], [0, 0, 1, 1], [], []>} : vector<80x128xbf16>, vector<128x256xbf16>, vector<80x256xf32> -> vector<80x256xf32>
    %40 = arith.addf %34, %39 : vector<80x256xf32>
    %c0_36 = arith.constant 0 : index
    %c120 = arith.constant 120 : index
    %c0_37 = arith.constant 0 : index
    %41 = vector.load %arg1[%c0_36, %c120, %c0_37] : memref<1x440x128xbf16, #tpu.memory_space<vmem>>, vector<1x80x128xbf16>
    %42 = vector.shape_cast %41 : vector<1x80x128xbf16> to vector<80x128xbf16>
    %c7 = arith.constant 7 : index
    %c0_38 = arith.constant 0 : index
    %c0_39 = arith.constant 0 : index
    %43 = vector.load %arg2[%c7, %c0_38, %c0_39] : memref<9x128x256xbf16, #tpu.memory_space<vmem>>, vector<1x128x256xbf16>
    %44 = vector.shape_cast %43 : vector<1x128x256xbf16> to vector<128x256xbf16>
    %cst_40 = arith.constant dense<0.000000e+00> : vector<80x256xf32>
    %45 = tpu.matmul %42, %44, %cst_40 {dimension_numbers = #tpu.dot_dimension_numbers<[1], [0], [0], [1], [0, 0, 1, 1], [], []>} : vector<80x128xbf16>, vector<128x256xbf16>, vector<80x256xf32> -> vector<80x256xf32>
    %46 = arith.addf %40, %45 : vector<80x256xf32>
    %c0_41 = arith.constant 0 : index
    %c11 = arith.constant 11 : index
    %c0_42 = arith.constant 0 : index
    %47 = vector.load %arg1[%c0_41, %c11, %c0_42] : memref<1x440x128xbf16, #tpu.memory_space<vmem>>, vector<1x80x128xbf16>
    %48 = vector.shape_cast %47 : vector<1x80x128xbf16> to vector<80x128xbf16>
    %c8 = arith.constant 8 : index
    %c0_43 = arith.constant 0 : index
    %c0_44 = arith.constant 0 : index
    %49 = vector.load %arg2[%c8, %c0_43, %c0_44] : memref<9x128x256xbf16, #tpu.memory_space<vmem>>, vector<1x128x256xbf16>
    %50 = vector.shape_cast %49 : vector<1x128x256xbf16> to vector<128x256xbf16>
    %cst_45 = arith.constant dense<0.000000e+00> : vector<80x256xf32>
    %51 = tpu.matmul %48, %50, %cst_45 {dimension_numbers = #tpu.dot_dimension_numbers<[1], [0], [0], [1], [0, 0, 1, 1], [], []>} : vector<80x128xbf16>, vector<128x256xbf16>, vector<80x256xf32> -> vector<80x256xf32>
    %52 = arith.addf %46, %51 : vector<80x256xf32>
    %53 = arith.truncf %52 : vector<80x256xf32> to vector<80x256xbf16>
    %c0_46 = arith.constant 0 : index
    %c0_47 = arith.constant 0 : index
    %c0_48 = arith.constant 0 : index
    %54 = vector.load %arg3[%c0_46, %c0_47, %c0_48] : memref<1x80x256xbf16, #tpu.memory_space<vmem>>, vector<1x80x256xbf16>
    %55 = vector.shape_cast %54 : vector<1x80x256xbf16> to vector<80x256xbf16>
    %56 = vector.shape_cast %53 : vector<80x256xbf16> to vector<1x80x256xbf16>
    tpu.vector_store %arg3[%c0_46, %c0_47, %c0_48], %56 {strides = array<i32>} : memref<1x80x256xbf16, #tpu.memory_space<vmem>>, vector<1x80x256xbf16>,
    %c0_i32 = arith.constant 0 : i32
    %57 = arith.cmpi eq, %arg0, %c0_i32 : i32
    %58 = arith.extui %57 : i1 to i32
    %c0_i32_49 = arith.constant 0 : i32
    %59 = arith.cmpi ne, %58, %c0_i32_49 : i32
    scf.if %59 {
      %cst_65 = arith.constant 0.000000e+00 : f32
      %94 = vector.broadcast %cst_65 : f32 to vector<1x256xf32>
      %c0_66 = arith.constant 0 : index
      %c0_67 = arith.constant 0 : index
      %95 = vector.load %arg4[%c0_66, %c0_67] : memref<1x256xf32, #tpu.memory_space<vmem>>, vector<1x256xf32>
      tpu.vector_store %arg4[%c0_66, %c0_67], %94 {strides = array<i32>} : memref<1x256xf32, #tpu.memory_space<vmem>>, vector<1x256xf32>,
      %cst_68 = arith.constant 0.000000e+00 : f32
      %96 = vector.broadcast %cst_68 : f32 to vector<1x256xf32>
      %c0_69 = arith.constant 0 : index
      %c0_70 = arith.constant 0 : index
      %97 = vector.load %arg5[%c0_69, %c0_70] : memref<1x256xf32, #tpu.memory_space<vmem>>, vector<1x256xf32>
      tpu.vector_store %arg5[%c0_69, %c0_70], %96 {strides = array<i32>} : memref<1x256xf32, #tpu.memory_space<vmem>>, vector<1x256xf32>,
    } else {
    }
    %60 = tpu.iota {dimensions = array<i32: 0>} : vector<80x1xi32>
    %c10_i32 = arith.constant 10 : i32
    %c0_i32_50 = arith.constant 0 : i32
    %61 = arith.cmpi eq, %c10_i32, %c0_i32_50 : i32
    %c1_i32 = arith.constant 1 : i32
    %62 = arith.select %61, %c1_i32, %c10_i32 : i32
    %63 = vector.broadcast %62 : i32 to vector<80x1xi32>
    %64 = arith.remsi %60, %63 : vector<80x1xi32>
    %c0_i32_51 = arith.constant 0 : i32
    %65 = vector.broadcast %c0_i32_51 : i32 to vector<80x1xi32>
    %66 = arith.cmpi ne, %64, %65 : vector<80x1xi32>
    %c0_i32_52 = arith.constant 0 : i32
    %67 = vector.broadcast %c0_i32_52 : i32 to vector<80x1xi32>
    %68 = arith.cmpi slt, %64, %67 : vector<80x1xi32>
    %c0_i32_53 = arith.constant 0 : i32
    %69 = arith.cmpi slt, %62, %c0_i32_53 : i32
    %70 = vector.broadcast %69 : i1 to vector<80x1xi1>
    %71 = vector.broadcast %70 : vector<80x1xi1> to vector<80x1xi1>
    %72 = arith.xori %68, %71 : vector<80x1xi1>
    %73 = arith.andi %72, %66 : vector<80x1xi1>
    %74 = vector.broadcast %62 : i32 to vector<80x1xi32>
    %75 = arith.addi %64, %74 : vector<80x1xi32>
    %76 = arith.select %73, %75, %64 : vector<80x1xi1>, vector<80x1xi32>
    %c8_i32 = arith.constant 8 : i32
    %77 = vector.broadcast %c8_i32 : i32 to vector<80x1xi32>
    %78 = arith.cmpi slt, %76, %77 : vector<80x1xi32>
    %cst_54 = arith.constant 0.000000e+00 : f32
    %79 = vector.shape_cast %78 : vector<80x1xi1> to vector<80x1xi1>
    %80 = vector.broadcast %79 : vector<80x1xi1> to vector<80x256xi1>
    %81 = vector.broadcast %cst_54 : f32 to vector<80x256xf32>
    %82 = arith.select %80, %52, %81 : vector<80x256xi1>, vector<80x256xf32>
    %c0_55 = arith.constant 0 : index
    %c0_56 = arith.constant 0 : index
    %83 = vector.load %arg4[%c0_55, %c0_56] : memref<1x256xf32, #tpu.memory_space<vmem>>, vector<1x256xf32>
    %cst_57 = arith.constant dense<0.000000e+00> : vector<256xf32>
    %84 = vector.multi_reduction <add>, %82, %cst_57 [0] : vector<80x256xf32> to vector<256xf32>
    %85 = vector.shape_cast %84 : vector<256xf32> to vector<1x256xf32>
    %86 = arith.addf %83, %85 : vector<1x256xf32>
    %c0_58 = arith.constant 0 : index
    %c0_59 = arith.constant 0 : index
    %87 = vector.load %arg4[%c0_58, %c0_59] : memref<1x256xf32, #tpu.memory_space<vmem>>, vector<1x256xf32>
    tpu.vector_store %arg4[%c0_58, %c0_59], %86 {strides = array<i32>} : memref<1x256xf32, #tpu.memory_space<vmem>>, vector<1x256xf32>,
    %c0_60 = arith.constant 0 : index
    %c0_61 = arith.constant 0 : index
    %88 = vector.load %arg5[%c0_60, %c0_61] : memref<1x256xf32, #tpu.memory_space<vmem>>, vector<1x256xf32>
    %89 = arith.mulf %82, %82 : vector<80x256xf32>
    %cst_62 = arith.constant dense<0.000000e+00> : vector<256xf32>
    %90 = vector.multi_reduction <add>, %89, %cst_62 [0] : vector<80x256xf32> to vector<256xf32>
    %91 = vector.shape_cast %90 : vector<256xf32> to vector<1x256xf32>
    %92 = arith.addf %88, %91 : vector<1x256xf32>
    %c0_63 = arith.constant 0 : index
    %c0_64 = arith.constant 0 : index
    %93 = vector.load %arg5[%c0_63, %c0_64] : memref<1x256xf32, #tpu.memory_space<vmem>>, vector<1x256xf32>
    tpu.vector_store %arg5[%c0_63, %c0_64], %92 {strides = array<i32>} : memref<1x256xf32, #tpu.memory_space<vmem>>, vector<1x256xf32>,
    return
  }
  func.func @transform_0(%arg0: i32) -> (i32, i32, i32) {
    %c0_i32 = arith.constant 0 : i32
    %c0_i32_0 = arith.constant 0 : i32
    %c0_i32_1 = arith.constant 0 : i32
    return %arg0, %c0_i32, %c0_i32_0 : i32, i32, i32
  }
  func.func @transform_1(%arg0: i32) -> (i32, i32, i32) {
    %c0_i32 = arith.constant 0 : i32
    %c0_i32_0 = arith.constant 0 : i32
    %c0_i32_1 = arith.constant 0 : i32
    %c0_i32_2 = arith.constant 0 : i32
    return %c0_i32, %c0_i32_0, %c0_i32_1 : i32, i32, i32
  }
  func.func @transform_2(%arg0: i32) -> (i32, i32, i32) {
    %c0_i32 = arith.constant 0 : i32
    %c0_i32_0 = arith.constant 0 : i32
    %c0_i32_1 = arith.constant 0 : i32
    return %arg0, %c0_i32, %c0_i32_0 : i32, i32, i32
  }
  func.func @transform_3(%arg0: i32) -> (i32, i32) {
    %c0_i32 = arith.constant 0 : i32
    %c0_i32_0 = arith.constant 0 : i32
    %c0_i32_1 = arith.constant 0 : i32
    return %c0_i32, %c0_i32_0 : i32, i32
  }
  func.func @transform_4(%arg0: i32) -> (i32, i32) {
    %c0_i32 = arith.constant 0 : i32
    %c0_i32_0 = arith.constant 0 : i32
    %c0_i32_1 = arith.constant 0 : i32
    return %c0_i32, %c0_i32_0 : i32, i32
  }
}

module attributes {stable_mosaic.version = 11 : i64} {
  func.func @_bn_apply_split_kernel(%arg0: i32, %arg1: memref<1x80x256xbf16, #tpu.memory_space<vmem>>, %arg2: memref<1x256xf32, #tpu.memory_space<vmem>>, %arg3: memref<1x256xf32, #tpu.memory_space<vmem>>, %arg4: memref<1x256xf32, #tpu.memory_space<vmem>>, %arg5: memref<1x256xf32, #tpu.memory_space<vmem>>, %arg6: memref<1x80x128xbf16, #tpu.memory_space<vmem>>, %arg7: memref<1x80x128xbf16, #tpu.memory_space<vmem>>) attributes {dimension_semantics = [#tpu.dimension_semantics<parallel>], iteration_bounds = array<i64: 2>, scalar_prefetch = 0 : i64, scratch_operands = 0 : i64, tpu.core_type = #tpu.core_type<tc>, window_params = [{transform_indices = @transform_0, window_bounds = array<i64: 1, 80, 256>}, {pipeline_mode = #tpu.pipeline_mode<synchronous>, transform_indices = @transform_1, window_bounds = array<i64: 1, 256>}, {pipeline_mode = #tpu.pipeline_mode<synchronous>, transform_indices = @transform_2, window_bounds = array<i64: 1, 256>}, {pipeline_mode = #tpu.pipeline_mode<synchronous>, transform_indices = @transform_3, window_bounds = array<i64: 1, 256>}, {pipeline_mode = #tpu.pipeline_mode<synchronous>, transform_indices = @transform_4, window_bounds = array<i64: 1, 256>}, {transform_indices = @transform_5, window_bounds = array<i64: 1, 80, 128>}, {transform_indices = @transform_6, window_bounds = array<i64: 1, 80, 128>}]} {
    %c0 = arith.constant 0 : index
    %c0_0 = arith.constant 0 : index
    %0 = vector.load %arg2[%c0, %c0_0] : memref<1x256xf32, #tpu.memory_space<vmem>>, vector<1x256xf32>
    %cst = arith.constant 7.812500e-03 : f32
    %1 = vector.broadcast %cst : f32 to vector<1x256xf32>
    %2 = arith.mulf %0, %1 : vector<1x256xf32>
    %c0_1 = arith.constant 0 : index
    %c0_2 = arith.constant 0 : index
    %3 = vector.load %arg3[%c0_1, %c0_2] : memref<1x256xf32, #tpu.memory_space<vmem>>, vector<1x256xf32>
    %cst_3 = arith.constant 7.812500e-03 : f32
    %4 = vector.broadcast %cst_3 : f32 to vector<1x256xf32>
    %5 = arith.mulf %3, %4 : vector<1x256xf32>
    %6 = arith.mulf %2, %2 : vector<1x256xf32>
    %7 = arith.subf %5, %6 : vector<1x256xf32>
    %cst_4 = arith.constant 0.000000e+00 : f32
    %8 = vector.broadcast %cst_4 : f32 to vector<1x256xf32>
    %9 = arith.maximumf %7, %8 : vector<1x256xf32>
    %cst_5 = arith.constant 1.000000e-03 : f32
    %10 = vector.broadcast %cst_5 : f32 to vector<1x256xf32>
    %11 = arith.addf %9, %10 : vector<1x256xf32>
    %12 = math.rsqrt %11 : vector<1x256xf32>
    %c0_6 = arith.constant 0 : index
    %c0_7 = arith.constant 0 : index
    %c0_8 = arith.constant 0 : index
    %13 = vector.load %arg1[%c0_6, %c0_7, %c0_8] : memref<1x80x256xbf16, #tpu.memory_space<vmem>>, vector<1x80x256xbf16>
    %14 = vector.shape_cast %13 : vector<1x80x256xbf16> to vector<80x256xbf16>
    %15 = arith.extf %14 : vector<80x256xbf16> to vector<80x256xf32>
    %16 = vector.broadcast %2 : vector<1x256xf32> to vector<80x256xf32>
    %17 = arith.subf %15, %16 : vector<80x256xf32>
    %18 = vector.broadcast %12 : vector<1x256xf32> to vector<80x256xf32>
    %19 = arith.mulf %17, %18 : vector<80x256xf32>
    %c0_9 = arith.constant 0 : index
    %c0_10 = arith.constant 0 : index
    %20 = vector.load %arg4[%c0_9, %c0_10] : memref<1x256xf32, #tpu.memory_space<vmem>>, vector<1x256xf32>
    %21 = vector.broadcast %20 : vector<1x256xf32> to vector<80x256xf32>
    %22 = arith.mulf %19, %21 : vector<80x256xf32>
    %c0_11 = arith.constant 0 : index
    %c0_12 = arith.constant 0 : index
    %23 = vector.load %arg5[%c0_11, %c0_12] : memref<1x256xf32, #tpu.memory_space<vmem>>, vector<1x256xf32>
    %24 = vector.broadcast %23 : vector<1x256xf32> to vector<80x256xf32>
    %25 = arith.addf %22, %24 : vector<80x256xf32>
    %26 = vector.extract_strided_slice %25 {offsets = [0, 0], sizes = [80, 128], strides = [1, 1]} : vector<80x256xf32> to vector<80x128xf32>
    %cst_13 = arith.constant 0.000000e+00 : f32
    %27 = vector.broadcast %cst_13 : f32 to vector<80x128xf32>
    %28 = arith.maximumf %26, %27 : vector<80x128xf32>
    %29 = arith.truncf %28 : vector<80x128xf32> to vector<80x128xbf16>
    %c0_14 = arith.constant 0 : index
    %c0_15 = arith.constant 0 : index
    %c0_16 = arith.constant 0 : index
    %30 = vector.load %arg6[%c0_14, %c0_15, %c0_16] : memref<1x80x128xbf16, #tpu.memory_space<vmem>>, vector<1x80x128xbf16>
    %31 = vector.shape_cast %30 : vector<1x80x128xbf16> to vector<80x128xbf16>
    %32 = vector.shape_cast %29 : vector<80x128xbf16> to vector<1x80x128xbf16>
    tpu.vector_store %arg6[%c0_14, %c0_15, %c0_16], %32 {strides = array<i32>} : memref<1x80x128xbf16, #tpu.memory_space<vmem>>, vector<1x80x128xbf16>,
    %33 = vector.extract_strided_slice %25 {offsets = [0, 128], sizes = [80, 128], strides = [1, 1]} : vector<80x256xf32> to vector<80x128xf32>
    %34 = arith.truncf %33 : vector<80x128xf32> to vector<80x128xbf16>
    %c0_17 = arith.constant 0 : index
    %c0_18 = arith.constant 0 : index
    %c0_19 = arith.constant 0 : index
    %35 = vector.load %arg7[%c0_17, %c0_18, %c0_19] : memref<1x80x128xbf16, #tpu.memory_space<vmem>>, vector<1x80x128xbf16>
    %36 = vector.shape_cast %35 : vector<1x80x128xbf16> to vector<80x128xbf16>
    %37 = vector.shape_cast %34 : vector<80x128xbf16> to vector<1x80x128xbf16>
    tpu.vector_store %arg7[%c0_17, %c0_18, %c0_19], %37 {strides = array<i32>} : memref<1x80x128xbf16, #tpu.memory_space<vmem>>, vector<1x80x128xbf16>,
    return
  }
  func.func @transform_0(%arg0: i32) -> (i32, i32, i32) {
    %c0_i32 = arith.constant 0 : i32
    %c0_i32_0 = arith.constant 0 : i32
    %c0_i32_1 = arith.constant 0 : i32
    return %arg0, %c0_i32, %c0_i32_0 : i32, i32, i32
  }
  func.func @transform_1(%arg0: i32) -> (i32, i32) {
    %c0_i32 = arith.constant 0 : i32
    %c0_i32_0 = arith.constant 0 : i32
    %c0_i32_1 = arith.constant 0 : i32
    return %c0_i32, %c0_i32_0 : i32, i32
  }
  func.func @transform_2(%arg0: i32) -> (i32, i32) {
    %c0_i32 = arith.constant 0 : i32
    %c0_i32_0 = arith.constant 0 : i32
    %c0_i32_1 = arith.constant 0 : i32
    return %c0_i32, %c0_i32_0 : i32, i32
  }
  func.func @transform_3(%arg0: i32) -> (i32, i32) {
    %c0_i32 = arith.constant 0 : i32
    %c0_i32_0 = arith.constant 0 : i32
    %c0_i32_1 = arith.constant 0 : i32
    return %c0_i32, %c0_i32_0 : i32, i32
  }
  func.func @transform_4(%arg0: i32) -> (i32, i32) {
    %c0_i32 = arith.constant 0 : i32
    %c0_i32_0 = arith.constant 0 : i32
    %c0_i32_1 = arith.constant 0 : i32
    return %c0_i32, %c0_i32_0 : i32, i32
  }
  func.func @transform_5(%arg0: i32) -> (i32, i32, i32) {
    %c0_i32 = arith.constant 0 : i32
    %c0_i32_0 = arith.constant 0 : i32
    %c0_i32_1 = arith.constant 0 : i32
    return %arg0, %c0_i32, %c0_i32_0 : i32, i32, i32
  }
  func.func @transform_6(%arg0: i32) -> (i32, i32, i32) {
    %c0_i32 = arith.constant 0 : i32
    %c0_i32_0 = arith.constant 0 : i32
    %c0_i32_1 = arith.constant 0 : i32
    return %arg0, %c0_i32, %c0_i32_0 : i32, i32, i32
  }
}

module attributes {stable_mosaic.version = 11 : i64} {
  func.func @_conv_stats_kernel(%arg0: i32, %arg1: memref<1x110x128xbf16, #tpu.memory_space<vmem>>, %arg2: memref<9x128x128xbf16, #tpu.memory_space<vmem>>, %arg3: memref<1x80x128xbf16, #tpu.memory_space<vmem>>, %arg4: memref<1x128xf32, #tpu.memory_space<vmem>>, %arg5: memref<1x128xf32, #tpu.memory_space<vmem>>) attributes {dimension_semantics = [#tpu.dimension_semantics<arbitrary>], iteration_bounds = array<i64: 2>, scalar_prefetch = 0 : i64, scratch_operands = 0 : i64, tpu.core_type = #tpu.core_type<tc>, window_params = [{transform_indices = @transform_0, window_bounds = array<i64: 1, 110, 128>}, {pipeline_mode = #tpu.pipeline_mode<synchronous>, transform_indices = @transform_1, window_bounds = array<i64: 9, 128, 128>}, {transform_indices = @transform_2, window_bounds = array<i64: 1, 80, 128>}, {pipeline_mode = #tpu.pipeline_mode<synchronous>, transform_indices = @transform_3, window_bounds = array<i64: 1, 128>}, {pipeline_mode = #tpu.pipeline_mode<synchronous>, transform_indices = @transform_4, window_bounds = array<i64: 1, 128>}]} {
    %c0 = arith.constant 0 : index
    %c0_0 = arith.constant 0 : index
    %c0_1 = arith.constant 0 : index
    %0 = vector.load %arg1[%c0, %c0_0, %c0_1] : memref<1x110x128xbf16, #tpu.memory_space<vmem>>, vector<1x80x128xbf16>
    %1 = vector.shape_cast %0 : vector<1x80x128xbf16> to vector<80x128xbf16>
    %c0_2 = arith.constant 0 : index
    %c0_3 = arith.constant 0 : index
    %c0_4 = arith.constant 0 : index
    %2 = vector.load %arg2[%c0_2, %c0_3, %c0_4] : memref<9x128x128xbf16, #tpu.memory_space<vmem>>, vector<1x128x128xbf16>
    %3 = vector.shape_cast %2 : vector<1x128x128xbf16> to vector<128x128xbf16>
    %cst = arith.constant dense<0.000000e+00> : vector<80x128xf32>
    %4 = tpu.matmul %1, %3, %cst {dimension_numbers = #tpu.dot_dimension_numbers<[1], [0], [0], [1], [0, 0, 1, 1], [], []>} : vector<80x128xbf16>, vector<128x128xbf16>, vector<80x128xf32> -> vector<80x128xf32>
    %c0_5 = arith.constant 0 : index
    %c1 = arith.constant 1 : index
    %c0_6 = arith.constant 0 : index
    %5 = vector.load %arg1[%c0_5, %c1, %c0_6] : memref<1x110x128xbf16, #tpu.memory_space<vmem>>, vector<1x80x128xbf16>
    %6 = vector.shape_cast %5 : vector<1x80x128xbf16> to vector<80x128xbf16>
    %c1_7 = arith.constant 1 : index
    %c0_8 = arith.constant 0 : index
    %c0_9 = arith.constant 0 : index
    %7 = vector.load %arg2[%c1_7, %c0_8, %c0_9] : memref<9x128x128xbf16, #tpu.memory_space<vmem>>, vector<1x128x128xbf16>
    %8 = vector.shape_cast %7 : vector<1x128x128xbf16> to vector<128x128xbf16>
    %cst_10 = arith.constant dense<0.000000e+00> : vector<80x128xf32>
    %9 = tpu.matmul %6, %8, %cst_10 {dimension_numbers = #tpu.dot_dimension_numbers<[1], [0], [0], [1], [0, 0, 1, 1], [], []>} : vector<80x128xbf16>, vector<128x128xbf16>, vector<80x128xf32> -> vector<80x128xf32>
    %10 = arith.addf %4, %9 : vector<80x128xf32>
    %c0_11 = arith.constant 0 : index
    %c2 = arith.constant 2 : index
    %c0_12 = arith.constant 0 : index
    %11 = vector.load %arg1[%c0_11, %c2, %c0_12] : memref<1x110x128xbf16, #tpu.memory_space<vmem>>, vector<1x80x128xbf16>
    %12 = vector.shape_cast %11 : vector<1x80x128xbf16> to vector<80x128xbf16>
    %c2_13 = arith.constant 2 : index
    %c0_14 = arith.constant 0 : index
    %c0_15 = arith.constant 0 : index
    %13 = vector.load %arg2[%c2_13, %c0_14, %c0_15] : memref<9x128x128xbf16, #tpu.memory_space<vmem>>, vector<1x128x128xbf16>
    %14 = vector.shape_cast %13 : vector<1x128x128xbf16> to vector<128x128xbf16>
    %cst_16 = arith.constant dense<0.000000e+00> : vector<80x128xf32>
    %15 = tpu.matmul %12, %14, %cst_16 {dimension_numbers = #tpu.dot_dimension_numbers<[1], [0], [0], [1], [0, 0, 1, 1], [], []>} : vector<80x128xbf16>, vector<128x128xbf16>, vector<80x128xf32> -> vector<80x128xf32>
    %16 = arith.addf %10, %15 : vector<80x128xf32>
    %c0_17 = arith.constant 0 : index
    %c10 = arith.constant 10 : index
    %c0_18 = arith.constant 0 : index
    %17 = vector.load %arg1[%c0_17, %c10, %c0_18] : memref<1x110x128xbf16, #tpu.memory_space<vmem>>, vector<1x80x128xbf16>
    %18 = vector.shape_cast %17 : vector<1x80x128xbf16> to vector<80x128xbf16>
    %c3 = arith.constant 3 : index
    %c0_19 = arith.constant 0 : index
    %c0_20 = arith.constant 0 : index
    %19 = vector.load %arg2[%c3, %c0_19, %c0_20] : memref<9x128x128xbf16, #tpu.memory_space<vmem>>, vector<1x128x128xbf16>
    %20 = vector.shape_cast %19 : vector<1x128x128xbf16> to vector<128x128xbf16>
    %cst_21 = arith.constant dense<0.000000e+00> : vector<80x128xf32>
    %21 = tpu.matmul %18, %20, %cst_21 {dimension_numbers = #tpu.dot_dimension_numbers<[1], [0], [0], [1], [0, 0, 1, 1], [], []>} : vector<80x128xbf16>, vector<128x128xbf16>, vector<80x128xf32> -> vector<80x128xf32>
    %22 = arith.addf %16, %21 : vector<80x128xf32>
    %c0_22 = arith.constant 0 : index
    %c11 = arith.constant 11 : index
    %c0_23 = arith.constant 0 : index
    %23 = vector.load %arg1[%c0_22, %c11, %c0_23] : memref<1x110x128xbf16, #tpu.memory_space<vmem>>, vector<1x80x128xbf16>
    %24 = vector.shape_cast %23 : vector<1x80x128xbf16> to vector<80x128xbf16>
    %c4 = arith.constant 4 : index
    %c0_24 = arith.constant 0 : index
    %c0_25 = arith.constant 0 : index
    %25 = vector.load %arg2[%c4, %c0_24, %c0_25] : memref<9x128x128xbf16, #tpu.memory_space<vmem>>, vector<1x128x128xbf16>
    %26 = vector.shape_cast %25 : vector<1x128x128xbf16> to vector<128x128xbf16>
    %cst_26 = arith.constant dense<0.000000e+00> : vector<80x128xf32>
    %27 = tpu.matmul %24, %26, %cst_26 {dimension_numbers = #tpu.dot_dimension_numbers<[1], [0], [0], [1], [0, 0, 1, 1], [], []>} : vector<80x128xbf16>, vector<128x128xbf16>, vector<80x128xf32> -> vector<80x128xf32>
    %28 = arith.addf %22, %27 : vector<80x128xf32>
    %c0_27 = arith.constant 0 : index
    %c12 = arith.constant 12 : index
    %c0_28 = arith.constant 0 : index
    %29 = vector.load %arg1[%c0_27, %c12, %c0_28] : memref<1x110x128xbf16, #tpu.memory_space<vmem>>, vector<1x80x128xbf16>
    %30 = vector.shape_cast %29 : vector<1x80x128xbf16> to vector<80x128xbf16>
    %c5 = arith.constant 5 : index
    %c0_29 = arith.constant 0 : index
    %c0_30 = arith.constant 0 : index
    %31 = vector.load %arg2[%c5, %c0_29, %c0_30] : memref<9x128x128xbf16, #tpu.memory_space<vmem>>, vector<1x128x128xbf16>
    %32 = vector.shape_cast %31 : vector<1x128x128xbf16> to vector<128x128xbf16>
    %cst_31 = arith.constant dense<0.000000e+00> : vector<80x128xf32>
    %33 = tpu.matmul %30, %32, %cst_31 {dimension_numbers = #tpu.dot_dimension_numbers<[1], [0], [0], [1], [0, 0, 1, 1], [], []>} : vector<80x128xbf16>, vector<128x128xbf16>, vector<80x128xf32> -> vector<80x128xf32>
    %34 = arith.addf %28, %33 : vector<80x128xf32>
    %c0_32 = arith.constant 0 : index
    %c20 = arith.constant 20 : index
    %c0_33 = arith.constant 0 : index
    %35 = vector.load %arg1[%c0_32, %c20, %c0_33] : memref<1x110x128xbf16, #tpu.memory_space<vmem>>, vector<1x80x128xbf16>
    %36 = vector.shape_cast %35 : vector<1x80x128xbf16> to vector<80x128xbf16>
    %c6 = arith.constant 6 : index
    %c0_34 = arith.constant 0 : index
    %c0_35 = arith.constant 0 : index
    %37 = vector.load %arg2[%c6, %c0_34, %c0_35] : memref<9x128x128xbf16, #tpu.memory_space<vmem>>, vector<1x128x128xbf16>
    %38 = vector.shape_cast %37 : vector<1x128x128xbf16> to vector<128x128xbf16>
    %cst_36 = arith.constant dense<0.000000e+00> : vector<80x128xf32>
    %39 = tpu.matmul %36, %38, %cst_36 {dimension_numbers = #tpu.dot_dimension_numbers<[1], [0], [0], [1], [0, 0, 1, 1], [], []>} : vector<80x128xbf16>, vector<128x128xbf16>, vector<80x128xf32> -> vector<80x128xf32>
    %40 = arith.addf %34, %39 : vector<80x128xf32>
    %c0_37 = arith.constant 0 : index
    %c21 = arith.constant 21 : index
    %c0_38 = arith.constant 0 : index
    %41 = vector.load %arg1[%c0_37, %c21, %c0_38] : memref<1x110x128xbf16, #tpu.memory_space<vmem>>, vector<1x80x128xbf16>
    %42 = vector.shape_cast %41 : vector<1x80x128xbf16> to vector<80x128xbf16>
    %c7 = arith.constant 7 : index
    %c0_39 = arith.constant 0 : index
    %c0_40 = arith.constant 0 : index
    %43 = vector.load %arg2[%c7, %c0_39, %c0_40] : memref<9x128x128xbf16, #tpu.memory_space<vmem>>, vector<1x128x128xbf16>
    %44 = vector.shape_cast %43 : vector<1x128x128xbf16> to vector<128x128xbf16>
    %cst_41 = arith.constant dense<0.000000e+00> : vector<80x128xf32>
    %45 = tpu.matmul %42, %44, %cst_41 {dimension_numbers = #tpu.dot_dimension_numbers<[1], [0], [0], [1], [0, 0, 1, 1], [], []>} : vector<80x128xbf16>, vector<128x128xbf16>, vector<80x128xf32> -> vector<80x128xf32>
    %46 = arith.addf %40, %45 : vector<80x128xf32>
    %c0_42 = arith.constant 0 : index
    %c22 = arith.constant 22 : index
    %c0_43 = arith.constant 0 : index
    %47 = vector.load %arg1[%c0_42, %c22, %c0_43] : memref<1x110x128xbf16, #tpu.memory_space<vmem>>, vector<1x80x128xbf16>
    %48 = vector.shape_cast %47 : vector<1x80x128xbf16> to vector<80x128xbf16>
    %c8 = arith.constant 8 : index
    %c0_44 = arith.constant 0 : index
    %c0_45 = arith.constant 0 : index
    %49 = vector.load %arg2[%c8, %c0_44, %c0_45] : memref<9x128x128xbf16, #tpu.memory_space<vmem>>, vector<1x128x128xbf16>
    %50 = vector.shape_cast %49 : vector<1x128x128xbf16> to vector<128x128xbf16>
    %cst_46 = arith.constant dense<0.000000e+00> : vector<80x128xf32>
    %51 = tpu.matmul %48, %50, %cst_46 {dimension_numbers = #tpu.dot_dimension_numbers<[1], [0], [0], [1], [0, 0, 1, 1], [], []>} : vector<80x128xbf16>, vector<128x128xbf16>, vector<80x128xf32> -> vector<80x128xf32>
    %52 = arith.addf %46, %51 : vector<80x128xf32>
    %53 = arith.truncf %52 : vector<80x128xf32> to vector<80x128xbf16>
    %c0_47 = arith.constant 0 : index
    %c0_48 = arith.constant 0 : index
    %c0_49 = arith.constant 0 : index
    %54 = vector.load %arg3[%c0_47, %c0_48, %c0_49] : memref<1x80x128xbf16, #tpu.memory_space<vmem>>, vector<1x80x128xbf16>
    %55 = vector.shape_cast %54 : vector<1x80x128xbf16> to vector<80x128xbf16>
    %56 = vector.shape_cast %53 : vector<80x128xbf16> to vector<1x80x128xbf16>
    tpu.vector_store %arg3[%c0_47, %c0_48, %c0_49], %56 {strides = array<i32>} : memref<1x80x128xbf16, #tpu.memory_space<vmem>>, vector<1x80x128xbf16>,
    %c0_i32 = arith.constant 0 : i32
    %57 = arith.cmpi eq, %arg0, %c0_i32 : i32
    %58 = arith.extui %57 : i1 to i32
    %c0_i32_50 = arith.constant 0 : i32
    %59 = arith.cmpi ne, %58, %c0_i32_50 : i32
    scf.if %59 {
      %cst_66 = arith.constant 0.000000e+00 : f32
      %94 = vector.broadcast %cst_66 : f32 to vector<1x128xf32>
      %c0_67 = arith.constant 0 : index
      %c0_68 = arith.constant 0 : index
      %95 = vector.load %arg4[%c0_67, %c0_68] : memref<1x128xf32, #tpu.memory_space<vmem>>, vector<1x128xf32>
      tpu.vector_store %arg4[%c0_67, %c0_68], %94 {strides = array<i32>} : memref<1x128xf32, #tpu.memory_space<vmem>>, vector<1x128xf32>,
      %cst_69 = arith.constant 0.000000e+00 : f32
      %96 = vector.broadcast %cst_69 : f32 to vector<1x128xf32>
      %c0_70 = arith.constant 0 : index
      %c0_71 = arith.constant 0 : index
      %97 = vector.load %arg5[%c0_70, %c0_71] : memref<1x128xf32, #tpu.memory_space<vmem>>, vector<1x128xf32>
      tpu.vector_store %arg5[%c0_70, %c0_71], %96 {strides = array<i32>} : memref<1x128xf32, #tpu.memory_space<vmem>>, vector<1x128xf32>,
    } else {
    }
    %60 = tpu.iota {dimensions = array<i32: 0>} : vector<80x1xi32>
    %c10_i32 = arith.constant 10 : i32
    %c0_i32_51 = arith.constant 0 : i32
    %61 = arith.cmpi eq, %c10_i32, %c0_i32_51 : i32
    %c1_i32 = arith.constant 1 : i32
    %62 = arith.select %61, %c1_i32, %c10_i32 : i32
    %63 = vector.broadcast %62 : i32 to vector<80x1xi32>
    %64 = arith.remsi %60, %63 : vector<80x1xi32>
    %c0_i32_52 = arith.constant 0 : i32
    %65 = vector.broadcast %c0_i32_52 : i32 to vector<80x1xi32>
    %66 = arith.cmpi ne, %64, %65 : vector<80x1xi32>
    %c0_i32_53 = arith.constant 0 : i32
    %67 = vector.broadcast %c0_i32_53 : i32 to vector<80x1xi32>
    %68 = arith.cmpi slt, %64, %67 : vector<80x1xi32>
    %c0_i32_54 = arith.constant 0 : i32
    %69 = arith.cmpi slt, %62, %c0_i32_54 : i32
    %70 = vector.broadcast %69 : i1 to vector<80x1xi1>
    %71 = vector.broadcast %70 : vector<80x1xi1> to vector<80x1xi1>
    %72 = arith.xori %68, %71 : vector<80x1xi1>
    %73 = arith.andi %72, %66 : vector<80x1xi1>
    %74 = vector.broadcast %62 : i32 to vector<80x1xi32>
    %75 = arith.addi %64, %74 : vector<80x1xi32>
    %76 = arith.select %73, %75, %64 : vector<80x1xi1>, vector<80x1xi32>
    %c8_i32 = arith.constant 8 : i32
    %77 = vector.broadcast %c8_i32 : i32 to vector<80x1xi32>
    %78 = arith.cmpi slt, %76, %77 : vector<80x1xi32>
    %cst_55 = arith.constant 0.000000e+00 : f32
    %79 = vector.shape_cast %78 : vector<80x1xi1> to vector<80x1xi1>
    %80 = vector.broadcast %79 : vector<80x1xi1> to vector<80x128xi1>
    %81 = vector.broadcast %cst_55 : f32 to vector<80x128xf32>
    %82 = arith.select %80, %52, %81 : vector<80x128xi1>, vector<80x128xf32>
    %c0_56 = arith.constant 0 : index
    %c0_57 = arith.constant 0 : index
    %83 = vector.load %arg4[%c0_56, %c0_57] : memref<1x128xf32, #tpu.memory_space<vmem>>, vector<1x128xf32>
    %cst_58 = arith.constant dense<0.000000e+00> : vector<128xf32>
    %84 = vector.multi_reduction <add>, %82, %cst_58 [0] : vector<80x128xf32> to vector<128xf32>
    %85 = vector.shape_cast %84 : vector<128xf32> to vector<1x128xf32>
    %86 = arith.addf %83, %85 : vector<1x128xf32>
    %c0_59 = arith.constant 0 : index
    %c0_60 = arith.constant 0 : index
    %87 = vector.load %arg4[%c0_59, %c0_60] : memref<1x128xf32, #tpu.memory_space<vmem>>, vector<1x128xf32>
    tpu.vector_store %arg4[%c0_59, %c0_60], %86 {strides = array<i32>} : memref<1x128xf32, #tpu.memory_space<vmem>>, vector<1x128xf32>,
    %c0_61 = arith.constant 0 : index
    %c0_62 = arith.constant 0 : index
    %88 = vector.load %arg5[%c0_61, %c0_62] : memref<1x128xf32, #tpu.memory_space<vmem>>, vector<1x128xf32>
    %89 = arith.mulf %82, %82 : vector<80x128xf32>
    %cst_63 = arith.constant dense<0.000000e+00> : vector<128xf32>
    %90 = vector.multi_reduction <add>, %89, %cst_63 [0] : vector<80x128xf32> to vector<128xf32>
    %91 = vector.shape_cast %90 : vector<128xf32> to vector<1x128xf32>
    %92 = arith.addf %88, %91 : vector<1x128xf32>
    %c0_64 = arith.constant 0 : index
    %c0_65 = arith.constant 0 : index
    %93 = vector.load %arg5[%c0_64, %c0_65] : memref<1x128xf32, #tpu.memory_space<vmem>>, vector<1x128xf32>
    tpu.vector_store %arg5[%c0_64, %c0_65], %92 {strides = array<i32>} : memref<1x128xf32, #tpu.memory_space<vmem>>, vector<1x128xf32>,
    return
  }
  func.func @transform_0(%arg0: i32) -> (i32, i32, i32) {
    %c0_i32 = arith.constant 0 : i32
    %c0_i32_0 = arith.constant 0 : i32
    %c0_i32_1 = arith.constant 0 : i32
    return %arg0, %c0_i32, %c0_i32_0 : i32, i32, i32
  }
  func.func @transform_1(%arg0: i32) -> (i32, i32, i32) {
    %c0_i32 = arith.constant 0 : i32
    %c0_i32_0 = arith.constant 0 : i32
    %c0_i32_1 = arith.constant 0 : i32
    %c0_i32_2 = arith.constant 0 : i32
    return %c0_i32, %c0_i32_0, %c0_i32_1 : i32, i32, i32
  }
  func.func @transform_2(%arg0: i32) -> (i32, i32, i32) {
    %c0_i32 = arith.constant 0 : i32
    %c0_i32_0 = arith.constant 0 : i32
    %c0_i32_1 = arith.constant 0 : i32
    return %arg0, %c0_i32, %c0_i32_0 : i32, i32, i32
  }
  func.func @transform_3(%arg0: i32) -> (i32, i32) {
    %c0_i32 = arith.constant 0 : i32
    %c0_i32_0 = arith.constant 0 : i32
    %c0_i32_1 = arith.constant 0 : i32
    return %c0_i32, %c0_i32_0 : i32, i32
  }
  func.func @transform_4(%arg0: i32) -> (i32, i32) {
    %c0_i32 = arith.constant 0 : i32
    %c0_i32_0 = arith.constant 0 : i32
    %c0_i32_1 = arith.constant 0 : i32
    return %c0_i32, %c0_i32_0 : i32, i32
  }
}

module attributes {stable_mosaic.version = 11 : i64} {
  func.func @_bn_add_relu_kernel(%arg0: i32, %arg1: memref<1x80x128xbf16, #tpu.memory_space<vmem>>, %arg2: memref<1x128xf32, #tpu.memory_space<vmem>>, %arg3: memref<1x128xf32, #tpu.memory_space<vmem>>, %arg4: memref<1x128xf32, #tpu.memory_space<vmem>>, %arg5: memref<1x128xf32, #tpu.memory_space<vmem>>, %arg6: memref<1x80x128xbf16, #tpu.memory_space<vmem>>, %arg7: memref<1x80x128xbf16, #tpu.memory_space<vmem>>) attributes {dimension_semantics = [#tpu.dimension_semantics<parallel>], iteration_bounds = array<i64: 2>, scalar_prefetch = 0 : i64, scratch_operands = 0 : i64, tpu.core_type = #tpu.core_type<tc>, window_params = [{transform_indices = @transform_0, window_bounds = array<i64: 1, 80, 128>}, {pipeline_mode = #tpu.pipeline_mode<synchronous>, transform_indices = @transform_1, window_bounds = array<i64: 1, 128>}, {pipeline_mode = #tpu.pipeline_mode<synchronous>, transform_indices = @transform_2, window_bounds = array<i64: 1, 128>}, {pipeline_mode = #tpu.pipeline_mode<synchronous>, transform_indices = @transform_3, window_bounds = array<i64: 1, 128>}, {pipeline_mode = #tpu.pipeline_mode<synchronous>, transform_indices = @transform_4, window_bounds = array<i64: 1, 128>}, {transform_indices = @transform_5, window_bounds = array<i64: 1, 80, 128>}, {transform_indices = @transform_6, window_bounds = array<i64: 1, 80, 128>}]} {
    %c0 = arith.constant 0 : index
    %c0_0 = arith.constant 0 : index
    %0 = vector.load %arg2[%c0, %c0_0] : memref<1x128xf32, #tpu.memory_space<vmem>>, vector<1x128xf32>
    %cst = arith.constant 7.812500e-03 : f32
    %1 = vector.broadcast %cst : f32 to vector<1x128xf32>
    %2 = arith.mulf %0, %1 : vector<1x128xf32>
    %c0_1 = arith.constant 0 : index
    %c0_2 = arith.constant 0 : index
    %3 = vector.load %arg3[%c0_1, %c0_2] : memref<1x128xf32, #tpu.memory_space<vmem>>, vector<1x128xf32>
    %cst_3 = arith.constant 7.812500e-03 : f32
    %4 = vector.broadcast %cst_3 : f32 to vector<1x128xf32>
    %5 = arith.mulf %3, %4 : vector<1x128xf32>
    %6 = arith.mulf %2, %2 : vector<1x128xf32>
    %7 = arith.subf %5, %6 : vector<1x128xf32>
    %cst_4 = arith.constant 0.000000e+00 : f32
    %8 = vector.broadcast %cst_4 : f32 to vector<1x128xf32>
    %9 = arith.maximumf %7, %8 : vector<1x128xf32>
    %cst_5 = arith.constant 1.000000e-03 : f32
    %10 = vector.broadcast %cst_5 : f32 to vector<1x128xf32>
    %11 = arith.addf %9, %10 : vector<1x128xf32>
    %12 = math.rsqrt %11 : vector<1x128xf32>
    %c0_6 = arith.constant 0 : index
    %c0_7 = arith.constant 0 : index
    %c0_8 = arith.constant 0 : index
    %13 = vector.load %arg1[%c0_6, %c0_7, %c0_8] : memref<1x80x128xbf16, #tpu.memory_space<vmem>>, vector<1x80x128xbf16>
    %14 = vector.shape_cast %13 : vector<1x80x128xbf16> to vector<80x128xbf16>
    %15 = arith.extf %14 : vector<80x128xbf16> to vector<80x128xf32>
    %16 = vector.broadcast %2 : vector<1x128xf32> to vector<80x128xf32>
    %17 = arith.subf %15, %16 : vector<80x128xf32>
    %18 = vector.broadcast %12 : vector<1x128xf32> to vector<80x128xf32>
    %19 = arith.mulf %17, %18 : vector<80x128xf32>
    %c0_9 = arith.constant 0 : index
    %c0_10 = arith.constant 0 : index
    %20 = vector.load %arg4[%c0_9, %c0_10] : memref<1x128xf32, #tpu.memory_space<vmem>>, vector<1x128xf32>
    %21 = vector.broadcast %20 : vector<1x128xf32> to vector<80x128xf32>
    %22 = arith.mulf %19, %21 : vector<80x128xf32>
    %c0_11 = arith.constant 0 : index
    %c0_12 = arith.constant 0 : index
    %23 = vector.load %arg5[%c0_11, %c0_12] : memref<1x128xf32, #tpu.memory_space<vmem>>, vector<1x128xf32>
    %24 = vector.broadcast %23 : vector<1x128xf32> to vector<80x128xf32>
    %25 = arith.addf %22, %24 : vector<80x128xf32>
    %c0_13 = arith.constant 0 : index
    %c0_14 = arith.constant 0 : index
    %c0_15 = arith.constant 0 : index
    %26 = vector.load %arg6[%c0_13, %c0_14, %c0_15] : memref<1x80x128xbf16, #tpu.memory_space<vmem>>, vector<1x80x128xbf16>
    %27 = vector.shape_cast %26 : vector<1x80x128xbf16> to vector<80x128xbf16>
    %28 = arith.extf %27 : vector<80x128xbf16> to vector<80x128xf32>
    %29 = arith.addf %25, %28 : vector<80x128xf32>
    %cst_16 = arith.constant 0.000000e+00 : f32
    %30 = vector.broadcast %cst_16 : f32 to vector<80x128xf32>
    %31 = arith.maximumf %29, %30 : vector<80x128xf32>
    %32 = arith.truncf %31 : vector<80x128xf32> to vector<80x128xbf16>
    %c0_17 = arith.constant 0 : index
    %c0_18 = arith.constant 0 : index
    %c0_19 = arith.constant 0 : index
    %33 = vector.load %arg7[%c0_17, %c0_18, %c0_19] : memref<1x80x128xbf16, #tpu.memory_space<vmem>>, vector<1x80x128xbf16>
    %34 = vector.shape_cast %33 : vector<1x80x128xbf16> to vector<80x128xbf16>
    %35 = vector.shape_cast %32 : vector<80x128xbf16> to vector<1x80x128xbf16>
    tpu.vector_store %arg7[%c0_17, %c0_18, %c0_19], %35 {strides = array<i32>} : memref<1x80x128xbf16, #tpu.memory_space<vmem>>, vector<1x80x128xbf16>,
    return
  }
  func.func @transform_0(%arg0: i32) -> (i32, i32, i32) {
    %c0_i32 = arith.constant 0 : i32
    %c0_i32_0 = arith.constant 0 : i32
    %c0_i32_1 = arith.constant 0 : i32
    return %arg0, %c0_i32, %c0_i32_0 : i32, i32, i32
  }
  func.func @transform_1(%arg0: i32) -> (i32, i32) {
    %c0_i32 = arith.constant 0 : i32
    %c0_i32_0 = arith.constant 0 : i32
    %c0_i32_1 = arith.constant 0 : i32
    return %c0_i32, %c0_i32_0 : i32, i32
  }
  func.func @transform_2(%arg0: i32) -> (i32, i32) {
    %c0_i32 = arith.constant 0 : i32
    %c0_i32_0 = arith.constant 0 : i32
    %c0_i32_1 = arith.constant 0 : i32
    return %c0_i32, %c0_i32_0 : i32, i32
  }
  func.func @transform_3(%arg0: i32) -> (i32, i32) {
    %c0_i32 = arith.constant 0 : i32
    %c0_i32_0 = arith.constant 0 : i32
    %c0_i32_1 = arith.constant 0 : i32
    return %c0_i32, %c0_i32_0 : i32, i32
  }
  func.func @transform_4(%arg0: i32) -> (i32, i32) {
    %c0_i32 = arith.constant 0 : i32
    %c0_i32_0 = arith.constant 0 : i32
    %c0_i32_1 = arith.constant 0 : i32
    return %c0_i32, %c0_i32_0 : i32, i32
  }
  func.func @transform_5(%arg0: i32) -> (i32, i32, i32) {
    %c0_i32 = arith.constant 0 : i32
    %c0_i32_0 = arith.constant 0 : i32
    %c0_i32_1 = arith.constant 0 : i32
    return %arg0, %c0_i32, %c0_i32_0 : i32, i32, i32
  }
  func.func @transform_6(%arg0: i32) -> (i32, i32, i32) {
    %c0_i32 = arith.constant 0 : i32
    %c0_i32_0 = arith.constant 0 : i32
    %c0_i32_1 = arith.constant 0 : i32
    return %arg0, %c0_i32, %c0_i32_0 : i32, i32, i32
  }
}

</mosaic_0001>

<llo_original>
// kernel: residual_block.5
$region0: #{residual_block.5}
  #allocation0 [shape = 'u32[]', space=smem, size = 0x4, offset = 0x4, fixed_abs, tag = 'smem constant byte address 0x4 - core index']
  #allocation1 [shape = 'u32[144,128]{1,0:T(1,128)}', space=vmem, size = 0x12000, scoped, tag = 'internal scratch']
  %s0 = inlined_call_operand.vmem [shape: bf16[2,80,256], index: 0, kind: input, shape index: {}]
  %s1 = inlined_call_operand.vmem [shape: f32[1,256], index: 1, kind: input, shape index: {}]
  %s2 = inlined_call_operand.vmem [shape: f32[1,256], index: 2, kind: input, shape index: {}]
  %s3 = inlined_call_operand.vmem [shape: f32[1,256], index: 3, kind: input, shape index: {}]
  %s4 = inlined_call_operand.vmem [shape: f32[1,256], index: 4, kind: input, shape index: {}]
  %s5 = inlined_call_operand.vmem [shape: bf16[2,80,128], index: 5, kind: output, shape index: {0}]
  %s6 = inlined_call_operand.vmem [shape: bf16[2,80,128], index: 6, kind: output, shape index: {1}]
  %7 = xla_tuple %s5, %s6
  %s8 = sld [smem:[#allocation0]]
  $region61: #{residual_block.5} parent=0
    _
  %s10 = ssub.s32 1, %s8
  %s11 = scalar_select 0, %s10, %s8
  loop: start=0, step=1, limit=4
  $region2: #{residual_block.5} parent=0 // loop_pre_header
    _
  $region3: #{residual_block.5} parent=0 // loop_header
    %s13 = sphi 0, %s17
    %p14 = scmp.ge.s32.totalorder %s13, 4
    %s23 = sphi 0, %s25
    %s26 = sphi 0, %s23
    %s27 = sphi 0, %s26
    %s43 = sphi 0, %s27
    %s47 = sphi 0, %s47
    %s49 = sphi 0, %s47
    %s50 = sphi 0, %s49
    %s64 = sphi 0, %s50
    %s68 = sphi 0, %s68
    %s70 = sphi 0, %s68
    %s71 = sphi 0, %s70
    %s85 = sphi 0, %s71
    %s89 = sphi 0, %s89
    %s91 = sphi 0, %s89
    %s92 = sphi 0, %s91
    %s106 = sphi 0, %s92
    %s110 = sphi 0, %s110
    %s112 = sphi 0, %s110
    %s113 = sphi 0, %s112
    %s127 = sphi 0, %s113
    %s133 = sphi 0, %s135
    %s136 = sphi 0, %s133
    %s137 = sphi 0, %s136
    %s153 = sphi 0, %s137
    %s159 = sphi 0, %s161
    %s162 = sphi 0, %s159
    %s163 = sphi 0, %s162
    %s179 = sphi 0, %s163
  $region4: #{residual_block.5} parent=0 // loop_header_branch
    %16 = sbr.rel (%p14) target = $region8
  $region5: #{residual_block.5} parent=0 // loop_body
    %s18 = ssub.s32 %s13, 1
    %s19 = ssub.s32 %s13, 2
    %s20 = sadd.s32 %s13, 1
    %s21 = ssub.s32 %s13, %s20
    %p22 = scmp.eq.s32.totalorder %s21, 0
    %s24 = sadd.s32 %s23, 1
    %s25 = scalar_select %p22, %s23, %s24
    %p28 = pneg %p22
    %p29 = scmp.eq.s32.totalorder %s13, 1
    %p30 = por %p28, %p29
    %p31 = scmp.ne.s32.totalorder %s23, %s26
    %p32 = scmp.eq.s32.totalorder %s13, 0
    %p33 = por %p31, %p32
    %p34 = scmp.ne.s32.totalorder %s23, %s26
    %p35 = scmp.eq.s32.totalorder %s18, 1
    %p36 = por %p34, %p35
    %p37 = scmp.ne.s32.totalorder %s26, %s27
    %p38 = scmp.eq.s32.totalorder %s18, 0
    %p39 = por %p37, %p38
    %p40 = scmp.ne.s32.totalorder %s26, %s27
    %p41 = scmp.eq.s32.totalorder %s19, 1
    %p42 = por %p40, %p41
    %p44 = scmp.ne.s32.totalorder %s27, %s43
    %p45 = scmp.eq.s32.totalorder %s19, 0
    %p46 = por %p44, %p45
    %s48 = sadd.s32 %s47, 1
    %p51 = scmp.eq.s32.totalorder %s13, 1
    %p52 = scmp.ne.s32.totalorder %s47, %s49
    %p53 = scmp.eq.s32.totalorder %s13, 0
    %p54 = por %p52, %p53
    %p55 = scmp.ne.s32.totalorder %s47, %s49
    %p56 = scmp.eq.s32.totalorder %s18, 1
    %p57 = por %p55, %p56
    %p58 = scmp.ne.s32.totalorder %s49, %s50
    %p59 = scmp.eq.s32.totalorder %s18, 0
    %p60 = por %p58, %p59
    %p61 = scmp.ne.s32.totalorder %s49, %s50
    %p62 = scmp.eq.s32.totalorder %s19, 1
    %p63 = por %p61, %p62
    %p65 = scmp.ne.s32.totalorder %s50, %s64
    %p66 = scmp.eq.s32.totalorder %s19, 0
    %p67 = por %p65, %p66
    %s69 = sadd.s32 %s68, 1
    %p72 = scmp.eq.s32.totalorder %s13, 1
    %p73 = scmp.ne.s32.totalorder %s68, %s70
    %p74 = scmp.eq.s32.totalorder %s13, 0
    %p75 = por %p73, %p74
    %p76 = scmp.ne.s32.totalorder %s68, %s70
    %p77 = scmp.eq.s32.totalorder %s18, 1
    %p78 = por %p76, %p77
    %p79 = scmp.ne.s32.totalorder %s70, %s71
    %p80 = scmp.eq.s32.totalorder %s18, 0
    %p81 = por %p79, %p80
    %p82 = scmp.ne.s32.totalorder %s70, %s71
    %p83 = scmp.eq.s32.totalorder %s19, 1
    %p84 = por %p82, %p83
    %p86 = scmp.ne.s32.totalorder %s71, %s85
    %p87 = scmp.eq.s32.totalorder %s19, 0
    %p88 = por %p86, %p87
    %s90 = sadd.s32 %s89, 1
    %p93 = scmp.eq.s32.totalorder %s13, 1
    %p94 = scmp.ne.s32.totalorder %s89, %s91
    %p95 = scmp.eq.s32.totalorder %s13, 0
    %p96 = por %p94, %p95
    %p97 = scmp.ne.s32.totalorder %s89, %s91
    %p98 = scmp.eq.s32.totalorder %s18, 1
    %p99 = por %p97, %p98
    %p100 = scmp.ne.s32.totalorder %s91, %s92
    %p101 = scmp.eq.s32.totalorder %s18, 0
    %p102 = por %p100, %p101
    %p103 = scmp.ne.s32.totalorder %s91, %s92
    %p104 = scmp.eq.s32.totalorder %s19, 1
    %p105 = por %p103, %p104
    %p107 = scmp.ne.s32.totalorder %s92, %s106
    %p108 = scmp.eq.s32.totalorder %s19, 0
    %p109 = por %p107, %p108
    %s111 = sadd.s32 %s110, 1
    %p114 = scmp.eq.s32.totalorder %s13, 1
    %p115 = scmp.ne.s32.totalorder %s110, %s112
    %p116 = scmp.eq.s32.totalorder %s13, 0
    %p117 = por %p115, %p116
    %p118 = scmp.ne.s32.totalorder %s110, %s112
    %p119 = scmp.eq.s32.totalorder %s18, 1
    %p120 = por %p118, %p119
    %p121 = scmp.ne.s32.totalorder %s112, %s113
    %p122 = scmp.eq.s32.totalorder %s18, 0
    %p123 = por %p121, %p122
    %p124 = scmp.ne.s32.totalorder %s112, %s113
    %p125 = scmp.eq.s32.totalorder %s19, 1
    %p126 = por %p124, %p125
    %p128 = scmp.ne.s32.totalorder %s113, %s127
    %p129 = scmp.eq.s32.totalorder %s19, 0
    %p130 = por %p128, %p129
    %s131 = ssub.s32 %s13, %s20
    %p132 = scmp.eq.s32.totalorder %s131, 0
    %s134 = sadd.s32 %s133, 1
    %s135 = scalar_select %p132, %s133, %s134
    %p138 = pneg %p132
    %p139 = scmp.eq.s32.totalorder %s13, 1
    %p140 = por %p138, %p139
    %p141 = scmp.ne.s32.totalorder %s133, %s136
    %p142 = scmp.eq.s32.totalorder %s13, 0
    %p143 = por %p141, %p142
    %p144 = scmp.ne.s32.totalorder %s133, %s136
    %p145 = scmp.eq.s32.totalorder %s18, 1
    %p146 = por %p144, %p145
    %p147 = scmp.ne.s32.totalorder %s136, %s137
    %p148 = scmp.eq.s32.totalorder %s18, 0
    %p149 = por %p147, %p148
    %p150 = scmp.ne.s32.totalorder %s136, %s137
    %p151 = scmp.eq.s32.totalorder %s19, 1
    %p152 = por %p150, %p151
    %p154 = scmp.ne.s32.totalorder %s137, %s153
    %p155 = scmp.eq.s32.totalorder %s19, 0
    %p156 = por %p154, %p155
    %s157 = ssub.s32 %s13, %s20
    %p158 = scmp.eq.s32.totalorder %s157, 0
    %s160 = sadd.s32 %s159, 1
    %s161 = scalar_select %p158, %s159, %s160
    %p164 = pneg %p158
    %p165 = scmp.eq.s32.totalorder %s13, 1
    %p166 = por %p164, %p165
    %p167 = scmp.ne.s32.totalorder %s159, %s162
    %p168 = scmp.eq.s32.totalorder %s13, 0
    %p169 = por %p167, %p168
    %p170 = scmp.ne.s32.totalorder %s159, %s162
    %p171 = scmp.eq.s32.totalorder %s18, 1
    %p172 = por %p170, %p171
    %p173 = scmp.ne.s32.totalorder %s162, %s163
    %p174 = scmp.eq.s32.totalorder %s18, 0
    %p175 = por %p173, %p174
    %p176 = scmp.ne.s32.totalorder %s162, %s163
    %p177 = scmp.eq.s32.totalorder %s19, 1
    %p178 = por %p176, %p177
    %p180 = scmp.ne.s32.totalorder %s163, %s179
    %p181 = scmp.eq.s32.totalorder %s19, 0
    %p182 = por %p180, %p181
    %p183 = scmp.le.s32.totalorder 1, %s13
    %p184 = scmp.lt.s32.totalorder %s13, 3
    %p185 = pnand %p183, %p184
    %p186 = pneg %p185
    // Predicated region
    $region9: #{residual_block.5} parent=5 // pred_check
      _
    $region10: #{residual_block.5} parent=5 // pred_check_branch
      %188 = sbr.rel (%p185) target = $region12
    $region11: #{residual_block.5} parent=5 // pred_region
      %s189 = ssub.s32 %s13, 1
      // Predicated region
      $region13: #{residual_block.5} parent=11 // pred_check
        %p190 = pneg %p60
      $region14: #{residual_block.5} parent=11 // pred_check_branch
        %192 = sbr.rel (%p190) target = $region16
      $region15: #{residual_block.5} parent=11 // pred_region
        _
      $region16: #{residual_block.5} parent=11 // pred_fallthru
        _
      // Predicated region
      $region17: #{residual_block.5} parent=11 // pred_check
        %p193 = pneg %p81
      $region18: #{residual_block.5} parent=11 // pred_check_branch
        %195 = sbr.rel (%p193) target = $region20
      $region19: #{residual_block.5} parent=11 // pred_region
        _
      $region20: #{residual_block.5} parent=11 // pred_fallthru
        _
      // Predicated region
      $region21: #{residual_block.5} parent=11 // pred_check
        %p196 = pneg %p102
      $region22: #{residual_block.5} parent=11 // pred_check_branch
        %198 = sbr.rel (%p196) target = $region24
      $region23: #{residual_block.5} parent=11 // pred_region
        _
      $region24: #{residual_block.5} parent=11 // pred_fallthru
        _
      // Predicated region
      $region25: #{residual_block.5} parent=11 // pred_check
        %p199 = pneg %p123
      $region26: #{residual_block.5} parent=11 // pred_check_branch
        %201 = sbr.rel (%p199) target = $region28
      $region27: #{residual_block.5} parent=11 // pred_region
        _
      $region28: #{residual_block.5} parent=11 // pred_fallthru
        _
    $region12: #{residual_block.5} parent=5 // pred_fallthru
      _
    %p202 = scmp.lt.s32.totalorder %s13, 2
    // Predicated region
    $region29: #{residual_block.5} parent=5 // pred_check
      %p203 = pneg %p202
    $region30: #{residual_block.5} parent=5 // pred_check_branch
      %205 = sbr.rel (%p203) target = $region32
    $region31: #{residual_block.5} parent=5 // pred_region
      // Predicated region
      $region33: #{residual_block.5} parent=31 // pred_check
        %p206 = pneg %p33
      $region34: #{residual_block.5} parent=31 // pred_check_branch
        %208 = sbr.rel (%p206) target = $region36
      $region35: #{residual_block.5} parent=31 // pred_region
        %p209 = scmp.lt.s32.totalorder %s13, 1
        %s210 = scalar_select %p209, %s13, 1
        %s211 = smul.addr %s210, 20
        %s212 = smul.addr %s211, 4
        %s213 = scalar_lea.vmem %s0, %s212
      $region36: #{residual_block.5} parent=31 // pred_fallthru
        _
    $region32: #{residual_block.5} parent=5 // pred_fallthru
      _
    %p214 = scmp.le.s32.totalorder 1, %s13
    %p215 = scmp.lt.s32.totalorder %s13, 3
    %p216 = pnand %p214, %p215
    %p217 = pneg %p216
    // Predicated region
    $region37: #{residual_block.5} parent=5 // pred_check
      _
    $region38: #{residual_block.5} parent=5 // pred_check_branch
      %219 = sbr.rel (%p216) target = $region40
    $region39: #{residual_block.5} parent=5 // pred_region
      %s220 = ssub.s32 %s13, 1
      %p221 = scmp.lt.s32.totalorder %s18, 1
      %s222 = scalar_select %p221, %s18, 1
      %s223 = smul.addr %s222, 20
      %s224 = smul.addr %s223, 4
      %s225 = scalar_lea.vmem %s0, %s224
      %p226 = pneg %p39
      %p227 = pneg %p36
      %p228 = pneg %p60
      %p229 = pneg %p57
      %p230 = pneg %p81
      %p231 = pneg %p78
      %p232 = pneg %p102
      %p233 = pneg %p99
      %p234 = pneg %p123
      %p235 = pneg %p120
      %p236 = pneg %p149
      %p237 = pneg %p146
      %p238 = scmp.lt.s32.totalorder %s18, 1
      %s239 = scalar_select %p238, %s18, 1
      %s240 = smul.addr %s239, 10
      %s241 = smul.addr %s240, 4
      %s242 = scalar_lea.vmem %s5, %s241
      %p243 = pneg %p175
      %p244 = pneg %p172
      %p245 = scmp.lt.s32.totalorder %s18, 1
      %s246 = scalar_select %p245, %s18, 1
      %s247 = smul.addr %s246, 10
      %s248 = smul.addr %s247, 4
      %s249 = scalar_lea.vmem %s6, %s248
      %p250 = scmp.lt.s32.totalorder %s18, 1
      %s251 = scalar_select %p250, %s18, 1
      %s252 = smul.addr %s251, 20
      %s253 = smul.addr %s252, 4
      %s254 = scalar_lea.vmem %s0, %s253
      %p255 = scmp.lt.s32.totalorder %s18, 1
      %s256 = scalar_select %p255, %s18, 1
      %s257 = smul.addr %s256, 10
      %s258 = smul.addr %s257, 4
      %s259 = scalar_lea.vmem %s5, %s258
      %p260 = scmp.lt.s32.totalorder %s18, 1
      %s261 = scalar_select %p260, %s18, 1
      %s262 = smul.addr %s261, 10
      %s263 = smul.addr %s262, 4
      %s264 = scalar_lea.vmem %s6, %s263
      %v265 = vld [vmem:[%s1] sm:$0x3]
      %v266 = vmul.f32 %v265, 0.0078125
      %v267 = vld [vmem:[%s2] sm:$0x3]
      %v268 = vmul.f32 %v267, 0.0078125
      %v269 = vmul.f32 %v266, %v266
      %v270 = vsub.f32 %v268, %v269
      %v271 = vmax.f32 %v270, 0.0
      %v272 = vadd.f32 %v271, 0.001
      %v273 = vrsqrt.pop %v272
      %v274 = vld [vmem:[%s254] sm:$0xff]
      %v275 = vld [vmem:[%s254 + $0x8] sm:$0xff]
      %v276 = vld [vmem:[%s254 + $0x10] sm:$0xff]
      %v277 = vld [vmem:[%s254 + $0x18] sm:$0xff]
      %v278 = vld [vmem:[%s254 + $0x20] sm:$0xff]
      %v279 = vld [vmem:[%s254 + $0x28] sm:$0xff]
      %v280 = vld [vmem:[%s254 + $0x30] sm:$0xff]
      %v281 = vld [vmem:[%s254 + $0x38] sm:$0xff]
      %v282 = vld [vmem:[%s254 + $0x40] sm:$0xff]
      %v283 = vld [vmem:[%s254 + $0x48] sm:$0xff]
      %v284 = vunpack.c.l.bf16 %v274
      %v285 = vunpack.c.h.bf16 %v274
      %v286 = vunpack.c.l.bf16 %v275
      %v287 = vunpack.c.h.bf16 %v275
      %v288 = vunpack.c.l.bf16 %v276
      %v289 = vunpack.c.h.bf16 %v276
      %v290 = vunpack.c.l.bf16 %v277
      %v291 = vunpack.c.h.bf16 %v277
      %v292 = vunpack.c.l.bf16 %v278
      %v293 = vunpack.c.h.bf16 %v278
      %v294 = vunpack.c.l.bf16 %v279
      %v295 = vunpack.c.h.bf16 %v279
      %v296 = vunpack.c.l.bf16 %v280
      %v297 = vunpack.c.h.bf16 %v280
      %v298 = vunpack.c.l.bf16 %v281
      %v299 = vunpack.c.h.bf16 %v281
      %v300 = vunpack.c.l.bf16 %v282
      %v301 = vunpack.c.h.bf16 %v282
      %v302 = vunpack.c.l.bf16 %v283
      %v303 = vunpack.c.h.bf16 %v283
      %v305 = vlaneseq
      %v306 = vshrl.u32 %v305, 7
      %v307 = vsub.s32 0, %v306
      %v308 = vrot.slane %v266, %v307
      %v309 = vlaneseq
      %v310 = vshrl.u32 %v309, 7
      %v311 = vsub.s32 1, %v310
      %v312 = vrot.slane %v266, %v311
      %v315 = vsub.f32 %v284, %v308
      %v316 = vsub.f32 %v285, %v312
      %v317 = vsub.f32 %v286, %v308
      %v318 = vsub.f32 %v287, %v312
      %v319 = vsub.f32 %v288, %v308
      %v320 = vsub.f32 %v289, %v312
      %v321 = vsub.f32 %v290, %v308
      %v322 = vsub.f32 %v291, %v312
      %v323 = vsub.f32 %v292, %v308
      %v324 = vsub.f32 %v293, %v312
      %v325 = vsub.f32 %v294, %v308
      %v326 = vsub.f32 %v295, %v312
      %v327 = vsub.f32 %v296, %v308
      %v328 = vsub.f32 %v297, %v312
      %v329 = vsub.f32 %v298, %v308
      %v330 = vsub.f32 %v299, %v312
      %v331 = vsub.f32 %v300, %v308
      %v332 = vsub.f32 %v301, %v312
      %v333 = vsub.f32 %v302, %v308
      %v334 = vsub.f32 %v303, %v312
      %v336 = vlaneseq
      %v337 = vshrl.u32 %v336, 7
      %v338 = vsub.s32 0, %v337
      %v339 = vrot.slane %v273, %v338
      %v340 = vlaneseq
      %v341 = vshrl.u32 %v340, 7
      %v342 = vsub.s32 1, %v341
      %v343 = vrot.slane %v273, %v342
      %v346 = vmul.f32 %v315, %v339
      %v347 = vmul.f32 %v316, %v343
      %v348 = vmul.f32 %v317, %v339
      %v349 = vmul.f32 %v318, %v343
      %v350 = vmul.f32 %v319, %v339
      %v351 = vmul.f32 %v320, %v343
      %v352 = vmul.f32 %v321, %v339
      %v353 = vmul.f32 %v322, %v343
      %v354 = vmul.f32 %v323, %v339
      %v355 = vmul.f32 %v324, %v343
      %v356 = vmul.f32 %v325, %v339
      %v357 = vmul.f32 %v326, %v343
      %v358 = vmul.f32 %v327, %v339
      %v359 = vmul.f32 %v328, %v343
      %v360 = vmul.f32 %v329, %v339
      %v361 = vmul.f32 %v330, %v343
      %v362 = vmul.f32 %v331, %v339
      %v363 = vmul.f32 %v332, %v343
      %v364 = vmul.f32 %v333, %v339
      %v365 = vmul.f32 %v334, %v343
      %v366 = vld [vmem:[%s3] sm:$0x3]
      %v368 = vlaneseq
      %v369 = vshrl.u32 %v368, 7
      %v370 = vsub.s32 0, %v369
      %v371 = vrot.slane %v366, %v370
      %v372 = vlaneseq
      %v373 = vshrl.u32 %v372, 7
      %v374 = vsub.s32 1, %v373
      %v375 = vrot.slane %v366, %v374
      %v378 = vmul.f32 %v346, %v371
      %v379 = vmul.f32 %v347, %v375
      %v380 = vmul.f32 %v348, %v371
      %v381 = vmul.f32 %v349, %v375
      %v382 = vmul.f32 %v350, %v371
      %v383 = vmul.f32 %v351, %v375
      %v384 = vmul.f32 %v352, %v371
      %v385 = vmul.f32 %v353, %v375
      %v386 = vmul.f32 %v354, %v371
      %v387 = vmul.f32 %v355, %v375
      %v388 = vmul.f32 %v356, %v371
      %v389 = vmul.f32 %v357, %v375
      %v390 = vmul.f32 %v358, %v371
      %v391 = vmul.f32 %v359, %v375
      %v392 = vmul.f32 %v360, %v371
      %v393 = vmul.f32 %v361, %v375
      %v394 = vmul.f32 %v362, %v371
      %v395 = vmul.f32 %v363, %v375
      %v396 = vmul.f32 %v364, %v371
      %v397 = vmul.f32 %v365, %v375
      %v398 = vld [vmem:[%s4] sm:$0x3]
      %v400 = vlaneseq
      %v401 = vshrl.u32 %v400, 7
      %v402 = vsub.s32 0, %v401
      %v403 = vrot.slane %v398, %v402
      %v404 = vlaneseq
      %v405 = vshrl.u32 %v404, 7
      %v406 = vsub.s32 1, %v405
      %v407 = vrot.slane %v398, %v406
      %v410 = vadd.f32 %v378, %v403
      %v411 = vadd.f32 %v379, %v407
      %v412 = vadd.f32 %v380, %v403
      %v413 = vadd.f32 %v381, %v407
      %v414 = vadd.f32 %v382, %v403
      %v415 = vadd.f32 %v383, %v407
      %v416 = vadd.f32 %v384, %v403
      %v417 = vadd.f32 %v385, %v407
      %v418 = vadd.f32 %v386, %v403
      %v419 = vadd.f32 %v387, %v407
      %v420 = vadd.f32 %v388, %v403
      %v421 = vadd.f32 %v389, %v407
      %v422 = vadd.f32 %v390, %v403
      %v423 = vadd.f32 %v391, %v407
      %v424 = vadd.f32 %v392, %v403
      %v425 = vadd.f32 %v393, %v407
      %v426 = vadd.f32 %v394, %v403
      %v427 = vadd.f32 %v395, %v407
      %v428 = vadd.f32 %v396, %v403
      %v429 = vadd.f32 %v397, %v407
      %v430 = vmax.f32 %v410, 0.0
      %v431 = vmax.f32 %v412, 0.0
      %v432 = vmax.f32 %v414, 0.0
      %v433 = vmax.f32 %v416, 0.0
      %v434 = vmax.f32 %v418, 0.0
      %v435 = vmax.f32 %v420, 0.0
      %v436 = vmax.f32 %v422, 0.0
      %v437 = vmax.f32 %v424, 0.0
      %v438 = vmax.f32 %v426, 0.0
      %v439 = vmax.f32 %v428, 0.0
      %v440 = vpack.c.bf16 %v431, %v430
      %v441 = vpack.c.bf16 %v433, %v432
      %v442 = vpack.c.bf16 %v435, %v434
      %v443 = vpack.c.bf16 %v437, %v436
      %v444 = vpack.c.bf16 %v439, %v438
      %v450 = vunpack.c.l.b16 %v440
      %v451 = vunpack.c.h.b16 %v440
      %v452 = vunpack.c.l.b16 %v441
      %v453 = vunpack.c.h.b16 %v441
      %v454 = vunpack.c.l.b16 %v442
      %v455 = vunpack.c.h.b16 %v442
      %v456 = vunpack.c.l.b16 %v443
      %v457 = vunpack.c.h.b16 %v443
      %v458 = vunpack.c.l.b16 %v444
      %v459 = vunpack.c.h.b16 %v444
      %v460 = vpack.c.b16 %v450, %v450
      %v461 = vpack.c.b16 %v451, %v451
      %v462 = vpack.c.b16 %v452, %v452
      %v463 = vpack.c.b16 %v453, %v453
      %v464 = vpack.c.b16 %v454, %v454
      %v465 = vpack.c.b16 %v455, %v455
      %v466 = vpack.c.b16 %v456, %v456
      %v467 = vpack.c.b16 %v457, %v457
      %v468 = vpack.c.b16 %v458, %v458
      %v469 = vpack.c.b16 %v459, %v459
      %480 = vst [vmem:[%s259] sm:$0xf] %v460
      %481 = vst [vmem:[%s259 + $0x4] sm:$0xf] %v461
      %482 = vst [vmem:[%s259 + $0x8] sm:$0xf] %v462
      %483 = vst [vmem:[%s259 + $0xc] sm:$0xf] %v463
      %484 = vst [vmem:[%s259 + $0x10] sm:$0xf] %v464
      %485 = vst [vmem:[%s259 + $0x14] sm:$0xf] %v465
      %486 = vst [vmem:[%s259 + $0x18] sm:$0xf] %v466
      %487 = vst [vmem:[%s259 + $0x1c] sm:$0xf] %v467
      %488 = vst [vmem:[%s259 + $0x20] sm:$0xf] %v468
      %489 = vst [vmem:[%s259 + $0x24] sm:$0xf] %v469
      %v490 = vpack.c.bf16 %v413, %v411
      %v491 = vpack.c.bf16 %v417, %v415
      %v492 = vpack.c.bf16 %v421, %v419
      %v493 = vpack.c.bf16 %v425, %v423
      %v494 = vpack.c.bf16 %v429, %v427
      %v500 = vunpack.c.l.b16 %v490
      %v501 = vunpack.c.h.b16 %v490
      %v502 = vunpack.c.l.b16 %v491
      %v503 = vunpack.c.h.b16 %v491
      %v504 = vunpack.c.l.b16 %v492
      %v505 = vunpack.c.h.b16 %v492
      %v506 = vunpack.c.l.b16 %v493
      %v507 = vunpack.c.h.b16 %v493
      %v508 = vunpack.c.l.b16 %v494
      %v509 = vunpack.c.h.b16 %v494
      %v510 = vpack.c.b16 %v500, %v500
      %v511 = vpack.c.b16 %v501, %v501
      %v512 = vpack.c.b16 %v502, %v502
      %v513 = vpack.c.b16 %v503, %v503
      %v514 = vpack.c.b16 %v504, %v504
      %v515 = vpack.c.b16 %v505, %v505
      %v516 = vpack.c.b16 %v506, %v506
      %v517 = vpack.c.b16 %v507, %v507
      %v518 = vpack.c.b16 %v508, %v508
      %v519 = vpack.c.b16 %v509, %v509
      %530 = vst [vmem:[%s264] sm:$0xf] %v510
      %531 = vst [vmem:[%s264 + $0x4] sm:$0xf] %v511
      %532 = vst [vmem:[%s264 + $0x8] sm:$0xf] %v512
      %533 = vst [vmem:[%s264 + $0xc] sm:$0xf] %v513
      %534 = vst [vmem:[%s264 + $0x10] sm:$0xf] %v514
      %535 = vst [vmem:[%s264 + $0x14] sm:$0xf] %v515
      %536 = vst [vmem:[%s264 + $0x18] sm:$0xf] %v516
      %537 = vst [vmem:[%s264 + $0x1c] sm:$0xf] %v517
      %538 = vst [vmem:[%s264 + $0x20] sm:$0xf] %v518
      %539 = vst [vmem:[%s264 + $0x24] sm:$0xf] %v519
      %p540 = scmp.lt.s32.totalorder %s18, 1
      %s541 = scalar_select %p540, %s18, 1
      %s542 = smul.addr %s541, 10
      %s543 = smul.addr %s542, 4
      %s544 = scalar_lea.vmem %s5, %s543
      %p545 = scmp.lt.s32.totalorder %s18, 1
      %s546 = scalar_select %p545, %s18, 1
      %s547 = smul.addr %s546, 10
      %s548 = smul.addr %s547, 4
      %s549 = scalar_lea.vmem %s6, %s548
      // Predicated region
      $region41: #{residual_block.5} parent=39 // pred_check
        %p550 = pneg %p146
      $region42: #{residual_block.5} parent=39 // pred_check_branch
        %552 = sbr.rel (%p550) target = $region44
      $region43: #{residual_block.5} parent=39 // pred_region
        _
      $region44: #{residual_block.5} parent=39 // pred_fallthru
        _
      // Predicated region
      $region45: #{residual_block.5} parent=39 // pred_check
        %p553 = pneg %p172
      $region46: #{residual_block.5} parent=39 // pred_check_branch
        %555 = sbr.rel (%p553) target = $region48
      $region47: #{residual_block.5} parent=39 // pred_region
        _
      $region48: #{residual_block.5} parent=39 // pred_fallthru
        _
    $region40: #{residual_block.5} parent=5 // pred_fallthru
      _
    %p556 = scmp.le.s32.totalorder 2, %s13
    // Predicated region
    $region49: #{residual_block.5} parent=5 // pred_check
      %p557 = pneg %p556
    $region50: #{residual_block.5} parent=5 // pred_check_branch
      %559 = sbr.rel (%p557) target = $region52
    $region51: #{residual_block.5} parent=5 // pred_region
      %s560 = ssub.s32 %s13, 2
      // Predicated region
      $region53: #{residual_block.5} parent=51 // pred_check
        %p561 = pneg %p152
      $region54: #{residual_block.5} parent=51 // pred_check_branch
        %563 = sbr.rel (%p561) target = $region56
      $region55: #{residual_block.5} parent=51 // pred_region
        %p564 = scmp.lt.s32.totalorder %s19, 1
        %s565 = scalar_select %p564, %s19, 1
        %s566 = smul.addr %s565, 10
        %s567 = smul.addr %s566, 4
        %s568 = scalar_lea.vmem %s5, %s567
      $region56: #{residual_block.5} parent=51 // pred_fallthru
        _
      // Predicated region
      $region57: #{residual_block.5} parent=51 // pred_check
        %p569 = pneg %p178
      $region58: #{residual_block.5} parent=51 // pred_check_branch
        %571 = sbr.rel (%p569) target = $region60
      $region59: #{residual_block.5} parent=51 // pred_region
        %p572 = scmp.lt.s32.totalorder %s19, 1
        %s573 = scalar_select %p572, %s19, 1
        %s574 = smul.addr %s573, 10
        %s575 = smul.addr %s574, 4
        %s576 = scalar_lea.vmem %s6, %s575
      $region60: #{residual_block.5} parent=51 // pred_fallthru
        _
    $region52: #{residual_block.5} parent=5 // pred_fallthru
      _
  $region6: #{residual_block.5} parent=0 // loop_footer
    %s17 = sadd.s32 1, %s13
  $region7: #{residual_block.5} parent=0 // loop_footer_branch
    %12 = sbr.rel target = $region3
  $region8: #{residual_block.5} parent=0 // loop_exit
    _

// kernel: residual_block.4
$region0: #{residual_block.4}
  #allocation0 [shape = 'u32[]', space=smem, size = 0x4, offset = 0x4, fixed_abs, tag = 'smem constant byte address 0x4 - core index']
  #allocation1 [shape = 'u32[144,128]{1,0:T(1,128)}', space=vmem, size = 0x12000, scoped, tag = 'internal scratch']
  %s0 = inlined_call_operand.vmem [shape: bf16[2,440,128], index: 0, kind: input, shape index: {}]
  %s1 = inlined_call_operand.vmem [shape: bf16[9,128,256], index: 1, kind: input, shape index: {}]
  %s2 = inlined_call_operand.vmem [shape: bf16[2,80,256], index: 2, kind: output, shape index: {0}]
  %s3 = inlined_call_operand.vmem [shape: f32[1,256], index: 3, kind: output, shape index: {1}]
  %s4 = inlined_call_operand.vmem [shape: f32[1,256], index: 4, kind: output, shape index: {2}]
  %5 = xla_tuple %s2, %s3, %s4
  %s6 = sld [smem:[#allocation0]]
  $region61: #{residual_block.4} parent=0
    _
  %s8 = ssub.s32 1, %s6
  %s9 = scalar_select 0, %s8, %s6
  loop: start=0, step=1, limit=4
  $region2: #{residual_block.4} parent=0 // loop_pre_header
    _
  $region3: #{residual_block.4} parent=0 // loop_header
    %s11 = sphi 0, %s15
    %p12 = scmp.ge.s32.totalorder %s11, 4
    %s21 = sphi 0, %s23
    %s24 = sphi 0, %s21
    %s25 = sphi 0, %s24
    %s41 = sphi 0, %s25
    %s45 = sphi 0, %s45
    %s47 = sphi 0, %s45
    %s48 = sphi 0, %s47
    %s62 = sphi 0, %s48
    %s68 = sphi 0, %s70
    %s71 = sphi 0, %s68
    %s72 = sphi 0, %s71
    %s88 = sphi 0, %s72
    %s92 = sphi 0, %s92
    %s94 = sphi 0, %s92
    %s95 = sphi 0, %s94
    %s109 = sphi 0, %s95
    %s113 = sphi 0, %s113
    %s115 = sphi 0, %s113
    %s116 = sphi 0, %s115
    %s130 = sphi 0, %s116
  $region4: #{residual_block.4} parent=0 // loop_header_branch
    %14 = sbr.rel (%p12) target = $region8
  $region5: #{residual_block.4} parent=0 // loop_body
    %s16 = ssub.s32 %s11, 1
    %s17 = ssub.s32 %s11, 2
    %s18 = sadd.s32 %s11, 1
    %s19 = ssub.s32 %s11, %s18
    %p20 = scmp.eq.s32.totalorder %s19, 0
    %s22 = sadd.s32 %s21, 1
    %s23 = scalar_select %p20, %s21, %s22
    %p26 = pneg %p20
    %p27 = scmp.eq.s32.totalorder %s11, 1
    %p28 = por %p26, %p27
    %p29 = scmp.ne.s32.totalorder %s21, %s24
    %p30 = scmp.eq.s32.totalorder %s11, 0
    %p31 = por %p29, %p30
    %p32 = scmp.ne.s32.totalorder %s21, %s24
    %p33 = scmp.eq.s32.totalorder %s16, 1
    %p34 = por %p32, %p33
    %p35 = scmp.ne.s32.totalorder %s24, %s25
    %p36 = scmp.eq.s32.totalorder %s16, 0
    %p37 = por %p35, %p36
    %p38 = scmp.ne.s32.totalorder %s24, %s25
    %p39 = scmp.eq.s32.totalorder %s17, 1
    %p40 = por %p38, %p39
    %p42 = scmp.ne.s32.totalorder %s25, %s41
    %p43 = scmp.eq.s32.totalorder %s17, 0
    %p44 = por %p42, %p43
    %s46 = sadd.s32 %s45, 1
    %p49 = scmp.eq.s32.totalorder %s11, 1
    %p50 = scmp.ne.s32.totalorder %s45, %s47
    %p51 = scmp.eq.s32.totalorder %s11, 0
    %p52 = por %p50, %p51
    %p53 = scmp.ne.s32.totalorder %s45, %s47
    %p54 = scmp.eq.s32.totalorder %s16, 1
    %p55 = por %p53, %p54
    %p56 = scmp.ne.s32.totalorder %s47, %s48
    %p57 = scmp.eq.s32.totalorder %s16, 0
    %p58 = por %p56, %p57
    %p59 = scmp.ne.s32.totalorder %s47, %s48
    %p60 = scmp.eq.s32.totalorder %s17, 1
    %p61 = por %p59, %p60
    %p63 = scmp.ne.s32.totalorder %s48, %s62
    %p64 = scmp.eq.s32.totalorder %s17, 0
    %p65 = por %p63, %p64
    %s66 = ssub.s32 %s11, %s18
    %p67 = scmp.eq.s32.totalorder %s66, 0
    %s69 = sadd.s32 %s68, 1
    %s70 = scalar_select %p67, %s68, %s69
    %p73 = pneg %p67
    %p74 = scmp.eq.s32.totalorder %s11, 1
    %p75 = por %p73, %p74
    %p76 = scmp.ne.s32.totalorder %s68, %s71
    %p77 = scmp.eq.s32.totalorder %s11, 0
    %p78 = por %p76, %p77
    %p79 = scmp.ne.s32.totalorder %s68, %s71
    %p80 = scmp.eq.s32.totalorder %s16, 1
    %p81 = por %p79, %p80
    %p82 = scmp.ne.s32.totalorder %s71, %s72
    %p83 = scmp.eq.s32.totalorder %s16, 0
    %p84 = por %p82, %p83
    %p85 = scmp.ne.s32.totalorder %s71, %s72
    %p86 = scmp.eq.s32.totalorder %s17, 1
    %p87 = por %p85, %p86
    %p89 = scmp.ne.s32.totalorder %s72, %s88
    %p90 = scmp.eq.s32.totalorder %s17, 0
    %p91 = por %p89, %p90
    %s93 = sadd.s32 %s92, 1
    %p96 = scmp.eq.s32.totalorder %s11, 1
    %p97 = scmp.ne.s32.totalorder %s92, %s94
    %p98 = scmp.eq.s32.totalorder %s11, 0
    %p99 = por %p97, %p98
    %p100 = scmp.ne.s32.totalorder %s92, %s94
    %p101 = scmp.eq.s32.totalorder %s16, 1
    %p102 = por %p100, %p101
    %p103 = scmp.ne.s32.totalorder %s94, %s95
    %p104 = scmp.eq.s32.totalorder %s16, 0
    %p105 = por %p103, %p104
    %p106 = scmp.ne.s32.totalorder %s94, %s95
    %p107 = scmp.eq.s32.totalorder %s17, 1
    %p108 = por %p106, %p107
    %p110 = scmp.ne.s32.totalorder %s95, %s109
    %p111 = scmp.eq.s32.totalorder %s17, 0
    %p112 = por %p110, %p111
    %s114 = sadd.s32 %s113, 1
    %p117 = scmp.eq.s32.totalorder %s11, 1
    %p118 = scmp.ne.s32.totalorder %s113, %s115
    %p119 = scmp.eq.s32.totalorder %s11, 0
    %p120 = por %p118, %p119
    %p121 = scmp.ne.s32.totalorder %s113, %s115
    %p122 = scmp.eq.s32.totalorder %s16, 1
    %p123 = por %p121, %p122
    %p124 = scmp.ne.s32.totalorder %s115, %s116
    %p125 = scmp.eq.s32.totalorder %s16, 0
    %p126 = por %p124, %p125
    %p127 = scmp.ne.s32.totalorder %s115, %s116
    %p128 = scmp.eq.s32.totalorder %s17, 1
    %p129 = por %p127, %p128
    %p131 = scmp.ne.s32.totalorder %s116, %s130
    %p132 = scmp.eq.s32.totalorder %s17, 0
    %p133 = por %p131, %p132
    %p134 = scmp.le.s32.totalorder 1, %s11
    %p135 = scmp.lt.s32.totalorder %s11, 3
    %p136 = pnand %p134, %p135
    %p137 = pneg %p136
    // Predicated region
    $region9: #{residual_block.4} parent=5 // pred_check
      _
    $region10: #{residual_block.4} parent=5 // pred_check_branch
      %139 = sbr.rel (%p136) target = $region12
    $region11: #{residual_block.4} parent=5 // pred_region
      %s140 = ssub.s32 %s11, 1
      // Predicated region
      $region13: #{residual_block.4} parent=11 // pred_check
        %p141 = pneg %p58
      $region14: #{residual_block.4} parent=11 // pred_check_branch
        %143 = sbr.rel (%p141) target = $region16
      $region15: #{residual_block.4} parent=11 // pred_region
        _
      $region16: #{residual_block.4} parent=11 // pred_fallthru
        _
    $region12: #{residual_block.4} parent=5 // pred_fallthru
      _
    %p144 = scmp.lt.s32.totalorder %s11, 2
    // Predicated region
    $region17: #{residual_block.4} parent=5 // pred_check
      %p145 = pneg %p144
    $region18: #{residual_block.4} parent=5 // pred_check_branch
      %147 = sbr.rel (%p145) target = $region20
    $region19: #{residual_block.4} parent=5 // pred_region
      // Predicated region
      $region21: #{residual_block.4} parent=19 // pred_check
        %p148 = pneg %p31
      $region22: #{residual_block.4} parent=19 // pred_check_branch
        %150 = sbr.rel (%p148) target = $region24
      $region23: #{residual_block.4} parent=19 // pred_region
        %p151 = scmp.lt.s32.totalorder %s11, 1
        %s152 = scalar_select %p151, %s11, 1
        %s153 = smul.addr %s152, 55
        %s154 = smul.addr %s153, 4
        %s155 = scalar_lea.vmem %s0, %s154
      $region24: #{residual_block.4} parent=19 // pred_fallthru
        _
    $region20: #{residual_block.4} parent=5 // pred_fallthru
      _
    %p156 = scmp.le.s32.totalorder 1, %s11
    %p157 = scmp.lt.s32.totalorder %s11, 3
    %p158 = pnand %p156, %p157
    %p159 = pneg %p158
    // Predicated region
    $region25: #{residual_block.4} parent=5 // pred_check
      _
    $region26: #{residual_block.4} parent=5 // pred_check_branch
      %161 = sbr.rel (%p158) target = $region28
    $region27: #{residual_block.4} parent=5 // pred_region
      %s162 = ssub.s32 %s11, 1
      %p163 = scmp.lt.s32.totalorder %s16, 1
      %s164 = scalar_select %p163, %s16, 1
      %s165 = smul.addr %s164, 55
      %s166 = smul.addr %s165, 4
      %s167 = scalar_lea.vmem %s0, %s166
      %p168 = pneg %p37
      %p169 = pneg %p34
      %p170 = pneg %p58
      %p171 = pneg %p55
      %p172 = pneg %p84
      %p173 = pneg %p81
      %p174 = scmp.lt.s32.totalorder %s16, 1
      %s175 = scalar_select %p174, %s16, 1
      %s176 = smul.addr %s175, 20
      %s177 = smul.addr %s176, 4
      %s178 = scalar_lea.vmem %s2, %s177
      %p179 = pneg %p105
      %p180 = pneg %p102
      %p181 = pneg %p126
      %p182 = pneg %p123
      %p183 = scmp.lt.s32.totalorder %s16, 1
      %s184 = scalar_select %p183, %s16, 1
      %s185 = smul.addr %s184, 55
      %s186 = smul.addr %s185, 4
      %s187 = scalar_lea.vmem %s0, %s186
      %p188 = scmp.lt.s32.totalorder %s16, 1
      %s189 = scalar_select %p188, %s16, 1
      %s190 = smul.addr %s189, 20
      %s191 = smul.addr %s190, 4
      %s192 = scalar_lea.vmem %s2, %s191
      %v194 = vld [vmem:[%s187] sm:$0xf]
      %v195 = vld [vmem:[%s187 + $0x4] sm:$0xf]
      %v196 = vld [vmem:[%s187 + $0x8] sm:$0xf]
      %v197 = vld [vmem:[%s187 + $0xc] sm:$0xf]
      %v198 = vld [vmem:[%s187 + $0x10] sm:$0xf]
      %v199 = vld [vmem:[%s187 + $0x14] sm:$0xf]
      %v200 = vld [vmem:[%s187 + $0x18] sm:$0xf]
      %v201 = vld [vmem:[%s187 + $0x1c] sm:$0xf]
      %v202 = vld [vmem:[%s187 + $0x20] sm:$0xf]
      %v203 = vld [vmem:[%s187 + $0x24] sm:$0xf]
      %v204 = vld [vmem:[%s1] sm:$0xff]
      %v205 = vld [vmem:[%s1 + $0x8] sm:$0xff]
      %v206 = vld [vmem:[%s1 + $0x10] sm:$0xff]
      %v207 = vld [vmem:[%s1 + $0x18] sm:$0xff]
      %v208 = vld [vmem:[%s1 + $0x20] sm:$0xff]
      %v209 = vld [vmem:[%s1 + $0x28] sm:$0xff]
      %v210 = vld [vmem:[%s1 + $0x30] sm:$0xff]
      %v211 = vld [vmem:[%s1 + $0x38] sm:$0xff]
      %v212 = vld [vmem:[%s1 + $0x40] sm:$0xff]
      %v213 = vld [vmem:[%s1 + $0x48] sm:$0xff]
      %v214 = vld [vmem:[%s1 + $0x50] sm:$0xff]
      %v215 = vld [vmem:[%s1 + $0x58] sm:$0xff]
      %v216 = vld [vmem:[%s1 + $0x60] sm:$0xff]
      %v217 = vld [vmem:[%s1 + $0x68] sm:$0xff]
      %v218 = vld [vmem:[%s1 + $0x70] sm:$0xff]
      %v219 = vld [vmem:[%s1 + $0x78] sm:$0xff]
      %v220 = vld [vmem:[%s187 + $0x34] sm:$0x8]
      %v221 = vld [vmem:[%s187 + $0x38] sm:$0xf]
      %v222 = vld [vmem:[%s187 + $0x3c] sm:$0xf]
      %v223 = vld [vmem:[%s187 + $0x40] sm:$0xf]
      %v224 = vld [vmem:[%s187 + $0x44] sm:$0xf]
      %v225 = vld [vmem:[%s187 + $0x48] sm:$0xf]
      %v226 = vld [vmem:[%s187 + $0x4c] sm:$0xf]
      %v227 = vld [vmem:[%s187 + $0x50] sm:$0xf]
      %v228 = vld [vmem:[%s187 + $0x54] sm:$0xf]
      %v229 = vld [vmem:[%s187 + $0x58] sm:$0xf]
      %v230 = vld [vmem:[%s187 + $0x5c] sm:$0x7]
      %s231 = scalar_lea.vmem %s1, 128
      %v232 = vld [vmem:[%s231] sm:$0xff]
      %v233 = vld [vmem:[%s231 + $0x8] sm:$0xff]
      %v234 = vld [vmem:[%s231 + $0x10] sm:$0xff]
      %v235 = vld [vmem:[%s231 + $0x18] sm:$0xff]
      %v236 = vld [vmem:[%s231 + $0x20] sm:$0xff]
      %v237 = vld [vmem:[%s231 + $0x28] sm:$0xff]
      %v238 = vld [vmem:[%s231 + $0x30] sm:$0xff]
      %v239 = vld [vmem:[%s231 + $0x38] sm:$0xff]
      %v240 = vld [vmem:[%s231 + $0x40] sm:$0xff]
      %v241 = vld [vmem:[%s231 + $0x48] sm:$0xff]
      %v242 = vld [vmem:[%s231 + $0x50] sm:$0xff]
      %v243 = vld [vmem:[%s231 + $0x58] sm:$0xff]
      %v244 = vld [vmem:[%s231 + $0x60] sm:$0xff]
      %v245 = vld [vmem:[%s231 + $0x68] sm:$0xff]
      %v246 = vld [vmem:[%s231 + $0x70] sm:$0xff]
      %v247 = vld [vmem:[%s231 + $0x78] sm:$0xff]
      %v259 = vunpack.c.l.b16 %v220
      %v260 = vunpack.c.l.b16 %v221
      %v261 = vunpack.c.l.b16 %v222
      %v262 = vunpack.c.l.b16 %v223
      %v263 = vunpack.c.l.b16 %v224
      %v264 = vunpack.c.l.b16 %v225
      %v265 = vunpack.c.l.b16 %v226
      %v266 = vunpack.c.l.b16 %v227
      %v267 = vunpack.c.l.b16 %v228
      %v268 = vunpack.c.l.b16 %v229
      %v269 = vunpack.c.l.b16 %v230
      %v270 = vpack.c.b16 %v260, %v259
      %v271 = vpack.c.b16 %v262, %v261
      %v272 = vpack.c.b16 %v264, %v263
      %v273 = vpack.c.b16 %v266, %v265
      %v274 = vpack.c.b16 %v268, %v267
      %v275 = vpack.c.b16 %v269, %v269
      %vm276 = vcmask 1044480
      %v277 = vrot.slane %v270, 3
      %v278 = vrot.slane %v271, 3
      %v279 = vsel %vm276, %v277, %v278
      %v280 = vrot.slane %v272, 3
      %v281 = vsel %vm276, %v278, %v280
      %v282 = vrot.slane %v273, 3
      %v283 = vsel %vm276, %v280, %v282
      %v284 = vrot.slane %v274, 3
      %v285 = vsel %vm276, %v282, %v284
      %v286 = vrot.slane %v275, 3
      %v287 = vsel %vm276, %v284, %v286
      %v309 = vunpack.c.l.b16 %v232
      %v310 = vunpack.c.h.b16 %v232
      %v311 = vunpack.c.l.b16 %v233
      %v312 = vunpack.c.h.b16 %v233
      %v313 = vunpack.c.l.b16 %v234
      %v314 = vunpack.c.h.b16 %v234
      %v315 = vunpack.c.l.b16 %v235
      %v316 = vunpack.c.h.b16 %v235
      %v317 = vunpack.c.l.b16 %v236
      %v318 = vunpack.c.h.b16 %v236
      %v319 = vunpack.c.l.b16 %v237
      %v320 = vunpack.c.h.b16 %v237
      %v321 = vunpack.c.l.b16 %v238
      %v322 = vunpack.c.h.b16 %v238
      %v323 = vunpack.c.l.b16 %v239
      %v324 = vunpack.c.h.b16 %v239
      %v325 = vunpack.c.l.b16 %v240
      %v326 = vunpack.c.h.b16 %v240
      %v327 = vunpack.c.l.b16 %v241
      %v328 = vunpack.c.h.b16 %v241
      %v329 = vunpack.c.l.b16 %v242
      %v330 = vunpack.c.h.b16 %v242
      %v331 = vunpack.c.l.b16 %v243
      %v332 = vunpack.c.h.b16 %v243
      %v333 = vunpack.c.l.b16 %v244
      %v334 = vunpack.c.h.b16 %v244
      %v335 = vunpack.c.l.b16 %v245
      %v336 = vunpack.c.h.b16 %v245
      %v337 = vunpack.c.l.b16 %v246
      %v338 = vunpack.c.h.b16 %v246
      %v339 = vunpack.c.l.b16 %v247
      %v340 = vunpack.c.h.b16 %v247
      %v341 = vpack.c.b16 %v311, %v309
      %v342 = vpack.c.b16 %v312, %v310
      %v343 = vpack.c.b16 %v315, %v313
      %v344 = vpack.c.b16 %v316, %v314
      %v345 = vpack.c.b16 %v319, %v317
      %v346 = vpack.c.b16 %v320, %v318
      %v347 = vpack.c.b16 %v323, %v321
      %v348 = vpack.c.b16 %v324, %v322
      %v349 = vpack.c.b16 %v327, %v325
      %v350 = vpack.c.b16 %v328, %v326
      %v351 = vpack.c.b16 %v331, %v329
      %v352 = vpack.c.b16 %v332, %v330
      %v353 = vpack.c.b16 %v335, %v333
      %v354 = vpack.c.b16 %v336, %v334
      %v355 = vpack.c.b16 %v339, %v337
      %v356 = vpack.c.b16 %v340, %v338
      %373 = vmatprep.subr.bf16.mxu0 %v342
      %374 = vmatpush1.bf16.msra.mxu0 %v341
      %375 = vmatprep.subr.bf16.mxu0 %v344
      %376 = vmatpush1.bf16.msra.mxu0 %v343
      %377 = vmatprep.subr.bf16.mxu0 %v346
      %378 = vmatpush1.bf16.msra.mxu0 %v345
      %379 = vmatprep.subr.bf16.mxu0 %v348
      %380 = vmatpush1.bf16.msra.mxu0 %v347
      %381 = vmatprep.subr.bf16.mxu0 %v350
      %382 = vmatpush1.bf16.msra.mxu0 %v349
      %383 = vmatprep.subr.bf16.mxu0 %v352
      %384 = vmatpush1.bf16.msra.mxu0 %v351
      %385 = vmatprep.subr.bf16.mxu0 %v354
      %386 = vmatpush1.bf16.msra.mxu0 %v353
      %387 = vmatprep.subr.bf16.mxu0 %v356
      %388 = vmatpush1.bf16.msra.mxu0 %v355
      %389 = vmatprep.subr.bf16.mxu0 0
      %390 = vmatpush1.bf16.msra.mxu0 0
      %391 = vmatprep.subr.bf16.mxu0 0
      %392 = vmatpush1.bf16.msra.mxu0 0
      %393 = vmatprep.subr.bf16.mxu0 0
      %394 = vmatpush1.bf16.msra.mxu0 0
      %395 = vmatprep.subr.bf16.mxu0 0
      %396 = vmatpush1.bf16.msra.mxu0 0
      %397 = vmatprep.subr.bf16.mxu0 0
      %398 = vmatpush1.bf16.msra.mxu0 0
      %399 = vmatprep.subr.bf16.mxu0 0
      %400 = vmatpush1.bf16.msra.mxu0 0
      %401 = vmatprep.subr.bf16.mxu0 0
      %402 = vmatpush1.bf16.msra.mxu0 0
      %403 = vmatprep.subr.bf16.mxu0 0
      %404 = vmatpush1.bf16.msra.mxu0 0
      %405 = vmatprep.mubr.bf16.mxu0 0
      %406 = vmatmul.mubr.bf16.gmra.mrb[0].mxu0 %v279
      %v407 = vpop.f32.mrb[0].mxu0
      %v408 = vadd.f32 0.0, %v407
      %v409 = vpop.f32.mrb[0].mxu0
      %v410 = vadd.f32 0.0, %v409
      %v411 = vpop.f32.mrb[0].mxu0
      %v412 = vadd.f32 0.0, %v411
      %v413 = vpop.f32.mrb[0].mxu0
      %v414 = vadd.f32 0.0, %v413
      %415 = vmatprep.mubr.bf16.mxu0 0
      %416 = vmatmul.mubr.bf16.gmra.mrb[0].mxu0 %v281
      %v417 = vpop.f32.mrb[0].mxu0
      %v418 = vadd.f32 0.0, %v417
      %v419 = vpop.f32.mrb[0].mxu0
      %v420 = vadd.f32 0.0, %v419
      %v421 = vpop.f32.mrb[0].mxu0
      %v422 = vadd.f32 0.0, %v421
      %v423 = vpop.f32.mrb[0].mxu0
      %v424 = vadd.f32 0.0, %v423
      %425 = vmatprep.mubr.bf16.mxu0 0
      %426 = vmatmul.mubr.bf16.gmra.mrb[0].mxu0 %v283
      %v427 = vpop.f32.mrb[0].mxu0
      %v428 = vadd.f32 0.0, %v427
      %v429 = vpop.f32.mrb[0].mxu0
      %v430 = vadd.f32 0.0, %v429
      %v431 = vpop.f32.mrb[0].mxu0
      %v432 = vadd.f32 0.0, %v431
      %v433 = vpop.f32.mrb[0].mxu0
      %v434 = vadd.f32 0.0, %v433
      %435 = vmatprep.mubr.bf16.mxu0 0
      %436 = vmatmul.mubr.bf16.gmra.mrb[0].mxu0 %v285
      %v437 = vpop.f32.mrb[0].mxu0
      %v438 = vadd.f32 0.0, %v437
      %v439 = vpop.f32.mrb[0].mxu0
      %v440 = vadd.f32 0.0, %v439
      %v441 = vpop.f32.mrb[0].mxu0
      %v442 = vadd.f32 0.0, %v441
      %v443 = vpop.f32.mrb[0].mxu0
      %v444 = vadd.f32 0.0, %v443
      %445 = vmatprep.mubr.bf16.mxu0 0
      %446 = vmatmul.mubr.bf16.gmra.mrb[0].mxu0 %v287
      %v447 = vpop.f32.mrb[0].mxu0
      %v448 = vadd.f32 0.0, %v447
      %v449 = vpop.f32.mrb[0].mxu0
      %v450 = vadd.f32 0.0, %v449
      %v451 = vpop.f32.mrb[0].mxu0
      %v452 = vadd.f32 0.0, %v451
      %v453 = vpop.f32.mrb[0].mxu0
      %v454 = vadd.f32 0.0, %v453
      %455 = vdwg.mxu0
      %v466 = vunpack.c.l.b16 %v194
      %v467 = vunpack.c.l.b16 %v195
      %v468 = vunpack.c.l.b16 %v196
      %v469 = vunpack.c.l.b16 %v197
      %v470 = vunpack.c.l.b16 %v198
      %v471 = vunpack.c.l.b16 %v199
      %v472 = vunpack.c.l.b16 %v200
      %v473 = vunpack.c.l.b16 %v201
      %v474 = vunpack.c.l.b16 %v202
      %v475 = vunpack.c.l.b16 %v203
      %v476 = vpack.c.b16 %v467, %v466
      %v477 = vpack.c.b16 %v469, %v468
      %v478 = vpack.c.b16 %v471, %v470
      %v479 = vpack.c.b16 %v473, %v472
      %v480 = vpack.c.b16 %v475, %v474
      %v502 = vunpack.c.l.b16 %v204
      %v503 = vunpack.c.h.b16 %v204
      %v504 = vunpack.c.l.b16 %v205
      %v505 = vunpack.c.h.b16 %v205
      %v506 = vunpack.c.l.b16 %v206
      %v507 = vunpack.c.h.b16 %v206
      %v508 = vunpack.c.l.b16 %v207
      %v509 = vunpack.c.h.b16 %v207
      %v510 = vunpack.c.l.b16 %v208
      %v511 = vunpack.c.h.b16 %v208
      %v512 = vunpack.c.l.b16 %v209
      %v513 = vunpack.c.h.b16 %v209
      %v514 = vunpack.c.l.b16 %v210
      %v515 = vunpack.c.h.b16 %v210
      %v516 = vunpack.c.l.b16 %v211
      %v517 = vunpack.c.h.b16 %v211
      %v518 = vunpack.c.l.b16 %v212
      %v519 = vunpack.c.h.b16 %v212
      %v520 = vunpack.c.l.b16 %v213
      %v521 = vunpack.c.h.b16 %v213
      %v522 = vunpack.c.l.b16 %v214
      %v523 = vunpack.c.h.b16 %v214
      %v524 = vunpack.c.l.b16 %v215
      %v525 = vunpack.c.h.b16 %v215
      %v526 = vunpack.c.l.b16 %v216
      %v527 = vunpack.c.h.b16 %v216
      %v528 = vunpack.c.l.b16 %v217
      %v529 = vunpack.c.h.b16 %v217
      %v530 = vunpack.c.l.b16 %v218
      %v531 = vunpack.c.h.b16 %v218
      %v532 = vunpack.c.l.b16 %v219
      %v533 = vunpack.c.h.b16 %v219
      %v534 = vpack.c.b16 %v504, %v502
      %v535 = vpack.c.b16 %v505, %v503
      %v536 = vpack.c.b16 %v508, %v506
      %v537 = vpack.c.b16 %v509, %v507
      %v538 = vpack.c.b16 %v512, %v510
      %v539 = vpack.c.b16 %v513, %v511
      %v540 = vpack.c.b16 %v516, %v514
      %v541 = vpack.c.b16 %v517, %v515
      %v542 = vpack.c.b16 %v520, %v518
      %v543 = vpack.c.b16 %v521, %v519
      %v544 = vpack.c.b16 %v524, %v522
      %v545 = vpack.c.b16 %v525, %v523
      %v546 = vpack.c.b16 %v528, %v526
      %v547 = vpack.c.b16 %v529, %v527
      %v548 = vpack.c.b16 %v532, %v530
      %v549 = vpack.c.b16 %v533, %v531
      %566 = vmatprep.subr.bf16.mxu0 %v535
      %567 = vmatpush1.bf16.msra.mxu0 %v534
      %568 = vmatprep.subr.bf16.mxu0 %v537
      %569 = vmatpush1.bf16.msra.mxu0 %v536
      %570 = vmatprep.subr.bf16.mxu0 %v539
      %571 = vmatpush1.bf16.msra.mxu0 %v538
      %572 = vmatprep.subr.bf16.mxu0 %v541
      %573 = vmatpush1.bf16.msra.mxu0 %v540
      %574 = vmatprep.subr.bf16.mxu0 %v543
      %575 = vmatpush1.bf16.msra.mxu0 %v542
      %576 = vmatprep.subr.bf16.mxu0 %v545
      %577 = vmatpush1.bf16.msra.mxu0 %v544
      %578 = vmatprep.subr.bf16.mxu0 %v547
      %579 = vmatpush1.bf16.msra.mxu0 %v546
      %580 = vmatprep.subr.bf16.mxu0 %v549
      %581 = vmatpush1.bf16.msra.mxu0 %v548
      %582 = vmatprep.subr.bf16.mxu0 0
      %583 = vmatpush1.bf16.msra.mxu0 0
      %584 = vmatprep.subr.bf16.mxu0 0
      %585 = vmatpush1.bf16.msra.mxu0 0
      %586 = vmatprep.subr.bf16.mxu0 0
      %587 = vmatpush1.bf16.msra.mxu0 0
      %588 = vmatprep.subr.bf16.mxu0 0
      %589 = vmatpush1.bf16.msra.mxu0 0
      %590 = vmatprep.subr.bf16.mxu0 0
      %591 = vmatpush1.bf16.msra.mxu0 0
      %592 = vmatprep.subr.bf16.mxu0 0
      %593 = vmatpush1.bf16.msra.mxu0 0
      %594 = vmatprep.subr.bf16.mxu0 0
      %595 = vmatpush1.bf16.msra.mxu0 0
      %596 = vmatprep.subr.bf16.mxu0 0
      %597 = vmatpush1.bf16.msra.mxu0 0
      %598 = vmatprep.mubr.bf16.mxu0 0
      %599 = vmatmul.mubr.bf16.gmra.mrb[0].mxu0 %v476
      %v600 = vpop.f32.mrb[0].mxu0
      %v601 = vadd.f32 %v408, %v600
      %v602 = vpop.f32.mrb[0].mxu0
      %v603 = vadd.f32 %v410, %v602
      %v604 = vpop.f32.mrb[0].mxu0
      %v605 = vadd.f32 %v412, %v604
      %v606 = vpop.f32.mrb[0].mxu0
      %v607 = vadd.f32 %v414, %v606
      %608 = vmatprep.mubr.bf16.mxu0 0
      %609 = vmatmul.mubr.bf16.gmra.mrb[0].mxu0 %v477
      %v610 = vpop.f32.mrb[0].mxu0
      %v611 = vadd.f32 %v418, %v610
      %v612 = vpop.f32.mrb[0].mxu0
      %v613 = vadd.f32 %v420, %v612
      %v614 = vpop.f32.mrb[0].mxu0
      %v615 = vadd.f32 %v422, %v614
      %v616 = vpop.f32.mrb[0].mxu0
      %v617 = vadd.f32 %v424, %v616
      %618 = vmatprep.mubr.bf16.mxu0 0
      %619 = vmatmul.mubr.bf16.gmra.mrb[0].mxu0 %v478
      %v620 = vpop.f32.mrb[0].mxu0
      %v621 = vadd.f32 %v428, %v620
      %v622 = vpop.f32.mrb[0].mxu0
      %v623 = vadd.f32 %v430, %v622
      %v624 = vpop.f32.mrb[0].mxu0
      %v625 = vadd.f32 %v432, %v624
      %v626 = vpop.f32.mrb[0].mxu0
      %v627 = vadd.f32 %v434, %v626
      %628 = vmatprep.mubr.bf16.mxu0 0
      %629 = vmatmul.mubr.bf16.gmra.mrb[0].mxu0 %v479
      %v630 = vpop.f32.mrb[0].mxu0
      %v631 = vadd.f32 %v438, %v630
      %v632 = vpop.f32.mrb[0].mxu0
      %v633 = vadd.f32 %v440, %v632
      %v634 = vpop.f32.mrb[0].mxu0
      %v635 = vadd.f32 %v442, %v634
      %v636 = vpop.f32.mrb[0].mxu0
      %v637 = vadd.f32 %v444, %v636
      %638 = vmatprep.mubr.bf16.mxu0 0
      %639 = vmatmul.mubr.bf16.gmra.mrb[0].mxu0 %v480
      %v640 = vpop.f32.mrb[0].mxu0
      %v641 = vadd.f32 %v448, %v640
      %v642 = vpop.f32.mrb[0].mxu0
      %v643 = vadd.f32 %v450, %v642
      %v644 = vpop.f32.mrb[0].mxu0
      %v645 = vadd.f32 %v452, %v644
      %v646 = vpop.f32.mrb[0].mxu0
      %v647 = vadd.f32 %v454, %v646
      %648 = vdwg.mxu0
      %v649 = vld [vmem:[%s187] sm:$0xf]
      %v650 = vld [vmem:[%s187 + $0x4] sm:$0xf]
      %v651 = vld [vmem:[%s187 + $0x8] sm:$0xf]
      %v652 = vld [vmem:[%s187 + $0xc] sm:$0xf]
      %v653 = vld [vmem:[%s187 + $0x10] sm:$0xf]
      %v654 = vld [vmem:[%s187 + $0x14] sm:$0xf]
      %v655 = vld [vmem:[%s187 + $0x18] sm:$0xf]
      %v656 = vld [vmem:[%s187 + $0x1c] sm:$0xf]
      %v657 = vld [vmem:[%s187 + $0x20] sm:$0xf]
      %v658 = vld [vmem:[%s187 + $0x24] sm:$0xf]
      %v659 = vld [vmem:[%s187 + $0x28] sm:$0x1]
      %s660 = scalar_lea.vmem %s1, 256
      %v661 = vld [vmem:[%s660] sm:$0xff]
      %v662 = vld [vmem:[%s660 + $0x8] sm:$0xff]
      %v663 = vld [vmem:[%s660 + $0x10] sm:$0xff]
      %v664 = vld [vmem:[%s660 + $0x18] sm:$0xff]
      %v665 = vld [vmem:[%s660 + $0x20] sm:$0xff]
      %v666 = vld [vmem:[%s660 + $0x28] sm:$0xff]
      %v667 = vld [vmem:[%s660 + $0x30] sm:$0xff]
      %v668 = vld [vmem:[%s660 + $0x38] sm:$0xff]
      %v669 = vld [vmem:[%s660 + $0x40] sm:$0xff]
      %v670 = vld [vmem:[%s660 + $0x48] sm:$0xff]
      %v671 = vld [vmem:[%s660 + $0x50] sm:$0xff]
      %v672 = vld [vmem:[%s660 + $0x58] sm:$0xff]
      %v673 = vld [vmem:[%s660 + $0x60] sm:$0xff]
      %v674 = vld [vmem:[%s660 + $0x68] sm:$0xff]
      %v675 = vld [vmem:[%s660 + $0x70] sm:$0xff]
      %v676 = vld [vmem:[%s660 + $0x78] sm:$0xff]
      %v688 = vunpack.c.l.b16 %v649
      %v689 = vunpack.c.l.b16 %v650
      %v690 = vunpack.c.l.b16 %v651
      %v691 = vunpack.c.l.b16 %v652
      %v692 = vunpack.c.l.b16 %v653
      %v693 = vunpack.c.l.b16 %v654
      %v694 = vunpack.c.l.b16 %v655
      %v695 = vunpack.c.l.b16 %v656
      %v696 = vunpack.c.l.b16 %v657
      %v697 = vunpack.c.l.b16 %v658
      %v698 = vunpack.c.l.b16 %v659
      %v699 = vpack.c.b16 %v689, %v688
      %v700 = vpack.c.b16 %v691, %v690
      %v701 = vpack.c.b16 %v693, %v692
      %v702 = vpack.c.b16 %v695, %v694
      %v703 = vpack.c.b16 %v697, %v696
      %v704 = vpack.c.b16 %v698, %v698
      %vm705 = vsmask.f32 7424
      %v707 = vshrl.u32 %v699, 16
      %v709 = vshll.u32 %v699, 16
      %v711 = vrot.slane %v709, 1
      %v712 = vor.u32 %v707, %v711
      %v714 = vshll.u32 %v700, 16
      %v716 = vrot.slane %v714, 1
      %v717 = vsel %vm705, %v712, %v716
      %v718 = vshrl.u32 %v700, 16
      %v720 = vor.u32 %v718, %v716
      %v722 = vshll.u32 %v701, 16
      %v724 = vrot.slane %v722, 1
      %v725 = vsel %vm705, %v720, %v724
      %v726 = vshrl.u32 %v701, 16
      %v728 = vor.u32 %v726, %v724
      %v730 = vshll.u32 %v702, 16
      %v732 = vrot.slane %v730, 1
      %v733 = vsel %vm705, %v728, %v732
      %v734 = vshrl.u32 %v702, 16
      %v736 = vor.u32 %v734, %v732
      %v738 = vshll.u32 %v703, 16
      %v740 = vrot.slane %v738, 1
      %v741 = vsel %vm705, %v736, %v740
      %v742 = vshrl.u32 %v703, 16
      %v744 = vor.u32 %v742, %v740
      %v746 = vshll.u32 %v704, 16
      %v748 = vrot.slane %v746, 1
      %v749 = vsel %vm705, %v744, %v748
      %v771 = vunpack.c.l.b16 %v661
      %v772 = vunpack.c.h.b16 %v661
      %v773 = vunpack.c.l.b16 %v662
      %v774 = vunpack.c.h.b16 %v662
      %v775 = vunpack.c.l.b16 %v663
      %v776 = vunpack.c.h.b16 %v663
      %v777 = vunpack.c.l.b16 %v664
      %v778 = vunpack.c.h.b16 %v664
      %v779 = vunpack.c.l.b16 %v665
      %v780 = vunpack.c.h.b16 %v665
      %v781 = vunpack.c.l.b16 %v666
      %v782 = vunpack.c.h.b16 %v666
      %v783 = vunpack.c.l.b16 %v667
      %v784 = vunpack.c.h.b16 %v667
      %v785 = vunpack.c.l.b16 %v668
      %v786 = vunpack.c.h.b16 %v668
      %v787 = vunpack.c.l.b16 %v669
      %v788 = vunpack.c.h.b16 %v669
      %v789 = vunpack.c.l.b16 %v670
      %v790 = vunpack.c.h.b16 %v670
      %v791 = vunpack.c.l.b16 %v671
      %v792 = vunpack.c.h.b16 %v671
      %v793 = vunpack.c.l.b16 %v672
      %v794 = vunpack.c.h.b16 %v672
      %v795 = vunpack.c.l.b16 %v673
      %v796 = vunpack.c.h.b16 %v673
      %v797 = vunpack.c.l.b16 %v674
      %v798 = vunpack.c.h.b16 %v674
      %v799 = vunpack.c.l.b16 %v675
      %v800 = vunpack.c.h.b16 %v675
      %v801 = vunpack.c.l.b16 %v676
      %v802 = vunpack.c.h.b16 %v676
      %v803 = vpack.c.b16 %v773, %v771
      %v804 = vpack.c.b16 %v774, %v772
      %v805 = vpack.c.b16 %v777, %v775
      %v806 = vpack.c.b16 %v778, %v776
      %v807 = vpack.c.b16 %v781, %v779
      %v808 = vpack.c.b16 %v782, %v780
      %v809 = vpack.c.b16 %v785, %v783
      %v810 = vpack.c.b16 %v786, %v784
      %v811 = vpack.c.b16 %v789, %v787
      %v812 = vpack.c.b16 %v790, %v788
      %v813 = vpack.c.b16 %v793, %v791
      %v814 = vpack.c.b16 %v794, %v792
      %v815 = vpack.c.b16 %v797, %v795
      %v816 = vpack.c.b16 %v798, %v796
      %v817 = vpack.c.b16 %v801, %v799
      %v818 = vpack.c.b16 %v802, %v800
      %835 = vmatprep.subr.bf16.mxu0 %v804
      %836 = vmatpush1.bf16.msra.mxu0 %v803
      %837 = vmatprep.subr.bf16.mxu0 %v806
      %838 = vmatpush1.bf16.msra.mxu0 %v805
      %839 = vmatprep.subr.bf16.mxu0 %v808
      %840 = vmatpush1.bf16.msra.mxu0 %v807
      %841 = vmatprep.subr.bf16.mxu0 %v810
      %842 = vmatpush1.bf16.msra.mxu0 %v809
      %843 = vmatprep.subr.bf16.mxu0 %v812
      %844 = vmatpush1.bf16.msra.mxu0 %v811
      %845 = vmatprep.subr.bf16.mxu0 %v814
      %846 = vmatpush1.bf16.msra.mxu0 %v813
      %847 = vmatprep.subr.bf16.mxu0 %v816
      %848 = vmatpush1.bf16.msra.mxu0 %v815
      %849 = vmatprep.subr.bf16.mxu0 %v818
      %850 = vmatpush1.bf16.msra.mxu0 %v817
      %851 = vmatprep.subr.bf16.mxu0 0
      %852 = vmatpush1.bf16.msra.mxu0 0
      %853 = vmatprep.subr.bf16.mxu0 0
      %854 = vmatpush1.bf16.msra.mxu0 0
      %855 = vmatprep.subr.bf16.mxu0 0
      %856 = vmatpush1.bf16.msra.mxu0 0
      %857 = vmatprep.subr.bf16.mxu0 0
      %858 = vmatpush1.bf16.msra.mxu0 0
      %859 = vmatprep.subr.bf16.mxu0 0
      %860 = vmatpush1.bf16.msra.mxu0 0
      %861 = vmatprep.subr.bf16.mxu0 0
      %862 = vmatpush1.bf16.msra.mxu0 0
      %863 = vmatprep.subr.bf16.mxu0 0
      %864 = vmatpush1.bf16.msra.mxu0 0
      %865 = vmatprep.subr.bf16.mxu0 0
      %866 = vmatpush1.bf16.msra.mxu0 0
      %867 = vmatprep.mubr.bf16.mxu0 0
      %868 = vmatmul.mubr.bf16.gmra.mrb[0].mxu0 %v717
      %v869 = vpop.f32.mrb[0].mxu0
      %v870 = vadd.f32 0.0, %v869
      %v871 = vpop.f32.mrb[0].mxu0
      %v872 = vadd.f32 0.0, %v871
      %v873 = vpop.f32.mrb[0].mxu0
      %v874 = vadd.f32 0.0, %v873
      %v875 = vpop.f32.mrb[0].mxu0
      %v876 = vadd.f32 0.0, %v875
      %877 = vmatprep.mubr.bf16.mxu0 0
      %878 = vmatmul.mubr.bf16.gmra.mrb[0].mxu0 %v725
      %v879 = vpop.f32.mrb[0].mxu0
      %v880 = vadd.f32 0.0, %v879
      %v881 = vpop.f32.mrb[0].mxu0
      %v882 = vadd.f32 0.0, %v881
      %v883 = vpop.f32.mrb[0].mxu0
      %v884 = vadd.f32 0.0, %v883
      %v885 = vpop.f32.mrb[0].mxu0
      %v886 = vadd.f32 0.0, %v885
      %887 = vmatprep.mubr.bf16.mxu0 0
      %888 = vmatmul.mubr.bf16.gmra.mrb[0].mxu0 %v733
      %v889 = vpop.f32.mrb[0].mxu0
      %v890 = vadd.f32 0.0, %v889
      %v891 = vpop.f32.mrb[0].mxu0
      %v892 = vadd.f32 0.0, %v891
      %v893 = vpop.f32.mrb[0].mxu0
      %v894 = vadd.f32 0.0, %v893
      %v895 = vpop.f32.mrb[0].mxu0
      %v896 = vadd.f32 0.0, %v895
      %897 = vmatprep.mubr.bf16.mxu0 0
      %898 = vmatmul.mubr.bf16.gmra.mrb[0].mxu0 %v741
      %v899 = vpop.f32.mrb[0].mxu0
      %v900 = vadd.f32 0.0, %v899
      %v901 = vpop.f32.mrb[0].mxu0
      %v902 = vadd.f32 0.0, %v901
      %v903 = vpop.f32.mrb[0].mxu0
      %v904 = vadd.f32 0.0, %v903
      %v905 = vpop.f32.mrb[0].mxu0
      %v906 = vadd.f32 0.0, %v905
      %907 = vmatprep.mubr.bf16.mxu0 0
      %908 = vmatmul.mubr.bf16.gmra.mrb[0].mxu0 %v749
      %v909 = vpop.f32.mrb[0].mxu0
      %v910 = vadd.f32 0.0, %v909
      %v911 = vpop.f32.mrb[0].mxu0
      %v912 = vadd.f32 0.0, %v911
      %v913 = vpop.f32.mrb[0].mxu0
      %v914 = vadd.f32 0.0, %v913
      %v915 = vpop.f32.mrb[0].mxu0
      %v916 = vadd.f32 0.0, %v915
      %917 = vdwg.mxu0
      %v918 = vadd.f32 %v601, %v870
      %v919 = vadd.f32 %v603, %v872
      %v920 = vadd.f32 %v605, %v874
      %v921 = vadd.f32 %v607, %v876
      %v922 = vadd.f32 %v611, %v880
      %v923 = vadd.f32 %v613, %v882
      %v924 = vadd.f32 %v615, %v884
      %v925 = vadd.f32 %v617, %v886
      %v926 = vadd.f32 %v621, %v890
      %v927 = vadd.f32 %v623, %v892
      %v928 = vadd.f32 %v625, %v894
      %v929 = vadd.f32 %v627, %v896
      %v930 = vadd.f32 %v631, %v900
      %v931 = vadd.f32 %v633, %v902
      %v932 = vadd.f32 %v635, %v904
      %v933 = vadd.f32 %v637, %v906
      %v934 = vadd.f32 %v641, %v910
      %v935 = vadd.f32 %v643, %v912
      %v936 = vadd.f32 %v645, %v914
      %v937 = vadd.f32 %v647, %v916
      %v938 = vld [vmem:[%s187 + $0x6c] sm:$0xc]
      %v939 = vld [vmem:[%s187 + $0x70] sm:$0xf]
      %v940 = vld [vmem:[%s187 + $0x74] sm:$0xf]
      %v941 = vld [vmem:[%s187 + $0x78] sm:$0xf]
      %v942 = vld [vmem:[%s187 + $0x7c] sm:$0xf]
      %v943 = vld [vmem:[%s187 + $0x80] sm:$0xf]
      %v944 = vld [vmem:[%s187 + $0x84] sm:$0xf]
      %v945 = vld [vmem:[%s187 + $0x88] sm:$0xf]
      %v946 = vld [vmem:[%s187 + $0x8c] sm:$0xf]
      %v947 = vld [vmem:[%s187 + $0x90] sm:$0xf]
      %v948 = vld [vmem:[%s187 + $0x94] sm:$0x3]
      %s949 = scalar_lea.vmem %s1, 384
      %v950 = vld [vmem:[%s949] sm:$0xff]
      %v951 = vld [vmem:[%s949 + $0x8] sm:$0xff]
      %v952 = vld [vmem:[%s949 + $0x10] sm:$0xff]
      %v953 = vld [vmem:[%s949 + $0x18] sm:$0xff]
      %v954 = vld [vmem:[%s949 + $0x20] sm:$0xff]
      %v955 = vld [vmem:[%s949 + $0x28] sm:$0xff]
      %v956 = vld [vmem:[%s949 + $0x30] sm:$0xff]
      %v957 = vld [vmem:[%s949 + $0x38] sm:$0xff]
      %v958 = vld [vmem:[%s949 + $0x40] sm:$0xff]
      %v959 = vld [vmem:[%s949 + $0x48] sm:$0xff]
      %v960 = vld [vmem:[%s949 + $0x50] sm:$0xff]
      %v961 = vld [vmem:[%s949 + $0x58] sm:$0xff]
      %v962 = vld [vmem:[%s949 + $0x60] sm:$0xff]
      %v963 = vld [vmem:[%s949 + $0x68] sm:$0xff]
      %v964 = vld [vmem:[%s949 + $0x70] sm:$0xff]
      %v965 = vld [vmem:[%s949 + $0x78] sm:$0xff]
      %v977 = vunpack.c.l.b16 %v938
      %v978 = vunpack.c.l.b16 %v939
      %v979 = vunpack.c.l.b16 %v940
      %v980 = vunpack.c.l.b16 %v941
      %v981 = vunpack.c.l.b16 %v942
      %v982 = vunpack.c.l.b16 %v943
      %v983 = vunpack.c.l.b16 %v944
      %v984 = vunpack.c.l.b16 %v945
      %v985 = vunpack.c.l.b16 %v946
      %v986 = vunpack.c.l.b16 %v947
      %v987 = vunpack.c.l.b16 %v948
      %v988 = vpack.c.b16 %v978, %v977
      %v989 = vpack.c.b16 %v980, %v979
      %v990 = vpack.c.b16 %v982, %v981
      %v991 = vpack.c.b16 %v984, %v983
      %v992 = vpack.c.b16 %v986, %v985
      %v993 = vpack.c.b16 %v987, %v987
      %vm994 = vcmask 1045504
      %v995 = vrot.slane %v988, 2
      %v996 = vrot.slane %v989, 2
      %v997 = vsel %vm994, %v995, %v996
      %v998 = vrot.slane %v990, 2
      %v999 = vsel %vm994, %v996, %v998
      %v1000 = vrot.slane %v991, 2
      %v1001 = vsel %vm994, %v998, %v1000
      %v1002 = vrot.slane %v992, 2
      %v1003 = vsel %vm994, %v1000, %v1002
      %v1004 = vrot.slane %v993, 2
      %v1005 = vsel %vm994, %v1002, %v1004
      %v1027 = vunpack.c.l.b16 %v950
      %v1028 = vunpack.c.h.b16 %v950
      %v1029 = vunpack.c.l.b16 %v951
      %v1030 = vunpack.c.h.b16 %v951
      %v1031 = vunpack.c.l.b16 %v952
      %v1032 = vunpack.c.h.b16 %v952
      %v1033 = vunpack.c.l.b16 %v953
      %v1034 = vunpack.c.h.b16 %v953
      %v1035 = vunpack.c.l.b16 %v954
      %v1036 = vunpack.c.h.b16 %v954
      %v1037 = vunpack.c.l.b16 %v955
      %v1038 = vunpack.c.h.b16 %v955
      %v1039 = vunpack.c.l.b16 %v956
      %v1040 = vunpack.c.h.b16 %v956
      %v1041 = vunpack.c.l.b16 %v957
      %v1042 = vunpack.c.h.b16 %v957
      %v1043 = vunpack.c.l.b16 %v958
      %v1044 = vunpack.c.h.b16 %v958
      %v1045 = vunpack.c.l.b16 %v959
      %v1046 = vunpack.c.h.b16 %v959
      %v1047 = vunpack.c.l.b16 %v960
      %v1048 = vunpack.c.h.b16 %v960
      %v1049 = vunpack.c.l.b16 %v961
      %v1050 = vunpack.c.h.b16 %v961
      %v1051 = vunpack.c.l.b16 %v962
      %v1052 = vunpack.c.h.b16 %v962
      %v1053 = vunpack.c.l.b16 %v963
      %v1054 = vunpack.c.h.b16 %v963
      %v1055 = vunpack.c.l.b16 %v964
      %v1056 = vunpack.c.h.b16 %v964
      %v1057 = vunpack.c.l.b16 %v965
      %v1058 = vunpack.c.h.b16 %v965
      %v1059 = vpack.c.b16 %v1029, %v1027
      %v1060 = vpack.c.b16 %v1030, %v1028
      %v1061 = vpack.c.b16 %v1033, %v1031
      %v1062 = vpack.c.b16 %v1034, %v1032
      %v1063 = vpack.c.b16 %v1037, %v1035
      %v1064 = vpack.c.b16 %v1038, %v1036
      %v1065 = vpack.c.b16 %v1041, %v1039
      %v1066 = vpack.c.b16 %v1042, %v1040
      %v1067 = vpack.c.b16 %v1045, %v1043
      %v1068 = vpack.c.b16 %v1046, %v1044
      %v1069 = vpack.c.b16 %v1049, %v1047
      %v1070 = vpack.c.b16 %v1050, %v1048
      %v1071 = vpack.c.b16 %v1053, %v1051
      %v1072 = vpack.c.b16 %v1054, %v1052
      %v1073 = vpack.c.b16 %v1057, %v1055
      %v1074 = vpack.c.b16 %v1058, %v1056
      %1091 = vmatprep.subr.bf16.mxu0 %v1060
      %1092 = vmatpush1.bf16.msra.mxu0 %v1059
      %1093 = vmatprep.subr.bf16.mxu0 %v1062
      %1094 = vmatpush1.bf16.msra.mxu0 %v1061
      %1095 = vmatprep.subr.bf16.mxu0 %v1064
      %1096 = vmatpush1.bf16.msra.mxu0 %v1063
      %1097 = vmatprep.subr.bf16.mxu0 %v1066
      %1098 = vmatpush1.bf16.msra.mxu0 %v1065
      %1099 = vmatprep.subr.bf16.mxu0 %v1068
      %1100 = vmatpush1.bf16.msra.mxu0 %v1067
      %1101 = vmatprep.subr.bf16.mxu0 %v1070
      %1102 = vmatpush1.bf16.msra.mxu0 %v1069
      %1103 = vmatprep.subr.bf16.mxu0 %v1072
      %1104 = vmatpush1.bf16.msra.mxu0 %v1071
      %1105 = vmatprep.subr.bf16.mxu0 %v1074
      %1106 = vmatpush1.bf16.msra.mxu0 %v1073
      %1107 = vmatprep.subr.bf16.mxu0 0
      %1108 = vmatpush1.bf16.msra.mxu0 0
      %1109 = vmatprep.subr.bf16.mxu0 0
      %1110 = vmatpush1.bf16.msra.mxu0 0
      %1111 = vmatprep.subr.bf16.mxu0 0
      %1112 = vmatpush1.bf16.msra.mxu0 0
      %1113 = vmatprep.subr.bf16.mxu0 0
      %1114 = vmatpush1.bf16.msra.mxu0 0
      %1115 = vmatprep.subr.bf16.mxu0 0
      %1116 = vmatpush1.bf16.msra.mxu0 0
      %1117 = vmatprep.subr.bf16.mxu0 0
      %1118 = vmatpush1.bf16.msra.mxu0 0
      %1119 = vmatprep.subr.bf16.mxu0 0
      %1120 = vmatpush1.bf16.msra.mxu0 0
      %1121 = vmatprep.subr.bf16.mxu0 0
      %1122 = vmatpush1.bf16.msra.mxu0 0
      %1123 = vmatprep.mubr.bf16.mxu0 0
      %1124 = vmatmul.mubr.bf16.gmra.mrb[0].mxu0 %v997
      %v1125 = vpop.f32.mrb[0].mxu0
      %v1126 = vadd.f32 0.0, %v1125
      %v1127 = vpop.f32.mrb[0].mxu0
      %v1128 = vadd.f32 0.0, %v1127
      %v1129 = vpop.f32.mrb[0].mxu0
      %v1130 = vadd.f32 0.0, %v1129
      %v1131 = vpop.f32.mrb[0].mxu0
      %v1132 = vadd.f32 0.0, %v1131
      %1133 = vmatprep.mubr.bf16.mxu0 0
      %1134 = vmatmul.mubr.bf16.gmra.mrb[0].mxu0 %v999
      %v1135 = vpop.f32.mrb[0].mxu0
      %v1136 = vadd.f32 0.0, %v1135
      %v1137 = vpop.f32.mrb[0].mxu0
      %v1138 = vadd.f32 0.0, %v1137
      %v1139 = vpop.f32.mrb[0].mxu0
      %v1140 = vadd.f32 0.0, %v1139
      %v1141 = vpop.f32.mrb[0].mxu0
      %v1142 = vadd.f32 0.0, %v1141
      %1143 = vmatprep.mubr.bf16.mxu0 0
      %1144 = vmatmul.mubr.bf16.gmra.mrb[0].mxu0 %v1001
      %v1145 = vpop.f32.mrb[0].mxu0
      %v1146 = vadd.f32 0.0, %v1145
      %v1147 = vpop.f32.mrb[0].mxu0
      %v1148 = vadd.f32 0.0, %v1147
      %v1149 = vpop.f32.mrb[0].mxu0
      %v1150 = vadd.f32 0.0, %v1149
      %v1151 = vpop.f32.mrb[0].mxu0
      %v1152 = vadd.f32 0.0, %v1151
      %1153 = vmatprep.mubr.bf16.mxu0 0
      %1154 = vmatmul.mubr.bf16.gmra.mrb[0].mxu0 %v1003
      %v1155 = vpop.f32.mrb[0].mxu0
      %v1156 = vadd.f32 0.0, %v1155
      %v1157 = vpop.f32.mrb[0].mxu0
      %v1158 = vadd.f32 0.0, %v1157
      %v1159 = vpop.f32.mrb[0].mxu0
      %v1160 = vadd.f32 0.0, %v1159
      %v1161 = vpop.f32.mrb[0].mxu0
      %v1162 = vadd.f32 0.0, %v1161
      %1163 = vmatprep.mubr.bf16.mxu0 0
      %1164 = vmatmul.mubr.bf16.gmra.mrb[0].mxu0 %v1005
      %v1165 = vpop.f32.mrb[0].mxu0
      %v1166 = vadd.f32 0.0, %v1165
      %v1167 = vpop.f32.mrb[0].mxu0
      %v1168 = vadd.f32 0.0, %v1167
      %v1169 = vpop.f32.mrb[0].mxu0
      %v1170 = vadd.f32 0.0, %v1169
      %v1171 = vpop.f32.mrb[0].mxu0
      %v1172 = vadd.f32 0.0, %v1171
      %1173 = vdwg.mxu0
      %v1174 = vadd.f32 %v918, %v1126
      %v1175 = vadd.f32 %v919, %v1128
      %v1176 = vadd.f32 %v920, %v1130
      %v1177 = vadd.f32 %v921, %v1132
      %v1178 = vadd.f32 %v922, %v1136
      %v1179 = vadd.f32 %v923, %v1138
      %v1180 = vadd.f32 %v924, %v1140
      %v1181 = vadd.f32 %v925, %v1142
      %v1182 = vadd.f32 %v926, %v1146
      %v1183 = vadd.f32 %v927, %v1148
      %v1184 = vadd.f32 %v928, %v1150
      %v1185 = vadd.f32 %v929, %v1152
      %v1186 = vadd.f32 %v930, %v1156
      %v1187 = vadd.f32 %v931, %v1158
      %v1188 = vadd.f32 %v932, %v1160
      %v1189 = vadd.f32 %v933, %v1162
      %v1190 = vadd.f32 %v934, %v1166
      %v1191 = vadd.f32 %v935, %v1168
      %v1192 = vadd.f32 %v936, %v1170
      %v1193 = vadd.f32 %v937, %v1172
      %v1194 = vld [vmem:[%s187 + $0xa4] sm:$0xe]
      %v1195 = vld [vmem:[%s187 + $0xa8] sm:$0xf]
      %v1196 = vld [vmem:[%s187 + $0xac] sm:$0xf]
      %v1197 = vld [vmem:[%s187 + $0xb0] sm:$0xf]
      %v1198 = vld [vmem:[%s187 + $0xb4] sm:$0xf]
      %v1199 = vld [vmem:[%s187 + $0xb8] sm:$0xf]
      %v1200 = vld [vmem:[%s187 + $0xbc] sm:$0xf]
      %v1201 = vld [vmem:[%s187 + $0xc0] sm:$0xf]
      %v1202 = vld [vmem:[%s187 + $0xc4] sm:$0xf]
      %v1203 = vld [vmem:[%s187 + $0xc8] sm:$0xf]
      %v1204 = vld [vmem:[%s187 + $0xcc] sm:$0x1]
      %s1205 = scalar_lea.vmem %s1, 512
      %v1206 = vld [vmem:[%s1205] sm:$0xff]
      %v1207 = vld [vmem:[%s1205 + $0x8] sm:$0xff]
      %v1208 = vld [vmem:[%s1205 + $0x10] sm:$0xff]
      %v1209 = vld [vmem:[%s1205 + $0x18] sm:$0xff]
      %v1210 = vld [vmem:[%s1205 + $0x20] sm:$0xff]
      %v1211 = vld [vmem:[%s1205 + $0x28] sm:$0xff]
      %v1212 = vld [vmem:[%s1205 + $0x30] sm:$0xff]
      %v1213 = vld [vmem:[%s1205 + $0x38] sm:$0xff]
      %v1214 = vld [vmem:[%s1205 + $0x40] sm:$0xff]
      %v1215 = vld [vmem:[%s1205 + $0x48] sm:$0xff]
      %v1216 = vld [vmem:[%s1205 + $0x50] sm:$0xff]
      %v1217 = vld [vmem:[%s1205 + $0x58] sm:$0xff]
      %v1218 = vld [vmem:[%s1205 + $0x60] sm:$0xff]
      %v1219 = vld [vmem:[%s1205 + $0x68] sm:$0xff]
      %v1220 = vld [vmem:[%s1205 + $0x70] sm:$0xff]
      %v1221 = vld [vmem:[%s1205 + $0x78] sm:$0xff]
      %v1233 = vunpack.c.l.b16 %v1194
      %v1234 = vunpack.c.l.b16 %v1195
      %v1235 = vunpack.c.l.b16 %v1196
      %v1236 = vunpack.c.l.b16 %v1197
      %v1237 = vunpack.c.l.b16 %v1198
      %v1238 = vunpack.c.l.b16 %v1199
      %v1239 = vunpack.c.l.b16 %v1200
      %v1240 = vunpack.c.l.b16 %v1201
      %v1241 = vunpack.c.l.b16 %v1202
      %v1242 = vunpack.c.l.b16 %v1203
      %v1243 = vunpack.c.l.b16 %v1204
      %v1244 = vpack.c.b16 %v1234, %v1233
      %v1245 = vpack.c.b16 %v1236, %v1235
      %v1246 = vpack.c.b16 %v1238, %v1237
      %v1247 = vpack.c.b16 %v1240, %v1239
      %v1248 = vpack.c.b16 %v1242, %v1241
      %v1249 = vpack.c.b16 %v1243, %v1243
      %vm1250 = vcmask 1046528
      %v1251 = vrot.slane %v1244, 1
      %v1252 = vrot.slane %v1245, 1
      %v1253 = vsel %vm1250, %v1251, %v1252
      %v1254 = vrot.slane %v1246, 1
      %v1255 = vsel %vm1250, %v1252, %v1254
      %v1256 = vrot.slane %v1247, 1
      %v1257 = vsel %vm1250, %v1254, %v1256
      %v1258 = vrot.slane %v1248, 1
      %v1259 = vsel %vm1250, %v1256, %v1258
      %v1260 = vrot.slane %v1249, 1
      %v1261 = vsel %vm1250, %v1258, %v1260
      %v1283 = vunpack.c.l.b16 %v1206
      %v1284 = vunpack.c.h.b16 %v1206
      %v1285 = vunpack.c.l.b16 %v1207
      %v1286 = vunpack.c.h.b16 %v1207
      %v1287 = vunpack.c.l.b16 %v1208
      %v1288 = vunpack.c.h.b16 %v1208
      %v1289 = vunpack.c.l.b16 %v1209
      %v1290 = vunpack.c.h.b16 %v1209
      %v1291 = vunpack.c.l.b16 %v1210
      %v1292 = vunpack.c.h.b16 %v1210
      %v1293 = vunpack.c.l.b16 %v1211
      %v1294 = vunpack.c.h.b16 %v1211
      %v1295 = vunpack.c.l.b16 %v1212
      %v1296 = vunpack.c.h.b16 %v1212
      %v1297 = vunpack.c.l.b16 %v1213
      %v1298 = vunpack.c.h.b16 %v1213
      %v1299 = vunpack.c.l.b16 %v1214
      %v1300 = vunpack.c.h.b16 %v1214
      %v1301 = vunpack.c.l.b16 %v1215
      %v1302 = vunpack.c.h.b16 %v1215
      %v1303 = vunpack.c.l.b16 %v1216
      %v1304 = vunpack.c.h.b16 %v1216
      %v1305 = vunpack.c.l.b16 %v1217
      %v1306 = vunpack.c.h.b16 %v1217
      %v1307 = vunpack.c.l.b16 %v1218
      %v1308 = vunpack.c.h.b16 %v1218
      %v1309 = vunpack.c.l.b16 %v1219
      %v1310 = vunpack.c.h.b16 %v1219
      %v1311 = vunpack.c.l.b16 %v1220
      %v1312 = vunpack.c.h.b16 %v1220
      %v1313 = vunpack.c.l.b16 %v1221
      %v1314 = vunpack.c.h.b16 %v1221
      %v1315 = vpack.c.b16 %v1285, %v1283
      %v1316 = vpack.c.b16 %v1286, %v1284
      %v1317 = vpack.c.b16 %v1289, %v1287
      %v1318 = vpack.c.b16 %v1290, %v1288
      %v1319 = vpack.c.b16 %v1293, %v1291
      %v1320 = vpack.c.b16 %v1294, %v1292
      %v1321 = vpack.c.b16 %v1297, %v1295
      %v1322 = vpack.c.b16 %v1298, %v1296
      %v1323 = vpack.c.b16 %v1301, %v1299
      %v1324 = vpack.c.b16 %v1302, %v1300
      %v1325 = vpack.c.b16 %v1305, %v1303
      %v1326 = vpack.c.b16 %v1306, %v1304
      %v1327 = vpack.c.b16 %v1309, %v1307
      %v1328 = vpack.c.b16 %v1310, %v1308
      %v1329 = vpack.c.b16 %v1313, %v1311
      %v1330 = vpack.c.b16 %v1314, %v1312
      %1347 = vmatprep.subr.bf16.mxu0 %v1316
      %1348 = vmatpush1.bf16.msra.mxu0 %v1315
      %1349 = vmatprep.subr.bf16.mxu0 %v1318
      %1350 = vmatpush1.bf16.msra.mxu0 %v1317
      %1351 = vmatprep.subr.bf16.mxu0 %v1320
      %1352 = vmatpush1.bf16.msra.mxu0 %v1319
      %1353 = vmatprep.subr.bf16.mxu0 %v1322
      %1354 = vmatpush1.bf16.msra.mxu0 %v1321
      %1355 = vmatprep.subr.bf16.mxu0 %v1324
      %1356 = vmatpush1.bf16.msra.mxu0 %v1323
      %1357 = vmatprep.subr.bf16.mxu0 %v1326
      %1358 = vmatpush1.bf16.msra.mxu0 %v1325
      %1359 = vmatprep.subr.bf16.mxu0 %v1328
      %1360 = vmatpush1.bf16.msra.mxu0 %v1327
      %1361 = vmatprep.subr.bf16.mxu0 %v1330
      %1362 = vmatpush1.bf16.msra.mxu0 %v1329
      %1363 = vmatprep.subr.bf16.mxu0 0
      %1364 = vmatpush1.bf16.msra.mxu0 0
      %1365 = vmatprep.subr.bf16.mxu0 0
      %1366 = vmatpush1.bf16.msra.mxu0 0
      %1367 = vmatprep.subr.bf16.mxu0 0
      %1368 = vmatpush1.bf16.msra.mxu0 0
      %1369 = vmatprep.subr.bf16.mxu0 0
      %1370 = vmatpush1.bf16.msra.mxu0 0
      %1371 = vmatprep.subr.bf16.mxu0 0
      %1372 = vmatpush1.bf16.msra.mxu0 0
      %1373 = vmatprep.subr.bf16.mxu0 0
      %1374 = vmatpush1.bf16.msra.mxu0 0
      %1375 = vmatprep.subr.bf16.mxu0 0
      %1376 = vmatpush1.bf16.msra.mxu0 0
      %1377 = vmatprep.subr.bf16.mxu0 0
      %1378 = vmatpush1.bf16.msra.mxu0 0
      %1379 = vmatprep.mubr.bf16.mxu0 0
      %1380 = vmatmul.mubr.bf16.gmra.mrb[0].mxu0 %v1253
      %v1381 = vpop.f32.mrb[0].mxu0
      %v1382 = vadd.f32 0.0, %v1381
      %v1383 = vpop.f32.mrb[0].mxu0
      %v1384 = vadd.f32 0.0, %v1383
      %v1385 = vpop.f32.mrb[0].mxu0
      %v1386 = vadd.f32 0.0, %v1385
      %v1387 = vpop.f32.mrb[0].mxu0
      %v1388 = vadd.f32 0.0, %v1387
      %1389 = vmatprep.mubr.bf16.mxu0 0
      %1390 = vmatmul.mubr.bf16.gmra.mrb[0].mxu0 %v1255
      %v1391 = vpop.f32.mrb[0].mxu0
      %v1392 = vadd.f32 0.0, %v1391
      %v1393 = vpop.f32.mrb[0].mxu0
      %v1394 = vadd.f32 0.0, %v1393
      %v1395 = vpop.f32.mrb[0].mxu0
      %v1396 = vadd.f32 0.0, %v1395
      %v1397 = vpop.f32.mrb[0].mxu0
      %v1398 = vadd.f32 0.0, %v1397
      %1399 = vmatprep.mubr.bf16.mxu0 0
      %1400 = vmatmul.mubr.bf16.gmra.mrb[0].mxu0 %v1257
      %v1401 = vpop.f32.mrb[0].mxu0
      %v1402 = vadd.f32 0.0, %v1401
      %v1403 = vpop.f32.mrb[0].mxu0
      %v1404 = vadd.f32 0.0, %v1403
      %v1405 = vpop.f32.mrb[0].mxu0
      %v1406 = vadd.f32 0.0, %v1405
      %v1407 = vpop.f32.mrb[0].mxu0
      %v1408 = vadd.f32 0.0, %v1407
      %1409 = vmatprep.mubr.bf16.mxu0 0
      %1410 = vmatmul.mubr.bf16.gmra.mrb[0].mxu0 %v1259
      %v1411 = vpop.f32.mrb[0].mxu0
      %v1412 = vadd.f32 0.0, %v1411
      %v1413 = vpop.f32.mrb[0].mxu0
      %v1414 = vadd.f32 0.0, %v1413
      %v1415 = vpop.f32.mrb[0].mxu0
      %v1416 = vadd.f32 0.0, %v1415
      %v1417 = vpop.f32.mrb[0].mxu0
      %v1418 = vadd.f32 0.0, %v1417
      %1419 = vmatprep.mubr.bf16.mxu0 0
      %1420 = vmatmul.mubr.bf16.gmra.mrb[0].mxu0 %v1261
      %v1421 = vpop.f32.mrb[0].mxu0
      %v1422 = vadd.f32 0.0, %v1421
      %v1423 = vpop.f32.mrb[0].mxu0
      %v1424 = vadd.f32 0.0, %v1423
      %v1425 = vpop.f32.mrb[0].mxu0
      %v1426 = vadd.f32 0.0, %v1425
      %v1427 = vpop.f32.mrb[0].mxu0
      %v1428 = vadd.f32 0.0, %v1427
      %1429 = vdwg.mxu0
      %v1430 = vadd.f32 %v1174, %v1382
      %v1431 = vadd.f32 %v1175, %v1384
      %v1432 = vadd.f32 %v1176, %v1386
      %v1433 = vadd.f32 %v1177, %v1388
      %v1434 = vadd.f32 %v1178, %v1392
      %v1435 = vadd.f32 %v1179, %v1394
      %v1436 = vadd.f32 %v1180, %v1396
      %v1437 = vadd.f32 %v1181, %v1398
      %v1438 = vadd.f32 %v1182, %v1402
      %v1439 = vadd.f32 %v1183, %v1404
      %v1440 = vadd.f32 %v1184, %v1406
      %v1441 = vadd.f32 %v1185, %v1408
      %v1442 = vadd.f32 %v1186, %v1412
      %v1443 = vadd.f32 %v1187, %v1414
      %v1444 = vadd.f32 %v1188, %v1416
      %v1445 = vadd.f32 %v1189, %v1418
      %v1446 = vadd.f32 %v1190, %v1422
      %v1447 = vadd.f32 %v1191, %v1424
      %v1448 = vadd.f32 %v1192, %v1426
      %v1449 = vadd.f32 %v1193, %v1428
      %v1450 = vld [vmem:[%s187 + $0x94] sm:$0x7]
      %s1451 = scalar_lea.vmem %s1, 640
      %v1452 = vld [vmem:[%s1451] sm:$0xff]
      %v1453 = vld [vmem:[%s1451 + $0x8] sm:$0xff]
      %v1454 = vld [vmem:[%s1451 + $0x10] sm:$0xff]
      %v1455 = vld [vmem:[%s1451 + $0x18] sm:$0xff]
      %v1456 = vld [vmem:[%s1451 + $0x20] sm:$0xff]
      %v1457 = vld [vmem:[%s1451 + $0x28] sm:$0xff]
      %v1458 = vld [vmem:[%s1451 + $0x30] sm:$0xff]
      %v1459 = vld [vmem:[%s1451 + $0x38] sm:$0xff]
      %v1460 = vld [vmem:[%s1451 + $0x40] sm:$0xff]
      %v1461 = vld [vmem:[%s1451 + $0x48] sm:$0xff]
      %v1462 = vld [vmem:[%s1451 + $0x50] sm:$0xff]
      %v1463 = vld [vmem:[%s1451 + $0x58] sm:$0xff]
      %v1464 = vld [vmem:[%s1451 + $0x60] sm:$0xff]
      %v1465 = vld [vmem:[%s1451 + $0x68] sm:$0xff]
      %v1466 = vld [vmem:[%s1451 + $0x70] sm:$0xff]
      %v1467 = vld [vmem:[%s1451 + $0x78] sm:$0xff]
      %v1469 = vunpack.c.l.b16 %v1450
      %v1470 = vpack.c.b16 %v1469, %v1469
      %vm1471 = vsmask.f32 5376
      %v1473 = vshrl.u32 %v988, 16
      %v1475 = vrot.slane %v1473, 2
      %v1476 = vshll.u32 %v988, 16
      %v1478 = vrot.slane %v1476, 3
      %v1479 = vor.u32 %v1475, %v1478
      %v1481 = vshrl.u32 %v989, 16
      %v1483 = vrot.slane %v1481, 2
      %v1484 = vshll.u32 %v989, 16
      %v1486 = vrot.slane %v1484, 3
      %v1487 = vor.u32 %v1483, %v1486
      %v1488 = vsel %vm1471, %v1479, %v1487
      %v1490 = vshrl.u32 %v990, 16
      %v1492 = vrot.slane %v1490, 2
      %v1493 = vshll.u32 %v990, 16
      %v1495 = vrot.slane %v1493, 3
      %v1496 = vor.u32 %v1492, %v1495
      %v1497 = vsel %vm1471, %v1487, %v1496
      %v1499 = vshrl.u32 %v991, 16
      %v1501 = vrot.slane %v1499, 2
      %v1502 = vshll.u32 %v991, 16
      %v1504 = vrot.slane %v1502, 3
      %v1505 = vor.u32 %v1501, %v1504
      %v1506 = vsel %vm1471, %v1496, %v1505
      %v1508 = vshrl.u32 %v992, 16
      %v1510 = vrot.slane %v1508, 2
      %v1511 = vshll.u32 %v992, 16
      %v1513 = vrot.slane %v1511, 3
      %v1514 = vor.u32 %v1510, %v1513
      %v1515 = vsel %vm1471, %v1505, %v1514
      %v1517 = vshrl.u32 %v1470, 16
      %v1519 = vrot.slane %v1517, 2
      %v1520 = vshll.u32 %v1470, 16
      %v1522 = vrot.slane %v1520, 3
      %v1523 = vor.u32 %v1519, %v1522
      %v1524 = vsel %vm1471, %v1514, %v1523
      %v1546 = vunpack.c.l.b16 %v1452
      %v1547 = vunpack.c.h.b16 %v1452
      %v1548 = vunpack.c.l.b16 %v1453
      %v1549 = vunpack.c.h.b16 %v1453
      %v1550 = vunpack.c.l.b16 %v1454
      %v1551 = vunpack.c.h.b16 %v1454
      %v1552 = vunpack.c.l.b16 %v1455
      %v1553 = vunpack.c.h.b16 %v1455
      %v1554 = vunpack.c.l.b16 %v1456
      %v1555 = vunpack.c.h.b16 %v1456
      %v1556 = vunpack.c.l.b16 %v1457
      %v1557 = vunpack.c.h.b16 %v1457
      %v1558 = vunpack.c.l.b16 %v1458
      %v1559 = vunpack.c.h.b16 %v1458
      %v1560 = vunpack.c.l.b16 %v1459
      %v1561 = vunpack.c.h.b16 %v1459
      %v1562 = vunpack.c.l.b16 %v1460
      %v1563 = vunpack.c.h.b16 %v1460
      %v1564 = vunpack.c.l.b16 %v1461
      %v1565 = vunpack.c.h.b16 %v1461
      %v1566 = vunpack.c.l.b16 %v1462
      %v1567 = vunpack.c.h.b16 %v1462
      %v1568 = vunpack.c.l.b16 %v1463
      %v1569 = vunpack.c.h.b16 %v1463
      %v1570 = vunpack.c.l.b16 %v1464
      %v1571 = vunpack.c.h.b16 %v1464
      %v1572 = vunpack.c.l.b16 %v1465
      %v1573 = vunpack.c.h.b16 %v1465
      %v1574 = vunpack.c.l.b16 %v1466
      %v1575 = vunpack.c.h.b16 %v1466
      %v1576 = vunpack.c.l.b16 %v1467
      %v1577 = vunpack.c.h.b16 %v1467
      %v1578 = vpack.c.b16 %v1548, %v1546
      %v1579 = vpack.c.b16 %v1549, %v1547
      %v1580 = vpack.c.b16 %v1552, %v1550
      %v1581 = vpack.c.b16 %v1553, %v1551
      %v1582 = vpack.c.b16 %v1556, %v1554
      %v1583 = vpack.c.b16 %v1557, %v1555
      %v1584 = vpack.c.b16 %v1560, %v1558
      %v1585 = vpack.c.b16 %v1561, %v1559
      %v1586 = vpack.c.b16 %v1564, %v1562
      %v1587 = vpack.c.b16 %v1565, %v1563
      %v1588 = vpack.c.b16 %v1568, %v1566
      %v1589 = vpack.c.b16 %v1569, %v1567
      %v1590 = vpack.c.b16 %v1572, %v1570
      %v1591 = vpack.c.b16 %v1573, %v1571
      %v1592 = vpack.c.b16 %v1576, %v1574
      %v1593 = vpack.c.b16 %v1577, %v1575
      %1610 = vmatprep.subr.bf16.mxu0 %v1579
      %1611 = vmatpush1.bf16.msra.mxu0 %v1578
      %1612 = vmatprep.subr.bf16.mxu0 %v1581
      %1613 = vmatpush1.bf16.msra.mxu0 %v1580
      %1614 = vmatprep.subr.bf16.mxu0 %v1583
      %1615 = vmatpush1.bf16.msra.mxu0 %v1582
      %1616 = vmatprep.subr.bf16.mxu0 %v1585
      %1617 = vmatpush1.bf16.msra.mxu0 %v1584
      %1618 = vmatprep.subr.bf16.mxu0 %v1587
      %1619 = vmatpush1.bf16.msra.mxu0 %v1586
      %1620 = vmatprep.subr.bf16.mxu0 %v1589
      %1621 = vmatpush1.bf16.msra.mxu0 %v1588
      %1622 = vmatprep.subr.bf16.mxu0 %v1591
      %1623 = vmatpush1.bf16.msra.mxu0 %v1590
      %1624 = vmatprep.subr.bf16.mxu0 %v1593
      %1625 = vmatpush1.bf16.msra.mxu0 %v1592
      %1626 = vmatprep.subr.bf16.mxu0 0
      %1627 = vmatpush1.bf16.msra.mxu0 0
      %1628 = vmatprep.subr.bf16.mxu0 0
      %1629 = vmatpush1.bf16.msra.mxu0 0
      %1630 = vmatprep.subr.bf16.mxu0 0
      %1631 = vmatpush1.bf16.msra.mxu0 0
      %1632 = vmatprep.subr.bf16.mxu0 0
      %1633 = vmatpush1.bf16.msra.mxu0 0
      %1634 = vmatprep.subr.bf16.mxu0 0
      %1635 = vmatpush1.bf16.msra.mxu0 0
      %1636 = vmatprep.subr.bf16.mxu0 0
      %1637 = vmatpush1.bf16.msra.mxu0 0
      %1638 = vmatprep.subr.bf16.mxu0 0
      %1639 = vmatpush1.bf16.msra.mxu0 0
      %1640 = vmatprep.subr.bf16.mxu0 0
      %1641 = vmatpush1.bf16.msra.mxu0 0
      %1642 = vmatprep.mubr.bf16.mxu0 0
      %1643 = vmatmul.mubr.bf16.gmra.mrb[0].mxu0 %v1488
      %v1644 = vpop.f32.mrb[0].mxu0
      %v1645 = vadd.f32 0.0, %v1644
      %v1646 = vpop.f32.mrb[0].mxu0
      %v1647 = vadd.f32 0.0, %v1646
      %v1648 = vpop.f32.mrb[0].mxu0
      %v1649 = vadd.f32 0.0, %v1648
      %v1650 = vpop.f32.mrb[0].mxu0
      %v1651 = vadd.f32 0.0, %v1650
      %1652 = vmatprep.mubr.bf16.mxu0 0
      %1653 = vmatmul.mubr.bf16.gmra.mrb[0].mxu0 %v1497
      %v1654 = vpop.f32.mrb[0].mxu0
      %v1655 = vadd.f32 0.0, %v1654
      %v1656 = vpop.f32.mrb[0].mxu0
      %v1657 = vadd.f32 0.0, %v1656
      %v1658 = vpop.f32.mrb[0].mxu0
      %v1659 = vadd.f32 0.0, %v1658
      %v1660 = vpop.f32.mrb[0].mxu0
      %v1661 = vadd.f32 0.0, %v1660
      %1662 = vmatprep.mubr.bf16.mxu0 0
      %1663 = vmatmul.mubr.bf16.gmra.mrb[0].mxu0 %v1506
      %v1664 = vpop.f32.mrb[0].mxu0
      %v1665 = vadd.f32 0.0, %v1664
      %v1666 = vpop.f32.mrb[0].mxu0
      %v1667 = vadd.f32 0.0, %v1666
      %v1668 = vpop.f32.mrb[0].mxu0
      %v1669 = vadd.f32 0.0, %v1668
      %v1670 = vpop.f32.mrb[0].mxu0
      %v1671 = vadd.f32 0.0, %v1670
      %1672 = vmatprep.mubr.bf16.mxu0 0
      %1673 = vmatmul.mubr.bf16.gmra.mrb[0].mxu0 %v1515
      %v1674 = vpop.f32.mrb[0].mxu0
      %v1675 = vadd.f32 0.0, %v1674
      %v1676 = vpop.f32.mrb[0].mxu0
      %v1677 = vadd.f32 0.0, %v1676
      %v1678 = vpop.f32.mrb[0].mxu0
      %v1679 = vadd.f32 0.0, %v1678
      %v1680 = vpop.f32.mrb[0].mxu0
      %v1681 = vadd.f32 0.0, %v1680
      %1682 = vmatprep.mubr.bf16.mxu0 0
      %1683 = vmatmul.mubr.bf16.gmra.mrb[0].mxu0 %v1524
      %v1684 = vpop.f32.mrb[0].mxu0
      %v1685 = vadd.f32 0.0, %v1684
      %v1686 = vpop.f32.mrb[0].mxu0
      %v1687 = vadd.f32 0.0, %v1686
      %v1688 = vpop.f32.mrb[0].mxu0
      %v1689 = vadd.f32 0.0, %v1688
      %v1690 = vpop.f32.mrb[0].mxu0
      %v1691 = vadd.f32 0.0, %v1690
      %1692 = vdwg.mxu0
      %v1693 = vadd.f32 %v1430, %v1645
      %v1694 = vadd.f32 %v1431, %v1647
      %v1695 = vadd.f32 %v1432, %v1649
      %v1696 = vadd.f32 %v1433, %v1651
      %v1697 = vadd.f32 %v1434, %v1655
      %v1698 = vadd.f32 %v1435, %v1657
      %v1699 = vadd.f32 %v1436, %v1659
      %v1700 = vadd.f32 %v1437, %v1661
      %v1701 = vadd.f32 %v1438, %v1665
      %v1702 = vadd.f32 %v1439, %v1667
      %v1703 = vadd.f32 %v1440, %v1669
      %v1704 = vadd.f32 %v1441, %v1671
      %v1705 = vadd.f32 %v1442, %v1675
      %v1706 = vadd.f32 %v1443, %v1677
      %v1707 = vadd.f32 %v1444, %v1679
      %v1708 = vadd.f32 %v1445, %v1681
      %v1709 = vadd.f32 %v1446, %v1685
      %v1710 = vadd.f32 %v1447, %v1687
      %v1711 = vadd.f32 %v1448, %v1689
      %v1712 = vadd.f32 %v1449, %v1691
      %v1713 = vld [vmem:[%s187 + $0x4] sm:$0xe]
      %v1714 = vld [vmem:[%s187 + $0x8] sm:$0xf]
      %v1715 = vld [vmem:[%s187 + $0xc] sm:$0xf]
      %v1716 = vld [vmem:[%s187 + $0x10] sm:$0xf]
      %v1717 = vld [vmem:[%s187 + $0x14] sm:$0xf]
      %v1718 = vld [vmem:[%s187 + $0x18] sm:$0xf]
      %v1719 = vld [vmem:[%s187 + $0x1c] sm:$0xf]
      %v1720 = vld [vmem:[%s187 + $0x20] sm:$0xf]
      %v1721 = vld [vmem:[%s187 + $0x24] sm:$0xf]
      %v1722 = vld [vmem:[%s187 + $0x28] sm:$0xf]
      %v1723 = vld [vmem:[%s187 + $0x2c] sm:$0x1]
      %s1724 = scalar_lea.vmem %s1, 768
      %v1725 = vld [vmem:[%s1724] sm:$0xff]
      %v1726 = vld [vmem:[%s1724 + $0x8] sm:$0xff]
      %v1727 = vld [vmem:[%s1724 + $0x10] sm:$0xff]
      %v1728 = vld [vmem:[%s1724 + $0x18] sm:$0xff]
      %v1729 = vld [vmem:[%s1724 + $0x20] sm:$0xff]
      %v1730 = vld [vmem:[%s1724 + $0x28] sm:$0xff]
      %v1731 = vld [vmem:[%s1724 + $0x30] sm:$0xff]
      %v1732 = vld [vmem:[%s1724 + $0x38] sm:$0xff]
      %v1733 = vld [vmem:[%s1724 + $0x40] sm:$0xff]
      %v1734 = vld [vmem:[%s1724 + $0x48] sm:$0xff]
      %v1735 = vld [vmem:[%s1724 + $0x50] sm:$0xff]
      %v1736 = vld [vmem:[%s1724 + $0x58] sm:$0xff]
      %v1737 = vld [vmem:[%s1724 + $0x60] sm:$0xff]
      %v1738 = vld [vmem:[%s1724 + $0x68] sm:$0xff]
      %v1739 = vld [vmem:[%s1724 + $0x70] sm:$0xff]
      %v1740 = vld [vmem:[%s1724 + $0x78] sm:$0xff]
      %v1752 = vunpack.c.l.b16 %v1713
      %v1753 = vunpack.c.l.b16 %v1714
      %v1754 = vunpack.c.l.b16 %v1715
      %v1755 = vunpack.c.l.b16 %v1716
      %v1756 = vunpack.c.l.b16 %v1717
      %v1757 = vunpack.c.l.b16 %v1718
      %v1758 = vunpack.c.l.b16 %v1719
      %v1759 = vunpack.c.l.b16 %v1720
      %v1760 = vunpack.c.l.b16 %v1721
      %v1761 = vunpack.c.l.b16 %v1722
      %v1762 = vunpack.c.l.b16 %v1723
      %v1763 = vpack.c.b16 %v1753, %v1752
      %v1764 = vpack.c.b16 %v1755, %v1754
      %v1765 = vpack.c.b16 %v1757, %v1756
      %v1766 = vpack.c.b16 %v1759, %v1758
      %v1767 = vpack.c.b16 %v1761, %v1760
      %v1768 = vpack.c.b16 %v1762, %v1762
      %v1769 = vrot.slane %v1763, 1
      %v1770 = vrot.slane %v1764, 1
      %v1771 = vsel %vm1250, %v1769, %v1770
      %v1772 = vrot.slane %v1765, 1
      %v1773 = vsel %vm1250, %v1770, %v1772
      %v1774 = vrot.slane %v1766, 1
      %v1775 = vsel %vm1250, %v1772, %v1774
      %v1776 = vrot.slane %v1767, 1
      %v1777 = vsel %vm1250, %v1774, %v1776
      %v1778 = vrot.slane %v1768, 1
      %v1779 = vsel %vm1250, %v1776, %v1778
      %v1801 = vunpack.c.l.b16 %v1725
      %v1802 = vunpack.c.h.b16 %v1725
      %v1803 = vunpack.c.l.b16 %v1726
      %v1804 = vunpack.c.h.b16 %v1726
      %v1805 = vunpack.c.l.b16 %v1727
      %v1806 = vunpack.c.h.b16 %v1727
      %v1807 = vunpack.c.l.b16 %v1728
      %v1808 = vunpack.c.h.b16 %v1728
      %v1809 = vunpack.c.l.b16 %v1729
      %v1810 = vunpack.c.h.b16 %v1729
      %v1811 = vunpack.c.l.b16 %v1730
      %v1812 = vunpack.c.h.b16 %v1730
      %v1813 = vunpack.c.l.b16 %v1731
      %v1814 = vunpack.c.h.b16 %v1731
      %v1815 = vunpack.c.l.b16 %v1732
      %v1816 = vunpack.c.h.b16 %v1732
      %v1817 = vunpack.c.l.b16 %v1733
      %v1818 = vunpack.c.h.b16 %v1733
      %v1819 = vunpack.c.l.b16 %v1734
      %v1820 = vunpack.c.h.b16 %v1734
      %v1821 = vunpack.c.l.b16 %v1735
      %v1822 = vunpack.c.h.b16 %v1735
      %v1823 = vunpack.c.l.b16 %v1736
      %v1824 = vunpack.c.h.b16 %v1736
      %v1825 = vunpack.c.l.b16 %v1737
      %v1826 = vunpack.c.h.b16 %v1737
      %v1827 = vunpack.c.l.b16 %v1738
      %v1828 = vunpack.c.h.b16 %v1738
      %v1829 = vunpack.c.l.b16 %v1739
      %v1830 = vunpack.c.h.b16 %v1739
      %v1831 = vunpack.c.l.b16 %v1740
      %v1832 = vunpack.c.h.b16 %v1740
      %v1833 = vpack.c.b16 %v1803, %v1801
      %v1834 = vpack.c.b16 %v1804, %v1802
      %v1835 = vpack.c.b16 %v1807, %v1805
      %v1836 = vpack.c.b16 %v1808, %v1806
      %v1837 = vpack.c.b16 %v1811, %v1809
      %v1838 = vpack.c.b16 %v1812, %v1810
      %v1839 = vpack.c.b16 %v1815, %v1813
      %v1840 = vpack.c.b16 %v1816, %v1814
      %v1841 = vpack.c.b16 %v1819, %v1817
      %v1842 = vpack.c.b16 %v1820, %v1818
      %v1843 = vpack.c.b16 %v1823, %v1821
      %v1844 = vpack.c.b16 %v1824, %v1822
      %v1845 = vpack.c.b16 %v1827, %v1825
      %v1846 = vpack.c.b16 %v1828, %v1826
      %v1847 = vpack.c.b16 %v1831, %v1829
      %v1848 = vpack.c.b16 %v1832, %v1830
      %1865 = vmatprep.subr.bf16.mxu0 %v1834
      %1866 = vmatpush1.bf16.msra.mxu0 %v1833
      %1867 = vmatprep.subr.bf16.mxu0 %v1836
      %1868 = vmatpush1.bf16.msra.mxu0 %v1835
      %1869 = vmatprep.subr.bf16.mxu0 %v1838
      %1870 = vmatpush1.bf16.msra.mxu0 %v1837
      %1871 = vmatprep.subr.bf16.mxu0 %v1840
      %1872 = vmatpush1.bf16.msra.mxu0 %v1839
      %1873 = vmatprep.subr.bf16.mxu0 %v1842
      %1874 = vmatpush1.bf16.msra.mxu0 %v1841
      %1875 = vmatprep.subr.bf16.mxu0 %v1844
      %1876 = vmatpush1.bf16.msra.mxu0 %v1843
      %1877 = vmatprep.subr.bf16.mxu0 %v1846
      %1878 = vmatpush1.bf16.msra.mxu0 %v1845
      %1879 = vmatprep.subr.bf16.mxu0 %v1848
      %1880 = vmatpush1.bf16.msra.mxu0 %v1847
      %1881 = vmatprep.subr.bf16.mxu0 0
      %1882 = vmatpush1.bf16.msra.mxu0 0
      %1883 = vmatprep.subr.bf16.mxu0 0
      %1884 = vmatpush1.bf16.msra.mxu0 0
      %1885 = vmatprep.subr.bf16.mxu0 0
      %1886 = vmatpush1.bf16.msra.mxu0 0
      %1887 = vmatprep.subr.bf16.mxu0 0
      %1888 = vmatpush1.bf16.msra.mxu0 0
      %1889 = vmatprep.subr.bf16.mxu0 0
      %1890 = vmatpush1.bf16.msra.mxu0 0
      %1891 = vmatprep.subr.bf16.mxu0 0
      %1892 = vmatpush1.bf16.msra.mxu0 0
      %1893 = vmatprep.subr.bf16.mxu0 0
      %1894 = vmatpush1.bf16.msra.mxu0 0
      %1895 = vmatprep.subr.bf16.mxu0 0
      %1896 = vmatpush1.bf16.msra.mxu0 0
      %1897 = vmatprep.mubr.bf16.mxu0 0
      %1898 = vmatmul.mubr.bf16.gmra.mrb[0].mxu0 %v1771
      %v1899 = vpop.f32.mrb[0].mxu0
      %v1900 = vadd.f32 0.0, %v1899
      %v1901 = vpop.f32.mrb[0].mxu0
      %v1902 = vadd.f32 0.0, %v1901
      %v1903 = vpop.f32.mrb[0].mxu0
      %v1904 = vadd.f32 0.0, %v1903
      %v1905 = vpop.f32.mrb[0].mxu0
      %v1906 = vadd.f32 0.0, %v1905
      %1907 = vmatprep.mubr.bf16.mxu0 0
      %1908 = vmatmul.mubr.bf16.gmra.mrb[0].mxu0 %v1773
      %v1909 = vpop.f32.mrb[0].mxu0
      %v1910 = vadd.f32 0.0, %v1909
      %v1911 = vpop.f32.mrb[0].mxu0
      %v1912 = vadd.f32 0.0, %v1911
      %v1913 = vpop.f32.mrb[0].mxu0
      %v1914 = vadd.f32 0.0, %v1913
      %v1915 = vpop.f32.mrb[0].mxu0
      %v1916 = vadd.f32 0.0, %v1915
      %1917 = vmatprep.mubr.bf16.mxu0 0
      %1918 = vmatmul.mubr.bf16.gmra.mrb[0].mxu0 %v1775
      %v1919 = vpop.f32.mrb[0].mxu0
      %v1920 = vadd.f32 0.0, %v1919
      %v1921 = vpop.f32.mrb[0].mxu0
      %v1922 = vadd.f32 0.0, %v1921
      %v1923 = vpop.f32.mrb[0].mxu0
      %v1924 = vadd.f32 0.0, %v1923
      %v1925 = vpop.f32.mrb[0].mxu0
      %v1926 = vadd.f32 0.0, %v1925
      %1927 = vmatprep.mubr.bf16.mxu0 0
      %1928 = vmatmul.mubr.bf16.gmra.mrb[0].mxu0 %v1777
      %v1929 = vpop.f32.mrb[0].mxu0
      %v1930 = vadd.f32 0.0, %v1929
      %v1931 = vpop.f32.mrb[0].mxu0
      %v1932 = vadd.f32 0.0, %v1931
      %v1933 = vpop.f32.mrb[0].mxu0
      %v1934 = vadd.f32 0.0, %v1933
      %v1935 = vpop.f32.mrb[0].mxu0
      %v1936 = vadd.f32 0.0, %v1935
      %1937 = vmatprep.mubr.bf16.mxu0 0
      %1938 = vmatmul.mubr.bf16.gmra.mrb[0].mxu0 %v1779
      %v1939 = vpop.f32.mrb[0].mxu0
      %v1940 = vadd.f32 0.0, %v1939
      %v1941 = vpop.f32.mrb[0].mxu0
      %v1942 = vadd.f32 0.0, %v1941
      %v1943 = vpop.f32.mrb[0].mxu0
      %v1944 = vadd.f32 0.0, %v1943
      %v1945 = vpop.f32.mrb[0].mxu0
      %v1946 = vadd.f32 0.0, %v1945
      %1947 = vdwg.mxu0
      %v1948 = vadd.f32 %v1693, %v1900
      %v1949 = vadd.f32 %v1694, %v1902
      %v1950 = vadd.f32 %v1695, %v1904
      %v1951 = vadd.f32 %v1696, %v1906
      %v1952 = vadd.f32 %v1697, %v1910
      %v1953 = vadd.f32 %v1698, %v1912
      %v1954 = vadd.f32 %v1699, %v1914
      %v1955 = vadd.f32 %v1700, %v1916
      %v1956 = vadd.f32 %v1701, %v1920
      %v1957 = vadd.f32 %v1702, %v1922
      %v1958 = vadd.f32 %v1703, %v1924
      %v1959 = vadd.f32 %v1704, %v1926
      %v1960 = vadd.f32 %v1705, %v1930
      %v1961 = vadd.f32 %v1706, %v1932
      %v1962 = vadd.f32 %v1707, %v1934
      %v1963 = vadd.f32 %v1708, %v1936
      %v1964 = vadd.f32 %v1709, %v1940
      %v1965 = vadd.f32 %v1710, %v1942
      %v1966 = vadd.f32 %v1711, %v1944
      %v1967 = vadd.f32 %v1712, %v1946
      %v1968 = vld [vmem:[%s187 + $0x3c] sm:$0xf]
      %v1969 = vld [vmem:[%s187 + $0x40] sm:$0xf]
      %v1970 = vld [vmem:[%s187 + $0x44] sm:$0xf]
      %v1971 = vld [vmem:[%s187 + $0x48] sm:$0xf]
      %v1972 = vld [vmem:[%s187 + $0x4c] sm:$0xf]
      %v1973 = vld [vmem:[%s187 + $0x50] sm:$0xf]
      %v1974 = vld [vmem:[%s187 + $0x54] sm:$0xf]
      %v1975 = vld [vmem:[%s187 + $0x58] sm:$0xf]
      %v1976 = vld [vmem:[%s187 + $0x5c] sm:$0xf]
      %v1977 = vld [vmem:[%s187 + $0x60] sm:$0xf]
      %s1978 = scalar_lea.vmem %s1, 896
      %v1979 = vld [vmem:[%s1978] sm:$0xff]
      %v1980 = vld [vmem:[%s1978 + $0x8] sm:$0xff]
      %v1981 = vld [vmem:[%s1978 + $0x10] sm:$0xff]
      %v1982 = vld [vmem:[%s1978 + $0x18] sm:$0xff]
      %v1983 = vld [vmem:[%s1978 + $0x20] sm:$0xff]
      %v1984 = vld [vmem:[%s1978 + $0x28] sm:$0xff]
      %v1985 = vld [vmem:[%s1978 + $0x30] sm:$0xff]
      %v1986 = vld [vmem:[%s1978 + $0x38] sm:$0xff]
      %v1987 = vld [vmem:[%s1978 + $0x40] sm:$0xff]
      %v1988 = vld [vmem:[%s1978 + $0x48] sm:$0xff]
      %v1989 = vld [vmem:[%s1978 + $0x50] sm:$0xff]
      %v1990 = vld [vmem:[%s1978 + $0x58] sm:$0xff]
      %v1991 = vld [vmem:[%s1978 + $0x60] sm:$0xff]
      %v1992 = vld [vmem:[%s1978 + $0x68] sm:$0xff]
      %v1993 = vld [vmem:[%s1978 + $0x70] sm:$0xff]
      %v1994 = vld [vmem:[%s1978 + $0x78] sm:$0xff]
      %v2005 = vunpack.c.l.b16 %v1968
      %v2006 = vunpack.c.l.b16 %v1969
      %v2007 = vunpack.c.l.b16 %v1970
      %v2008 = vunpack.c.l.b16 %v1971
      %v2009 = vunpack.c.l.b16 %v1972
      %v2010 = vunpack.c.l.b16 %v1973
      %v2011 = vunpack.c.l.b16 %v1974
      %v2012 = vunpack.c.l.b16 %v1975
      %v2013 = vunpack.c.l.b16 %v1976
      %v2014 = vunpack.c.l.b16 %v1977
      %v2015 = vpack.c.b16 %v2006, %v2005
      %v2016 = vpack.c.b16 %v2008, %v2007
      %v2017 = vpack.c.b16 %v2010, %v2009
      %v2018 = vpack.c.b16 %v2012, %v2011
      %v2019 = vpack.c.b16 %v2014, %v2013
      %v2041 = vunpack.c.l.b16 %v1979
      %v2042 = vunpack.c.h.b16 %v1979
      %v2043 = vunpack.c.l.b16 %v1980
      %v2044 = vunpack.c.h.b16 %v1980
      %v2045 = vunpack.c.l.b16 %v1981
      %v2046 = vunpack.c.h.b16 %v1981
      %v2047 = vunpack.c.l.b16 %v1982
      %v2048 = vunpack.c.h.b16 %v1982
      %v2049 = vunpack.c.l.b16 %v1983
      %v2050 = vunpack.c.h.b16 %v1983
      %v2051 = vunpack.c.l.b16 %v1984
      %v2052 = vunpack.c.h.b16 %v1984
      %v2053 = vunpack.c.l.b16 %v1985
      %v2054 = vunpack.c.h.b16 %v1985
      %v2055 = vunpack.c.l.b16 %v1986
      %v2056 = vunpack.c.h.b16 %v1986
      %v2057 = vunpack.c.l.b16 %v1987
      %v2058 = vunpack.c.h.b16 %v1987
      %v2059 = vunpack.c.l.b16 %v1988
      %v2060 = vunpack.c.h.b16 %v1988
      %v2061 = vunpack.c.l.b16 %v1989
      %v2062 = vunpack.c.h.b16 %v1989
      %v2063 = vunpack.c.l.b16 %v1990
      %v2064 = vunpack.c.h.b16 %v1990
      %v2065 = vunpack.c.l.b16 %v1991
      %v2066 = vunpack.c.h.b16 %v1991
      %v2067 = vunpack.c.l.b16 %v1992
      %v2068 = vunpack.c.h.b16 %v1992
      %v2069 = vunpack.c.l.b16 %v1993
      %v2070 = vunpack.c.h.b16 %v1993
      %v2071 = vunpack.c.l.b16 %v1994
      %v2072 = vunpack.c.h.b16 %v1994
      %v2073 = vpack.c.b16 %v2043, %v2041
      %v2074 = vpack.c.b16 %v2044, %v2042
      %v2075 = vpack.c.b16 %v2047, %v2045
      %v2076 = vpack.c.b16 %v2048, %v2046
      %v2077 = vpack.c.b16 %v2051, %v2049
      %v2078 = vpack.c.b16 %v2052, %v2050
      %v2079 = vpack.c.b16 %v2055, %v2053
      %v2080 = vpack.c.b16 %v2056, %v2054
      %v2081 = vpack.c.b16 %v2059, %v2057
      %v2082 = vpack.c.b16 %v2060, %v2058
      %v2083 = vpack.c.b16 %v2063, %v2061
      %v2084 = vpack.c.b16 %v2064, %v2062
      %v2085 = vpack.c.b16 %v2067, %v2065
      %v2086 = vpack.c.b16 %v2068, %v2066
      %v2087 = vpack.c.b16 %v2071, %v2069
      %v2088 = vpack.c.b16 %v2072, %v2070
      %2105 = vmatprep.subr.bf16.mxu0 %v2074
      %2106 = vmatpush1.bf16.msra.mxu0 %v2073
      %2107 = vmatprep.subr.bf16.mxu0 %v2076
      %2108 = vmatpush1.bf16.msra.mxu0 %v2075
      %2109 = vmatprep.subr.bf16.mxu0 %v2078
      %2110 = vmatpush1.bf16.msra.mxu0 %v2077
      %2111 = vmatprep.subr.bf16.mxu0 %v2080
      %2112 = vmatpush1.bf16.msra.mxu0 %v2079
      %2113 = vmatprep.subr.bf16.mxu0 %v2082
      %2114 = vmatpush1.bf16.msra.mxu0 %v2081
      %2115 = vmatprep.subr.bf16.mxu0 %v2084
      %2116 = vmatpush1.bf16.msra.mxu0 %v2083
      %2117 = vmatprep.subr.bf16.mxu0 %v2086
      %2118 = vmatpush1.bf16.msra.mxu0 %v2085
      %2119 = vmatprep.subr.bf16.mxu0 %v2088
      %2120 = vmatpush1.bf16.msra.mxu0 %v2087
      %2121 = vmatprep.subr.bf16.mxu0 0
      %2122 = vmatpush1.bf16.msra.mxu0 0
      %2123 = vmatprep.subr.bf16.mxu0 0
      %2124 = vmatpush1.bf16.msra.mxu0 0
      %2125 = vmatprep.subr.bf16.mxu0 0
      %2126 = vmatpush1.bf16.msra.mxu0 0
      %2127 = vmatprep.subr.bf16.mxu0 0
      %2128 = vmatpush1.bf16.msra.mxu0 0
      %2129 = vmatprep.subr.bf16.mxu0 0
      %2130 = vmatpush1.bf16.msra.mxu0 0
      %2131 = vmatprep.subr.bf16.mxu0 0
      %2132 = vmatpush1.bf16.msra.mxu0 0
      %2133 = vmatprep.subr.bf16.mxu0 0
      %2134 = vmatpush1.bf16.msra.mxu0 0
      %2135 = vmatprep.subr.bf16.mxu0 0
      %2136 = vmatpush1.bf16.msra.mxu0 0
      %2137 = vmatprep.mubr.bf16.mxu0 0
      %2138 = vmatmul.mubr.bf16.gmra.mrb[0].mxu0 %v2015
      %v2139 = vpop.f32.mrb[0].mxu0
      %v2140 = vadd.f32 0.0, %v2139
      %v2141 = vpop.f32.mrb[0].mxu0
      %v2142 = vadd.f32 0.0, %v2141
      %v2143 = vpop.f32.mrb[0].mxu0
      %v2144 = vadd.f32 0.0, %v2143
      %v2145 = vpop.f32.mrb[0].mxu0
      %v2146 = vadd.f32 0.0, %v2145
      %2147 = vmatprep.mubr.bf16.mxu0 0
      %2148 = vmatmul.mubr.bf16.gmra.mrb[0].mxu0 %v2016
      %v2149 = vpop.f32.mrb[0].mxu0
      %v2150 = vadd.f32 0.0, %v2149
      %v2151 = vpop.f32.mrb[0].mxu0
      %v2152 = vadd.f32 0.0, %v2151
      %v2153 = vpop.f32.mrb[0].mxu0
      %v2154 = vadd.f32 0.0, %v2153
      %v2155 = vpop.f32.mrb[0].mxu0
      %v2156 = vadd.f32 0.0, %v2155
      %2157 = vmatprep.mubr.bf16.mxu0 0
      %2158 = vmatmul.mubr.bf16.gmra.mrb[0].mxu0 %v2017
      %v2159 = vpop.f32.mrb[0].mxu0
      %v2160 = vadd.f32 0.0, %v2159
      %v2161 = vpop.f32.mrb[0].mxu0
      %v2162 = vadd.f32 0.0, %v2161
      %v2163 = vpop.f32.mrb[0].mxu0
      %v2164 = vadd.f32 0.0, %v2163
      %v2165 = vpop.f32.mrb[0].mxu0
      %v2166 = vadd.f32 0.0, %v2165
      %2167 = vmatprep.mubr.bf16.mxu0 0
      %2168 = vmatmul.mubr.bf16.gmra.mrb[0].mxu0 %v2018
      %v2169 = vpop.f32.mrb[0].mxu0
      %v2170 = vadd.f32 0.0, %v2169
      %v2171 = vpop.f32.mrb[0].mxu0
      %v2172 = vadd.f32 0.0, %v2171
      %v2173 = vpop.f32.mrb[0].mxu0
      %v2174 = vadd.f32 0.0, %v2173
      %v2175 = vpop.f32.mrb[0].mxu0
      %v2176 = vadd.f32 0.0, %v2175
      %2177 = vmatprep.mubr.bf16.mxu0 0
      %2178 = vmatmul.mubr.bf16.gmra.mrb[0].mxu0 %v2019
      %v2179 = vpop.f32.mrb[0].mxu0
      %v2180 = vadd.f32 0.0, %v2179
      %v2181 = vpop.f32.mrb[0].mxu0
      %v2182 = vadd.f32 0.0, %v2181
      %v2183 = vpop.f32.mrb[0].mxu0
      %v2184 = vadd.f32 0.0, %v2183
      %v2185 = vpop.f32.mrb[0].mxu0
      %v2186 = vadd.f32 0.0, %v2185
      %2187 = vdwg.mxu0
      %v2188 = vadd.f32 %v1948, %v2140
      %v2189 = vadd.f32 %v1949, %v2142
      %v2190 = vadd.f32 %v1950, %v2144
      %v2191 = vadd.f32 %v1951, %v2146
      %v2192 = vadd.f32 %v1952, %v2150
      %v2193 = vadd.f32 %v1953, %v2152
      %v2194 = vadd.f32 %v1954, %v2154
      %v2195 = vadd.f32 %v1955, %v2156
      %v2196 = vadd.f32 %v1956, %v2160
      %v2197 = vadd.f32 %v1957, %v2162
      %v2198 = vadd.f32 %v1958, %v2164
      %v2199 = vadd.f32 %v1959, %v2166
      %v2200 = vadd.f32 %v1960, %v2170
      %v2201 = vadd.f32 %v1961, %v2172
      %v2202 = vadd.f32 %v1962, %v2174
      %v2203 = vadd.f32 %v1963, %v2176
      %v2204 = vadd.f32 %v1964, %v2180
      %v2205 = vadd.f32 %v1965, %v2182
      %v2206 = vadd.f32 %v1966, %v2184
      %v2207 = vadd.f32 %v1967, %v2186
      %v2208 = vld [vmem:[%s187 + $0x2c] sm:$0x3]
      %s2209 = scalar_lea.vmem %s1, 1024
      %v2210 = vld [vmem:[%s2209] sm:$0xff]
      %v2211 = vld [vmem:[%s2209 + $0x8] sm:$0xff]
      %v2212 = vld [vmem:[%s2209 + $0x10] sm:$0xff]
      %v2213 = vld [vmem:[%s2209 + $0x18] sm:$0xff]
      %v2214 = vld [vmem:[%s2209 + $0x20] sm:$0xff]
      %v2215 = vld [vmem:[%s2209 + $0x28] sm:$0xff]
      %v2216 = vld [vmem:[%s2209 + $0x30] sm:$0xff]
      %v2217 = vld [vmem:[%s2209 + $0x38] sm:$0xff]
      %v2218 = vld [vmem:[%s2209 + $0x40] sm:$0xff]
      %v2219 = vld [vmem:[%s2209 + $0x48] sm:$0xff]
      %v2220 = vld [vmem:[%s2209 + $0x50] sm:$0xff]
      %v2221 = vld [vmem:[%s2209 + $0x58] sm:$0xff]
      %v2222 = vld [vmem:[%s2209 + $0x60] sm:$0xff]
      %v2223 = vld [vmem:[%s2209 + $0x68] sm:$0xff]
      %v2224 = vld [vmem:[%s2209 + $0x70] sm:$0xff]
      %v2225 = vld [vmem:[%s2209 + $0x78] sm:$0xff]
      %v2227 = vunpack.c.l.b16 %v2208
      %v2228 = vpack.c.b16 %v2227, %v2227
      %vm2229 = vsmask.f32 6400
      %v2231 = vshrl.u32 %v1763, 16
      %v2233 = vrot.slane %v2231, 1
      %v2234 = vshll.u32 %v1763, 16
      %v2236 = vrot.slane %v2234, 2
      %v2237 = vor.u32 %v2233, %v2236
      %v2239 = vshrl.u32 %v1764, 16
      %v2241 = vrot.slane %v2239, 1
      %v2242 = vshll.u32 %v1764, 16
      %v2244 = vrot.slane %v2242, 2
      %v2245 = vor.u32 %v2241, %v2244
      %v2246 = vsel %vm2229, %v2237, %v2245
      %v2248 = vshrl.u32 %v1765, 16
      %v2250 = vrot.slane %v2248, 1
      %v2251 = vshll.u32 %v1765, 16
      %v2253 = vrot.slane %v2251, 2
      %v2254 = vor.u32 %v2250, %v2253
      %v2255 = vsel %vm2229, %v2245, %v2254
      %v2257 = vshrl.u32 %v1766, 16
      %v2259 = vrot.slane %v2257, 1
      %v2260 = vshll.u32 %v1766, 16
      %v2262 = vrot.slane %v2260, 2
      %v2263 = vor.u32 %v2259, %v2262
      %v2264 = vsel %vm2229, %v2254, %v2263
      %v2266 = vshrl.u32 %v1767, 16
      %v2268 = vrot.slane %v2266, 1
      %v2269 = vshll.u32 %v1767, 16
      %v2271 = vrot.slane %v2269, 2
      %v2272 = vor.u32 %v2268, %v2271
      %v2273 = vsel %vm2229, %v2263, %v2272
      %v2275 = vshrl.u32 %v2228, 16
      %v2277 = vrot.slane %v2275, 1
      %v2278 = vshll.u32 %v2228, 16
      %v2280 = vrot.slane %v2278, 2
      %v2281 = vor.u32 %v2277, %v2280
      %v2282 = vsel %vm2229, %v2272, %v2281
      %v2304 = vunpack.c.l.b16 %v2210
      %v2305 = vunpack.c.h.b16 %v2210
      %v2306 = vunpack.c.l.b16 %v2211
      %v2307 = vunpack.c.h.b16 %v2211
      %v2308 = vunpack.c.l.b16 %v2212
      %v2309 = vunpack.c.h.b16 %v2212
      %v2310 = vunpack.c.l.b16 %v2213
      %v2311 = vunpack.c.h.b16 %v2213
      %v2312 = vunpack.c.l.b16 %v2214
      %v2313 = vunpack.c.h.b16 %v2214
      %v2314 = vunpack.c.l.b16 %v2215
      %v2315 = vunpack.c.h.b16 %v2215
      %v2316 = vunpack.c.l.b16 %v2216
      %v2317 = vunpack.c.h.b16 %v2216
      %v2318 = vunpack.c.l.b16 %v2217
      %v2319 = vunpack.c.h.b16 %v2217
      %v2320 = vunpack.c.l.b16 %v2218
      %v2321 = vunpack.c.h.b16 %v2218
      %v2322 = vunpack.c.l.b16 %v2219
      %v2323 = vunpack.c.h.b16 %v2219
      %v2324 = vunpack.c.l.b16 %v2220
      %v2325 = vunpack.c.h.b16 %v2220
      %v2326 = vunpack.c.l.b16 %v2221
      %v2327 = vunpack.c.h.b16 %v2221
      %v2328 = vunpack.c.l.b16 %v2222
      %v2329 = vunpack.c.h.b16 %v2222
      %v2330 = vunpack.c.l.b16 %v2223
      %v2331 = vunpack.c.h.b16 %v2223
      %v2332 = vunpack.c.l.b16 %v2224
      %v2333 = vunpack.c.h.b16 %v2224
      %v2334 = vunpack.c.l.b16 %v2225
      %v2335 = vunpack.c.h.b16 %v2225
      %v2336 = vpack.c.b16 %v2306, %v2304
      %v2337 = vpack.c.b16 %v2307, %v2305
      %v2338 = vpack.c.b16 %v2310, %v2308
      %v2339 = vpack.c.b16 %v2311, %v2309
      %v2340 = vpack.c.b16 %v2314, %v2312
      %v2341 = vpack.c.b16 %v2315, %v2313
      %v2342 = vpack.c.b16 %v2318, %v2316
      %v2343 = vpack.c.b16 %v2319, %v2317
      %v2344 = vpack.c.b16 %v2322, %v2320
      %v2345 = vpack.c.b16 %v2323, %v2321
      %v2346 = vpack.c.b16 %v2326, %v2324
      %v2347 = vpack.c.b16 %v2327, %v2325
      %v2348 = vpack.c.b16 %v2330, %v2328
      %v2349 = vpack.c.b16 %v2331, %v2329
      %v2350 = vpack.c.b16 %v2334, %v2332
      %v2351 = vpack.c.b16 %v2335, %v2333
      %2368 = vmatprep.subr.bf16.mxu0 %v2337
      %2369 = vmatpush1.bf16.msra.mxu0 %v2336
      %2370 = vmatprep.subr.bf16.mxu0 %v2339
      %2371 = vmatpush1.bf16.msra.mxu0 %v2338
      %2372 = vmatprep.subr.bf16.mxu0 %v2341
      %2373 = vmatpush1.bf16.msra.mxu0 %v2340
      %2374 = vmatprep.subr.bf16.mxu0 %v2343
      %2375 = vmatpush1.bf16.msra.mxu0 %v2342
      %2376 = vmatprep.subr.bf16.mxu0 %v2345
      %2377 = vmatpush1.bf16.msra.mxu0 %v2344
      %2378 = vmatprep.subr.bf16.mxu0 %v2347
      %2379 = vmatpush1.bf16.msra.mxu0 %v2346
      %2380 = vmatprep.subr.bf16.mxu0 %v2349
      %2381 = vmatpush1.bf16.msra.mxu0 %v2348
      %2382 = vmatprep.subr.bf16.mxu0 %v2351
      %2383 = vmatpush1.bf16.msra.mxu0 %v2350
      %2384 = vmatprep.subr.bf16.mxu0 0
      %2385 = vmatpush1.bf16.msra.mxu0 0
      %2386 = vmatprep.subr.bf16.mxu0 0
      %2387 = vmatpush1.bf16.msra.mxu0 0
      %2388 = vmatprep.subr.bf16.mxu0 0
      %2389 = vmatpush1.bf16.msra.mxu0 0
      %2390 = vmatprep.subr.bf16.mxu0 0
      %2391 = vmatpush1.bf16.msra.mxu0 0
      %2392 = vmatprep.subr.bf16.mxu0 0
      %2393 = vmatpush1.bf16.msra.mxu0 0
      %2394 = vmatprep.subr.bf16.mxu0 0
      %2395 = vmatpush1.bf16.msra.mxu0 0
      %2396 = vmatprep.subr.bf16.mxu0 0
      %2397 = vmatpush1.bf16.msra.mxu0 0
      %2398 = vmatprep.subr.bf16.mxu0 0
      %2399 = vmatpush1.bf16.msra.mxu0 0
      %2400 = vmatprep.mubr.bf16.mxu0 0
      %2401 = vmatmul.mubr.bf16.gmra.mrb[0].mxu0 %v2246
      %v2402 = vpop.f32.mrb[0].mxu0
      %v2403 = vadd.f32 0.0, %v2402
      %v2404 = vpop.f32.mrb[0].mxu0
      %v2405 = vadd.f32 0.0, %v2404
      %v2406 = vpop.f32.mrb[0].mxu0
      %v2407 = vadd.f32 0.0, %v2406
      %v2408 = vpop.f32.mrb[0].mxu0
      %v2409 = vadd.f32 0.0, %v2408
      %2410 = vmatprep.mubr.bf16.mxu0 0
      %2411 = vmatmul.mubr.bf16.gmra.mrb[0].mxu0 %v2255
      %v2412 = vpop.f32.mrb[0].mxu0
      %v2413 = vadd.f32 0.0, %v2412
      %v2414 = vpop.f32.mrb[0].mxu0
      %v2415 = vadd.f32 0.0, %v2414
      %v2416 = vpop.f32.mrb[0].mxu0
      %v2417 = vadd.f32 0.0, %v2416
      %v2418 = vpop.f32.mrb[0].mxu0
      %v2419 = vadd.f32 0.0, %v2418
      %2420 = vmatprep.mubr.bf16.mxu0 0
      %2421 = vmatmul.mubr.bf16.gmra.mrb[0].mxu0 %v2264
      %v2422 = vpop.f32.mrb[0].mxu0
      %v2423 = vadd.f32 0.0, %v2422
      %v2424 = vpop.f32.mrb[0].mxu0
      %v2425 = vadd.f32 0.0, %v2424
      %v2426 = vpop.f32.mrb[0].mxu0
      %v2427 = vadd.f32 0.0, %v2426
      %v2428 = vpop.f32.mrb[0].mxu0
      %v2429 = vadd.f32 0.0, %v2428
      %2430 = vmatprep.mubr.bf16.mxu0 0
      %2431 = vmatmul.mubr.bf16.gmra.mrb[0].mxu0 %v2273
      %v2432 = vpop.f32.mrb[0].mxu0
      %v2433 = vadd.f32 0.0, %v2432
      %v2434 = vpop.f32.mrb[0].mxu0
      %v2435 = vadd.f32 0.0, %v2434
      %v2436 = vpop.f32.mrb[0].mxu0
      %v2437 = vadd.f32 0.0, %v2436
      %v2438 = vpop.f32.mrb[0].mxu0
      %v2439 = vadd.f32 0.0, %v2438
      %2440 = vmatprep.mubr.bf16.mxu0 0
      %2441 = vmatmul.mubr.bf16.gmra.mrb[0].mxu0 %v2282
      %v2442 = vpop.f32.mrb[0].mxu0
      %v2443 = vadd.f32 0.0, %v2442
      %v2444 = vpop.f32.mrb[0].mxu0
      %v2445 = vadd.f32 0.0, %v2444
      %v2446 = vpop.f32.mrb[0].mxu0
      %v2447 = vadd.f32 0.0, %v2446
      %v2448 = vpop.f32.mrb[0].mxu0
      %v2449 = vadd.f32 0.0, %v2448
      %2450 = vdwg.mxu0
      %v2451 = vadd.f32 %v2188, %v2403
      %v2452 = vadd.f32 %v2189, %v2405
      %v2453 = vadd.f32 %v2190, %v2407
      %v2454 = vadd.f32 %v2191, %v2409
      %v2455 = vadd.f32 %v2192, %v2413
      %v2456 = vadd.f32 %v2193, %v2415
      %v2457 = vadd.f32 %v2194, %v2417
      %v2458 = vadd.f32 %v2195, %v2419
      %v2459 = vadd.f32 %v2196, %v2423
      %v2460 = vadd.f32 %v2197, %v2425
      %v2461 = vadd.f32 %v2198, %v2427
      %v2462 = vadd.f32 %v2199, %v2429
      %v2463 = vadd.f32 %v2200, %v2433
      %v2464 = vadd.f32 %v2201, %v2435
      %v2465 = vadd.f32 %v2202, %v2437
      %v2466 = vadd.f32 %v2203, %v2439
      %v2467 = vadd.f32 %v2204, %v2443
      %v2468 = vadd.f32 %v2205, %v2445
      %v2469 = vadd.f32 %v2206, %v2447
      %v2470 = vadd.f32 %v2207, %v2449
      %v2471 = vpack.c.bf16 %v2453, %v2451
      %v2472 = vpack.c.bf16 %v2454, %v2452
      %v2473 = vpack.c.bf16 %v2457, %v2455
      %v2474 = vpack.c.bf16 %v2458, %v2456
      %v2475 = vpack.c.bf16 %v2461, %v2459
      %v2476 = vpack.c.bf16 %v2462, %v2460
      %v2477 = vpack.c.bf16 %v2465, %v2463
      %v2478 = vpack.c.bf16 %v2466, %v2464
      %v2479 = vpack.c.bf16 %v2469, %v2467
      %v2480 = vpack.c.bf16 %v2470, %v2468
      %v2491 = vunpack.c.l.b16 %v2471
      %v2492 = vunpack.c.l.b16 %v2472
      %v2493 = vunpack.c.h.b16 %v2471
      %v2494 = vunpack.c.h.b16 %v2472
      %v2495 = vunpack.c.l.b16 %v2473
      %v2496 = vunpack.c.l.b16 %v2474
      %v2497 = vunpack.c.h.b16 %v2473
      %v2498 = vunpack.c.h.b16 %v2474
      %v2499 = vunpack.c.l.b16 %v2475
      %v2500 = vunpack.c.l.b16 %v2476
      %v2501 = vunpack.c.h.b16 %v2475
      %v2502 = vunpack.c.h.b16 %v2476
      %v2503 = vunpack.c.l.b16 %v2477
      %v2504 = vunpack.c.l.b16 %v2478
      %v2505 = vunpack.c.h.b16 %v2477
      %v2506 = vunpack.c.h.b16 %v2478
      %v2507 = vunpack.c.l.b16 %v2479
      %v2508 = vunpack.c.l.b16 %v2480
      %v2509 = vunpack.c.h.b16 %v2479
      %v2510 = vunpack.c.h.b16 %v2480
      %v2511 = vpack.c.b16 %v2492, %v2491
      %v2512 = vpack.c.b16 %v2494, %v2493
      %v2513 = vpack.c.b16 %v2496, %v2495
      %v2514 = vpack.c.b16 %v2498, %v2497
      %v2515 = vpack.c.b16 %v2500, %v2499
      %v2516 = vpack.c.b16 %v2502, %v2501
      %v2517 = vpack.c.b16 %v2504, %v2503
      %v2518 = vpack.c.b16 %v2506, %v2505
      %v2519 = vpack.c.b16 %v2508, %v2507
      %v2520 = vpack.c.b16 %v2510, %v2509
      %2531 = vst [vmem:[%s192] sm:$0xff] %v2511
      %2532 = vst [vmem:[%s192 + $0x8] sm:$0xff] %v2512
      %2533 = vst [vmem:[%s192 + $0x10] sm:$0xff] %v2513
      %2534 = vst [vmem:[%s192 + $0x18] sm:$0xff] %v2514
      %2535 = vst [vmem:[%s192 + $0x20] sm:$0xff] %v2515
      %2536 = vst [vmem:[%s192 + $0x28] sm:$0xff] %v2516
      %2537 = vst [vmem:[%s192 + $0x30] sm:$0xff] %v2517
      %2538 = vst [vmem:[%s192 + $0x38] sm:$0xff] %v2518
      %2539 = vst [vmem:[%s192 + $0x40] sm:$0xff] %v2519
      %2540 = vst [vmem:[%s192 + $0x48] sm:$0xff] %v2520
      %p2541 = scmp.eq.s32.totalorder %s16, 0
      // Predicated region
      $region29: #{residual_block.4} parent=27 // pred_check
        %p2542 = pneg %p2541
      $region30: #{residual_block.4} parent=27 // pred_check_branch
        %2544 = sbr.rel (%p2542) target = $region32
      $region31: #{residual_block.4} parent=27 // pred_region
        %v2545 = vlaneseq
        %vm2546 = vcmp.ge.s32.totalorder %v2545, 0
        %vm2547 = vcmp.lt.s32.totalorder %v2545, 256
        %vm2548 = vmand %vm2546, %vm2547
        %2549 = vst.msk [vmem:[%s3] sm:$0x3] %vm2548, 0.0
        %2550 = vst.msk [vmem:[%s4] sm:$0x3] %vm2548, 0.0
      $region32: #{residual_block.4} parent=27 // pred_fallthru
        _
      %v2551 = vlaneseq
      %v2552 = vshrl.u32 %v2551, 7
      %v2553 = vadd.s32 %v2552, 8
      %v2554 = vadd.s32 %v2552, 16
      %v2555 = vadd.s32 %v2552, 24
      %v2556 = vadd.s32 %v2552, 32
      %v2557 = vadd.s32 %v2552, 40
      %v2558 = vadd.s32 %v2552, 48
      %v2559 = vadd.s32 %v2552, 56
      %v2560 = vadd.s32 %v2552, 64
      %v2561 = vadd.s32 %v2552, 72
      %vm2562 = vcmp.lt.s32.totalorder %v2552, 0
      %v2563 = vsub.s32 0, %v2552
      %v2564 = vsel %vm2562, %v2563, %v2552
      %v2565 = vmul.u32.u64.compose %v2564, 3435973837
      %v2566 = vextract.low.u32 %v2565
      %v2567 = vextract.high.u32 %v2565
      %v2568 = vshrl.u32 %v2567, 3
      %v2569 = vmul.u32 %v2568, 10
      %v2570 = vsub.s32 %v2564, %v2569
      %v2571 = vsub.s32 0, %v2570
      %v2572 = vsel %vm2562, %v2571, %v2570
      %vm2573 = vcmp.lt.s32.totalorder %v2553, 0
      %v2574 = vsub.s32 0, %v2553
      %v2575 = vsel %vm2573, %v2574, %v2553
      %v2576 = vmul.u32.u64.compose %v2575, 3435973837
      %v2577 = vextract.low.u32 %v2576
      %v2578 = vextract.high.u32 %v2576
      %v2579 = vshrl.u32 %v2578, 3
      %v2580 = vmul.u32 %v2579, 10
      %v2581 = vsub.s32 %v2575, %v2580
      %v2582 = vsub.s32 0, %v2581
      %v2583 = vsel %vm2573, %v2582, %v2581
      %vm2584 = vcmp.lt.s32.totalorder %v2554, 0
      %v2585 = vsub.s32 0, %v2554
      %v2586 = vsel %vm2584, %v2585, %v2554
      %v2587 = vmul.u32.u64.compose %v2586, 3435973837
      %v2588 = vextract.low.u32 %v2587
      %v2589 = vextract.high.u32 %v2587
      %v2590 = vshrl.u32 %v2589, 3
      %v2591 = vmul.u32 %v2590, 10
      %v2592 = vsub.s32 %v2586, %v2591
      %v2593 = vsub.s32 0, %v2592
      %v2594 = vsel %vm2584, %v2593, %v2592
      %vm2595 = vcmp.lt.s32.totalorder %v2555, 0
      %v2596 = vsub.s32 0, %v2555
      %v2597 = vsel %vm2595, %v2596, %v2555
      %v2598 = vmul.u32.u64.compose %v2597, 3435973837
      %v2599 = vextract.low.u32 %v2598
      %v2600 = vextract.high.u32 %v2598
      %v2601 = vshrl.u32 %v2600, 3
      %v2602 = vmul.u32 %v2601, 10
      %v2603 = vsub.s32 %v2597, %v2602
      %v2604 = vsub.s32 0, %v2603
      %v2605 = vsel %vm2595, %v2604, %v2603
      %vm2606 = vcmp.lt.s32.totalorder %v2556, 0
      %v2607 = vsub.s32 0, %v2556
      %v2608 = vsel %vm2606, %v2607, %v2556
      %v2609 = vmul.u32.u64.compose %v2608, 3435973837
      %v2610 = vextract.low.u32 %v2609
      %v2611 = vextract.high.u32 %v2609
      %v2612 = vshrl.u32 %v2611, 3
      %v2613 = vmul.u32 %v2612, 10
      %v2614 = vsub.s32 %v2608, %v2613
      %v2615 = vsub.s32 0, %v2614
      %v2616 = vsel %vm2606, %v2615, %v2614
      %vm2617 = vcmp.lt.s32.totalorder %v2557, 0
      %v2618 = vsub.s32 0, %v2557
      %v2619 = vsel %vm2617, %v2618, %v2557
      %v2620 = vmul.u32.u64.compose %v2619, 3435973837
      %v2621 = vextract.low.u32 %v2620
      %v2622 = vextract.high.u32 %v2620
      %v2623 = vshrl.u32 %v2622, 3
      %v2624 = vmul.u32 %v2623, 10
      %v2625 = vsub.s32 %v2619, %v2624
      %v2626 = vsub.s32 0, %v2625
      %v2627 = vsel %vm2617, %v2626, %v2625
      %vm2628 = vcmp.lt.s32.totalorder %v2558, 0
      %v2629 = vsub.s32 0, %v2558
      %v2630 = vsel %vm2628, %v2629, %v2558
      %v2631 = vmul.u32.u64.compose %v2630, 3435973837
      %v2632 = vextract.low.u32 %v2631
      %v2633 = vextract.high.u32 %v2631
      %v2634 = vshrl.u32 %v2633, 3
      %v2635 = vmul.u32 %v2634, 10
      %v2636 = vsub.s32 %v2630, %v2635
      %v2637 = vsub.s32 0, %v2636
      %v2638 = vsel %vm2628, %v2637, %v2636
      %vm2639 = vcmp.lt.s32.totalorder %v2559, 0
      %v2640 = vsub.s32 0, %v2559
      %v2641 = vsel %vm2639, %v2640, %v2559
      %v2642 = vmul.u32.u64.compose %v2641, 3435973837
      %v2643 = vextract.low.u32 %v2642
      %v2644 = vextract.high.u32 %v2642
      %v2645 = vshrl.u32 %v2644, 3
      %v2646 = vmul.u32 %v2645, 10
      %v2647 = vsub.s32 %v2641, %v2646
      %v2648 = vsub.s32 0, %v2647
      %v2649 = vsel %vm2639, %v2648, %v2647
      %vm2650 = vcmp.lt.s32.totalorder %v2560, 0
      %v2651 = vsub.s32 0, %v2560
      %v2652 = vsel %vm2650, %v2651, %v2560
      %v2653 = vmul.u32.u64.compose %v2652, 3435973837
      %v2654 = vextract.low.u32 %v2653
      %v2655 = vextract.high.u32 %v2653
      %v2656 = vshrl.u32 %v2655, 3
      %v2657 = vmul.u32 %v2656, 10
      %v2658 = vsub.s32 %v2652, %v2657
      %v2659 = vsub.s32 0, %v2658
      %v2660 = vsel %vm2650, %v2659, %v2658
      %vm2661 = vcmp.lt.s32.totalorder %v2561, 0
      %v2662 = vsub.s32 0, %v2561
      %v2663 = vsel %vm2661, %v2662, %v2561
      %v2664 = vmul.u32.u64.compose %v2663, 3435973837
      %v2665 = vextract.low.u32 %v2664
      %v2666 = vextract.high.u32 %v2664
      %v2667 = vshrl.u32 %v2666, 3
      %v2668 = vmul.u32 %v2667, 10
      %v2669 = vsub.s32 %v2663, %v2668
      %v2670 = vsub.s32 0, %v2669
      %v2671 = vsel %vm2661, %v2670, %v2669
      %vm2672 = vcmp.ne.s32.totalorder %v2572, 0
      %vm2673 = vcmp.ne.s32.totalorder %v2583, 0
      %vm2674 = vcmp.ne.s32.totalorder %v2594, 0
      %vm2675 = vcmp.ne.s32.totalorder %v2605, 0
      %vm2676 = vcmp.ne.s32.totalorder %v2616, 0
      %vm2677 = vcmp.ne.s32.totalorder %v2627, 0
      %vm2678 = vcmp.ne.s32.totalorder %v2638, 0
      %vm2679 = vcmp.ne.s32.totalorder %v2649, 0
      %vm2680 = vcmp.ne.s32.totalorder %v2660, 0
      %vm2681 = vcmp.ne.s32.totalorder %v2671, 0
      %vm2682 = vcmp.lt.s32.totalorder %v2572, 0
      %vm2683 = vcmp.lt.s32.totalorder %v2583, 0
      %vm2684 = vcmp.lt.s32.totalorder %v2594, 0
      %vm2685 = vcmp.lt.s32.totalorder %v2605, 0
      %vm2686 = vcmp.lt.s32.totalorder %v2616, 0
      %vm2687 = vcmp.lt.s32.totalorder %v2627, 0
      %vm2688 = vcmp.lt.s32.totalorder %v2638, 0
      %vm2689 = vcmp.lt.s32.totalorder %v2649, 0
      %vm2690 = vcmp.lt.s32.totalorder %v2660, 0
      %vm2691 = vcmp.lt.s32.totalorder %v2671, 0
      %vm2692 = vmand %vm2682, %vm2672
      %vm2693 = vmand %vm2683, %vm2673
      %vm2694 = vmand %vm2684, %vm2674
      %vm2695 = vmand %vm2685, %vm2675
      %vm2696 = vmand %vm2686, %vm2676
      %vm2697 = vmand %vm2687, %vm2677
      %vm2698 = vmand %vm2688, %vm2678
      %vm2699 = vmand %vm2689, %vm2679
      %vm2700 = vmand %vm2690, %vm2680
      %vm2701 = vmand %vm2691, %vm2681
      %v2702 = vadd.s32 %v2572, 10
      %v2703 = vadd.s32 %v2583, 10
      %v2704 = vadd.s32 %v2594, 10
      %v2705 = vadd.s32 %v2605, 10
      %v2706 = vadd.s32 %v2616, 10
      %v2707 = vadd.s32 %v2627, 10
      %v2708 = vadd.s32 %v2638, 10
      %v2709 = vadd.s32 %v2649, 10
      %v2710 = vadd.s32 %v2660, 10
      %v2711 = vadd.s32 %v2671, 10
      %v2712 = vsel %vm2692, %v2702, %v2572
      %v2713 = vsel %vm2693, %v2703, %v2583
      %v2714 = vsel %vm2694, %v2704, %v2594
      %v2715 = vsel %vm2695, %v2705, %v2605
      %v2716 = vsel %vm2696, %v2706, %v2616
      %v2717 = vsel %vm2697, %v2707, %v2627
      %v2718 = vsel %vm2698, %v2708, %v2638
      %v2719 = vsel %vm2699, %v2709, %v2649
      %v2720 = vsel %vm2700, %v2710, %v2660
      %v2721 = vsel %vm2701, %v2711, %v2671
      %vm2722 = vcmp.lt.s32.totalorder %v2712, 8
      %vm2723 = vcmp.lt.s32.totalorder %v2713, 8
      %vm2724 = vcmp.lt.s32.totalorder %v2714, 8
      %vm2725 = vcmp.lt.s32.totalorder %v2715, 8
      %vm2726 = vcmp.lt.s32.totalorder %v2716, 8
      %vm2727 = vcmp.lt.s32.totalorder %v2717, 8
      %vm2728 = vcmp.lt.s32.totalorder %v2718, 8
      %vm2729 = vcmp.lt.s32.totalorder %v2719, 8
      %vm2730 = vcmp.lt.s32.totalorder %v2720, 8
      %vm2731 = vcmp.lt.s32.totalorder %v2721, 8
      %v2732 = vsel %vm2722, 1, 0
      %v2733 = vsel %vm2723, 1, 0
      %v2734 = vsel %vm2724, 1, 0
      %v2735 = vsel %vm2725, 1, 0
      %v2736 = vsel %vm2726, 1, 0
      %v2737 = vsel %vm2727, 1, 0
      %v2738 = vsel %vm2728, 1, 0
      %v2739 = vsel %vm2729, 1, 0
      %v2740 = vsel %vm2730, 1, 0
      %v2741 = vsel %vm2731, 1, 0
      %vm2742 = vcmp.eq.s32.totalorder %v2732, 1
      %vm2743 = vcmp.eq.s32.totalorder %v2733, 1
      %vm2744 = vcmp.eq.s32.totalorder %v2734, 1
      %vm2745 = vcmp.eq.s32.totalorder %v2735, 1
      %vm2746 = vcmp.eq.s32.totalorder %v2736, 1
      %vm2747 = vcmp.eq.s32.totalorder %v2737, 1
      %vm2748 = vcmp.eq.s32.totalorder %v2738, 1
      %vm2749 = vcmp.eq.s32.totalorder %v2739, 1
      %vm2750 = vcmp.eq.s32.totalorder %v2740, 1
      %vm2751 = vcmp.eq.s32.totalorder %v2741, 1
      %v2752 = vsel %vm2742, %v2451, 0.0
      %v2753 = vsel %vm2742, %v2452, 0.0
      %v2754 = vsel %vm2743, %v2453, 0.0
      %v2755 = vsel %vm2743, %v2454, 0.0
      %v2756 = vsel %vm2744, %v2455, 0.0
      %v2757 = vsel %vm2744, %v2456, 0.0
      %v2758 = vsel %vm2745, %v2457, 0.0
      %v2759 = vsel %vm2745, %v2458, 0.0
      %v2760 = vsel %vm2746, %v2459, 0.0
      %v2761 = vsel %vm2746, %v2460, 0.0
      %v2762 = vsel %vm2747, %v2461, 0.0
      %v2763 = vsel %vm2747, %v2462, 0.0
      %v2764 = vsel %vm2748, %v2463, 0.0
      %v2765 = vsel %vm2748, %v2464, 0.0
      %v2766 = vsel %vm2749, %v2465, 0.0
      %v2767 = vsel %vm2749, %v2466, 0.0
      %v2768 = vsel %vm2750, %v2467, 0.0
      %v2769 = vsel %vm2750, %v2468, 0.0
      %v2770 = vsel %vm2751, %v2469, 0.0
      %v2771 = vsel %vm2751, %v2470, 0.0
      %v2772 = vld [vmem:[%s3] sm:$0x3]
      %v2773 = vadd.f32 %v2752, %v2754
      %v2774 = vadd.f32 %v2773, %v2756
      %v2775 = vadd.f32 %v2774, %v2758
      %v2776 = vadd.f32 %v2775, %v2760
      %v2777 = vadd.f32 %v2776, %v2762
      %v2778 = vadd.f32 %v2777, %v2764
      %v2779 = vadd.f32 %v2778, %v2766
      %v2780 = vadd.f32 %v2779, %v2768
      %v2781 = vadd.f32 %v2780, %v2770
      %v2782 = vrot.slane %v2781, 4
      %v2783 = vadd.f32 %v2781, %v2782
      %v2784 = vrot.slane %v2783, 2
      %v2785 = vadd.f32 %v2783, %v2784
      %v2786 = vrot.slane %v2785, 1
      %v2787 = vadd.f32 %v2785, %v2786
      %v2788 = vadd.f32 %v2753, %v2755
      %v2789 = vadd.f32 %v2788, %v2757
      %v2790 = vadd.f32 %v2789, %v2759
      %v2791 = vadd.f32 %v2790, %v2761
      %v2792 = vadd.f32 %v2791, %v2763
      %v2793 = vadd.f32 %v2792, %v2765
      %v2794 = vadd.f32 %v2793, %v2767
      %v2795 = vadd.f32 %v2794, %v2769
      %v2796 = vadd.f32 %v2795, %v2771
      %v2797 = vrot.slane %v2796, 4
      %v2798 = vadd.f32 %v2796, %v2797
      %v2799 = vrot.slane %v2798, 2
      %v2800 = vadd.f32 %v2798, %v2799
      %v2801 = vrot.slane %v2800, 1
      %v2802 = vadd.f32 %v2800, %v2801
      %v2805 = vcombine.low %v2787, %v2802
      %v2807 = vunpack.c.l.s4 1966171168
      %v2808 = vunpack.c.0.s8 %v2807
      %v2809 = vlaneseq
      %v2810 = vshrl.u32 %v2809, 7
      %v2811 = vsub.s32 %v2808, %v2810
      %v2812 = vrot.slane %v2805, %v2811
      %v2814 = vunpack.c.l.s4 1966171168
      %v2815 = vunpack.c.0.s8 %v2814
      %v2816 = vlaneseq
      %v2817 = vshrl.u32 %v2816, 7
      %v2818 = vsub.s32 %v2815, %v2817
      %v2819 = vrot.slane %v2812, %v2818
      %v2821 = vadd.f32 %v2772, %v2819
      %v2822 = vlaneseq
      %vm2823 = vcmp.ge.s32.totalorder %v2822, 0
      %vm2824 = vcmp.lt.s32.totalorder %v2822, 256
      %vm2825 = vmand %vm2823, %vm2824
      %2826 = vst.msk [vmem:[%s3] sm:$0x3] %vm2825, %v2821
      %v2827 = vld [vmem:[%s4] sm:$0x3]
      %v2828 = vmul.f32 %v2752, %v2752
      %v2829 = vmul.f32 %v2753, %v2753
      %v2830 = vmul.f32 %v2754, %v2754
      %v2831 = vmul.f32 %v2755, %v2755
      %v2832 = vmul.f32 %v2756, %v2756
      %v2833 = vmul.f32 %v2757, %v2757
      %v2834 = vmul.f32 %v2758, %v2758
      %v2835 = vmul.f32 %v2759, %v2759
      %v2836 = vmul.f32 %v2760, %v2760
      %v2837 = vmul.f32 %v2761, %v2761
      %v2838 = vmul.f32 %v2762, %v2762
      %v2839 = vmul.f32 %v2763, %v2763
      %v2840 = vmul.f32 %v2764, %v2764
      %v2841 = vmul.f32 %v2765, %v2765
      %v2842 = vmul.f32 %v2766, %v2766
      %v2843 = vmul.f32 %v2767, %v2767
      %v2844 = vmul.f32 %v2768, %v2768
      %v2845 = vmul.f32 %v2769, %v2769
      %v2846 = vmul.f32 %v2770, %v2770
      %v2847 = vmul.f32 %v2771, %v2771
      %v2848 = vadd.f32 %v2828, %v2830
      %v2849 = vadd.f32 %v2848, %v2832
      %v2850 = vadd.f32 %v2849, %v2834
      %v2851 = vadd.f32 %v2850, %v2836
      %v2852 = vadd.f32 %v2851, %v2838
      %v2853 = vadd.f32 %v2852, %v2840
      %v2854 = vadd.f32 %v2853, %v2842
      %v2855 = vadd.f32 %v2854, %v2844
      %v2856 = vadd.f32 %v2855, %v2846
      %v2857 = vrot.slane %v2856, 4
      %v2858 = vadd.f32 %v2856, %v2857
      %v2859 = vrot.slane %v2858, 2
      %v2860 = vadd.f32 %v2858, %v2859
      %v2861 = vrot.slane %v2860, 1
      %v2862 = vadd.f32 %v2860, %v2861
      %v2863 = vadd.f32 %v2829, %v2831
      %v2864 = vadd.f32 %v2863, %v2833
      %v2865 = vadd.f32 %v2864, %v2835
      %v2866 = vadd.f32 %v2865, %v2837
      %v2867 = vadd.f32 %v2866, %v2839
      %v2868 = vadd.f32 %v2867, %v2841
      %v2869 = vadd.f32 %v2868, %v2843
      %v2870 = vadd.f32 %v2869, %v2845
      %v2871 = vadd.f32 %v2870, %v2847
      %v2872 = vrot.slane %v2871, 4
      %v2873 = vadd.f32 %v2871, %v2872
      %v2874 = vrot.slane %v2873, 2
      %v2875 = vadd.f32 %v2873, %v2874
      %v2876 = vrot.slane %v2875, 1
      %v2877 = vadd.f32 %v2875, %v2876
      %v2880 = vcombine.low %v2862, %v2877
      %v2882 = vunpack.c.l.s4 1966171168
      %v2883 = vunpack.c.0.s8 %v2882
      %v2884 = vlaneseq
      %v2885 = vshrl.u32 %v2884, 7
      %v2886 = vsub.s32 %v2883, %v2885
      %v2887 = vrot.slane %v2880, %v2886
      %v2889 = vunpack.c.l.s4 1966171168
      %v2890 = vunpack.c.0.s8 %v2889
      %v2891 = vlaneseq
      %v2892 = vshrl.u32 %v2891, 7
      %v2893 = vsub.s32 %v2890, %v2892
      %v2894 = vrot.slane %v2887, %v2893
      %v2896 = vadd.f32 %v2827, %v2894
      %2897 = vst.msk [vmem:[%s4] sm:$0x3] %vm2825, %v2896
      %p2898 = scmp.lt.s32.totalorder %s16, 1
      %s2899 = scalar_select %p2898, %s16, 1
      %s2900 = smul.addr %s2899, 20
      %s2901 = smul.addr %s2900, 4
      %s2902 = scalar_lea.vmem %s2, %s2901
      // Predicated region
      $region33: #{residual_block.4} parent=27 // pred_check
        %p2903 = pneg %p81
      $region34: #{residual_block.4} parent=27 // pred_check_branch
        %2905 = sbr.rel (%p2903) target = $region36
      $region35: #{residual_block.4} parent=27 // pred_region
        _
      $region36: #{residual_block.4} parent=27 // pred_fallthru
        _
      // Predicated region
      $region37: #{residual_block.4} parent=27 // pred_check
        %p2906 = pneg %p102
      $region38: #{residual_block.4} parent=27 // pred_check_branch
        %2908 = sbr.rel (%p2906) target = $region40
      $region39: #{residual_block.4} parent=27 // pred_region
        _
      $region40: #{residual_block.4} parent=27 // pred_fallthru
        _
      // Predicated region
      $region41: #{residual_block.4} parent=27 // pred_check
        %p2909 = pneg %p123
      $region42: #{residual_block.4} parent=27 // pred_check_branch
        %2911 = sbr.rel (%p2909) target = $region44
      $region43: #{residual_block.4} parent=27 // pred_region
        _
      $region44: #{residual_block.4} parent=27 // pred_fallthru
        _
      // Predicated region
      $region45: #{residual_block.4} parent=27 // pred_check
        %p2912 = pneg %p102
      $region46: #{residual_block.4} parent=27 // pred_check_branch
        %2914 = sbr.rel (%p2912) target = $region48
      $region47: #{residual_block.4} parent=27 // pred_region
        _
      $region48: #{residual_block.4} parent=27 // pred_fallthru
        _
      // Predicated region
      $region49: #{residual_block.4} parent=27 // pred_check
        %p2915 = pneg %p123
      $region50: #{residual_block.4} parent=27 // pred_check_branch
        %2917 = sbr.rel (%p2915) target = $region52
      $region51: #{residual_block.4} parent=27 // pred_region
        _
      $region52: #{residual_block.4} parent=27 // pred_fallthru
        _
    $region28: #{residual_block.4} parent=5 // pred_fallthru
      _
    %p2918 = scmp.le.s32.totalorder 2, %s11
    // Predicated region
    $region53: #{residual_block.4} parent=5 // pred_check
      %p2919 = pneg %p2918
    $region54: #{residual_block.4} parent=5 // pred_check_branch
      %2921 = sbr.rel (%p2919) target = $region56
    $region55: #{residual_block.4} parent=5 // pred_region
      %s2922 = ssub.s32 %s11, 2
      // Predicated region
      $region57: #{residual_block.4} parent=55 // pred_check
        %p2923 = pneg %p87
      $region58: #{residual_block.4} parent=55 // pred_check_branch
        %2925 = sbr.rel (%p2923) target = $region60
      $region59: #{residual_block.4} parent=55 // pred_region
        %p2926 = scmp.lt.s32.totalorder %s17, 1
        %s2927 = scalar_select %p2926, %s17, 1
        %s2928 = smul.addr %s2927, 20
        %s2929 = smul.addr %s2928, 4
        %s2930 = scalar_lea.vmem %s2, %s2929
      $region60: #{residual_block.4} parent=55 // pred_fallthru
        _
    $region56: #{residual_block.4} parent=5 // pred_fallthru
      _
  $region6: #{residual_block.4} parent=0 // loop_footer
    %s15 = sadd.s32 1, %s11
  $region7: #{residual_block.4} parent=0 // loop_footer_branch
    %10 = sbr.rel target = $region3
  $region8: #{residual_block.4} parent=0 // loop_exit
    _

// kernel: residual_block.7
$region0: #{residual_block.7}
  #allocation0 [shape = 'u32[]', space=smem, size = 0x4, offset = 0x4, fixed_abs, tag = 'smem constant byte address 0x4 - core index']
  #allocation1 [shape = 'u32[144,128]{1,0:T(1,128)}', space=vmem, size = 0x12000, scoped, tag = 'internal scratch']
  %s0 = inlined_call_operand.vmem [shape: bf16[2,80,128], index: 0, kind: input, shape index: {}]
  %s1 = inlined_call_operand.vmem [shape: f32[1,128], index: 1, kind: input, shape index: {}]
  %s2 = inlined_call_operand.vmem [shape: f32[1,128], index: 2, kind: input, shape index: {}]
  %s3 = inlined_call_operand.vmem [shape: f32[1,128], index: 3, kind: input, shape index: {}]
  %s4 = inlined_call_operand.vmem [shape: f32[1,128], index: 4, kind: input, shape index: {}]
  %s5 = inlined_call_operand.vmem [shape: bf16[2,80,128], index: 5, kind: input, shape index: {}]
  %s6 = inlined_call_operand.vmem [shape: bf16[2,80,128], index: 6, kind: output, shape index: {}]
  %s7 = sld [smem:[#allocation0]]
  $region57: #{residual_block.7} parent=0
    _
  %s9 = ssub.s32 1, %s7
  %s10 = scalar_select 0, %s9, %s7
  loop: start=0, step=1, limit=4
  $region2: #{residual_block.7} parent=0 // loop_pre_header
    _
  $region3: #{residual_block.7} parent=0 // loop_header
    %s12 = sphi 0, %s16
    %p13 = scmp.ge.s32.totalorder %s12, 4
    %s22 = sphi 0, %s24
    %s25 = sphi 0, %s22
    %s26 = sphi 0, %s25
    %s42 = sphi 0, %s26
    %s46 = sphi 0, %s46
    %s48 = sphi 0, %s46
    %s49 = sphi 0, %s48
    %s63 = sphi 0, %s49
    %s67 = sphi 0, %s67
    %s69 = sphi 0, %s67
    %s70 = sphi 0, %s69
    %s84 = sphi 0, %s70
    %s88 = sphi 0, %s88
    %s90 = sphi 0, %s88
    %s91 = sphi 0, %s90
    %s105 = sphi 0, %s91
    %s109 = sphi 0, %s109
    %s111 = sphi 0, %s109
    %s112 = sphi 0, %s111
    %s126 = sphi 0, %s112
    %s132 = sphi 0, %s134
    %s135 = sphi 0, %s132
    %s136 = sphi 0, %s135
    %s152 = sphi 0, %s136
    %s158 = sphi 0, %s160
    %s161 = sphi 0, %s158
    %s162 = sphi 0, %s161
    %s178 = sphi 0, %s162
  $region4: #{residual_block.7} parent=0 // loop_header_branch
    %15 = sbr.rel (%p13) target = $region8
  $region5: #{residual_block.7} parent=0 // loop_body
    %s17 = ssub.s32 %s12, 1
    %s18 = ssub.s32 %s12, 2
    %s19 = sadd.s32 %s12, 1
    %s20 = ssub.s32 %s12, %s19
    %p21 = scmp.eq.s32.totalorder %s20, 0
    %s23 = sadd.s32 %s22, 1
    %s24 = scalar_select %p21, %s22, %s23
    %p27 = pneg %p21
    %p28 = scmp.eq.s32.totalorder %s12, 1
    %p29 = por %p27, %p28
    %p30 = scmp.ne.s32.totalorder %s22, %s25
    %p31 = scmp.eq.s32.totalorder %s12, 0
    %p32 = por %p30, %p31
    %p33 = scmp.ne.s32.totalorder %s22, %s25
    %p34 = scmp.eq.s32.totalorder %s17, 1
    %p35 = por %p33, %p34
    %p36 = scmp.ne.s32.totalorder %s25, %s26
    %p37 = scmp.eq.s32.totalorder %s17, 0
    %p38 = por %p36, %p37
    %p39 = scmp.ne.s32.totalorder %s25, %s26
    %p40 = scmp.eq.s32.totalorder %s18, 1
    %p41 = por %p39, %p40
    %p43 = scmp.ne.s32.totalorder %s26, %s42
    %p44 = scmp.eq.s32.totalorder %s18, 0
    %p45 = por %p43, %p44
    %s47 = sadd.s32 %s46, 1
    %p50 = scmp.eq.s32.totalorder %s12, 1
    %p51 = scmp.ne.s32.totalorder %s46, %s48
    %p52 = scmp.eq.s32.totalorder %s12, 0
    %p53 = por %p51, %p52
    %p54 = scmp.ne.s32.totalorder %s46, %s48
    %p55 = scmp.eq.s32.totalorder %s17, 1
    %p56 = por %p54, %p55
    %p57 = scmp.ne.s32.totalorder %s48, %s49
    %p58 = scmp.eq.s32.totalorder %s17, 0
    %p59 = por %p57, %p58
    %p60 = scmp.ne.s32.totalorder %s48, %s49
    %p61 = scmp.eq.s32.totalorder %s18, 1
    %p62 = por %p60, %p61
    %p64 = scmp.ne.s32.totalorder %s49, %s63
    %p65 = scmp.eq.s32.totalorder %s18, 0
    %p66 = por %p64, %p65
    %s68 = sadd.s32 %s67, 1
    %p71 = scmp.eq.s32.totalorder %s12, 1
    %p72 = scmp.ne.s32.totalorder %s67, %s69
    %p73 = scmp.eq.s32.totalorder %s12, 0
    %p74 = por %p72, %p73
    %p75 = scmp.ne.s32.totalorder %s67, %s69
    %p76 = scmp.eq.s32.totalorder %s17, 1
    %p77 = por %p75, %p76
    %p78 = scmp.ne.s32.totalorder %s69, %s70
    %p79 = scmp.eq.s32.totalorder %s17, 0
    %p80 = por %p78, %p79
    %p81 = scmp.ne.s32.totalorder %s69, %s70
    %p82 = scmp.eq.s32.totalorder %s18, 1
    %p83 = por %p81, %p82
    %p85 = scmp.ne.s32.totalorder %s70, %s84
    %p86 = scmp.eq.s32.totalorder %s18, 0
    %p87 = por %p85, %p86
    %s89 = sadd.s32 %s88, 1
    %p92 = scmp.eq.s32.totalorder %s12, 1
    %p93 = scmp.ne.s32.totalorder %s88, %s90
    %p94 = scmp.eq.s32.totalorder %s12, 0
    %p95 = por %p93, %p94
    %p96 = scmp.ne.s32.totalorder %s88, %s90
    %p97 = scmp.eq.s32.totalorder %s17, 1
    %p98 = por %p96, %p97
    %p99 = scmp.ne.s32.totalorder %s90, %s91
    %p100 = scmp.eq.s32.totalorder %s17, 0
    %p101 = por %p99, %p100
    %p102 = scmp.ne.s32.totalorder %s90, %s91
    %p103 = scmp.eq.s32.totalorder %s18, 1
    %p104 = por %p102, %p103
    %p106 = scmp.ne.s32.totalorder %s91, %s105
    %p107 = scmp.eq.s32.totalorder %s18, 0
    %p108 = por %p106, %p107
    %s110 = sadd.s32 %s109, 1
    %p113 = scmp.eq.s32.totalorder %s12, 1
    %p114 = scmp.ne.s32.totalorder %s109, %s111
    %p115 = scmp.eq.s32.totalorder %s12, 0
    %p116 = por %p114, %p115
    %p117 = scmp.ne.s32.totalorder %s109, %s111
    %p118 = scmp.eq.s32.totalorder %s17, 1
    %p119 = por %p117, %p118
    %p120 = scmp.ne.s32.totalorder %s111, %s112
    %p121 = scmp.eq.s32.totalorder %s17, 0
    %p122 = por %p120, %p121
    %p123 = scmp.ne.s32.totalorder %s111, %s112
    %p124 = scmp.eq.s32.totalorder %s18, 1
    %p125 = por %p123, %p124
    %p127 = scmp.ne.s32.totalorder %s112, %s126
    %p128 = scmp.eq.s32.totalorder %s18, 0
    %p129 = por %p127, %p128
    %s130 = ssub.s32 %s12, %s19
    %p131 = scmp.eq.s32.totalorder %s130, 0
    %s133 = sadd.s32 %s132, 1
    %s134 = scalar_select %p131, %s132, %s133
    %p137 = pneg %p131
    %p138 = scmp.eq.s32.totalorder %s12, 1
    %p139 = por %p137, %p138
    %p140 = scmp.ne.s32.totalorder %s132, %s135
    %p141 = scmp.eq.s32.totalorder %s12, 0
    %p142 = por %p140, %p141
    %p143 = scmp.ne.s32.totalorder %s132, %s135
    %p144 = scmp.eq.s32.totalorder %s17, 1
    %p145 = por %p143, %p144
    %p146 = scmp.ne.s32.totalorder %s135, %s136
    %p147 = scmp.eq.s32.totalorder %s17, 0
    %p148 = por %p146, %p147
    %p149 = scmp.ne.s32.totalorder %s135, %s136
    %p150 = scmp.eq.s32.totalorder %s18, 1
    %p151 = por %p149, %p150
    %p153 = scmp.ne.s32.totalorder %s136, %s152
    %p154 = scmp.eq.s32.totalorder %s18, 0
    %p155 = por %p153, %p154
    %s156 = ssub.s32 %s12, %s19
    %p157 = scmp.eq.s32.totalorder %s156, 0
    %s159 = sadd.s32 %s158, 1
    %s160 = scalar_select %p157, %s158, %s159
    %p163 = pneg %p157
    %p164 = scmp.eq.s32.totalorder %s12, 1
    %p165 = por %p163, %p164
    %p166 = scmp.ne.s32.totalorder %s158, %s161
    %p167 = scmp.eq.s32.totalorder %s12, 0
    %p168 = por %p166, %p167
    %p169 = scmp.ne.s32.totalorder %s158, %s161
    %p170 = scmp.eq.s32.totalorder %s17, 1
    %p171 = por %p169, %p170
    %p172 = scmp.ne.s32.totalorder %s161, %s162
    %p173 = scmp.eq.s32.totalorder %s17, 0
    %p174 = por %p172, %p173
    %p175 = scmp.ne.s32.totalorder %s161, %s162
    %p176 = scmp.eq.s32.totalorder %s18, 1
    %p177 = por %p175, %p176
    %p179 = scmp.ne.s32.totalorder %s162, %s178
    %p180 = scmp.eq.s32.totalorder %s18, 0
    %p181 = por %p179, %p180
    %p182 = scmp.le.s32.totalorder 1, %s12
    %p183 = scmp.lt.s32.totalorder %s12, 3
    %p184 = pnand %p182, %p183
    %p185 = pneg %p184
    // Predicated region
    $region9: #{residual_block.7} parent=5 // pred_check
      _
    $region10: #{residual_block.7} parent=5 // pred_check_branch
      %187 = sbr.rel (%p184) target = $region12
    $region11: #{residual_block.7} parent=5 // pred_region
      %s188 = ssub.s32 %s12, 1
      // Predicated region
      $region13: #{residual_block.7} parent=11 // pred_check
        %p189 = pneg %p59
      $region14: #{residual_block.7} parent=11 // pred_check_branch
        %191 = sbr.rel (%p189) target = $region16
      $region15: #{residual_block.7} parent=11 // pred_region
        _
      $region16: #{residual_block.7} parent=11 // pred_fallthru
        _
      // Predicated region
      $region17: #{residual_block.7} parent=11 // pred_check
        %p192 = pneg %p80
      $region18: #{residual_block.7} parent=11 // pred_check_branch
        %194 = sbr.rel (%p192) target = $region20
      $region19: #{residual_block.7} parent=11 // pred_region
        _
      $region20: #{residual_block.7} parent=11 // pred_fallthru
        _
      // Predicated region
      $region21: #{residual_block.7} parent=11 // pred_check
        %p195 = pneg %p101
      $region22: #{residual_block.7} parent=11 // pred_check_branch
        %197 = sbr.rel (%p195) target = $region24
      $region23: #{residual_block.7} parent=11 // pred_region
        _
      $region24: #{residual_block.7} parent=11 // pred_fallthru
        _
      // Predicated region
      $region25: #{residual_block.7} parent=11 // pred_check
        %p198 = pneg %p122
      $region26: #{residual_block.7} parent=11 // pred_check_branch
        %200 = sbr.rel (%p198) target = $region28
      $region27: #{residual_block.7} parent=11 // pred_region
        _
      $region28: #{residual_block.7} parent=11 // pred_fallthru
        _
    $region12: #{residual_block.7} parent=5 // pred_fallthru
      _
    %p201 = scmp.lt.s32.totalorder %s12, 2
    // Predicated region
    $region29: #{residual_block.7} parent=5 // pred_check
      %p202 = pneg %p201
    $region30: #{residual_block.7} parent=5 // pred_check_branch
      %204 = sbr.rel (%p202) target = $region32
    $region31: #{residual_block.7} parent=5 // pred_region
      // Predicated region
      $region33: #{residual_block.7} parent=31 // pred_check
        %p205 = pneg %p32
      $region34: #{residual_block.7} parent=31 // pred_check_branch
        %207 = sbr.rel (%p205) target = $region36
      $region35: #{residual_block.7} parent=31 // pred_region
        %p208 = scmp.lt.s32.totalorder %s12, 1
        %s209 = scalar_select %p208, %s12, 1
        %s210 = smul.addr %s209, 10
        %s211 = smul.addr %s210, 4
        %s212 = scalar_lea.vmem %s0, %s211
      $region36: #{residual_block.7} parent=31 // pred_fallthru
        _
      // Predicated region
      $region37: #{residual_block.7} parent=31 // pred_check
        %p213 = pneg %p142
      $region38: #{residual_block.7} parent=31 // pred_check_branch
        %215 = sbr.rel (%p213) target = $region40
      $region39: #{residual_block.7} parent=31 // pred_region
        %p216 = scmp.lt.s32.totalorder %s12, 1
        %s217 = scalar_select %p216, %s12, 1
        %s218 = smul.addr %s217, 10
        %s219 = smul.addr %s218, 4
        %s220 = scalar_lea.vmem %s5, %s219
      $region40: #{residual_block.7} parent=31 // pred_fallthru
        _
    $region32: #{residual_block.7} parent=5 // pred_fallthru
      _
    %p221 = scmp.le.s32.totalorder 1, %s12
    %p222 = scmp.lt.s32.totalorder %s12, 3
    %p223 = pnand %p221, %p222
    %p224 = pneg %p223
    // Predicated region
    $region41: #{residual_block.7} parent=5 // pred_check
      _
    $region42: #{residual_block.7} parent=5 // pred_check_branch
      %226 = sbr.rel (%p223) target = $region44
    $region43: #{residual_block.7} parent=5 // pred_region
      %s227 = ssub.s32 %s12, 1
      %p228 = scmp.lt.s32.totalorder %s17, 1
      %s229 = scalar_select %p228, %s17, 1
      %s230 = smul.addr %s229, 10
      %s231 = smul.addr %s230, 4
      %s232 = scalar_lea.vmem %s0, %s231
      %p233 = pneg %p38
      %p234 = pneg %p35
      %p235 = pneg %p59
      %p236 = pneg %p56
      %p237 = pneg %p80
      %p238 = pneg %p77
      %p239 = pneg %p101
      %p240 = pneg %p98
      %p241 = pneg %p122
      %p242 = pneg %p119
      %p243 = scmp.lt.s32.totalorder %s17, 1
      %s244 = scalar_select %p243, %s17, 1
      %s245 = smul.addr %s244, 10
      %s246 = smul.addr %s245, 4
      %s247 = scalar_lea.vmem %s5, %s246
      %p248 = pneg %p148
      %p249 = pneg %p145
      %p250 = pneg %p174
      %p251 = pneg %p171
      %p252 = scmp.lt.s32.totalorder %s17, 1
      %s253 = scalar_select %p252, %s17, 1
      %s254 = smul.addr %s253, 10
      %s255 = smul.addr %s254, 4
      %s256 = scalar_lea.vmem %s6, %s255
      %p257 = scmp.lt.s32.totalorder %s17, 1
      %s258 = scalar_select %p257, %s17, 1
      %s259 = smul.addr %s258, 10
      %s260 = smul.addr %s259, 4
      %s261 = scalar_lea.vmem %s0, %s260
      %p262 = scmp.lt.s32.totalorder %s17, 1
      %s263 = scalar_select %p262, %s17, 1
      %s264 = smul.addr %s263, 10
      %s265 = smul.addr %s264, 4
      %s266 = scalar_lea.vmem %s5, %s265
      %p267 = scmp.lt.s32.totalorder %s17, 1
      %s268 = scalar_select %p267, %s17, 1
      %s269 = smul.addr %s268, 10
      %s270 = smul.addr %s269, 4
      %s271 = scalar_lea.vmem %s6, %s270
      %v272 = vld [vmem:[%s1] sm:$0x1]
      %v273 = vmul.f32 %v272, 0.0078125
      %v274 = vld [vmem:[%s2] sm:$0x1]
      %v275 = vmul.f32 %v274, 0.0078125
      %v276 = vmul.f32 %v273, %v273
      %v277 = vsub.f32 %v275, %v276
      %v278 = vmax.f32 %v277, 0.0
      %v279 = vadd.f32 %v278, 0.001
      %v280 = vrsqrt.pop %v279
      %v281 = vld [vmem:[%s261] sm:$0xf]
      %v282 = vld [vmem:[%s261 + $0x4] sm:$0xf]
      %v283 = vld [vmem:[%s261 + $0x8] sm:$0xf]
      %v284 = vld [vmem:[%s261 + $0xc] sm:$0xf]
      %v285 = vld [vmem:[%s261 + $0x10] sm:$0xf]
      %v286 = vld [vmem:[%s261 + $0x14] sm:$0xf]
      %v287 = vld [vmem:[%s261 + $0x18] sm:$0xf]
      %v288 = vld [vmem:[%s261 + $0x1c] sm:$0xf]
      %v289 = vld [vmem:[%s261 + $0x20] sm:$0xf]
      %v290 = vld [vmem:[%s261 + $0x24] sm:$0xf]
      %v291 = vunpack.c.l.bf16 %v281
      %v292 = vunpack.c.l.bf16 %v282
      %v293 = vunpack.c.l.bf16 %v283
      %v294 = vunpack.c.l.bf16 %v284
      %v295 = vunpack.c.l.bf16 %v285
      %v296 = vunpack.c.l.bf16 %v286
      %v297 = vunpack.c.l.bf16 %v287
      %v298 = vunpack.c.l.bf16 %v288
      %v299 = vunpack.c.l.bf16 %v289
      %v300 = vunpack.c.l.bf16 %v290
      %v302 = vlaneseq
      %v303 = vshrl.u32 %v302, 7
      %v304 = vsub.s32 0, %v303
      %v305 = vrot.slane %v273, %v304
      %v307 = vsub.f32 %v291, %v305
      %v308 = vsub.f32 %v292, %v305
      %v309 = vsub.f32 %v293, %v305
      %v310 = vsub.f32 %v294, %v305
      %v311 = vsub.f32 %v295, %v305
      %v312 = vsub.f32 %v296, %v305
      %v313 = vsub.f32 %v297, %v305
      %v314 = vsub.f32 %v298, %v305
      %v315 = vsub.f32 %v299, %v305
      %v316 = vsub.f32 %v300, %v305
      %v318 = vlaneseq
      %v319 = vshrl.u32 %v318, 7
      %v320 = vsub.s32 0, %v319
      %v321 = vrot.slane %v280, %v320
      %v323 = vmul.f32 %v307, %v321
      %v324 = vmul.f32 %v308, %v321
      %v325 = vmul.f32 %v309, %v321
      %v326 = vmul.f32 %v310, %v321
      %v327 = vmul.f32 %v311, %v321
      %v328 = vmul.f32 %v312, %v321
      %v329 = vmul.f32 %v313, %v321
      %v330 = vmul.f32 %v314, %v321
      %v331 = vmul.f32 %v315, %v321
      %v332 = vmul.f32 %v316, %v321
      %v333 = vld [vmem:[%s3] sm:$0x1]
      %v335 = vlaneseq
      %v336 = vshrl.u32 %v335, 7
      %v337 = vsub.s32 0, %v336
      %v338 = vrot.slane %v333, %v337
      %v340 = vmul.f32 %v323, %v338
      %v341 = vmul.f32 %v324, %v338
      %v342 = vmul.f32 %v325, %v338
      %v343 = vmul.f32 %v326, %v338
      %v344 = vmul.f32 %v327, %v338
      %v345 = vmul.f32 %v328, %v338
      %v346 = vmul.f32 %v329, %v338
      %v347 = vmul.f32 %v330, %v338
      %v348 = vmul.f32 %v331, %v338
      %v349 = vmul.f32 %v332, %v338
      %v350 = vld [vmem:[%s4] sm:$0x1]
      %v352 = vlaneseq
      %v353 = vshrl.u32 %v352, 7
      %v354 = vsub.s32 0, %v353
      %v355 = vrot.slane %v350, %v354
      %v357 = vadd.f32 %v340, %v355
      %v358 = vadd.f32 %v341, %v355
      %v359 = vadd.f32 %v342, %v355
      %v360 = vadd.f32 %v343, %v355
      %v361 = vadd.f32 %v344, %v355
      %v362 = vadd.f32 %v345, %v355
      %v363 = vadd.f32 %v346, %v355
      %v364 = vadd.f32 %v347, %v355
      %v365 = vadd.f32 %v348, %v355
      %v366 = vadd.f32 %v349, %v355
      %v367 = vld [vmem:[%s266] sm:$0xf]
      %v368 = vld [vmem:[%s266 + $0x4] sm:$0xf]
      %v369 = vld [vmem:[%s266 + $0x8] sm:$0xf]
      %v370 = vld [vmem:[%s266 + $0xc] sm:$0xf]
      %v371 = vld [vmem:[%s266 + $0x10] sm:$0xf]
      %v372 = vld [vmem:[%s266 + $0x14] sm:$0xf]
      %v373 = vld [vmem:[%s266 + $0x18] sm:$0xf]
      %v374 = vld [vmem:[%s266 + $0x1c] sm:$0xf]
      %v375 = vld [vmem:[%s266 + $0x20] sm:$0xf]
      %v376 = vld [vmem:[%s266 + $0x24] sm:$0xf]
      %v377 = vunpack.c.l.bf16 %v367
      %v378 = vunpack.c.l.bf16 %v368
      %v379 = vunpack.c.l.bf16 %v369
      %v380 = vunpack.c.l.bf16 %v370
      %v381 = vunpack.c.l.bf16 %v371
      %v382 = vunpack.c.l.bf16 %v372
      %v383 = vunpack.c.l.bf16 %v373
      %v384 = vunpack.c.l.bf16 %v374
      %v385 = vunpack.c.l.bf16 %v375
      %v386 = vunpack.c.l.bf16 %v376
      %v387 = vadd.f32 %v357, %v377
      %v388 = vadd.f32 %v358, %v378
      %v389 = vadd.f32 %v359, %v379
      %v390 = vadd.f32 %v360, %v380
      %v391 = vadd.f32 %v361, %v381
      %v392 = vadd.f32 %v362, %v382
      %v393 = vadd.f32 %v363, %v383
      %v394 = vadd.f32 %v364, %v384
      %v395 = vadd.f32 %v365, %v385
      %v396 = vadd.f32 %v366, %v386
      %v397 = vmax.f32 %v387, 0.0
      %v398 = vmax.f32 %v388, 0.0
      %v399 = vmax.f32 %v389, 0.0
      %v400 = vmax.f32 %v390, 0.0
      %v401 = vmax.f32 %v391, 0.0
      %v402 = vmax.f32 %v392, 0.0
      %v403 = vmax.f32 %v393, 0.0
      %v404 = vmax.f32 %v394, 0.0
      %v405 = vmax.f32 %v395, 0.0
      %v406 = vmax.f32 %v396, 0.0
      %v407 = vpack.c.bf16 %v398, %v397
      %v408 = vpack.c.bf16 %v400, %v399
      %v409 = vpack.c.bf16 %v402, %v401
      %v410 = vpack.c.bf16 %v404, %v403
      %v411 = vpack.c.bf16 %v406, %v405
      %v417 = vunpack.c.l.b16 %v407
      %v418 = vunpack.c.h.b16 %v407
      %v419 = vunpack.c.l.b16 %v408
      %v420 = vunpack.c.h.b16 %v408
      %v421 = vunpack.c.l.b16 %v409
      %v422 = vunpack.c.h.b16 %v409
      %v423 = vunpack.c.l.b16 %v410
      %v424 = vunpack.c.h.b16 %v410
      %v425 = vunpack.c.l.b16 %v411
      %v426 = vunpack.c.h.b16 %v411
      %v427 = vpack.c.b16 %v417, %v417
      %v428 = vpack.c.b16 %v418, %v418
      %v429 = vpack.c.b16 %v419, %v419
      %v430 = vpack.c.b16 %v420, %v420
      %v431 = vpack.c.b16 %v421, %v421
      %v432 = vpack.c.b16 %v422, %v422
      %v433 = vpack.c.b16 %v423, %v423
      %v434 = vpack.c.b16 %v424, %v424
      %v435 = vpack.c.b16 %v425, %v425
      %v436 = vpack.c.b16 %v426, %v426
      %447 = vst [vmem:[%s271] sm:$0xf] %v427
      %448 = vst [vmem:[%s271 + $0x4] sm:$0xf] %v428
      %449 = vst [vmem:[%s271 + $0x8] sm:$0xf] %v429
      %450 = vst [vmem:[%s271 + $0xc] sm:$0xf] %v430
      %451 = vst [vmem:[%s271 + $0x10] sm:$0xf] %v431
      %452 = vst [vmem:[%s271 + $0x14] sm:$0xf] %v432
      %453 = vst [vmem:[%s271 + $0x18] sm:$0xf] %v433
      %454 = vst [vmem:[%s271 + $0x1c] sm:$0xf] %v434
      %455 = vst [vmem:[%s271 + $0x20] sm:$0xf] %v435
      %456 = vst [vmem:[%s271 + $0x24] sm:$0xf] %v436
      %p457 = scmp.lt.s32.totalorder %s17, 1
      %s458 = scalar_select %p457, %s17, 1
      %s459 = smul.addr %s458, 10
      %s460 = smul.addr %s459, 4
      %s461 = scalar_lea.vmem %s6, %s460
      // Predicated region
      $region45: #{residual_block.7} parent=43 // pred_check
        %p462 = pneg %p171
      $region46: #{residual_block.7} parent=43 // pred_check_branch
        %464 = sbr.rel (%p462) target = $region48
      $region47: #{residual_block.7} parent=43 // pred_region
        _
      $region48: #{residual_block.7} parent=43 // pred_fallthru
        _
    $region44: #{residual_block.7} parent=5 // pred_fallthru
      _
    %p465 = scmp.le.s32.totalorder 2, %s12
    // Predicated region
    $region49: #{residual_block.7} parent=5 // pred_check
      %p466 = pneg %p465
    $region50: #{residual_block.7} parent=5 // pred_check_branch
      %468 = sbr.rel (%p466) target = $region52
    $region51: #{residual_block.7} parent=5 // pred_region
      %s469 = ssub.s32 %s12, 2
      // Predicated region
      $region53: #{residual_block.7} parent=51 // pred_check
        %p470 = pneg %p177
      $region54: #{residual_block.7} parent=51 // pred_check_branch
        %472 = sbr.rel (%p470) target = $region56
      $region55: #{residual_block.7} parent=51 // pred_region
        %p473 = scmp.lt.s32.totalorder %s18, 1
        %s474 = scalar_select %p473, %s18, 1
        %s475 = smul.addr %s474, 10
        %s476 = smul.addr %s475, 4
        %s477 = scalar_lea.vmem %s6, %s476
      $region56: #{residual_block.7} parent=51 // pred_fallthru
        _
    $region52: #{residual_block.7} parent=5 // pred_fallthru
      _
  $region6: #{residual_block.7} parent=0 // loop_footer
    %s16 = sadd.s32 1, %s12
  $region7: #{residual_block.7} parent=0 // loop_footer_branch
    %11 = sbr.rel target = $region3
  $region8: #{residual_block.7} parent=0 // loop_exit
    _

// kernel: residual_block.6
$region0: #{residual_block.6}
  #allocation0 [shape = 'u32[]', space=smem, size = 0x4, offset = 0x4, fixed_abs, tag = 'smem constant byte address 0x4 - core index']
  #allocation1 [shape = 'u32[144,128]{1,0:T(1,128)}', space=vmem, size = 0x12000, scoped, tag = 'internal scratch']
  %s0 = inlined_call_operand.vmem [shape: bf16[2,110,128], index: 0, kind: input, shape index: {}]
  %s1 = inlined_call_operand.vmem [shape: bf16[9,128,128], index: 1, kind: input, shape index: {}]
  %s2 = inlined_call_operand.vmem [shape: bf16[2,80,128], index: 2, kind: output, shape index: {0}]
  %s3 = inlined_call_operand.vmem [shape: f32[1,128], index: 3, kind: output, shape index: {1}]
  %s4 = inlined_call_operand.vmem [shape: f32[1,128], index: 4, kind: output, shape index: {2}]
  %5 = xla_tuple %s2, %s3, %s4
  %s6 = sld [smem:[#allocation0]]
  $region61: #{residual_block.6} parent=0
    _
  %s8 = ssub.s32 1, %s6
  %s9 = scalar_select 0, %s8, %s6
  loop: start=0, step=1, limit=4
  $region2: #{residual_block.6} parent=0 // loop_pre_header
    _
  $region3: #{residual_block.6} parent=0 // loop_header
    %s11 = sphi 0, %s15
    %p12 = scmp.ge.s32.totalorder %s11, 4
    %s21 = sphi 0, %s23
    %s24 = sphi 0, %s21
    %s25 = sphi 0, %s24
    %s41 = sphi 0, %s25
    %s45 = sphi 0, %s45
    %s47 = sphi 0, %s45
    %s48 = sphi 0, %s47
    %s62 = sphi 0, %s48
    %s68 = sphi 0, %s70
    %s71 = sphi 0, %s68
    %s72 = sphi 0, %s71
    %s88 = sphi 0, %s72
    %s92 = sphi 0, %s92
    %s94 = sphi 0, %s92
    %s95 = sphi 0, %s94
    %s109 = sphi 0, %s95
    %s113 = sphi 0, %s113
    %s115 = sphi 0, %s113
    %s116 = sphi 0, %s115
    %s130 = sphi 0, %s116
  $region4: #{residual_block.6} parent=0 // loop_header_branch
    %14 = sbr.rel (%p12) target = $region8
  $region5: #{residual_block.6} parent=0 // loop_body
    %s16 = ssub.s32 %s11, 1
    %s17 = ssub.s32 %s11, 2
    %s18 = sadd.s32 %s11, 1
    %s19 = ssub.s32 %s11, %s18
    %p20 = scmp.eq.s32.totalorder %s19, 0
    %s22 = sadd.s32 %s21, 1
    %s23 = scalar_select %p20, %s21, %s22
    %p26 = pneg %p20
    %p27 = scmp.eq.s32.totalorder %s11, 1
    %p28 = por %p26, %p27
    %p29 = scmp.ne.s32.totalorder %s21, %s24
    %p30 = scmp.eq.s32.totalorder %s11, 0
    %p31 = por %p29, %p30
    %p32 = scmp.ne.s32.totalorder %s21, %s24
    %p33 = scmp.eq.s32.totalorder %s16, 1
    %p34 = por %p32, %p33
    %p35 = scmp.ne.s32.totalorder %s24, %s25
    %p36 = scmp.eq.s32.totalorder %s16, 0
    %p37 = por %p35, %p36
    %p38 = scmp.ne.s32.totalorder %s24, %s25
    %p39 = scmp.eq.s32.totalorder %s17, 1
    %p40 = por %p38, %p39
    %p42 = scmp.ne.s32.totalorder %s25, %s41
    %p43 = scmp.eq.s32.totalorder %s17, 0
    %p44 = por %p42, %p43
    %s46 = sadd.s32 %s45, 1
    %p49 = scmp.eq.s32.totalorder %s11, 1
    %p50 = scmp.ne.s32.totalorder %s45, %s47
    %p51 = scmp.eq.s32.totalorder %s11, 0
    %p52 = por %p50, %p51
    %p53 = scmp.ne.s32.totalorder %s45, %s47
    %p54 = scmp.eq.s32.totalorder %s16, 1
    %p55 = por %p53, %p54
    %p56 = scmp.ne.s32.totalorder %s47, %s48
    %p57 = scmp.eq.s32.totalorder %s16, 0
    %p58 = por %p56, %p57
    %p59 = scmp.ne.s32.totalorder %s47, %s48
    %p60 = scmp.eq.s32.totalorder %s17, 1
    %p61 = por %p59, %p60
    %p63 = scmp.ne.s32.totalorder %s48, %s62
    %p64 = scmp.eq.s32.totalorder %s17, 0
    %p65 = por %p63, %p64
    %s66 = ssub.s32 %s11, %s18
    %p67 = scmp.eq.s32.totalorder %s66, 0
    %s69 = sadd.s32 %s68, 1
    %s70 = scalar_select %p67, %s68, %s69
    %p73 = pneg %p67
    %p74 = scmp.eq.s32.totalorder %s11, 1
    %p75 = por %p73, %p74
    %p76 = scmp.ne.s32.totalorder %s68, %s71
    %p77 = scmp.eq.s32.totalorder %s11, 0
    %p78 = por %p76, %p77
    %p79 = scmp.ne.s32.totalorder %s68, %s71
    %p80 = scmp.eq.s32.totalorder %s16, 1
    %p81 = por %p79, %p80
    %p82 = scmp.ne.s32.totalorder %s71, %s72
    %p83 = scmp.eq.s32.totalorder %s16, 0
    %p84 = por %p82, %p83
    %p85 = scmp.ne.s32.totalorder %s71, %s72
    %p86 = scmp.eq.s32.totalorder %s17, 1
    %p87 = por %p85, %p86
    %p89 = scmp.ne.s32.totalorder %s72, %s88
    %p90 = scmp.eq.s32.totalorder %s17, 0
    %p91 = por %p89, %p90
    %s93 = sadd.s32 %s92, 1
    %p96 = scmp.eq.s32.totalorder %s11, 1
    %p97 = scmp.ne.s32.totalorder %s92, %s94
    %p98 = scmp.eq.s32.totalorder %s11, 0
    %p99 = por %p97, %p98
    %p100 = scmp.ne.s32.totalorder %s92, %s94
    %p101 = scmp.eq.s32.totalorder %s16, 1
    %p102 = por %p100, %p101
    %p103 = scmp.ne.s32.totalorder %s94, %s95
    %p104 = scmp.eq.s32.totalorder %s16, 0
    %p105 = por %p103, %p104
    %p106 = scmp.ne.s32.totalorder %s94, %s95
    %p107 = scmp.eq.s32.totalorder %s17, 1
    %p108 = por %p106, %p107
    %p110 = scmp.ne.s32.totalorder %s95, %s109
    %p111 = scmp.eq.s32.totalorder %s17, 0
    %p112 = por %p110, %p111
    %s114 = sadd.s32 %s113, 1
    %p117 = scmp.eq.s32.totalorder %s11, 1
    %p118 = scmp.ne.s32.totalorder %s113, %s115
    %p119 = scmp.eq.s32.totalorder %s11, 0
    %p120 = por %p118, %p119
    %p121 = scmp.ne.s32.totalorder %s113, %s115
    %p122 = scmp.eq.s32.totalorder %s16, 1
    %p123 = por %p121, %p122
    %p124 = scmp.ne.s32.totalorder %s115, %s116
    %p125 = scmp.eq.s32.totalorder %s16, 0
    %p126 = por %p124, %p125
    %p127 = scmp.ne.s32.totalorder %s115, %s116
    %p128 = scmp.eq.s32.totalorder %s17, 1
    %p129 = por %p127, %p128
    %p131 = scmp.ne.s32.totalorder %s116, %s130
    %p132 = scmp.eq.s32.totalorder %s17, 0
    %p133 = por %p131, %p132
    %p134 = scmp.le.s32.totalorder 1, %s11
    %p135 = scmp.lt.s32.totalorder %s11, 3
    %p136 = pnand %p134, %p135
    %p137 = pneg %p136
    // Predicated region
    $region9: #{residual_block.6} parent=5 // pred_check
      _
    $region10: #{residual_block.6} parent=5 // pred_check_branch
      %139 = sbr.rel (%p136) target = $region12
    $region11: #{residual_block.6} parent=5 // pred_region
      %s140 = ssub.s32 %s11, 1
      // Predicated region
      $region13: #{residual_block.6} parent=11 // pred_check
        %p141 = pneg %p58
      $region14: #{residual_block.6} parent=11 // pred_check_branch
        %143 = sbr.rel (%p141) target = $region16
      $region15: #{residual_block.6} parent=11 // pred_region
        _
      $region16: #{residual_block.6} parent=11 // pred_fallthru
        _
    $region12: #{residual_block.6} parent=5 // pred_fallthru
      _
    %p144 = scmp.lt.s32.totalorder %s11, 2
    // Predicated region
    $region17: #{residual_block.6} parent=5 // pred_check
      %p145 = pneg %p144
    $region18: #{residual_block.6} parent=5 // pred_check_branch
      %147 = sbr.rel (%p145) target = $region20
    $region19: #{residual_block.6} parent=5 // pred_region
      // Predicated region
      $region21: #{residual_block.6} parent=19 // pred_check
        %p148 = pneg %p31
      $region22: #{residual_block.6} parent=19 // pred_check_branch
        %150 = sbr.rel (%p148) target = $region24
      $region23: #{residual_block.6} parent=19 // pred_region
        %p151 = scmp.lt.s32.totalorder %s11, 1
        %s152 = scalar_select %p151, %s11, 1
        %s153 = smul.addr %s152, 14
        %s154 = smul.addr %s153, 4
        %s155 = scalar_lea.vmem %s0, %s154
      $region24: #{residual_block.6} parent=19 // pred_fallthru
        _
    $region20: #{residual_block.6} parent=5 // pred_fallthru
      _
    %p156 = scmp.le.s32.totalorder 1, %s11
    %p157 = scmp.lt.s32.totalorder %s11, 3
    %p158 = pnand %p156, %p157
    %p159 = pneg %p158
    // Predicated region
    $region25: #{residual_block.6} parent=5 // pred_check
      _
    $region26: #{residual_block.6} parent=5 // pred_check_branch
      %161 = sbr.rel (%p158) target = $region28
    $region27: #{residual_block.6} parent=5 // pred_region
      %s162 = ssub.s32 %s11, 1
      %p163 = scmp.lt.s32.totalorder %s16, 1
      %s164 = scalar_select %p163, %s16, 1
      %s165 = smul.addr %s164, 14
      %s166 = smul.addr %s165, 4
      %s167 = scalar_lea.vmem %s0, %s166
      %p168 = pneg %p37
      %p169 = pneg %p34
      %p170 = pneg %p58
      %p171 = pneg %p55
      %p172 = pneg %p84
      %p173 = pneg %p81
      %p174 = scmp.lt.s32.totalorder %s16, 1
      %s175 = scalar_select %p174, %s16, 1
      %s176 = smul.addr %s175, 10
      %s177 = smul.addr %s176, 4
      %s178 = scalar_lea.vmem %s2, %s177
      %p179 = pneg %p105
      %p180 = pneg %p102
      %p181 = pneg %p126
      %p182 = pneg %p123
      %p183 = scmp.lt.s32.totalorder %s16, 1
      %s184 = scalar_select %p183, %s16, 1
      %s185 = smul.addr %s184, 14
      %s186 = smul.addr %s185, 4
      %s187 = scalar_lea.vmem %s0, %s186
      %p188 = scmp.lt.s32.totalorder %s16, 1
      %s189 = scalar_select %p188, %s16, 1
      %s190 = smul.addr %s189, 10
      %s191 = smul.addr %s190, 4
      %s192 = scalar_lea.vmem %s2, %s191
      %v194 = vld [vmem:[%s187] sm:$0xf]
      %v195 = vld [vmem:[%s187 + $0x4] sm:$0xf]
      %v196 = vld [vmem:[%s187 + $0x8] sm:$0xf]
      %v197 = vld [vmem:[%s187 + $0xc] sm:$0xf]
      %v198 = vld [vmem:[%s187 + $0x10] sm:$0xf]
      %v199 = vld [vmem:[%s187 + $0x14] sm:$0xf]
      %v200 = vld [vmem:[%s187 + $0x18] sm:$0xf]
      %v201 = vld [vmem:[%s187 + $0x1c] sm:$0xf]
      %v202 = vld [vmem:[%s187 + $0x20] sm:$0xf]
      %v203 = vld [vmem:[%s187 + $0x24] sm:$0xf]
      %v204 = vld [vmem:[%s1] sm:$0xf]
      %v205 = vld [vmem:[%s1 + $0x4] sm:$0xf]
      %v206 = vld [vmem:[%s1 + $0x8] sm:$0xf]
      %v207 = vld [vmem:[%s1 + $0xc] sm:$0xf]
      %v208 = vld [vmem:[%s1 + $0x10] sm:$0xf]
      %v209 = vld [vmem:[%s1 + $0x14] sm:$0xf]
      %v210 = vld [vmem:[%s1 + $0x18] sm:$0xf]
      %v211 = vld [vmem:[%s1 + $0x1c] sm:$0xf]
      %v212 = vld [vmem:[%s1 + $0x20] sm:$0xf]
      %v213 = vld [vmem:[%s1 + $0x24] sm:$0xf]
      %v214 = vld [vmem:[%s1 + $0x28] sm:$0xf]
      %v215 = vld [vmem:[%s1 + $0x2c] sm:$0xf]
      %v216 = vld [vmem:[%s1 + $0x30] sm:$0xf]
      %v217 = vld [vmem:[%s1 + $0x34] sm:$0xf]
      %v218 = vld [vmem:[%s1 + $0x38] sm:$0xf]
      %v219 = vld [vmem:[%s1 + $0x3c] sm:$0xf]
      %v220 = vld [vmem:[%s187 + $0x28] sm:$0x1]
      %s221 = scalar_lea.vmem %s1, 64
      %v222 = vld [vmem:[%s221] sm:$0xf]
      %v223 = vld [vmem:[%s221 + $0x4] sm:$0xf]
      %v224 = vld [vmem:[%s221 + $0x8] sm:$0xf]
      %v225 = vld [vmem:[%s221 + $0xc] sm:$0xf]
      %v226 = vld [vmem:[%s221 + $0x10] sm:$0xf]
      %v227 = vld [vmem:[%s221 + $0x14] sm:$0xf]
      %v228 = vld [vmem:[%s221 + $0x18] sm:$0xf]
      %v229 = vld [vmem:[%s221 + $0x1c] sm:$0xf]
      %v230 = vld [vmem:[%s221 + $0x20] sm:$0xf]
      %v231 = vld [vmem:[%s221 + $0x24] sm:$0xf]
      %v232 = vld [vmem:[%s221 + $0x28] sm:$0xf]
      %v233 = vld [vmem:[%s221 + $0x2c] sm:$0xf]
      %v234 = vld [vmem:[%s221 + $0x30] sm:$0xf]
      %v235 = vld [vmem:[%s221 + $0x34] sm:$0xf]
      %v236 = vld [vmem:[%s221 + $0x38] sm:$0xf]
      %v237 = vld [vmem:[%s221 + $0x3c] sm:$0xf]
      %v249 = vunpack.c.l.b16 %v194
      %v250 = vunpack.c.l.b16 %v195
      %v251 = vunpack.c.l.b16 %v196
      %v252 = vunpack.c.l.b16 %v197
      %v253 = vunpack.c.l.b16 %v198
      %v254 = vunpack.c.l.b16 %v199
      %v255 = vunpack.c.l.b16 %v200
      %v256 = vunpack.c.l.b16 %v201
      %v257 = vunpack.c.l.b16 %v202
      %v258 = vunpack.c.l.b16 %v203
      %v259 = vunpack.c.l.b16 %v220
      %v260 = vpack.c.b16 %v250, %v249
      %v261 = vpack.c.b16 %v252, %v251
      %v262 = vpack.c.b16 %v254, %v253
      %v263 = vpack.c.b16 %v256, %v255
      %v264 = vpack.c.b16 %v258, %v257
      %v265 = vpack.c.b16 %v259, %v259
      %vm266 = vsmask.f32 7424
      %v268 = vshrl.u32 %v260, 16
      %v270 = vshll.u32 %v260, 16
      %v272 = vrot.slane %v270, 1
      %v273 = vor.u32 %v268, %v272
      %v275 = vshll.u32 %v261, 16
      %v277 = vrot.slane %v275, 1
      %v278 = vsel %vm266, %v273, %v277
      %v279 = vshrl.u32 %v261, 16
      %v281 = vor.u32 %v279, %v277
      %v283 = vshll.u32 %v262, 16
      %v285 = vrot.slane %v283, 1
      %v286 = vsel %vm266, %v281, %v285
      %v287 = vshrl.u32 %v262, 16
      %v289 = vor.u32 %v287, %v285
      %v291 = vshll.u32 %v263, 16
      %v293 = vrot.slane %v291, 1
      %v294 = vsel %vm266, %v289, %v293
      %v295 = vshrl.u32 %v263, 16
      %v297 = vor.u32 %v295, %v293
      %v299 = vshll.u32 %v264, 16
      %v301 = vrot.slane %v299, 1
      %v302 = vsel %vm266, %v297, %v301
      %v303 = vshrl.u32 %v264, 16
      %v305 = vor.u32 %v303, %v301
      %v307 = vshll.u32 %v265, 16
      %v309 = vrot.slane %v307, 1
      %v310 = vsel %vm266, %v305, %v309
      %v332 = vunpack.c.l.b16 %v222
      %v333 = vunpack.c.l.b16 %v223
      %v334 = vunpack.c.l.b16 %v224
      %v335 = vunpack.c.l.b16 %v225
      %v336 = vunpack.c.l.b16 %v226
      %v337 = vunpack.c.l.b16 %v227
      %v338 = vunpack.c.l.b16 %v228
      %v339 = vunpack.c.l.b16 %v229
      %v340 = vunpack.c.l.b16 %v230
      %v341 = vunpack.c.l.b16 %v231
      %v342 = vunpack.c.l.b16 %v232
      %v343 = vunpack.c.l.b16 %v233
      %v344 = vunpack.c.l.b16 %v234
      %v345 = vunpack.c.l.b16 %v235
      %v346 = vunpack.c.l.b16 %v236
      %v347 = vunpack.c.l.b16 %v237
      %v348 = vpack.c.b16 %v333, %v332
      %v349 = vpack.c.b16 %v335, %v334
      %v350 = vpack.c.b16 %v337, %v336
      %v351 = vpack.c.b16 %v339, %v338
      %v352 = vpack.c.b16 %v341, %v340
      %v353 = vpack.c.b16 %v343, %v342
      %v354 = vpack.c.b16 %v345, %v344
      %v355 = vpack.c.b16 %v347, %v346
      %364 = vmatprep.subr.bf16.mxu0 0
      %365 = vmatpush1.bf16.msra.mxu0 %v348
      %366 = vmatprep.subr.bf16.mxu0 0
      %367 = vmatpush1.bf16.msra.mxu0 %v349
      %368 = vmatprep.subr.bf16.mxu0 0
      %369 = vmatpush1.bf16.msra.mxu0 %v350
      %370 = vmatprep.subr.bf16.mxu0 0
      %371 = vmatpush1.bf16.msra.mxu0 %v351
      %372 = vmatprep.subr.bf16.mxu0 0
      %373 = vmatpush1.bf16.msra.mxu0 %v352
      %374 = vmatprep.subr.bf16.mxu0 0
      %375 = vmatpush1.bf16.msra.mxu0 %v353
      %376 = vmatprep.subr.bf16.mxu0 0
      %377 = vmatpush1.bf16.msra.mxu0 %v354
      %378 = vmatprep.subr.bf16.mxu0 0
      %379 = vmatpush1.bf16.msra.mxu0 %v355
      %380 = vmatprep.subr.bf16.mxu0 0
      %381 = vmatpush1.bf16.msra.mxu0 0
      %382 = vmatprep.subr.bf16.mxu0 0
      %383 = vmatpush1.bf16.msra.mxu0 0
      %384 = vmatprep.subr.bf16.mxu0 0
      %385 = vmatpush1.bf16.msra.mxu0 0
      %386 = vmatprep.subr.bf16.mxu0 0
      %387 = vmatpush1.bf16.msra.mxu0 0
      %388 = vmatprep.subr.bf16.mxu0 0
      %389 = vmatpush1.bf16.msra.mxu0 0
      %390 = vmatprep.subr.bf16.mxu0 0
      %391 = vmatpush1.bf16.msra.mxu0 0
      %392 = vmatprep.subr.bf16.mxu0 0
      %393 = vmatpush1.bf16.msra.mxu0 0
      %394 = vmatprep.subr.bf16.mxu0 0
      %395 = vmatpush1.bf16.msra.mxu0 0
      %396 = vmatprep.mubr.bf16.mxu0 0
      %397 = vmatmul.mubr.bf16.gmra.mrb[0].mxu0 %v278
      %v398 = vpop.f32.mrb[0].mxu0
      %v399 = vadd.f32 0.0, %v398
      %v400 = vpop.f32.mrb[0].mxu0
      %v401 = vpop.f32.mrb[0].mxu0
      %v402 = vadd.f32 0.0, %v401
      %v403 = vpop.f32.mrb[0].mxu0
      %404 = vmatprep.mubr.bf16.mxu0 0
      %405 = vmatmul.mubr.bf16.gmra.mrb[0].mxu0 %v286
      %v406 = vpop.f32.mrb[0].mxu0
      %v407 = vadd.f32 0.0, %v406
      %v408 = vpop.f32.mrb[0].mxu0
      %v409 = vpop.f32.mrb[0].mxu0
      %v410 = vadd.f32 0.0, %v409
      %v411 = vpop.f32.mrb[0].mxu0
      %412 = vmatprep.mubr.bf16.mxu0 0
      %413 = vmatmul.mubr.bf16.gmra.mrb[0].mxu0 %v294
      %v414 = vpop.f32.mrb[0].mxu0
      %v415 = vadd.f32 0.0, %v414
      %v416 = vpop.f32.mrb[0].mxu0
      %v417 = vpop.f32.mrb[0].mxu0
      %v418 = vadd.f32 0.0, %v417
      %v419 = vpop.f32.mrb[0].mxu0
      %420 = vmatprep.mubr.bf16.mxu0 0
      %421 = vmatmul.mubr.bf16.gmra.mrb[0].mxu0 %v302
      %v422 = vpop.f32.mrb[0].mxu0
      %v423 = vadd.f32 0.0, %v422
      %v424 = vpop.f32.mrb[0].mxu0
      %v425 = vpop.f32.mrb[0].mxu0
      %v426 = vadd.f32 0.0, %v425
      %v427 = vpop.f32.mrb[0].mxu0
      %428 = vmatprep.mubr.bf16.mxu0 0
      %429 = vmatmul.mubr.bf16.gmra.mrb[0].mxu0 %v310
      %v430 = vpop.f32.mrb[0].mxu0
      %v431 = vadd.f32 0.0, %v430
      %v432 = vpop.f32.mrb[0].mxu0
      %v433 = vpop.f32.mrb[0].mxu0
      %v434 = vadd.f32 0.0, %v433
      %v435 = vpop.f32.mrb[0].mxu0
      %436 = vdwg.mxu0
      %v458 = vunpack.c.l.b16 %v204
      %v459 = vunpack.c.l.b16 %v205
      %v460 = vunpack.c.l.b16 %v206
      %v461 = vunpack.c.l.b16 %v207
      %v462 = vunpack.c.l.b16 %v208
      %v463 = vunpack.c.l.b16 %v209
      %v464 = vunpack.c.l.b16 %v210
      %v465 = vunpack.c.l.b16 %v211
      %v466 = vunpack.c.l.b16 %v212
      %v467 = vunpack.c.l.b16 %v213
      %v468 = vunpack.c.l.b16 %v214
      %v469 = vunpack.c.l.b16 %v215
      %v470 = vunpack.c.l.b16 %v216
      %v471 = vunpack.c.l.b16 %v217
      %v472 = vunpack.c.l.b16 %v218
      %v473 = vunpack.c.l.b16 %v219
      %v474 = vpack.c.b16 %v459, %v458
      %v475 = vpack.c.b16 %v461, %v460
      %v476 = vpack.c.b16 %v463, %v462
      %v477 = vpack.c.b16 %v465, %v464
      %v478 = vpack.c.b16 %v467, %v466
      %v479 = vpack.c.b16 %v469, %v468
      %v480 = vpack.c.b16 %v471, %v470
      %v481 = vpack.c.b16 %v473, %v472
      %490 = vmatprep.subr.bf16.mxu0 0
      %491 = vmatpush1.bf16.msra.mxu0 %v474
      %492 = vmatprep.subr.bf16.mxu0 0
      %493 = vmatpush1.bf16.msra.mxu0 %v475
      %494 = vmatprep.subr.bf16.mxu0 0
      %495 = vmatpush1.bf16.msra.mxu0 %v476
      %496 = vmatprep.subr.bf16.mxu0 0
      %497 = vmatpush1.bf16.msra.mxu0 %v477
      %498 = vmatprep.subr.bf16.mxu0 0
      %499 = vmatpush1.bf16.msra.mxu0 %v478
      %500 = vmatprep.subr.bf16.mxu0 0
      %501 = vmatpush1.bf16.msra.mxu0 %v479
      %502 = vmatprep.subr.bf16.mxu0 0
      %503 = vmatpush1.bf16.msra.mxu0 %v480
      %504 = vmatprep.subr.bf16.mxu0 0
      %505 = vmatpush1.bf16.msra.mxu0 %v481
      %506 = vmatprep.subr.bf16.mxu0 0
      %507 = vmatpush1.bf16.msra.mxu0 0
      %508 = vmatprep.subr.bf16.mxu0 0
      %509 = vmatpush1.bf16.msra.mxu0 0
      %510 = vmatprep.subr.bf16.mxu0 0
      %511 = vmatpush1.bf16.msra.mxu0 0
      %512 = vmatprep.subr.bf16.mxu0 0
      %513 = vmatpush1.bf16.msra.mxu0 0
      %514 = vmatprep.subr.bf16.mxu0 0
      %515 = vmatpush1.bf16.msra.mxu0 0
      %516 = vmatprep.subr.bf16.mxu0 0
      %517 = vmatpush1.bf16.msra.mxu0 0
      %518 = vmatprep.subr.bf16.mxu0 0
      %519 = vmatpush1.bf16.msra.mxu0 0
      %520 = vmatprep.subr.bf16.mxu0 0
      %521 = vmatpush1.bf16.msra.mxu0 0
      %522 = vmatprep.mubr.bf16.mxu0 0
      %523 = vmatmul.mubr.bf16.gmra.mrb[0].mxu0 %v260
      %v524 = vpop.f32.mrb[0].mxu0
      %v525 = vadd.f32 %v399, %v524
      %v526 = vpop.f32.mrb[0].mxu0
      %v527 = vpop.f32.mrb[0].mxu0
      %v528 = vadd.f32 %v402, %v527
      %v529 = vpop.f32.mrb[0].mxu0
      %530 = vmatprep.mubr.bf16.mxu0 0
      %531 = vmatmul.mubr.bf16.gmra.mrb[0].mxu0 %v261
      %v532 = vpop.f32.mrb[0].mxu0
      %v533 = vadd.f32 %v407, %v532
      %v534 = vpop.f32.mrb[0].mxu0
      %v535 = vpop.f32.mrb[0].mxu0
      %v536 = vadd.f32 %v410, %v535
      %v537 = vpop.f32.mrb[0].mxu0
      %538 = vmatprep.mubr.bf16.mxu0 0
      %539 = vmatmul.mubr.bf16.gmra.mrb[0].mxu0 %v262
      %v540 = vpop.f32.mrb[0].mxu0
      %v541 = vadd.f32 %v415, %v540
      %v542 = vpop.f32.mrb[0].mxu0
      %v543 = vpop.f32.mrb[0].mxu0
      %v544 = vadd.f32 %v418, %v543
      %v545 = vpop.f32.mrb[0].mxu0
      %546 = vmatprep.mubr.bf16.mxu0 0
      %547 = vmatmul.mubr.bf16.gmra.mrb[0].mxu0 %v263
      %v548 = vpop.f32.mrb[0].mxu0
      %v549 = vadd.f32 %v423, %v548
      %v550 = vpop.f32.mrb[0].mxu0
      %v551 = vpop.f32.mrb[0].mxu0
      %v552 = vadd.f32 %v426, %v551
      %v553 = vpop.f32.mrb[0].mxu0
      %554 = vmatprep.mubr.bf16.mxu0 0
      %555 = vmatmul.mubr.bf16.gmra.mrb[0].mxu0 %v264
      %v556 = vpop.f32.mrb[0].mxu0
      %v557 = vadd.f32 %v431, %v556
      %v558 = vpop.f32.mrb[0].mxu0
      %v559 = vpop.f32.mrb[0].mxu0
      %v560 = vadd.f32 %v434, %v559
      %v561 = vpop.f32.mrb[0].mxu0
      %562 = vdwg.mxu0
      %v563 = vld [vmem:[%s187] sm:$0xe]
      %s564 = scalar_lea.vmem %s1, 128
      %v565 = vld [vmem:[%s564] sm:$0xf]
      %v566 = vld [vmem:[%s564 + $0x4] sm:$0xf]
      %v567 = vld [vmem:[%s564 + $0x8] sm:$0xf]
      %v568 = vld [vmem:[%s564 + $0xc] sm:$0xf]
      %v569 = vld [vmem:[%s564 + $0x10] sm:$0xf]
      %v570 = vld [vmem:[%s564 + $0x14] sm:$0xf]
      %v571 = vld [vmem:[%s564 + $0x18] sm:$0xf]
      %v572 = vld [vmem:[%s564 + $0x1c] sm:$0xf]
      %v573 = vld [vmem:[%s564 + $0x20] sm:$0xf]
      %v574 = vld [vmem:[%s564 + $0x24] sm:$0xf]
      %v575 = vld [vmem:[%s564 + $0x28] sm:$0xf]
      %v576 = vld [vmem:[%s564 + $0x2c] sm:$0xf]
      %v577 = vld [vmem:[%s564 + $0x30] sm:$0xf]
      %v578 = vld [vmem:[%s564 + $0x34] sm:$0xf]
      %v579 = vld [vmem:[%s564 + $0x38] sm:$0xf]
      %v580 = vld [vmem:[%s564 + $0x3c] sm:$0xf]
      %v582 = vunpack.c.l.b16 %v563
      %v583 = vpack.c.b16 %v250, %v582
      %vm584 = vcmask 1046528
      %v585 = vrot.slane %v583, 1
      %v586 = vrot.slane %v261, 1
      %v587 = vsel %vm584, %v585, %v586
      %v588 = vrot.slane %v262, 1
      %v589 = vsel %vm584, %v586, %v588
      %v590 = vrot.slane %v263, 1
      %v591 = vsel %vm584, %v588, %v590
      %v592 = vrot.slane %v264, 1
      %v593 = vsel %vm584, %v590, %v592
      %v594 = vrot.slane %v265, 1
      %v595 = vsel %vm584, %v592, %v594
      %v617 = vunpack.c.l.b16 %v565
      %v618 = vunpack.c.l.b16 %v566
      %v619 = vunpack.c.l.b16 %v567
      %v620 = vunpack.c.l.b16 %v568
      %v621 = vunpack.c.l.b16 %v569
      %v622 = vunpack.c.l.b16 %v570
      %v623 = vunpack.c.l.b16 %v571
      %v624 = vunpack.c.l.b16 %v572
      %v625 = vunpack.c.l.b16 %v573
      %v626 = vunpack.c.l.b16 %v574
      %v627 = vunpack.c.l.b16 %v575
      %v628 = vunpack.c.l.b16 %v576
      %v629 = vunpack.c.l.b16 %v577
      %v630 = vunpack.c.l.b16 %v578
      %v631 = vunpack.c.l.b16 %v579
      %v632 = vunpack.c.l.b16 %v580
      %v633 = vpack.c.b16 %v618, %v617
      %v634 = vpack.c.b16 %v620, %v619
      %v635 = vpack.c.b16 %v622, %v621
      %v636 = vpack.c.b16 %v624, %v623
      %v637 = vpack.c.b16 %v626, %v625
      %v638 = vpack.c.b16 %v628, %v627
      %v639 = vpack.c.b16 %v630, %v629
      %v640 = vpack.c.b16 %v632, %v631
      %649 = vmatprep.subr.bf16.mxu0 0
      %650 = vmatpush1.bf16.msra.mxu0 %v633
      %651 = vmatprep.subr.bf16.mxu0 0
      %652 = vmatpush1.bf16.msra.mxu0 %v634
      %653 = vmatprep.subr.bf16.mxu0 0
      %654 = vmatpush1.bf16.msra.mxu0 %v635
      %655 = vmatprep.subr.bf16.mxu0 0
      %656 = vmatpush1.bf16.msra.mxu0 %v636
      %657 = vmatprep.subr.bf16.mxu0 0
      %658 = vmatpush1.bf16.msra.mxu0 %v637
      %659 = vmatprep.subr.bf16.mxu0 0
      %660 = vmatpush1.bf16.msra.mxu0 %v638
      %661 = vmatprep.subr.bf16.mxu0 0
      %662 = vmatpush1.bf16.msra.mxu0 %v639
      %663 = vmatprep.subr.bf16.mxu0 0
      %664 = vmatpush1.bf16.msra.mxu0 %v640
      %665 = vmatprep.subr.bf16.mxu0 0
      %666 = vmatpush1.bf16.msra.mxu0 0
      %667 = vmatprep.subr.bf16.mxu0 0
      %668 = vmatpush1.bf16.msra.mxu0 0
      %669 = vmatprep.subr.bf16.mxu0 0
      %670 = vmatpush1.bf16.msra.mxu0 0
      %671 = vmatprep.subr.bf16.mxu0 0
      %672 = vmatpush1.bf16.msra.mxu0 0
      %673 = vmatprep.subr.bf16.mxu0 0
      %674 = vmatpush1.bf16.msra.mxu0 0
      %675 = vmatprep.subr.bf16.mxu0 0
      %676 = vmatpush1.bf16.msra.mxu0 0
      %677 = vmatprep.subr.bf16.mxu0 0
      %678 = vmatpush1.bf16.msra.mxu0 0
      %679 = vmatprep.subr.bf16.mxu0 0
      %680 = vmatpush1.bf16.msra.mxu0 0
      %681 = vmatprep.mubr.bf16.mxu0 0
      %682 = vmatmul.mubr.bf16.gmra.mrb[0].mxu0 %v587
      %v683 = vpop.f32.mrb[0].mxu0
      %v684 = vadd.f32 0.0, %v683
      %v685 = vpop.f32.mrb[0].mxu0
      %v686 = vpop.f32.mrb[0].mxu0
      %v687 = vadd.f32 0.0, %v686
      %v688 = vpop.f32.mrb[0].mxu0
      %689 = vmatprep.mubr.bf16.mxu0 0
      %690 = vmatmul.mubr.bf16.gmra.mrb[0].mxu0 %v589
      %v691 = vpop.f32.mrb[0].mxu0
      %v692 = vadd.f32 0.0, %v691
      %v693 = vpop.f32.mrb[0].mxu0
      %v694 = vpop.f32.mrb[0].mxu0
      %v695 = vadd.f32 0.0, %v694
      %v696 = vpop.f32.mrb[0].mxu0
      %697 = vmatprep.mubr.bf16.mxu0 0
      %698 = vmatmul.mubr.bf16.gmra.mrb[0].mxu0 %v591
      %v699 = vpop.f32.mrb[0].mxu0
      %v700 = vadd.f32 0.0, %v699
      %v701 = vpop.f32.mrb[0].mxu0
      %v702 = vpop.f32.mrb[0].mxu0
      %v703 = vadd.f32 0.0, %v702
      %v704 = vpop.f32.mrb[0].mxu0
      %705 = vmatprep.mubr.bf16.mxu0 0
      %706 = vmatmul.mubr.bf16.gmra.mrb[0].mxu0 %v593
      %v707 = vpop.f32.mrb[0].mxu0
      %v708 = vadd.f32 0.0, %v707
      %v709 = vpop.f32.mrb[0].mxu0
      %v710 = vpop.f32.mrb[0].mxu0
      %v711 = vadd.f32 0.0, %v710
      %v712 = vpop.f32.mrb[0].mxu0
      %713 = vmatprep.mubr.bf16.mxu0 0
      %714 = vmatmul.mubr.bf16.gmra.mrb[0].mxu0 %v595
      %v715 = vpop.f32.mrb[0].mxu0
      %v716 = vadd.f32 0.0, %v715
      %v717 = vpop.f32.mrb[0].mxu0
      %v718 = vpop.f32.mrb[0].mxu0
      %v719 = vadd.f32 0.0, %v718
      %v720 = vpop.f32.mrb[0].mxu0
      %721 = vdwg.mxu0
      %v722 = vadd.f32 %v525, %v684
      %v723 = vadd.f32 %v528, %v687
      %v724 = vadd.f32 %v533, %v692
      %v725 = vadd.f32 %v536, %v695
      %v726 = vadd.f32 %v541, %v700
      %v727 = vadd.f32 %v544, %v703
      %v728 = vadd.f32 %v549, %v708
      %v729 = vadd.f32 %v552, %v711
      %v730 = vadd.f32 %v557, %v716
      %v731 = vadd.f32 %v560, %v719
      %v732 = vld [vmem:[%s187 + $0x4] sm:$0xe]
      %v733 = vld [vmem:[%s187 + $0x8] sm:$0xf]
      %v734 = vld [vmem:[%s187 + $0xc] sm:$0xf]
      %v735 = vld [vmem:[%s187 + $0x10] sm:$0xf]
      %v736 = vld [vmem:[%s187 + $0x14] sm:$0xf]
      %v737 = vld [vmem:[%s187 + $0x18] sm:$0xf]
      %v738 = vld [vmem:[%s187 + $0x1c] sm:$0xf]
      %v739 = vld [vmem:[%s187 + $0x20] sm:$0xf]
      %v740 = vld [vmem:[%s187 + $0x24] sm:$0xf]
      %v741 = vld [vmem:[%s187 + $0x28] sm:$0xf]
      %v742 = vld [vmem:[%s187 + $0x2c] sm:$0x1]
      %s743 = scalar_lea.vmem %s1, 192
      %v744 = vld [vmem:[%s743] sm:$0xf]
      %v745 = vld [vmem:[%s743 + $0x4] sm:$0xf]
      %v746 = vld [vmem:[%s743 + $0x8] sm:$0xf]
      %v747 = vld [vmem:[%s743 + $0xc] sm:$0xf]
      %v748 = vld [vmem:[%s743 + $0x10] sm:$0xf]
      %v749 = vld [vmem:[%s743 + $0x14] sm:$0xf]
      %v750 = vld [vmem:[%s743 + $0x18] sm:$0xf]
      %v751 = vld [vmem:[%s743 + $0x1c] sm:$0xf]
      %v752 = vld [vmem:[%s743 + $0x20] sm:$0xf]
      %v753 = vld [vmem:[%s743 + $0x24] sm:$0xf]
      %v754 = vld [vmem:[%s743 + $0x28] sm:$0xf]
      %v755 = vld [vmem:[%s743 + $0x2c] sm:$0xf]
      %v756 = vld [vmem:[%s743 + $0x30] sm:$0xf]
      %v757 = vld [vmem:[%s743 + $0x34] sm:$0xf]
      %v758 = vld [vmem:[%s743 + $0x38] sm:$0xf]
      %v759 = vld [vmem:[%s743 + $0x3c] sm:$0xf]
      %v771 = vunpack.c.l.b16 %v732
      %v772 = vunpack.c.l.b16 %v733
      %v773 = vunpack.c.l.b16 %v734
      %v774 = vunpack.c.l.b16 %v735
      %v775 = vunpack.c.l.b16 %v736
      %v776 = vunpack.c.l.b16 %v737
      %v777 = vunpack.c.l.b16 %v738
      %v778 = vunpack.c.l.b16 %v739
      %v779 = vunpack.c.l.b16 %v740
      %v780 = vunpack.c.l.b16 %v741
      %v781 = vunpack.c.l.b16 %v742
      %v782 = vpack.c.b16 %v772, %v771
      %v783 = vpack.c.b16 %v774, %v773
      %v784 = vpack.c.b16 %v776, %v775
      %v785 = vpack.c.b16 %v778, %v777
      %v786 = vpack.c.b16 %v780, %v779
      %v787 = vpack.c.b16 %v781, %v781
      %v788 = vrot.slane %v782, 1
      %v789 = vrot.slane %v783, 1
      %v790 = vsel %vm584, %v788, %v789
      %v791 = vrot.slane %v784, 1
      %v792 = vsel %vm584, %v789, %v791
      %v793 = vrot.slane %v785, 1
      %v794 = vsel %vm584, %v791, %v793
      %v795 = vrot.slane %v786, 1
      %v796 = vsel %vm584, %v793, %v795
      %v797 = vrot.slane %v787, 1
      %v798 = vsel %vm584, %v795, %v797
      %v820 = vunpack.c.l.b16 %v744
      %v821 = vunpack.c.l.b16 %v745
      %v822 = vunpack.c.l.b16 %v746
      %v823 = vunpack.c.l.b16 %v747
      %v824 = vunpack.c.l.b16 %v748
      %v825 = vunpack.c.l.b16 %v749
      %v826 = vunpack.c.l.b16 %v750
      %v827 = vunpack.c.l.b16 %v751
      %v828 = vunpack.c.l.b16 %v752
      %v829 = vunpack.c.l.b16 %v753
      %v830 = vunpack.c.l.b16 %v754
      %v831 = vunpack.c.l.b16 %v755
      %v832 = vunpack.c.l.b16 %v756
      %v833 = vunpack.c.l.b16 %v757
      %v834 = vunpack.c.l.b16 %v758
      %v835 = vunpack.c.l.b16 %v759
      %v836 = vpack.c.b16 %v821, %v820
      %v837 = vpack.c.b16 %v823, %v822
      %v838 = vpack.c.b16 %v825, %v824
      %v839 = vpack.c.b16 %v827, %v826
      %v840 = vpack.c.b16 %v829, %v828
      %v841 = vpack.c.b16 %v831, %v830
      %v842 = vpack.c.b16 %v833, %v832
      %v843 = vpack.c.b16 %v835, %v834
      %852 = vmatprep.subr.bf16.mxu0 0
      %853 = vmatpush1.bf16.msra.mxu0 %v836
      %854 = vmatprep.subr.bf16.mxu0 0
      %855 = vmatpush1.bf16.msra.mxu0 %v837
      %856 = vmatprep.subr.bf16.mxu0 0
      %857 = vmatpush1.bf16.msra.mxu0 %v838
      %858 = vmatprep.subr.bf16.mxu0 0
      %859 = vmatpush1.bf16.msra.mxu0 %v839
      %860 = vmatprep.subr.bf16.mxu0 0
      %861 = vmatpush1.bf16.msra.mxu0 %v840
      %862 = vmatprep.subr.bf16.mxu0 0
      %863 = vmatpush1.bf16.msra.mxu0 %v841
      %864 = vmatprep.subr.bf16.mxu0 0
      %865 = vmatpush1.bf16.msra.mxu0 %v842
      %866 = vmatprep.subr.bf16.mxu0 0
      %867 = vmatpush1.bf16.msra.mxu0 %v843
      %868 = vmatprep.subr.bf16.mxu0 0
      %869 = vmatpush1.bf16.msra.mxu0 0
      %870 = vmatprep.subr.bf16.mxu0 0
      %871 = vmatpush1.bf16.msra.mxu0 0
      %872 = vmatprep.subr.bf16.mxu0 0
      %873 = vmatpush1.bf16.msra.mxu0 0
      %874 = vmatprep.subr.bf16.mxu0 0
      %875 = vmatpush1.bf16.msra.mxu0 0
      %876 = vmatprep.subr.bf16.mxu0 0
      %877 = vmatpush1.bf16.msra.mxu0 0
      %878 = vmatprep.subr.bf16.mxu0 0
      %879 = vmatpush1.bf16.msra.mxu0 0
      %880 = vmatprep.subr.bf16.mxu0 0
      %881 = vmatpush1.bf16.msra.mxu0 0
      %882 = vmatprep.subr.bf16.mxu0 0
      %883 = vmatpush1.bf16.msra.mxu0 0
      %884 = vmatprep.mubr.bf16.mxu0 0
      %885 = vmatmul.mubr.bf16.gmra.mrb[0].mxu0 %v790
      %v886 = vpop.f32.mrb[0].mxu0
      %v887 = vadd.f32 0.0, %v886
      %v888 = vpop.f32.mrb[0].mxu0
      %v889 = vpop.f32.mrb[0].mxu0
      %v890 = vadd.f32 0.0, %v889
      %v891 = vpop.f32.mrb[0].mxu0
      %892 = vmatprep.mubr.bf16.mxu0 0
      %893 = vmatmul.mubr.bf16.gmra.mrb[0].mxu0 %v792
      %v894 = vpop.f32.mrb[0].mxu0
      %v895 = vadd.f32 0.0, %v894
      %v896 = vpop.f32.mrb[0].mxu0
      %v897 = vpop.f32.mrb[0].mxu0
      %v898 = vadd.f32 0.0, %v897
      %v899 = vpop.f32.mrb[0].mxu0
      %900 = vmatprep.mubr.bf16.mxu0 0
      %901 = vmatmul.mubr.bf16.gmra.mrb[0].mxu0 %v794
      %v902 = vpop.f32.mrb[0].mxu0
      %v903 = vadd.f32 0.0, %v902
      %v904 = vpop.f32.mrb[0].mxu0
      %v905 = vpop.f32.mrb[0].mxu0
      %v906 = vadd.f32 0.0, %v905
      %v907 = vpop.f32.mrb[0].mxu0
      %908 = vmatprep.mubr.bf16.mxu0 0
      %909 = vmatmul.mubr.bf16.gmra.mrb[0].mxu0 %v796
      %v910 = vpop.f32.mrb[0].mxu0
      %v911 = vadd.f32 0.0, %v910
      %v912 = vpop.f32.mrb[0].mxu0
      %v913 = vpop.f32.mrb[0].mxu0
      %v914 = vadd.f32 0.0, %v913
      %v915 = vpop.f32.mrb[0].mxu0
      %916 = vmatprep.mubr.bf16.mxu0 0
      %917 = vmatmul.mubr.bf16.gmra.mrb[0].mxu0 %v798
      %v918 = vpop.f32.mrb[0].mxu0
      %v919 = vadd.f32 0.0, %v918
      %v920 = vpop.f32.mrb[0].mxu0
      %v921 = vpop.f32.mrb[0].mxu0
      %v922 = vadd.f32 0.0, %v921
      %v923 = vpop.f32.mrb[0].mxu0
      %924 = vdwg.mxu0
      %v925 = vadd.f32 %v722, %v887
      %v926 = vadd.f32 %v723, %v890
      %v927 = vadd.f32 %v724, %v895
      %v928 = vadd.f32 %v725, %v898
      %v929 = vadd.f32 %v726, %v903
      %v930 = vadd.f32 %v727, %v906
      %v931 = vadd.f32 %v728, %v911
      %v932 = vadd.f32 %v729, %v914
      %v933 = vadd.f32 %v730, %v919
      %v934 = vadd.f32 %v731, %v922
      %v935 = vld [vmem:[%s187 + $0x2c] sm:$0x3]
      %s936 = scalar_lea.vmem %s1, 256
      %v937 = vld [vmem:[%s936] sm:$0xf]
      %v938 = vld [vmem:[%s936 + $0x4] sm:$0xf]
      %v939 = vld [vmem:[%s936 + $0x8] sm:$0xf]
      %v940 = vld [vmem:[%s936 + $0xc] sm:$0xf]
      %v941 = vld [vmem:[%s936 + $0x10] sm:$0xf]
      %v942 = vld [vmem:[%s936 + $0x14] sm:$0xf]
      %v943 = vld [vmem:[%s936 + $0x18] sm:$0xf]
      %v944 = vld [vmem:[%s936 + $0x1c] sm:$0xf]
      %v945 = vld [vmem:[%s936 + $0x20] sm:$0xf]
      %v946 = vld [vmem:[%s936 + $0x24] sm:$0xf]
      %v947 = vld [vmem:[%s936 + $0x28] sm:$0xf]
      %v948 = vld [vmem:[%s936 + $0x2c] sm:$0xf]
      %v949 = vld [vmem:[%s936 + $0x30] sm:$0xf]
      %v950 = vld [vmem:[%s936 + $0x34] sm:$0xf]
      %v951 = vld [vmem:[%s936 + $0x38] sm:$0xf]
      %v952 = vld [vmem:[%s936 + $0x3c] sm:$0xf]
      %v954 = vunpack.c.l.b16 %v935
      %v955 = vpack.c.b16 %v954, %v954
      %vm956 = vsmask.f32 6400
      %v958 = vshrl.u32 %v782, 16
      %v960 = vrot.slane %v958, 1
      %v961 = vshll.u32 %v782, 16
      %v963 = vrot.slane %v961, 2
      %v964 = vor.u32 %v960, %v963
      %v966 = vshrl.u32 %v783, 16
      %v968 = vrot.slane %v966, 1
      %v969 = vshll.u32 %v783, 16
      %v971 = vrot.slane %v969, 2
      %v972 = vor.u32 %v968, %v971
      %v973 = vsel %vm956, %v964, %v972
      %v975 = vshrl.u32 %v784, 16
      %v977 = vrot.slane %v975, 1
      %v978 = vshll.u32 %v784, 16
      %v980 = vrot.slane %v978, 2
      %v981 = vor.u32 %v977, %v980
      %v982 = vsel %vm956, %v972, %v981
      %v984 = vshrl.u32 %v785, 16
      %v986 = vrot.slane %v984, 1
      %v987 = vshll.u32 %v785, 16
      %v989 = vrot.slane %v987, 2
      %v990 = vor.u32 %v986, %v989
      %v991 = vsel %vm956, %v981, %v990
      %v993 = vshrl.u32 %v786, 16
      %v995 = vrot.slane %v993, 1
      %v996 = vshll.u32 %v786, 16
      %v998 = vrot.slane %v996, 2
      %v999 = vor.u32 %v995, %v998
      %v1000 = vsel %vm956, %v990, %v999
      %v1002 = vshrl.u32 %v955, 16
      %v1004 = vrot.slane %v1002, 1
      %v1005 = vshll.u32 %v955, 16
      %v1007 = vrot.slane %v1005, 2
      %v1008 = vor.u32 %v1004, %v1007
      %v1009 = vsel %vm956, %v999, %v1008
      %v1031 = vunpack.c.l.b16 %v937
      %v1032 = vunpack.c.l.b16 %v938
      %v1033 = vunpack.c.l.b16 %v939
      %v1034 = vunpack.c.l.b16 %v940
      %v1035 = vunpack.c.l.b16 %v941
      %v1036 = vunpack.c.l.b16 %v942
      %v1037 = vunpack.c.l.b16 %v943
      %v1038 = vunpack.c.l.b16 %v944
      %v1039 = vunpack.c.l.b16 %v945
      %v1040 = vunpack.c.l.b16 %v946
      %v1041 = vunpack.c.l.b16 %v947
      %v1042 = vunpack.c.l.b16 %v948
      %v1043 = vunpack.c.l.b16 %v949
      %v1044 = vunpack.c.l.b16 %v950
      %v1045 = vunpack.c.l.b16 %v951
      %v1046 = vunpack.c.l.b16 %v952
      %v1047 = vpack.c.b16 %v1032, %v1031
      %v1048 = vpack.c.b16 %v1034, %v1033
      %v1049 = vpack.c.b16 %v1036, %v1035
      %v1050 = vpack.c.b16 %v1038, %v1037
      %v1051 = vpack.c.b16 %v1040, %v1039
      %v1052 = vpack.c.b16 %v1042, %v1041
      %v1053 = vpack.c.b16 %v1044, %v1043
      %v1054 = vpack.c.b16 %v1046, %v1045
      %1063 = vmatprep.subr.bf16.mxu0 0
      %1064 = vmatpush1.bf16.msra.mxu0 %v1047
      %1065 = vmatprep.subr.bf16.mxu0 0
      %1066 = vmatpush1.bf16.msra.mxu0 %v1048
      %1067 = vmatprep.subr.bf16.mxu0 0
      %1068 = vmatpush1.bf16.msra.mxu0 %v1049
      %1069 = vmatprep.subr.bf16.mxu0 0
      %1070 = vmatpush1.bf16.msra.mxu0 %v1050
      %1071 = vmatprep.subr.bf16.mxu0 0
      %1072 = vmatpush1.bf16.msra.mxu0 %v1051
      %1073 = vmatprep.subr.bf16.mxu0 0
      %1074 = vmatpush1.bf16.msra.mxu0 %v1052
      %1075 = vmatprep.subr.bf16.mxu0 0
      %1076 = vmatpush1.bf16.msra.mxu0 %v1053
      %1077 = vmatprep.subr.bf16.mxu0 0
      %1078 = vmatpush1.bf16.msra.mxu0 %v1054
      %1079 = vmatprep.subr.bf16.mxu0 0
      %1080 = vmatpush1.bf16.msra.mxu0 0
      %1081 = vmatprep.subr.bf16.mxu0 0
      %1082 = vmatpush1.bf16.msra.mxu0 0
      %1083 = vmatprep.subr.bf16.mxu0 0
      %1084 = vmatpush1.bf16.msra.mxu0 0
      %1085 = vmatprep.subr.bf16.mxu0 0
      %1086 = vmatpush1.bf16.msra.mxu0 0
      %1087 = vmatprep.subr.bf16.mxu0 0
      %1088 = vmatpush1.bf16.msra.mxu0 0
      %1089 = vmatprep.subr.bf16.mxu0 0
      %1090 = vmatpush1.bf16.msra.mxu0 0
      %1091 = vmatprep.subr.bf16.mxu0 0
      %1092 = vmatpush1.bf16.msra.mxu0 0
      %1093 = vmatprep.subr.bf16.mxu0 0
      %1094 = vmatpush1.bf16.msra.mxu0 0
      %1095 = vmatprep.mubr.bf16.mxu0 0
      %1096 = vmatmul.mubr.bf16.gmra.mrb[0].mxu0 %v973
      %v1097 = vpop.f32.mrb[0].mxu0
      %v1098 = vadd.f32 0.0, %v1097
      %v1099 = vpop.f32.mrb[0].mxu0
      %v1100 = vpop.f32.mrb[0].mxu0
      %v1101 = vadd.f32 0.0, %v1100
      %v1102 = vpop.f32.mrb[0].mxu0
      %1103 = vmatprep.mubr.bf16.mxu0 0
      %1104 = vmatmul.mubr.bf16.gmra.mrb[0].mxu0 %v982
      %v1105 = vpop.f32.mrb[0].mxu0
      %v1106 = vadd.f32 0.0, %v1105
      %v1107 = vpop.f32.mrb[0].mxu0
      %v1108 = vpop.f32.mrb[0].mxu0
      %v1109 = vadd.f32 0.0, %v1108
      %v1110 = vpop.f32.mrb[0].mxu0
      %1111 = vmatprep.mubr.bf16.mxu0 0
      %1112 = vmatmul.mubr.bf16.gmra.mrb[0].mxu0 %v991
      %v1113 = vpop.f32.mrb[0].mxu0
      %v1114 = vadd.f32 0.0, %v1113
      %v1115 = vpop.f32.mrb[0].mxu0
      %v1116 = vpop.f32.mrb[0].mxu0
      %v1117 = vadd.f32 0.0, %v1116
      %v1118 = vpop.f32.mrb[0].mxu0
      %1119 = vmatprep.mubr.bf16.mxu0 0
      %1120 = vmatmul.mubr.bf16.gmra.mrb[0].mxu0 %v1000
      %v1121 = vpop.f32.mrb[0].mxu0
      %v1122 = vadd.f32 0.0, %v1121
      %v1123 = vpop.f32.mrb[0].mxu0
      %v1124 = vpop.f32.mrb[0].mxu0
      %v1125 = vadd.f32 0.0, %v1124
      %v1126 = vpop.f32.mrb[0].mxu0
      %1127 = vmatprep.mubr.bf16.mxu0 0
      %1128 = vmatmul.mubr.bf16.gmra.mrb[0].mxu0 %v1009
      %v1129 = vpop.f32.mrb[0].mxu0
      %v1130 = vadd.f32 0.0, %v1129
      %v1131 = vpop.f32.mrb[0].mxu0
      %v1132 = vpop.f32.mrb[0].mxu0
      %v1133 = vadd.f32 0.0, %v1132
      %v1134 = vpop.f32.mrb[0].mxu0
      %1135 = vdwg.mxu0
      %v1136 = vadd.f32 %v925, %v1098
      %v1137 = vadd.f32 %v926, %v1101
      %v1138 = vadd.f32 %v927, %v1106
      %v1139 = vadd.f32 %v928, %v1109
      %v1140 = vadd.f32 %v929, %v1114
      %v1141 = vadd.f32 %v930, %v1117
      %v1142 = vadd.f32 %v931, %v1122
      %v1143 = vadd.f32 %v932, %v1125
      %v1144 = vadd.f32 %v933, %v1130
      %v1145 = vadd.f32 %v934, %v1133
      %v1146 = vld [vmem:[%s187 + $0x4] sm:$0xc]
      %s1147 = scalar_lea.vmem %s1, 320
      %v1148 = vld [vmem:[%s1147] sm:$0xf]
      %v1149 = vld [vmem:[%s1147 + $0x4] sm:$0xf]
      %v1150 = vld [vmem:[%s1147 + $0x8] sm:$0xf]
      %v1151 = vld [vmem:[%s1147 + $0xc] sm:$0xf]
      %v1152 = vld [vmem:[%s1147 + $0x10] sm:$0xf]
      %v1153 = vld [vmem:[%s1147 + $0x14] sm:$0xf]
      %v1154 = vld [vmem:[%s1147 + $0x18] sm:$0xf]
      %v1155 = vld [vmem:[%s1147 + $0x1c] sm:$0xf]
      %v1156 = vld [vmem:[%s1147 + $0x20] sm:$0xf]
      %v1157 = vld [vmem:[%s1147 + $0x24] sm:$0xf]
      %v1158 = vld [vmem:[%s1147 + $0x28] sm:$0xf]
      %v1159 = vld [vmem:[%s1147 + $0x2c] sm:$0xf]
      %v1160 = vld [vmem:[%s1147 + $0x30] sm:$0xf]
      %v1161 = vld [vmem:[%s1147 + $0x34] sm:$0xf]
      %v1162 = vld [vmem:[%s1147 + $0x38] sm:$0xf]
      %v1163 = vld [vmem:[%s1147 + $0x3c] sm:$0xf]
      %v1165 = vunpack.c.l.b16 %v1146
      %v1166 = vpack.c.b16 %v772, %v1165
      %vm1167 = vcmask 1045504
      %v1168 = vrot.slane %v1166, 2
      %v1169 = vrot.slane %v783, 2
      %v1170 = vsel %vm1167, %v1168, %v1169
      %v1171 = vrot.slane %v784, 2
      %v1172 = vsel %vm1167, %v1169, %v1171
      %v1173 = vrot.slane %v785, 2
      %v1174 = vsel %vm1167, %v1171, %v1173
      %v1175 = vrot.slane %v786, 2
      %v1176 = vsel %vm1167, %v1173, %v1175
      %v1177 = vrot.slane %v955, 2
      %v1178 = vsel %vm1167, %v1175, %v1177
      %v1200 = vunpack.c.l.b16 %v1148
      %v1201 = vunpack.c.l.b16 %v1149
      %v1202 = vunpack.c.l.b16 %v1150
      %v1203 = vunpack.c.l.b16 %v1151
      %v1204 = vunpack.c.l.b16 %v1152
      %v1205 = vunpack.c.l.b16 %v1153
      %v1206 = vunpack.c.l.b16 %v1154
      %v1207 = vunpack.c.l.b16 %v1155
      %v1208 = vunpack.c.l.b16 %v1156
      %v1209 = vunpack.c.l.b16 %v1157
      %v1210 = vunpack.c.l.b16 %v1158
      %v1211 = vunpack.c.l.b16 %v1159
      %v1212 = vunpack.c.l.b16 %v1160
      %v1213 = vunpack.c.l.b16 %v1161
      %v1214 = vunpack.c.l.b16 %v1162
      %v1215 = vunpack.c.l.b16 %v1163
      %v1216 = vpack.c.b16 %v1201, %v1200
      %v1217 = vpack.c.b16 %v1203, %v1202
      %v1218 = vpack.c.b16 %v1205, %v1204
      %v1219 = vpack.c.b16 %v1207, %v1206
      %v1220 = vpack.c.b16 %v1209, %v1208
      %v1221 = vpack.c.b16 %v1211, %v1210
      %v1222 = vpack.c.b16 %v1213, %v1212
      %v1223 = vpack.c.b16 %v1215, %v1214
      %1232 = vmatprep.subr.bf16.mxu0 0
      %1233 = vmatpush1.bf16.msra.mxu0 %v1216
      %1234 = vmatprep.subr.bf16.mxu0 0
      %1235 = vmatpush1.bf16.msra.mxu0 %v1217
      %1236 = vmatprep.subr.bf16.mxu0 0
      %1237 = vmatpush1.bf16.msra.mxu0 %v1218
      %1238 = vmatprep.subr.bf16.mxu0 0
      %1239 = vmatpush1.bf16.msra.mxu0 %v1219
      %1240 = vmatprep.subr.bf16.mxu0 0
      %1241 = vmatpush1.bf16.msra.mxu0 %v1220
      %1242 = vmatprep.subr.bf16.mxu0 0
      %1243 = vmatpush1.bf16.msra.mxu0 %v1221
      %1244 = vmatprep.subr.bf16.mxu0 0
      %1245 = vmatpush1.bf16.msra.mxu0 %v1222
      %1246 = vmatprep.subr.bf16.mxu0 0
      %1247 = vmatpush1.bf16.msra.mxu0 %v1223
      %1248 = vmatprep.subr.bf16.mxu0 0
      %1249 = vmatpush1.bf16.msra.mxu0 0
      %1250 = vmatprep.subr.bf16.mxu0 0
      %1251 = vmatpush1.bf16.msra.mxu0 0
      %1252 = vmatprep.subr.bf16.mxu0 0
      %1253 = vmatpush1.bf16.msra.mxu0 0
      %1254 = vmatprep.subr.bf16.mxu0 0
      %1255 = vmatpush1.bf16.msra.mxu0 0
      %1256 = vmatprep.subr.bf16.mxu0 0
      %1257 = vmatpush1.bf16.msra.mxu0 0
      %1258 = vmatprep.subr.bf16.mxu0 0
      %1259 = vmatpush1.bf16.msra.mxu0 0
      %1260 = vmatprep.subr.bf16.mxu0 0
      %1261 = vmatpush1.bf16.msra.mxu0 0
      %1262 = vmatprep.subr.bf16.mxu0 0
      %1263 = vmatpush1.bf16.msra.mxu0 0
      %1264 = vmatprep.mubr.bf16.mxu0 0
      %1265 = vmatmul.mubr.bf16.gmra.mrb[0].mxu0 %v1170
      %v1266 = vpop.f32.mrb[0].mxu0
      %v1267 = vadd.f32 0.0, %v1266
      %v1268 = vpop.f32.mrb[0].mxu0
      %v1269 = vpop.f32.mrb[0].mxu0
      %v1270 = vadd.f32 0.0, %v1269
      %v1271 = vpop.f32.mrb[0].mxu0
      %1272 = vmatprep.mubr.bf16.mxu0 0
      %1273 = vmatmul.mubr.bf16.gmra.mrb[0].mxu0 %v1172
      %v1274 = vpop.f32.mrb[0].mxu0
      %v1275 = vadd.f32 0.0, %v1274
      %v1276 = vpop.f32.mrb[0].mxu0
      %v1277 = vpop.f32.mrb[0].mxu0
      %v1278 = vadd.f32 0.0, %v1277
      %v1279 = vpop.f32.mrb[0].mxu0
      %1280 = vmatprep.mubr.bf16.mxu0 0
      %1281 = vmatmul.mubr.bf16.gmra.mrb[0].mxu0 %v1174
      %v1282 = vpop.f32.mrb[0].mxu0
      %v1283 = vadd.f32 0.0, %v1282
      %v1284 = vpop.f32.mrb[0].mxu0
      %v1285 = vpop.f32.mrb[0].mxu0
      %v1286 = vadd.f32 0.0, %v1285
      %v1287 = vpop.f32.mrb[0].mxu0
      %1288 = vmatprep.mubr.bf16.mxu0 0
      %1289 = vmatmul.mubr.bf16.gmra.mrb[0].mxu0 %v1176
      %v1290 = vpop.f32.mrb[0].mxu0
      %v1291 = vadd.f32 0.0, %v1290
      %v1292 = vpop.f32.mrb[0].mxu0
      %v1293 = vpop.f32.mrb[0].mxu0
      %v1294 = vadd.f32 0.0, %v1293
      %v1295 = vpop.f32.mrb[0].mxu0
      %1296 = vmatprep.mubr.bf16.mxu0 0
      %1297 = vmatmul.mubr.bf16.gmra.mrb[0].mxu0 %v1178
      %v1298 = vpop.f32.mrb[0].mxu0
      %v1299 = vadd.f32 0.0, %v1298
      %v1300 = vpop.f32.mrb[0].mxu0
      %v1301 = vpop.f32.mrb[0].mxu0
      %v1302 = vadd.f32 0.0, %v1301
      %v1303 = vpop.f32.mrb[0].mxu0
      %1304 = vdwg.mxu0
      %v1305 = vadd.f32 %v1136, %v1267
      %v1306 = vadd.f32 %v1137, %v1270
      %v1307 = vadd.f32 %v1138, %v1275
      %v1308 = vadd.f32 %v1139, %v1278
      %v1309 = vadd.f32 %v1140, %v1283
      %v1310 = vadd.f32 %v1141, %v1286
      %v1311 = vadd.f32 %v1142, %v1291
      %v1312 = vadd.f32 %v1143, %v1294
      %v1313 = vadd.f32 %v1144, %v1299
      %v1314 = vadd.f32 %v1145, %v1302
      %v1315 = vld [vmem:[%s187 + $0x8] sm:$0xc]
      %v1316 = vld [vmem:[%s187 + $0xc] sm:$0xf]
      %v1317 = vld [vmem:[%s187 + $0x10] sm:$0xf]
      %v1318 = vld [vmem:[%s187 + $0x14] sm:$0xf]
      %v1319 = vld [vmem:[%s187 + $0x18] sm:$0xf]
      %v1320 = vld [vmem:[%s187 + $0x1c] sm:$0xf]
      %v1321 = vld [vmem:[%s187 + $0x20] sm:$0xf]
      %v1322 = vld [vmem:[%s187 + $0x24] sm:$0xf]
      %v1323 = vld [vmem:[%s187 + $0x28] sm:$0xf]
      %v1324 = vld [vmem:[%s187 + $0x2c] sm:$0xf]
      %v1325 = vld [vmem:[%s187 + $0x30] sm:$0x3]
      %s1326 = scalar_lea.vmem %s1, 384
      %v1327 = vld [vmem:[%s1326] sm:$0xf]
      %v1328 = vld [vmem:[%s1326 + $0x4] sm:$0xf]
      %v1329 = vld [vmem:[%s1326 + $0x8] sm:$0xf]
      %v1330 = vld [vmem:[%s1326 + $0xc] sm:$0xf]
      %v1331 = vld [vmem:[%s1326 + $0x10] sm:$0xf]
      %v1332 = vld [vmem:[%s1326 + $0x14] sm:$0xf]
      %v1333 = vld [vmem:[%s1326 + $0x18] sm:$0xf]
      %v1334 = vld [vmem:[%s1326 + $0x1c] sm:$0xf]
      %v1335 = vld [vmem:[%s1326 + $0x20] sm:$0xf]
      %v1336 = vld [vmem:[%s1326 + $0x24] sm:$0xf]
      %v1337 = vld [vmem:[%s1326 + $0x28] sm:$0xf]
      %v1338 = vld [vmem:[%s1326 + $0x2c] sm:$0xf]
      %v1339 = vld [vmem:[%s1326 + $0x30] sm:$0xf]
      %v1340 = vld [vmem:[%s1326 + $0x34] sm:$0xf]
      %v1341 = vld [vmem:[%s1326 + $0x38] sm:$0xf]
      %v1342 = vld [vmem:[%s1326 + $0x3c] sm:$0xf]
      %v1354 = vunpack.c.l.b16 %v1315
      %v1355 = vunpack.c.l.b16 %v1316
      %v1356 = vunpack.c.l.b16 %v1317
      %v1357 = vunpack.c.l.b16 %v1318
      %v1358 = vunpack.c.l.b16 %v1319
      %v1359 = vunpack.c.l.b16 %v1320
      %v1360 = vunpack.c.l.b16 %v1321
      %v1361 = vunpack.c.l.b16 %v1322
      %v1362 = vunpack.c.l.b16 %v1323
      %v1363 = vunpack.c.l.b16 %v1324
      %v1364 = vunpack.c.l.b16 %v1325
      %v1365 = vpack.c.b16 %v1355, %v1354
      %v1366 = vpack.c.b16 %v1357, %v1356
      %v1367 = vpack.c.b16 %v1359, %v1358
      %v1368 = vpack.c.b16 %v1361, %v1360
      %v1369 = vpack.c.b16 %v1363, %v1362
      %v1370 = vpack.c.b16 %v1364, %v1364
      %v1371 = vrot.slane %v1365, 2
      %v1372 = vrot.slane %v1366, 2
      %v1373 = vsel %vm1167, %v1371, %v1372
      %v1374 = vrot.slane %v1367, 2
      %v1375 = vsel %vm1167, %v1372, %v1374
      %v1376 = vrot.slane %v1368, 2
      %v1377 = vsel %vm1167, %v1374, %v1376
      %v1378 = vrot.slane %v1369, 2
      %v1379 = vsel %vm1167, %v1376, %v1378
      %v1380 = vrot.slane %v1370, 2
      %v1381 = vsel %vm1167, %v1378, %v1380
      %v1403 = vunpack.c.l.b16 %v1327
      %v1404 = vunpack.c.l.b16 %v1328
      %v1405 = vunpack.c.l.b16 %v1329
      %v1406 = vunpack.c.l.b16 %v1330
      %v1407 = vunpack.c.l.b16 %v1331
      %v1408 = vunpack.c.l.b16 %v1332
      %v1409 = vunpack.c.l.b16 %v1333
      %v1410 = vunpack.c.l.b16 %v1334
      %v1411 = vunpack.c.l.b16 %v1335
      %v1412 = vunpack.c.l.b16 %v1336
      %v1413 = vunpack.c.l.b16 %v1337
      %v1414 = vunpack.c.l.b16 %v1338
      %v1415 = vunpack.c.l.b16 %v1339
      %v1416 = vunpack.c.l.b16 %v1340
      %v1417 = vunpack.c.l.b16 %v1341
      %v1418 = vunpack.c.l.b16 %v1342
      %v1419 = vpack.c.b16 %v1404, %v1403
      %v1420 = vpack.c.b16 %v1406, %v1405
      %v1421 = vpack.c.b16 %v1408, %v1407
      %v1422 = vpack.c.b16 %v1410, %v1409
      %v1423 = vpack.c.b16 %v1412, %v1411
      %v1424 = vpack.c.b16 %v1414, %v1413
      %v1425 = vpack.c.b16 %v1416, %v1415
      %v1426 = vpack.c.b16 %v1418, %v1417
      %1435 = vmatprep.subr.bf16.mxu0 0
      %1436 = vmatpush1.bf16.msra.mxu0 %v1419
      %1437 = vmatprep.subr.bf16.mxu0 0
      %1438 = vmatpush1.bf16.msra.mxu0 %v1420
      %1439 = vmatprep.subr.bf16.mxu0 0
      %1440 = vmatpush1.bf16.msra.mxu0 %v1421
      %1441 = vmatprep.subr.bf16.mxu0 0
      %1442 = vmatpush1.bf16.msra.mxu0 %v1422
      %1443 = vmatprep.subr.bf16.mxu0 0
      %1444 = vmatpush1.bf16.msra.mxu0 %v1423
      %1445 = vmatprep.subr.bf16.mxu0 0
      %1446 = vmatpush1.bf16.msra.mxu0 %v1424
      %1447 = vmatprep.subr.bf16.mxu0 0
      %1448 = vmatpush1.bf16.msra.mxu0 %v1425
      %1449 = vmatprep.subr.bf16.mxu0 0
      %1450 = vmatpush1.bf16.msra.mxu0 %v1426
      %1451 = vmatprep.subr.bf16.mxu0 0
      %1452 = vmatpush1.bf16.msra.mxu0 0
      %1453 = vmatprep.subr.bf16.mxu0 0
      %1454 = vmatpush1.bf16.msra.mxu0 0
      %1455 = vmatprep.subr.bf16.mxu0 0
      %1456 = vmatpush1.bf16.msra.mxu0 0
      %1457 = vmatprep.subr.bf16.mxu0 0
      %1458 = vmatpush1.bf16.msra.mxu0 0
      %1459 = vmatprep.subr.bf16.mxu0 0
      %1460 = vmatpush1.bf16.msra.mxu0 0
      %1461 = vmatprep.subr.bf16.mxu0 0
      %1462 = vmatpush1.bf16.msra.mxu0 0
      %1463 = vmatprep.subr.bf16.mxu0 0
      %1464 = vmatpush1.bf16.msra.mxu0 0
      %1465 = vmatprep.subr.bf16.mxu0 0
      %1466 = vmatpush1.bf16.msra.mxu0 0
      %1467 = vmatprep.mubr.bf16.mxu0 0
      %1468 = vmatmul.mubr.bf16.gmra.mrb[0].mxu0 %v1373
      %v1469 = vpop.f32.mrb[0].mxu0
      %v1470 = vadd.f32 0.0, %v1469
      %v1471 = vpop.f32.mrb[0].mxu0
      %v1472 = vpop.f32.mrb[0].mxu0
      %v1473 = vadd.f32 0.0, %v1472
      %v1474 = vpop.f32.mrb[0].mxu0
      %1475 = vmatprep.mubr.bf16.mxu0 0
      %1476 = vmatmul.mubr.bf16.gmra.mrb[0].mxu0 %v1375
      %v1477 = vpop.f32.mrb[0].mxu0
      %v1478 = vadd.f32 0.0, %v1477
      %v1479 = vpop.f32.mrb[0].mxu0
      %v1480 = vpop.f32.mrb[0].mxu0
      %v1481 = vadd.f32 0.0, %v1480
      %v1482 = vpop.f32.mrb[0].mxu0
      %1483 = vmatprep.mubr.bf16.mxu0 0
      %1484 = vmatmul.mubr.bf16.gmra.mrb[0].mxu0 %v1377
      %v1485 = vpop.f32.mrb[0].mxu0
      %v1486 = vadd.f32 0.0, %v1485
      %v1487 = vpop.f32.mrb[0].mxu0
      %v1488 = vpop.f32.mrb[0].mxu0
      %v1489 = vadd.f32 0.0, %v1488
      %v1490 = vpop.f32.mrb[0].mxu0
      %1491 = vmatprep.mubr.bf16.mxu0 0
      %1492 = vmatmul.mubr.bf16.gmra.mrb[0].mxu0 %v1379
      %v1493 = vpop.f32.mrb[0].mxu0
      %v1494 = vadd.f32 0.0, %v1493
      %v1495 = vpop.f32.mrb[0].mxu0
      %v1496 = vpop.f32.mrb[0].mxu0
      %v1497 = vadd.f32 0.0, %v1496
      %v1498 = vpop.f32.mrb[0].mxu0
      %1499 = vmatprep.mubr.bf16.mxu0 0
      %1500 = vmatmul.mubr.bf16.gmra.mrb[0].mxu0 %v1381
      %v1501 = vpop.f32.mrb[0].mxu0
      %v1502 = vadd.f32 0.0, %v1501
      %v1503 = vpop.f32.mrb[0].mxu0
      %v1504 = vpop.f32.mrb[0].mxu0
      %v1505 = vadd.f32 0.0, %v1504
      %v1506 = vpop.f32.mrb[0].mxu0
      %1507 = vdwg.mxu0
      %v1508 = vadd.f32 %v1305, %v1470
      %v1509 = vadd.f32 %v1306, %v1473
      %v1510 = vadd.f32 %v1307, %v1478
      %v1511 = vadd.f32 %v1308, %v1481
      %v1512 = vadd.f32 %v1309, %v1486
      %v1513 = vadd.f32 %v1310, %v1489
      %v1514 = vadd.f32 %v1311, %v1494
      %v1515 = vadd.f32 %v1312, %v1497
      %v1516 = vadd.f32 %v1313, %v1502
      %v1517 = vadd.f32 %v1314, %v1505
      %v1518 = vld [vmem:[%s187 + $0x30] sm:$0x7]
      %s1519 = scalar_lea.vmem %s1, 448
      %v1520 = vld [vmem:[%s1519] sm:$0xf]
      %v1521 = vld [vmem:[%s1519 + $0x4] sm:$0xf]
      %v1522 = vld [vmem:[%s1519 + $0x8] sm:$0xf]
      %v1523 = vld [vmem:[%s1519 + $0xc] sm:$0xf]
      %v1524 = vld [vmem:[%s1519 + $0x10] sm:$0xf]
      %v1525 = vld [vmem:[%s1519 + $0x14] sm:$0xf]
      %v1526 = vld [vmem:[%s1519 + $0x18] sm:$0xf]
      %v1527 = vld [vmem:[%s1519 + $0x1c] sm:$0xf]
      %v1528 = vld [vmem:[%s1519 + $0x20] sm:$0xf]
      %v1529 = vld [vmem:[%s1519 + $0x24] sm:$0xf]
      %v1530 = vld [vmem:[%s1519 + $0x28] sm:$0xf]
      %v1531 = vld [vmem:[%s1519 + $0x2c] sm:$0xf]
      %v1532 = vld [vmem:[%s1519 + $0x30] sm:$0xf]
      %v1533 = vld [vmem:[%s1519 + $0x34] sm:$0xf]
      %v1534 = vld [vmem:[%s1519 + $0x38] sm:$0xf]
      %v1535 = vld [vmem:[%s1519 + $0x3c] sm:$0xf]
      %v1537 = vunpack.c.l.b16 %v1518
      %v1538 = vpack.c.b16 %v1537, %v1537
      %vm1539 = vsmask.f32 5376
      %v1541 = vshrl.u32 %v1365, 16
      %v1543 = vrot.slane %v1541, 2
      %v1544 = vshll.u32 %v1365, 16
      %v1546 = vrot.slane %v1544, 3
      %v1547 = vor.u32 %v1543, %v1546
      %v1549 = vshrl.u32 %v1366, 16
      %v1551 = vrot.slane %v1549, 2
      %v1552 = vshll.u32 %v1366, 16
      %v1554 = vrot.slane %v1552, 3
      %v1555 = vor.u32 %v1551, %v1554
      %v1556 = vsel %vm1539, %v1547, %v1555
      %v1558 = vshrl.u32 %v1367, 16
      %v1560 = vrot.slane %v1558, 2
      %v1561 = vshll.u32 %v1367, 16
      %v1563 = vrot.slane %v1561, 3
      %v1564 = vor.u32 %v1560, %v1563
      %v1565 = vsel %vm1539, %v1555, %v1564
      %v1567 = vshrl.u32 %v1368, 16
      %v1569 = vrot.slane %v1567, 2
      %v1570 = vshll.u32 %v1368, 16
      %v1572 = vrot.slane %v1570, 3
      %v1573 = vor.u32 %v1569, %v1572
      %v1574 = vsel %vm1539, %v1564, %v1573
      %v1576 = vshrl.u32 %v1369, 16
      %v1578 = vrot.slane %v1576, 2
      %v1579 = vshll.u32 %v1369, 16
      %v1581 = vrot.slane %v1579, 3
      %v1582 = vor.u32 %v1578, %v1581
      %v1583 = vsel %vm1539, %v1573, %v1582
      %v1585 = vshrl.u32 %v1538, 16
      %v1587 = vrot.slane %v1585, 2
      %v1588 = vshll.u32 %v1538, 16
      %v1590 = vrot.slane %v1588, 3
      %v1591 = vor.u32 %v1587, %v1590
      %v1592 = vsel %vm1539, %v1582, %v1591
      %v1614 = vunpack.c.l.b16 %v1520
      %v1615 = vunpack.c.l.b16 %v1521
      %v1616 = vunpack.c.l.b16 %v1522
      %v1617 = vunpack.c.l.b16 %v1523
      %v1618 = vunpack.c.l.b16 %v1524
      %v1619 = vunpack.c.l.b16 %v1525
      %v1620 = vunpack.c.l.b16 %v1526
      %v1621 = vunpack.c.l.b16 %v1527
      %v1622 = vunpack.c.l.b16 %v1528
      %v1623 = vunpack.c.l.b16 %v1529
      %v1624 = vunpack.c.l.b16 %v1530
      %v1625 = vunpack.c.l.b16 %v1531
      %v1626 = vunpack.c.l.b16 %v1532
      %v1627 = vunpack.c.l.b16 %v1533
      %v1628 = vunpack.c.l.b16 %v1534
      %v1629 = vunpack.c.l.b16 %v1535
      %v1630 = vpack.c.b16 %v1615, %v1614
      %v1631 = vpack.c.b16 %v1617, %v1616
      %v1632 = vpack.c.b16 %v1619, %v1618
      %v1633 = vpack.c.b16 %v1621, %v1620
      %v1634 = vpack.c.b16 %v1623, %v1622
      %v1635 = vpack.c.b16 %v1625, %v1624
      %v1636 = vpack.c.b16 %v1627, %v1626
      %v1637 = vpack.c.b16 %v1629, %v1628
      %1646 = vmatprep.subr.bf16.mxu0 0
      %1647 = vmatpush1.bf16.msra.mxu0 %v1630
      %1648 = vmatprep.subr.bf16.mxu0 0
      %1649 = vmatpush1.bf16.msra.mxu0 %v1631
      %1650 = vmatprep.subr.bf16.mxu0 0
      %1651 = vmatpush1.bf16.msra.mxu0 %v1632
      %1652 = vmatprep.subr.bf16.mxu0 0
      %1653 = vmatpush1.bf16.msra.mxu0 %v1633
      %1654 = vmatprep.subr.bf16.mxu0 0
      %1655 = vmatpush1.bf16.msra.mxu0 %v1634
      %1656 = vmatprep.subr.bf16.mxu0 0
      %1657 = vmatpush1.bf16.msra.mxu0 %v1635
      %1658 = vmatprep.subr.bf16.mxu0 0
      %1659 = vmatpush1.bf16.msra.mxu0 %v1636
      %1660 = vmatprep.subr.bf16.mxu0 0
      %1661 = vmatpush1.bf16.msra.mxu0 %v1637
      %1662 = vmatprep.subr.bf16.mxu0 0
      %1663 = vmatpush1.bf16.msra.mxu0 0
      %1664 = vmatprep.subr.bf16.mxu0 0
      %1665 = vmatpush1.bf16.msra.mxu0 0
      %1666 = vmatprep.subr.bf16.mxu0 0
      %1667 = vmatpush1.bf16.msra.mxu0 0
      %1668 = vmatprep.subr.bf16.mxu0 0
      %1669 = vmatpush1.bf16.msra.mxu0 0
      %1670 = vmatprep.subr.bf16.mxu0 0
      %1671 = vmatpush1.bf16.msra.mxu0 0
      %1672 = vmatprep.subr.bf16.mxu0 0
      %1673 = vmatpush1.bf16.msra.mxu0 0
      %1674 = vmatprep.subr.bf16.mxu0 0
      %1675 = vmatpush1.bf16.msra.mxu0 0
      %1676 = vmatprep.subr.bf16.mxu0 0
      %1677 = vmatpush1.bf16.msra.mxu0 0
      %1678 = vmatprep.mubr.bf16.mxu0 0
      %1679 = vmatmul.mubr.bf16.gmra.mrb[0].mxu0 %v1556
      %v1680 = vpop.f32.mrb[0].mxu0
      %v1681 = vadd.f32 0.0, %v1680
      %v1682 = vpop.f32.mrb[0].mxu0
      %v1683 = vpop.f32.mrb[0].mxu0
      %v1684 = vadd.f32 0.0, %v1683
      %v1685 = vpop.f32.mrb[0].mxu0
      %1686 = vmatprep.mubr.bf16.mxu0 0
      %1687 = vmatmul.mubr.bf16.gmra.mrb[0].mxu0 %v1565
      %v1688 = vpop.f32.mrb[0].mxu0
      %v1689 = vadd.f32 0.0, %v1688
      %v1690 = vpop.f32.mrb[0].mxu0
      %v1691 = vpop.f32.mrb[0].mxu0
      %v1692 = vadd.f32 0.0, %v1691
      %v1693 = vpop.f32.mrb[0].mxu0
      %1694 = vmatprep.mubr.bf16.mxu0 0
      %1695 = vmatmul.mubr.bf16.gmra.mrb[0].mxu0 %v1574
      %v1696 = vpop.f32.mrb[0].mxu0
      %v1697 = vadd.f32 0.0, %v1696
      %v1698 = vpop.f32.mrb[0].mxu0
      %v1699 = vpop.f32.mrb[0].mxu0
      %v1700 = vadd.f32 0.0, %v1699
      %v1701 = vpop.f32.mrb[0].mxu0
      %1702 = vmatprep.mubr.bf16.mxu0 0
      %1703 = vmatmul.mubr.bf16.gmra.mrb[0].mxu0 %v1583
      %v1704 = vpop.f32.mrb[0].mxu0
      %v1705 = vadd.f32 0.0, %v1704
      %v1706 = vpop.f32.mrb[0].mxu0
      %v1707 = vpop.f32.mrb[0].mxu0
      %v1708 = vadd.f32 0.0, %v1707
      %v1709 = vpop.f32.mrb[0].mxu0
      %1710 = vmatprep.mubr.bf16.mxu0 0
      %1711 = vmatmul.mubr.bf16.gmra.mrb[0].mxu0 %v1592
      %v1712 = vpop.f32.mrb[0].mxu0
      %v1713 = vadd.f32 0.0, %v1712
      %v1714 = vpop.f32.mrb[0].mxu0
      %v1715 = vpop.f32.mrb[0].mxu0
      %v1716 = vadd.f32 0.0, %v1715
      %v1717 = vpop.f32.mrb[0].mxu0
      %1718 = vdwg.mxu0
      %v1719 = vadd.f32 %v1508, %v1681
      %v1720 = vadd.f32 %v1509, %v1684
      %v1721 = vadd.f32 %v1510, %v1689
      %v1722 = vadd.f32 %v1511, %v1692
      %v1723 = vadd.f32 %v1512, %v1697
      %v1724 = vadd.f32 %v1513, %v1700
      %v1725 = vadd.f32 %v1514, %v1705
      %v1726 = vadd.f32 %v1515, %v1708
      %v1727 = vadd.f32 %v1516, %v1713
      %v1728 = vadd.f32 %v1517, %v1716
      %v1729 = vld [vmem:[%s187 + $0x8] sm:$0x8]
      %s1730 = scalar_lea.vmem %s1, 512
      %v1731 = vld [vmem:[%s1730] sm:$0xf]
      %v1732 = vld [vmem:[%s1730 + $0x4] sm:$0xf]
      %v1733 = vld [vmem:[%s1730 + $0x8] sm:$0xf]
      %v1734 = vld [vmem:[%s1730 + $0xc] sm:$0xf]
      %v1735 = vld [vmem:[%s1730 + $0x10] sm:$0xf]
      %v1736 = vld [vmem:[%s1730 + $0x14] sm:$0xf]
      %v1737 = vld [vmem:[%s1730 + $0x18] sm:$0xf]
      %v1738 = vld [vmem:[%s1730 + $0x1c] sm:$0xf]
      %v1739 = vld [vmem:[%s1730 + $0x20] sm:$0xf]
      %v1740 = vld [vmem:[%s1730 + $0x24] sm:$0xf]
      %v1741 = vld [vmem:[%s1730 + $0x28] sm:$0xf]
      %v1742 = vld [vmem:[%s1730 + $0x2c] sm:$0xf]
      %v1743 = vld [vmem:[%s1730 + $0x30] sm:$0xf]
      %v1744 = vld [vmem:[%s1730 + $0x34] sm:$0xf]
      %v1745 = vld [vmem:[%s1730 + $0x38] sm:$0xf]
      %v1746 = vld [vmem:[%s1730 + $0x3c] sm:$0xf]
      %v1748 = vunpack.c.l.b16 %v1729
      %v1749 = vpack.c.b16 %v1355, %v1748
      %vm1750 = vcmask 1044480
      %v1751 = vrot.slane %v1749, 3
      %v1752 = vrot.slane %v1366, 3
      %v1753 = vsel %vm1750, %v1751, %v1752
      %v1754 = vrot.slane %v1367, 3
      %v1755 = vsel %vm1750, %v1752, %v1754
      %v1756 = vrot.slane %v1368, 3
      %v1757 = vsel %vm1750, %v1754, %v1756
      %v1758 = vrot.slane %v1369, 3
      %v1759 = vsel %vm1750, %v1756, %v1758
      %v1760 = vrot.slane %v1538, 3
      %v1761 = vsel %vm1750, %v1758, %v1760
      %v1783 = vunpack.c.l.b16 %v1731
      %v1784 = vunpack.c.l.b16 %v1732
      %v1785 = vunpack.c.l.b16 %v1733
      %v1786 = vunpack.c.l.b16 %v1734
      %v1787 = vunpack.c.l.b16 %v1735
      %v1788 = vunpack.c.l.b16 %v1736
      %v1789 = vunpack.c.l.b16 %v1737
      %v1790 = vunpack.c.l.b16 %v1738
      %v1791 = vunpack.c.l.b16 %v1739
      %v1792 = vunpack.c.l.b16 %v1740
      %v1793 = vunpack.c.l.b16 %v1741
      %v1794 = vunpack.c.l.b16 %v1742
      %v1795 = vunpack.c.l.b16 %v1743
      %v1796 = vunpack.c.l.b16 %v1744
      %v1797 = vunpack.c.l.b16 %v1745
      %v1798 = vunpack.c.l.b16 %v1746
      %v1799 = vpack.c.b16 %v1784, %v1783
      %v1800 = vpack.c.b16 %v1786, %v1785
      %v1801 = vpack.c.b16 %v1788, %v1787
      %v1802 = vpack.c.b16 %v1790, %v1789
      %v1803 = vpack.c.b16 %v1792, %v1791
      %v1804 = vpack.c.b16 %v1794, %v1793
      %v1805 = vpack.c.b16 %v1796, %v1795
      %v1806 = vpack.c.b16 %v1798, %v1797
      %1815 = vmatprep.subr.bf16.mxu0 0
      %1816 = vmatpush1.bf16.msra.mxu0 %v1799
      %1817 = vmatprep.subr.bf16.mxu0 0
      %1818 = vmatpush1.bf16.msra.mxu0 %v1800
      %1819 = vmatprep.subr.bf16.mxu0 0
      %1820 = vmatpush1.bf16.msra.mxu0 %v1801
      %1821 = vmatprep.subr.bf16.mxu0 0
      %1822 = vmatpush1.bf16.msra.mxu0 %v1802
      %1823 = vmatprep.subr.bf16.mxu0 0
      %1824 = vmatpush1.bf16.msra.mxu0 %v1803
      %1825 = vmatprep.subr.bf16.mxu0 0
      %1826 = vmatpush1.bf16.msra.mxu0 %v1804
      %1827 = vmatprep.subr.bf16.mxu0 0
      %1828 = vmatpush1.bf16.msra.mxu0 %v1805
      %1829 = vmatprep.subr.bf16.mxu0 0
      %1830 = vmatpush1.bf16.msra.mxu0 %v1806
      %1831 = vmatprep.subr.bf16.mxu0 0
      %1832 = vmatpush1.bf16.msra.mxu0 0
      %1833 = vmatprep.subr.bf16.mxu0 0
      %1834 = vmatpush1.bf16.msra.mxu0 0
      %1835 = vmatprep.subr.bf16.mxu0 0
      %1836 = vmatpush1.bf16.msra.mxu0 0
      %1837 = vmatprep.subr.bf16.mxu0 0
      %1838 = vmatpush1.bf16.msra.mxu0 0
      %1839 = vmatprep.subr.bf16.mxu0 0
      %1840 = vmatpush1.bf16.msra.mxu0 0
      %1841 = vmatprep.subr.bf16.mxu0 0
      %1842 = vmatpush1.bf16.msra.mxu0 0
      %1843 = vmatprep.subr.bf16.mxu0 0
      %1844 = vmatpush1.bf16.msra.mxu0 0
      %1845 = vmatprep.subr.bf16.mxu0 0
      %1846 = vmatpush1.bf16.msra.mxu0 0
      %1847 = vmatprep.mubr.bf16.mxu0 0
      %1848 = vmatmul.mubr.bf16.gmra.mrb[0].mxu0 %v1753
      %v1849 = vpop.f32.mrb[0].mxu0
      %v1850 = vadd.f32 0.0, %v1849
      %v1851 = vpop.f32.mrb[0].mxu0
      %v1852 = vpop.f32.mrb[0].mxu0
      %v1853 = vadd.f32 0.0, %v1852
      %v1854 = vpop.f32.mrb[0].mxu0
      %1855 = vmatprep.mubr.bf16.mxu0 0
      %1856 = vmatmul.mubr.bf16.gmra.mrb[0].mxu0 %v1755
      %v1857 = vpop.f32.mrb[0].mxu0
      %v1858 = vadd.f32 0.0, %v1857
      %v1859 = vpop.f32.mrb[0].mxu0
      %v1860 = vpop.f32.mrb[0].mxu0
      %v1861 = vadd.f32 0.0, %v1860
      %v1862 = vpop.f32.mrb[0].mxu0
      %1863 = vmatprep.mubr.bf16.mxu0 0
      %1864 = vmatmul.mubr.bf16.gmra.mrb[0].mxu0 %v1757
      %v1865 = vpop.f32.mrb[0].mxu0
      %v1866 = vadd.f32 0.0, %v1865
      %v1867 = vpop.f32.mrb[0].mxu0
      %v1868 = vpop.f32.mrb[0].mxu0
      %v1869 = vadd.f32 0.0, %v1868
      %v1870 = vpop.f32.mrb[0].mxu0
      %1871 = vmatprep.mubr.bf16.mxu0 0
      %1872 = vmatmul.mubr.bf16.gmra.mrb[0].mxu0 %v1759
      %v1873 = vpop.f32.mrb[0].mxu0
      %v1874 = vadd.f32 0.0, %v1873
      %v1875 = vpop.f32.mrb[0].mxu0
      %v1876 = vpop.f32.mrb[0].mxu0
      %v1877 = vadd.f32 0.0, %v1876
      %v1878 = vpop.f32.mrb[0].mxu0
      %1879 = vmatprep.mubr.bf16.mxu0 0
      %1880 = vmatmul.mubr.bf16.gmra.mrb[0].mxu0 %v1761
      %v1881 = vpop.f32.mrb[0].mxu0
      %v1882 = vadd.f32 0.0, %v1881
      %v1883 = vpop.f32.mrb[0].mxu0
      %v1884 = vpop.f32.mrb[0].mxu0
      %v1885 = vadd.f32 0.0, %v1884
      %v1886 = vpop.f32.mrb[0].mxu0
      %1887 = vdwg.mxu0
      %v1888 = vadd.f32 %v1719, %v1850
      %v1889 = vadd.f32 %v1720, %v1853
      %v1890 = vadd.f32 %v1721, %v1858
      %v1891 = vadd.f32 %v1722, %v1861
      %v1892 = vadd.f32 %v1723, %v1866
      %v1893 = vadd.f32 %v1724, %v1869
      %v1894 = vadd.f32 %v1725, %v1874
      %v1895 = vadd.f32 %v1726, %v1877
      %v1896 = vadd.f32 %v1727, %v1882
      %v1897 = vadd.f32 %v1728, %v1885
      %v1898 = vpack.c.bf16 %v1889, %v1888
      %v1899 = vpack.c.bf16 %v1891, %v1890
      %v1900 = vpack.c.bf16 %v1893, %v1892
      %v1901 = vpack.c.bf16 %v1895, %v1894
      %v1902 = vpack.c.bf16 %v1897, %v1896
      %v1908 = vunpack.c.l.b16 %v1898
      %v1909 = vunpack.c.h.b16 %v1898
      %v1910 = vunpack.c.l.b16 %v1899
      %v1911 = vunpack.c.h.b16 %v1899
      %v1912 = vunpack.c.l.b16 %v1900
      %v1913 = vunpack.c.h.b16 %v1900
      %v1914 = vunpack.c.l.b16 %v1901
      %v1915 = vunpack.c.h.b16 %v1901
      %v1916 = vunpack.c.l.b16 %v1902
      %v1917 = vunpack.c.h.b16 %v1902
      %v1918 = vpack.c.b16 %v1908, %v1908
      %v1919 = vpack.c.b16 %v1909, %v1909
      %v1920 = vpack.c.b16 %v1910, %v1910
      %v1921 = vpack.c.b16 %v1911, %v1911
      %v1922 = vpack.c.b16 %v1912, %v1912
      %v1923 = vpack.c.b16 %v1913, %v1913
      %v1924 = vpack.c.b16 %v1914, %v1914
      %v1925 = vpack.c.b16 %v1915, %v1915
      %v1926 = vpack.c.b16 %v1916, %v1916
      %v1927 = vpack.c.b16 %v1917, %v1917
      %1938 = vst [vmem:[%s192] sm:$0xf] %v1918
      %1939 = vst [vmem:[%s192 + $0x4] sm:$0xf] %v1919
      %1940 = vst [vmem:[%s192 + $0x8] sm:$0xf] %v1920
      %1941 = vst [vmem:[%s192 + $0xc] sm:$0xf] %v1921
      %1942 = vst [vmem:[%s192 + $0x10] sm:$0xf] %v1922
      %1943 = vst [vmem:[%s192 + $0x14] sm:$0xf] %v1923
      %1944 = vst [vmem:[%s192 + $0x18] sm:$0xf] %v1924
      %1945 = vst [vmem:[%s192 + $0x1c] sm:$0xf] %v1925
      %1946 = vst [vmem:[%s192 + $0x20] sm:$0xf] %v1926
      %1947 = vst [vmem:[%s192 + $0x24] sm:$0xf] %v1927
      %p1948 = scmp.eq.s32.totalorder %s16, 0
      // Predicated region
      $region29: #{residual_block.6} parent=27 // pred_check
        %p1949 = pneg %p1948
      $region30: #{residual_block.6} parent=27 // pred_check_branch
        %1951 = sbr.rel (%p1949) target = $region32
      $region31: #{residual_block.6} parent=27 // pred_region
        %1952 = vst [vmem:[%s3] sm:$0x1] 0.0
        %1953 = vst [vmem:[%s4] sm:$0x1] 0.0
      $region32: #{residual_block.6} parent=27 // pred_fallthru
        _
      %v1954 = vlaneseq
      %v1955 = vshrl.u32 %v1954, 7
      %v1956 = vadd.s32 %v1955, 8
      %v1957 = vadd.s32 %v1955, 16
      %v1958 = vadd.s32 %v1955, 24
      %v1959 = vadd.s32 %v1955, 32
      %v1960 = vadd.s32 %v1955, 40
      %v1961 = vadd.s32 %v1955, 48
      %v1962 = vadd.s32 %v1955, 56
      %v1963 = vadd.s32 %v1955, 64
      %v1964 = vadd.s32 %v1955, 72
      %vm1965 = vcmp.lt.s32.totalorder %v1955, 0
      %v1966 = vsub.s32 0, %v1955
      %v1967 = vsel %vm1965, %v1966, %v1955
      %v1968 = vmul.u32.u64.compose %v1967, 3435973837
      %v1969 = vextract.low.u32 %v1968
      %v1970 = vextract.high.u32 %v1968
      %v1971 = vshrl.u32 %v1970, 3
      %v1972 = vmul.u32 %v1971, 10
      %v1973 = vsub.s32 %v1967, %v1972
      %v1974 = vsub.s32 0, %v1973
      %v1975 = vsel %vm1965, %v1974, %v1973
      %vm1976 = vcmp.lt.s32.totalorder %v1956, 0
      %v1977 = vsub.s32 0, %v1956
      %v1978 = vsel %vm1976, %v1977, %v1956
      %v1979 = vmul.u32.u64.compose %v1978, 3435973837
      %v1980 = vextract.low.u32 %v1979
      %v1981 = vextract.high.u32 %v1979
      %v1982 = vshrl.u32 %v1981, 3
      %v1983 = vmul.u32 %v1982, 10
      %v1984 = vsub.s32 %v1978, %v1983
      %v1985 = vsub.s32 0, %v1984
      %v1986 = vsel %vm1976, %v1985, %v1984
      %vm1987 = vcmp.lt.s32.totalorder %v1957, 0
      %v1988 = vsub.s32 0, %v1957
      %v1989 = vsel %vm1987, %v1988, %v1957
      %v1990 = vmul.u32.u64.compose %v1989, 3435973837
      %v1991 = vextract.low.u32 %v1990
      %v1992 = vextract.high.u32 %v1990
      %v1993 = vshrl.u32 %v1992, 3
      %v1994 = vmul.u32 %v1993, 10
      %v1995 = vsub.s32 %v1989, %v1994
      %v1996 = vsub.s32 0, %v1995
      %v1997 = vsel %vm1987, %v1996, %v1995
      %vm1998 = vcmp.lt.s32.totalorder %v1958, 0
      %v1999 = vsub.s32 0, %v1958
      %v2000 = vsel %vm1998, %v1999, %v1958
      %v2001 = vmul.u32.u64.compose %v2000, 3435973837
      %v2002 = vextract.low.u32 %v2001
      %v2003 = vextract.high.u32 %v2001
      %v2004 = vshrl.u32 %v2003, 3
      %v2005 = vmul.u32 %v2004, 10
      %v2006 = vsub.s32 %v2000, %v2005
      %v2007 = vsub.s32 0, %v2006
      %v2008 = vsel %vm1998, %v2007, %v2006
      %vm2009 = vcmp.lt.s32.totalorder %v1959, 0
      %v2010 = vsub.s32 0, %v1959
      %v2011 = vsel %vm2009, %v2010, %v1959
      %v2012 = vmul.u32.u64.compose %v2011, 3435973837
      %v2013 = vextract.low.u32 %v2012
      %v2014 = vextract.high.u32 %v2012
      %v2015 = vshrl.u32 %v2014, 3
      %v2016 = vmul.u32 %v2015, 10
      %v2017 = vsub.s32 %v2011, %v2016
      %v2018 = vsub.s32 0, %v2017
      %v2019 = vsel %vm2009, %v2018, %v2017
      %vm2020 = vcmp.lt.s32.totalorder %v1960, 0
      %v2021 = vsub.s32 0, %v1960
      %v2022 = vsel %vm2020, %v2021, %v1960
      %v2023 = vmul.u32.u64.compose %v2022, 3435973837
      %v2024 = vextract.low.u32 %v2023
      %v2025 = vextract.high.u32 %v2023
      %v2026 = vshrl.u32 %v2025, 3
      %v2027 = vmul.u32 %v2026, 10
      %v2028 = vsub.s32 %v2022, %v2027
      %v2029 = vsub.s32 0, %v2028
      %v2030 = vsel %vm2020, %v2029, %v2028
      %vm2031 = vcmp.lt.s32.totalorder %v1961, 0
      %v2032 = vsub.s32 0, %v1961
      %v2033 = vsel %vm2031, %v2032, %v1961
      %v2034 = vmul.u32.u64.compose %v2033, 3435973837
      %v2035 = vextract.low.u32 %v2034
      %v2036 = vextract.high.u32 %v2034
      %v2037 = vshrl.u32 %v2036, 3
      %v2038 = vmul.u32 %v2037, 10
      %v2039 = vsub.s32 %v2033, %v2038
      %v2040 = vsub.s32 0, %v2039
      %v2041 = vsel %vm2031, %v2040, %v2039
      %vm2042 = vcmp.lt.s32.totalorder %v1962, 0
      %v2043 = vsub.s32 0, %v1962
      %v2044 = vsel %vm2042, %v2043, %v1962
      %v2045 = vmul.u32.u64.compose %v2044, 3435973837
      %v2046 = vextract.low.u32 %v2045
      %v2047 = vextract.high.u32 %v2045
      %v2048 = vshrl.u32 %v2047, 3
      %v2049 = vmul.u32 %v2048, 10
      %v2050 = vsub.s32 %v2044, %v2049
      %v2051 = vsub.s32 0, %v2050
      %v2052 = vsel %vm2042, %v2051, %v2050
      %vm2053 = vcmp.lt.s32.totalorder %v1963, 0
      %v2054 = vsub.s32 0, %v1963
      %v2055 = vsel %vm2053, %v2054, %v1963
      %v2056 = vmul.u32.u64.compose %v2055, 3435973837
      %v2057 = vextract.low.u32 %v2056
      %v2058 = vextract.high.u32 %v2056
      %v2059 = vshrl.u32 %v2058, 3
      %v2060 = vmul.u32 %v2059, 10
      %v2061 = vsub.s32 %v2055, %v2060
      %v2062 = vsub.s32 0, %v2061
      %v2063 = vsel %vm2053, %v2062, %v2061
      %vm2064 = vcmp.lt.s32.totalorder %v1964, 0
      %v2065 = vsub.s32 0, %v1964
      %v2066 = vsel %vm2064, %v2065, %v1964
      %v2067 = vmul.u32.u64.compose %v2066, 3435973837
      %v2068 = vextract.low.u32 %v2067
      %v2069 = vextract.high.u32 %v2067
      %v2070 = vshrl.u32 %v2069, 3
      %v2071 = vmul.u32 %v2070, 10
      %v2072 = vsub.s32 %v2066, %v2071
      %v2073 = vsub.s32 0, %v2072
      %v2074 = vsel %vm2064, %v2073, %v2072
      %vm2075 = vcmp.ne.s32.totalorder %v1975, 0
      %vm2076 = vcmp.ne.s32.totalorder %v1986, 0
      %vm2077 = vcmp.ne.s32.totalorder %v1997, 0
      %vm2078 = vcmp.ne.s32.totalorder %v2008, 0
      %vm2079 = vcmp.ne.s32.totalorder %v2019, 0
      %vm2080 = vcmp.ne.s32.totalorder %v2030, 0
      %vm2081 = vcmp.ne.s32.totalorder %v2041, 0
      %vm2082 = vcmp.ne.s32.totalorder %v2052, 0
      %vm2083 = vcmp.ne.s32.totalorder %v2063, 0
      %vm2084 = vcmp.ne.s32.totalorder %v2074, 0
      %vm2085 = vcmp.lt.s32.totalorder %v1975, 0
      %vm2086 = vcmp.lt.s32.totalorder %v1986, 0
      %vm2087 = vcmp.lt.s32.totalorder %v1997, 0
      %vm2088 = vcmp.lt.s32.totalorder %v2008, 0
      %vm2089 = vcmp.lt.s32.totalorder %v2019, 0
      %vm2090 = vcmp.lt.s32.totalorder %v2030, 0
      %vm2091 = vcmp.lt.s32.totalorder %v2041, 0
      %vm2092 = vcmp.lt.s32.totalorder %v2052, 0
      %vm2093 = vcmp.lt.s32.totalorder %v2063, 0
      %vm2094 = vcmp.lt.s32.totalorder %v2074, 0
      %vm2095 = vmand %vm2085, %vm2075
      %vm2096 = vmand %vm2086, %vm2076
      %vm2097 = vmand %vm2087, %vm2077
      %vm2098 = vmand %vm2088, %vm2078
      %vm2099 = vmand %vm2089, %vm2079
      %vm2100 = vmand %vm2090, %vm2080
      %vm2101 = vmand %vm2091, %vm2081
      %vm2102 = vmand %vm2092, %vm2082
      %vm2103 = vmand %vm2093, %vm2083
      %vm2104 = vmand %vm2094, %vm2084
      %v2105 = vadd.s32 %v1975, 10
      %v2106 = vadd.s32 %v1986, 10
      %v2107 = vadd.s32 %v1997, 10
      %v2108 = vadd.s32 %v2008, 10
      %v2109 = vadd.s32 %v2019, 10
      %v2110 = vadd.s32 %v2030, 10
      %v2111 = vadd.s32 %v2041, 10
      %v2112 = vadd.s32 %v2052, 10
      %v2113 = vadd.s32 %v2063, 10
      %v2114 = vadd.s32 %v2074, 10
      %v2115 = vsel %vm2095, %v2105, %v1975
      %v2116 = vsel %vm2096, %v2106, %v1986
      %v2117 = vsel %vm2097, %v2107, %v1997
      %v2118 = vsel %vm2098, %v2108, %v2008
      %v2119 = vsel %vm2099, %v2109, %v2019
      %v2120 = vsel %vm2100, %v2110, %v2030
      %v2121 = vsel %vm2101, %v2111, %v2041
      %v2122 = vsel %vm2102, %v2112, %v2052
      %v2123 = vsel %vm2103, %v2113, %v2063
      %v2124 = vsel %vm2104, %v2114, %v2074
      %vm2125 = vcmp.lt.s32.totalorder %v2115, 8
      %vm2126 = vcmp.lt.s32.totalorder %v2116, 8
      %vm2127 = vcmp.lt.s32.totalorder %v2117, 8
      %vm2128 = vcmp.lt.s32.totalorder %v2118, 8
      %vm2129 = vcmp.lt.s32.totalorder %v2119, 8
      %vm2130 = vcmp.lt.s32.totalorder %v2120, 8
      %vm2131 = vcmp.lt.s32.totalorder %v2121, 8
      %vm2132 = vcmp.lt.s32.totalorder %v2122, 8
      %vm2133 = vcmp.lt.s32.totalorder %v2123, 8
      %vm2134 = vcmp.lt.s32.totalorder %v2124, 8
      %v2135 = vsel %vm2125, 1, 0
      %v2136 = vsel %vm2126, 1, 0
      %v2137 = vsel %vm2127, 1, 0
      %v2138 = vsel %vm2128, 1, 0
      %v2139 = vsel %vm2129, 1, 0
      %v2140 = vsel %vm2130, 1, 0
      %v2141 = vsel %vm2131, 1, 0
      %v2142 = vsel %vm2132, 1, 0
      %v2143 = vsel %vm2133, 1, 0
      %v2144 = vsel %vm2134, 1, 0
      %vm2145 = vcmp.eq.s32.totalorder %v2135, 1
      %vm2146 = vcmp.eq.s32.totalorder %v2136, 1
      %vm2147 = vcmp.eq.s32.totalorder %v2137, 1
      %vm2148 = vcmp.eq.s32.totalorder %v2138, 1
      %vm2149 = vcmp.eq.s32.totalorder %v2139, 1
      %vm2150 = vcmp.eq.s32.totalorder %v2140, 1
      %vm2151 = vcmp.eq.s32.totalorder %v2141, 1
      %vm2152 = vcmp.eq.s32.totalorder %v2142, 1
      %vm2153 = vcmp.eq.s32.totalorder %v2143, 1
      %vm2154 = vcmp.eq.s32.totalorder %v2144, 1
      %v2155 = vsel %vm2145, %v1888, 0.0
      %v2156 = vsel %vm2146, %v1889, 0.0
      %v2157 = vsel %vm2147, %v1890, 0.0
      %v2158 = vsel %vm2148, %v1891, 0.0
      %v2159 = vsel %vm2149, %v1892, 0.0
      %v2160 = vsel %vm2150, %v1893, 0.0
      %v2161 = vsel %vm2151, %v1894, 0.0
      %v2162 = vsel %vm2152, %v1895, 0.0
      %v2163 = vsel %vm2153, %v1896, 0.0
      %v2164 = vsel %vm2154, %v1897, 0.0
      %v2165 = vld [vmem:[%s3] sm:$0x1]
      %v2166 = vadd.f32 %v2155, %v2156
      %v2167 = vadd.f32 %v2166, %v2157
      %v2168 = vadd.f32 %v2167, %v2158
      %v2169 = vadd.f32 %v2168, %v2159
      %v2170 = vadd.f32 %v2169, %v2160
      %v2171 = vadd.f32 %v2170, %v2161
      %v2172 = vadd.f32 %v2171, %v2162
      %v2173 = vadd.f32 %v2172, %v2163
      %v2174 = vadd.f32 %v2173, %v2164
      %v2175 = vrot.slane %v2174, 4
      %v2176 = vadd.f32 %v2174, %v2175
      %v2177 = vrot.slane %v2176, 2
      %v2178 = vadd.f32 %v2176, %v2177
      %v2179 = vrot.slane %v2178, 1
      %v2180 = vadd.f32 %v2178, %v2179
      %v2181 = vadd.f32 %v2165, %v2180
      %2182 = vst [vmem:[%s3] sm:$0x1] %v2181
      %v2183 = vld [vmem:[%s4] sm:$0x1]
      %v2184 = vmul.f32 %v2155, %v2155
      %v2185 = vmul.f32 %v2156, %v2156
      %v2186 = vmul.f32 %v2157, %v2157
      %v2187 = vmul.f32 %v2158, %v2158
      %v2188 = vmul.f32 %v2159, %v2159
      %v2189 = vmul.f32 %v2160, %v2160
      %v2190 = vmul.f32 %v2161, %v2161
      %v2191 = vmul.f32 %v2162, %v2162
      %v2192 = vmul.f32 %v2163, %v2163
      %v2193 = vmul.f32 %v2164, %v2164
      %v2194 = vadd.f32 %v2184, %v2185
      %v2195 = vadd.f32 %v2194, %v2186
      %v2196 = vadd.f32 %v2195, %v2187
      %v2197 = vadd.f32 %v2196, %v2188
      %v2198 = vadd.f32 %v2197, %v2189
      %v2199 = vadd.f32 %v2198, %v2190
      %v2200 = vadd.f32 %v2199, %v2191
      %v2201 = vadd.f32 %v2200, %v2192
      %v2202 = vadd.f32 %v2201, %v2193
      %v2203 = vrot.slane %v2202, 4
      %v2204 = vadd.f32 %v2202, %v2203
      %v2205 = vrot.slane %v2204, 2
      %v2206 = vadd.f32 %v2204, %v2205
      %v2207 = vrot.slane %v2206, 1
      %v2208 = vadd.f32 %v2206, %v2207
      %v2209 = vadd.f32 %v2183, %v2208
      %2210 = vst [vmem:[%s4] sm:$0x1] %v2209
      %p2211 = scmp.lt.s32.totalorder %s16, 1
      %s2212 = scalar_select %p2211, %s16, 1
      %s2213 = smul.addr %s2212, 10
      %s2214 = smul.addr %s2213, 4
      %s2215 = scalar_lea.vmem %s2, %s2214
      // Predicated region
      $region33: #{residual_block.6} parent=27 // pred_check
        %p2216 = pneg %p81
      $region34: #{residual_block.6} parent=27 // pred_check_branch
        %2218 = sbr.rel (%p2216) target = $region36
      $region35: #{residual_block.6} parent=27 // pred_region
        _
      $region36: #{residual_block.6} parent=27 // pred_fallthru
        _
      // Predicated region
      $region37: #{residual_block.6} parent=27 // pred_check
        %p2219 = pneg %p102
      $region38: #{residual_block.6} parent=27 // pred_check_branch
        %2221 = sbr.rel (%p2219) target = $region40
      $region39: #{residual_block.6} parent=27 // pred_region
        _
      $region40: #{residual_block.6} parent=27 // pred_fallthru
        _
      // Predicated region
      $region41: #{residual_block.6} parent=27 // pred_check
        %p2222 = pneg %p123
      $region42: #{residual_block.6} parent=27 // pred_check_branch
        %2224 = sbr.rel (%p2222) target = $region44
      $region43: #{residual_block.6} parent=27 // pred_region
        _
      $region44: #{residual_block.6} parent=27 // pred_fallthru
        _
      // Predicated region
      $region45: #{residual_block.6} parent=27 // pred_check
        %p2225 = pneg %p102
      $region46: #{residual_block.6} parent=27 // pred_check_branch
        %2227 = sbr.rel (%p2225) target = $region48
      $region47: #{residual_block.6} parent=27 // pred_region
        _
      $region48: #{residual_block.6} parent=27 // pred_fallthru
        _
      // Predicated region
      $region49: #{residual_block.6} parent=27 // pred_check
        %p2228 = pneg %p123
      $region50: #{residual_block.6} parent=27 // pred_check_branch
        %2230 = sbr.rel (%p2228) target = $region52
      $region51: #{residual_block.6} parent=27 // pred_region
        _
      $region52: #{residual_block.6} parent=27 // pred_fallthru
        _
    $region28: #{residual_block.6} parent=5 // pred_fallthru
      _
    %p2231 = scmp.le.s32.totalorder 2, %s11
    // Predicated region
    $region53: #{residual_block.6} parent=5 // pred_check
      %p2232 = pneg %p2231
    $region54: #{residual_block.6} parent=5 // pred_check_branch
      %2234 = sbr.rel (%p2232) target = $region56
    $region55: #{residual_block.6} parent=5 // pred_region
      %s2235 = ssub.s32 %s11, 2
      // Predicated region
      $region57: #{residual_block.6} parent=55 // pred_check
        %p2236 = pneg %p87
      $region58: #{residual_block.6} parent=55 // pred_check_branch
        %2238 = sbr.rel (%p2236) target = $region60
      $region59: #{residual_block.6} parent=55 // pred_region
        %p2239 = scmp.lt.s32.totalorder %s17, 1
        %s2240 = scalar_select %p2239, %s17, 1
        %s2241 = smul.addr %s2240, 10
        %s2242 = smul.addr %s2241, 4
        %s2243 = scalar_lea.vmem %s2, %s2242
      $region60: #{residual_block.6} parent=55 // pred_fallthru
        _
    $region56: #{residual_block.6} parent=5 // pred_fallthru
      _
  $region6: #{residual_block.6} parent=0 // loop_footer
    %s15 = sadd.s32 1, %s11
  $region7: #{residual_block.6} parent=0 // loop_footer_branch
    %10 = sbr.rel target = $region3
  $region8: #{residual_block.6} parent=0 // loop_exit
    _

</llo_original>
